<compile_context>
chip_gen: v7x
topology: tpu7x:2x2x1
jax: 0.10.0
libtpu: 0.0.40
codegen_flags: <defaults>
</compile_context>

<pallas_src>
import functools
import math

import jax
import jax.numpy as jnp
from jax.experimental import pallas as pl
from jax.experimental.pallas import tpu as pltpu


# ----------------------------------------------------------------------------
# In-kernel elementwise helpers
# ----------------------------------------------------------------------------
def _erf(x):
    # Abramowitz & Stegun 7.1.26, |err| < 1.5e-7.
    a1, a2, a3, a4, a5 = 0.254829592, -0.284496736, 1.421413741, -1.453152027, 1.061405429
    p = 0.3275911
    ax = jnp.abs(x)
    t = 1.0 / (1.0 + p * ax)
    poly = ((((a5 * t + a4) * t + a3) * t + a2) * t + a1) * t
    y = 1.0 - poly * jnp.exp(-ax * ax)
    return jnp.where(x >= 0, y, -y)


def _gelu(x):
    # nn.GELU() default = exact erf-based GELU.
    return 0.5 * x * (1.0 + _erf(x * (1.0 / math.sqrt(2.0))))


# ----------------------------------------------------------------------------
# Fused kernel: lift -> depth x [spectral + pointwise + GELU] -> proj1 -> proj2
# (one batch tile of TB elements per grid step; activations stay in VMEM/vregs)
# ----------------------------------------------------------------------------
def _fno1d_fused_kernel(*refs, depth, width, modes):
    (x_ref, lw_ref, lb_ref, fsc_ref, gic_ref) = refs[:5]
    blk_refs = refs[5:5 + 3 * depth]
    p1w_ref, p1b_ref, p2w_ref, p2b_ref, o_ref = refs[5 + 3 * depth:]

    tb, cin, n = x_ref.shape
    w, m = width, modes
    tbw = tb * w
    cout = o_ref.shape[1]
    bf16, f32 = jnp.bfloat16, jnp.float32

    # (TB, Cin, N) native layout -> (N, TB*Cin): collapse leading dims + one 2-D transpose.
    xt = x_ref[...].reshape(tb * cin, n).T.astype(bf16)                    # (N, TB*Cin)

    # lift (1x1 conv): block-diagonal kron(I_TB, W_lift^T) -> one lane-dense MXU matmul.
    h = jnp.dot(xt, lw_ref[...], preferred_element_type=f32) + lb_ref[...]  # (N, TB*W) f32

    fsc = fsc_ref[...]                                                     # (2M, N)  [cos ; -sin]
    gic = gic_ref[...]                                                     # (N, 2M)  [Gr | Gi]

    for d in range(depth):  # static unroll (depth is small here)
        wblk_ref, pww_ref, pwb_ref = blk_refs[3 * d: 3 * d + 3]
        hb = h.astype(bf16)

        # Forward truncated real DFT: real + imag rows in ONE MXU matmul.
        xf = jnp.dot(fsc, hb, preferred_element_type=f32)                  # (2M, TB*W)
        xr = xf[:m].reshape(m, tb, w)
        xi = xf[m:].reshape(m, tb, w)
        xc = jnp.concatenate([xr, xi], axis=-1).astype(bf16)               # (M, TB, 2W)

        # Complex channel mixing over ALL modes: ONE batched MXU matmul (batch = modes)
        # against block-packed [[Wr, Wi], [-Wi, Wr]] weights.
        yc = jnp.einsum('mbc,mck->mbk', xc, wblk_ref[...],
                        preferred_element_type=f32)                        # (M, TB, 2W)
        ys = jnp.concatenate([yc[:, :, :w], yc[:, :, w:]], axis=0)         # (2M, TB, W)
        ys = ys.reshape(2 * m, tbw).astype(bf16)

        # Truncated inverse real DFT: ONE matmul against concatenated [Gr | Gi].
        x1 = jnp.dot(gic, ys, preferred_element_type=f32)                  # (N, TB*W)

        # Pointwise 1x1-conv branch: block-diagonal kron weights, one matmul.
        x2 = jnp.dot(hb, pww_ref[...], preferred_element_type=f32) + pwb_ref[...]

        h = _gelu(h + x1 + x2)

    h = _gelu(jnp.dot(h.astype(bf16), p1w_ref[...], preferred_element_type=f32) + p1b_ref[...])
    out = jnp.dot(h.astype(bf16), p2w_ref[...], preferred_element_type=f32) + p2b_ref[...]

    # Lane-dense output: (N, TB*Cout) -> (TB, Cout, N), N on lanes; no wrapper transpose.
    o_ref[...] = out.T.reshape(tb, cout, n).astype(o_ref.dtype)


# ----------------------------------------------------------------------------
# Wrapper around pallas_call
# ----------------------------------------------------------------------------
def fno1d_forward(packed, x_bcn, *, width, modes1, depth, out_channels, tb):
    """Fused Pallas forward. x_bcn: (B, in_channels, N) float32 (native PyTorch NCL)."""
    B, cin, n = x_bcn.shape
    nb = -(-B // tb)
    bp = nb * tb
    x = x_bcn.astype(jnp.float32)
    if bp != B:
        x = jnp.concatenate([x, jnp.zeros((bp - B, cin, n), jnp.float32)], axis=0)

    in_specs = [pl.BlockSpec((tb, cin, n), lambda b: (b, 0, 0))]
    for arr in packed:
        nd = arr.ndim
        # whole-array, constant block index -> stays resident in VMEM across the grid
        in_specs.append(pl.BlockSpec(arr.shape, lambda b, _nd=nd: (0,) * _nd))

    kern = functools.partial(_fno1d_fused_kernel, depth=depth, width=width, modes=modes1)
    out = pl.pallas_call(
        kern,
        out_shape=jax.ShapeDtypeStruct((bp, out_channels, n), jnp.float32),
        grid=(nb,),
        in_specs=in_specs,
        out_specs=pl.BlockSpec((tb, out_channels, n), lambda b: (b, 0, 0)),
        compiler_params=pltpu.CompilerParams(dimension_semantics=("parallel",)),
    )(x, *packed)
    return out[:B]


# ----------------------------------------------------------------------------
# Parameter construction / one-time packing into kernel layout
# ----------------------------------------------------------------------------
def fourier_matrices(N, modes):
    """Real DFT matrices reproducing torch.fft.rfft / irfft (truncated to `modes`)."""
    assert modes <= N // 2 + 1, "modes1 must be <= N//2 + 1"
    n = jnp.arange(N, dtype=jnp.float32)
    m = jnp.arange(modes, dtype=jnp.float32)
    ang = 2.0 * jnp.pi * jnp.outer(m, n) / N                  # (M, N)
    fcT = jnp.cos(ang)                                        # Re of rfft
    fsT = -jnp.sin(ang)                                       # Im of rfft
    mi = jnp.arange(modes)
    if N % 2 == 0:
        dc_or_nyq = (mi == 0) | (mi == N // 2)                # Nyquist only exists for even N
    else:
        dc_or_nyq = (mi == 0)
    coef = jnp.where(dc_or_nyq, 1.0, 2.0)                     # (M,)
    grT = (jnp.cos(ang) * coef[:, None] / N).T                # (N, M)
    giT = (-jnp.sin(ang) * coef[:, None] / N).T
    # c2r ignores imaginary parts of DC / Nyquist bins
    giT = giT * jnp.where(dc_or_nyq, 0.0, 1.0)[None, :]
    return fcT, fsT, grT, giT


def init_params(key, in_channels, out_channels, width, modes1, depth):
    # The reference einsum 'bci,cio->boi' (as written in the PyTorch module) is only
    # shape-consistent when modes1 == width; we honor that constraint.
    assert width == modes1, "FNO1d's SpectralConv1d einsum requires width == modes1"
    ks = jax.random.split(key, 3 + 2 * depth)

    def conv1d_init(k, cout, cin):
        bound = 1.0 / math.sqrt(cin)
        kw, kb = jax.random.split(k)
        w = jax.random.uniform(kw, (cout, cin), jnp.float32, -bound, bound)
        b = jax.random.uniform(kb, (cout,), jnp.float32, -bound, bound)
        return w, b

    lift_w, lift_b = conv1d_init(ks[0], width, in_channels)
    blocks = []
    scale = 1.0 / (width * width)
    for d in range(depth):
        kr, ki = jax.random.split(ks[1 + 2 * d])
        # torch layout: (in_channels, out_channels, modes1), complex (real, imag)
        wr = scale * jax.random.normal(kr, (width, width, modes1), jnp.float32) / math.sqrt(2.0)
        wi = scale * jax.random.normal(ki, (width, width, modes1), jnp.float32) / math.sqrt(2.0)
        pw_w, pw_b = conv1d_init(ks[2 + 2 * d], width, width)
        blocks.append(dict(spec_wr=wr, spec_wi=wi, pw_w=pw_w, pw_b=pw_b))
    proj1_w, proj1_b = conv1d_init(ks[1 + 2 * depth], width // 2, width)
    proj2_w, proj2_b = conv1d_init(ks[2 + 2 * depth], out_channels, width // 2)
    return dict(lift_w=lift_w, lift_b=lift_b, blocks=blocks,
                proj1_w=proj1_w, proj1_b=proj1_b,
                proj2_w=proj2_w, proj2_b=proj2_b)


def pack_params(params, modes1, N, tb):
    """One-time repack of PyTorch-layout params into kernel layout (bf16 matmul operands)."""
    f32, bf16 = jnp.float32, jnp.bfloat16
    fcT, fsT, grT, giT = fourier_matrices(N, modes1)
    fsc = jnp.concatenate([fcT, fsT], axis=0).astype(bf16)       # (2M, N): fused fwd DFT
    gic = jnp.concatenate([grT, giT], axis=1).astype(bf16)       # (N, 2M): fused inv DFT

    eye = jnp.eye(tb, dtype=f32)

    def blk_w(w):   # torch conv weight (out, in) -> block-diag kron(I_TB, w^T) in bf16
        return jnp.kron(eye, w.T.astype(f32)).astype(bf16)

    def blk_b(b):   # (out,) -> (1, TB*out), f32 (added to f32 activations)
        return jnp.tile(b.astype(f32), tb)[None, :]

    packed = [blk_w(params["lift_w"]), blk_b(params["lift_b"]), fsc, gic]
    for blk in params["blocks"]:
        # torch einsum 'bci,cio->boi' uses the weight as weights[in, mode, out]; pack the
        # per-mode complex mixing as a real block matrix so yr|yi come from ONE batched dot.
        wr = jnp.transpose(blk["spec_wr"], (1, 0, 2))             # (M, in, out)
        wi = jnp.transpose(blk["spec_wi"], (1, 0, 2))
        top = jnp.concatenate([wr, wi], axis=2)                   # (M, in, 2*out)
        bot = jnp.concatenate([-wi, wr], axis=2)
        wblk = jnp.concatenate([top, bot], axis=1).astype(bf16)   # (M, 2*in, 2*out)
        packed += [wblk, blk_w(blk["pw_w"]), blk_b(blk["pw_b"])]
    packed += [blk_w(params["proj1_w"]), blk_b(params["proj1_b"]),
               blk_w(params["proj2_w"]), blk_b(params["proj2_b"])]
    return packed


# ----------------------------------------------------------------------------
# Pure-JAX reference (mirrors the PyTorch module op-for-op, HIGHEST precision)
# ----------------------------------------------------------------------------
def fno1d_reference(params, cfg, x_bcn):
    W, M = cfg["width"], cfg["modes1"]
    N = x_bcn.shape[-1]
    hi = jax.lax.Precision.HIGHEST

    def conv(x, w, b):                       # w: (out, in), b: (out,)
        return jnp.einsum('oc,bcn->bon', w, x, precision=hi) + b[None, :, None]

    def gelu(x):
        return jax.nn.gelu(x, approximate=False)

    def spectral(x, wr, wi):
        xft = jnp.fft.rfft(x, axis=-1)
        wc = (wr + 1j * wi).astype(jnp.complex64)
        y = jnp.einsum('bci,cio->boi', xft[:, :, :M], wc, precision=hi)
        out_ft = jnp.zeros((x.shape[0], W, N // 2 + 1), dtype=jnp.complex64)
        out_ft = out_ft.at[:, :, :M].set(y)
        return jnp.fft.irfft(out_ft, n=N, axis=-1)

    h = conv(x_bcn, params["lift_w"], params["lift_b"])
    for blk in params["blocks"]:
        x1 = spectral(h, blk["spec_wr"], blk["spec_wi"])
        x2 = conv(h, blk["pw_w"], blk["pw_b"])
        h = gelu(h + x1 + x2)
    h = gelu(conv(h, params["proj1_w"], params["proj1_b"]))
    h = conv(h, params["proj2_w"], params["proj2_b"])
    return h


# ----------------------------------------------------------------------------
if __name__ == "__main__":
    B, Cin, Cout, width, modes1, depth, N = 16, 3, 2, 16, 16, 2, 128
    # Batch tile sized so TB*width fills the 128-wide lane axis (same on v5e/v6e/v7x).
    TB = max(1, min(B, 128 // width))                       # -> 8, grid of 2 batch tiles

    key = jax.random.PRNGKey(0)
    kp, kx = jax.random.split(key)
    params = init_params(kp, Cin, Cout, width, modes1, depth)
    x = jax.random.normal(kx, (B, Cin, N), jnp.float32)

    # one-time packing: block-diag / block-complex weights + fused DFT matrices (bf16)
    packed = pack_params(params, modes1, N, TB)

    fwd = jax.jit(functools.partial(fno1d_forward, width=width, modes1=modes1,
                                    depth=depth, out_channels=Cout, tb=TB))
    out = jax.block_until_ready(fwd(packed, x))
    ref = jax.block_until_ready(fno1d_reference(params, dict(width=width, modes1=modes1), x))

    assert out.shape == (B, Cout, N), out.shape
    rel = float(jnp.linalg.norm(out - ref) / (jnp.linalg.norm(ref) + 1e-12))
    # bf16 matmul operands with f32 accumulation vs a HIGHEST-precision FFT reference:
    # validate with a relative L2 bound.
    assert rel < 2e-2, f"relative L2 error vs reference: {rel}"
    print("KERNEL_OK")
</pallas_src>

<mosaic_0001>
module attributes {stable_mosaic.version = 11 : i64} {
  func.func @_fno1d_fused_kernel(%arg0: i32, %arg1: memref<8x3x128xf32, #tpu.memory_space<vmem>>, %arg2: memref<24x128xbf16, #tpu.memory_space<vmem>>, %arg3: memref<1x128xf32, #tpu.memory_space<vmem>>, %arg4: memref<32x128xbf16, #tpu.memory_space<vmem>>, %arg5: memref<128x32xbf16, #tpu.memory_space<vmem>>, %arg6: memref<16x32x32xbf16, #tpu.memory_space<vmem>>, %arg7: memref<128x128xbf16, #tpu.memory_space<vmem>>, %arg8: memref<1x128xf32, #tpu.memory_space<vmem>>, %arg9: memref<16x32x32xbf16, #tpu.memory_space<vmem>>, %arg10: memref<128x128xbf16, #tpu.memory_space<vmem>>, %arg11: memref<1x128xf32, #tpu.memory_space<vmem>>, %arg12: memref<128x64xbf16, #tpu.memory_space<vmem>>, %arg13: memref<1x64xf32, #tpu.memory_space<vmem>>, %arg14: memref<64x16xbf16, #tpu.memory_space<vmem>>, %arg15: memref<1x16xf32, #tpu.memory_space<vmem>>, %arg16: memref<8x2x128xf32, #tpu.memory_space<vmem>>) attributes {dimension_semantics = [#tpu.dimension_semantics<parallel>], iteration_bounds = array<i64: 2>, scalar_prefetch = 0 : i64, scratch_operands = 0 : i64, tpu.core_type = #tpu.core_type<tc>, window_params = [{transform_indices = @transform_0, window_bounds = array<i64: 8, 3, 128>}, {pipeline_mode = #tpu.pipeline_mode<synchronous>, transform_indices = @transform_1, window_bounds = array<i64: 24, 128>}, {pipeline_mode = #tpu.pipeline_mode<synchronous>, transform_indices = @transform_2, window_bounds = array<i64: 1, 128>}, {pipeline_mode = #tpu.pipeline_mode<synchronous>, transform_indices = @transform_3, window_bounds = array<i64: 32, 128>}, {pipeline_mode = #tpu.pipeline_mode<synchronous>, transform_indices = @transform_4, window_bounds = array<i64: 128, 32>}, {pipeline_mode = #tpu.pipeline_mode<synchronous>, transform_indices = @transform_5, window_bounds = array<i64: 16, 32, 32>}, {pipeline_mode = #tpu.pipeline_mode<synchronous>, transform_indices = @transform_6, window_bounds = array<i64: 128, 128>}, {pipeline_mode = #tpu.pipeline_mode<synchronous>, transform_indices = @transform_7, window_bounds = array<i64: 1, 128>}, {pipeline_mode = #tpu.pipeline_mode<synchronous>, transform_indices = @transform_8, window_bounds = array<i64: 16, 32, 32>}, {pipeline_mode = #tpu.pipeline_mode<synchronous>, transform_indices = @transform_9, window_bounds = array<i64: 128, 128>}, {pipeline_mode = #tpu.pipeline_mode<synchronous>, transform_indices = @transform_10, window_bounds = array<i64: 1, 128>}, {pipeline_mode = #tpu.pipeline_mode<synchronous>, transform_indices = @transform_11, window_bounds = array<i64: 128, 64>}, {pipeline_mode = #tpu.pipeline_mode<synchronous>, transform_indices = @transform_12, window_bounds = array<i64: 1, 64>}, {pipeline_mode = #tpu.pipeline_mode<synchronous>, transform_indices = @transform_13, window_bounds = array<i64: 64, 16>}, {pipeline_mode = #tpu.pipeline_mode<synchronous>, transform_indices = @transform_14, window_bounds = array<i64: 1, 16>}, {transform_indices = @transform_15, window_bounds = array<i64: 8, 2, 128>}]} {
    %c0 = arith.constant 0 : index
    %c0_0 = arith.constant 0 : index
    %c0_1 = arith.constant 0 : index
    %0 = vector.load %arg1[%c0, %c0_0, %c0_1] : memref<8x3x128xf32, #tpu.memory_space<vmem>>, vector<8x3x128xf32>
    %1 = vector.shape_cast %0 : vector<8x3x128xf32> to vector<24x128xf32>
    %2 = tpu.transpose %1, [1, 0] : vector<24x128xf32> -> vector<128x24xf32>
    %3 = arith.truncf %2 : vector<128x24xf32> to vector<128x24xbf16>
    %c0_2 = arith.constant 0 : index
    %c0_3 = arith.constant 0 : index
    %4 = vector.load %arg2[%c0_2, %c0_3] : memref<24x128xbf16, #tpu.memory_space<vmem>>, vector<24x128xbf16>
    %cst = arith.constant dense<0.000000e+00> : vector<128x128xf32>
    %5 = tpu.matmul %3, %4, %cst {dimension_numbers = #tpu.dot_dimension_numbers<[1], [0], [0], [1], [0, 0, 1, 1], [], []>} : vector<128x24xbf16>, vector<24x128xbf16>, vector<128x128xf32> -> vector<128x128xf32>
    %c0_4 = arith.constant 0 : index
    %c0_5 = arith.constant 0 : index
    %6 = vector.load %arg3[%c0_4, %c0_5] : memref<1x128xf32, #tpu.memory_space<vmem>>, vector<1x128xf32>
    %7 = vector.broadcast %6 : vector<1x128xf32> to vector<128x128xf32>
    %8 = arith.addf %5, %7 : vector<128x128xf32>
    %c0_6 = arith.constant 0 : index
    %c0_7 = arith.constant 0 : index
    %9 = vector.load %arg4[%c0_6, %c0_7] : memref<32x128xbf16, #tpu.memory_space<vmem>>, vector<32x128xbf16>
    %c0_8 = arith.constant 0 : index
    %c0_9 = arith.constant 0 : index
    %10 = vector.load %arg5[%c0_8, %c0_9] : memref<128x32xbf16, #tpu.memory_space<vmem>>, vector<128x32xbf16>
    %11 = arith.truncf %8 : vector<128x128xf32> to vector<128x128xbf16>
    %cst_10 = arith.constant dense<0.000000e+00> : vector<32x128xf32>
    %12 = tpu.matmul %9, %11, %cst_10 {dimension_numbers = #tpu.dot_dimension_numbers<[1], [0], [0], [1], [0, 0, 1, 1], [], []>} : vector<32x128xbf16>, vector<128x128xbf16>, vector<32x128xf32> -> vector<32x128xf32>
    %13 = vector.extract_strided_slice %12 {offsets = [0, 0], sizes = [16, 128], strides = [1, 1]} : vector<32x128xf32> to vector<16x128xf32>
    %14 = vector.shape_cast %13 : vector<16x128xf32> to vector<16x8x16xf32>
    %15 = vector.extract_strided_slice %12 {offsets = [16, 0], sizes = [16, 128], strides = [1, 1]} : vector<32x128xf32> to vector<16x128xf32>
    %16 = vector.shape_cast %15 : vector<16x128xf32> to vector<16x8x16xf32>
    %17 = tpu.concatenate %14, %16 in 2 : vector<16x8x16xf32>, vector<16x8x16xf32> -> vector<16x8x32xf32>
    %18 = arith.truncf %17 : vector<16x8x32xf32> to vector<16x8x32xbf16>
    %c0_11 = arith.constant 0 : index
    %c0_12 = arith.constant 0 : index
    %c0_13 = arith.constant 0 : index
    %19 = vector.load %arg6[%c0_11, %c0_12, %c0_13] : memref<16x32x32xbf16, #tpu.memory_space<vmem>>, vector<16x32x32xbf16>
    "tpu.trace_start"() <{level = 10 : i32, message = "mbc,mck->mbk"}> : () -> ()
    %cst_14 = arith.constant dense<0.000000e+00> : vector<16x8x32xf32>
    %20 = tpu.matmul %18, %19, %cst_14 {dimension_numbers = #tpu.dot_dimension_numbers<[2], [1], [1], [2], [0, 0, 0, 1, 1, 2], [0], [0]>} : vector<16x8x32xbf16>, vector<16x32x32xbf16>, vector<16x8x32xf32> -> vector<16x8x32xf32>
    "tpu.trace_stop"() : () -> ()
    %21 = vector.extract_strided_slice %20 {offsets = [0, 0, 0], sizes = [16, 8, 16], strides = [1, 1, 1]} : vector<16x8x32xf32> to vector<16x8x16xf32>
    %22 = vector.extract_strided_slice %20 {offsets = [0, 0, 16], sizes = [16, 8, 16], strides = [1, 1, 1]} : vector<16x8x32xf32> to vector<16x8x16xf32>
    %23 = tpu.concatenate %21, %22 in 0 : vector<16x8x16xf32>, vector<16x8x16xf32> -> vector<32x8x16xf32>
    %24 = vector.shape_cast %23 : vector<32x8x16xf32> to vector<32x128xf32>
    %25 = arith.truncf %24 : vector<32x128xf32> to vector<32x128xbf16>
    %cst_15 = arith.constant dense<0.000000e+00> : vector<128x128xf32>
    %26 = tpu.matmul %10, %25, %cst_15 {dimension_numbers = #tpu.dot_dimension_numbers<[1], [0], [0], [1], [0, 0, 1, 1], [], []>} : vector<128x32xbf16>, vector<32x128xbf16>, vector<128x128xf32> -> vector<128x128xf32>
    %c0_16 = arith.constant 0 : index
    %c0_17 = arith.constant 0 : index
    %27 = vector.load %arg7[%c0_16, %c0_17] : memref<128x128xbf16, #tpu.memory_space<vmem>>, vector<128x128xbf16>
    %cst_18 = arith.constant dense<0.000000e+00> : vector<128x128xf32>
    %28 = tpu.matmul %11, %27, %cst_18 {dimension_numbers = #tpu.dot_dimension_numbers<[1], [0], [0], [1], [0, 0, 1, 1], [], []>} : vector<128x128xbf16>, vector<128x128xbf16>, vector<128x128xf32> -> vector<128x128xf32>
    %c0_19 = arith.constant 0 : index
    %c0_20 = arith.constant 0 : index
    %29 = vector.load %arg8[%c0_19, %c0_20] : memref<1x128xf32, #tpu.memory_space<vmem>>, vector<1x128xf32>
    %30 = vector.broadcast %29 : vector<1x128xf32> to vector<128x128xf32>
    %31 = arith.addf %28, %30 : vector<128x128xf32>
    %32 = arith.addf %8, %26 : vector<128x128xf32>
    %33 = arith.addf %32, %31 : vector<128x128xf32>
    %cst_21 = arith.constant 5.000000e-01 : f32
    %34 = vector.broadcast %cst_21 : f32 to vector<128x128xf32>
    %35 = arith.mulf %34, %33 : vector<128x128xf32>
    %cst_22 = arith.constant 0.707106769 : f32
    %36 = vector.broadcast %cst_22 : f32 to vector<128x128xf32>
    %37 = arith.mulf %33, %36 : vector<128x128xf32>
    %38 = math.absf %37 : vector<128x128xf32>
    %cst_23 = arith.constant 0.327591091 : f32
    %39 = vector.broadcast %cst_23 : f32 to vector<128x128xf32>
    %40 = arith.mulf %39, %38 : vector<128x128xf32>
    %cst_24 = arith.constant 1.000000e+00 : f32
    %41 = vector.broadcast %cst_24 : f32 to vector<128x128xf32>
    %42 = arith.addf %41, %40 : vector<128x128xf32>
    %cst_25 = arith.constant 1.000000e+00 : f32
    %43 = vector.broadcast %cst_25 : f32 to vector<128x128xf32>
    %44 = arith.divf %43, %42 : vector<128x128xf32>
    %cst_26 = arith.constant 1.06140542 : f32
    %45 = vector.broadcast %cst_26 : f32 to vector<128x128xf32>
    %46 = arith.mulf %45, %44 : vector<128x128xf32>
    %cst_27 = arith.constant -1.45315206 : f32
    %47 = vector.broadcast %cst_27 : f32 to vector<128x128xf32>
    %48 = arith.addf %46, %47 : vector<128x128xf32>
    %49 = arith.mulf %48, %44 : vector<128x128xf32>
    %cst_28 = arith.constant 1.42141378 : f32
    %50 = vector.broadcast %cst_28 : f32 to vector<128x128xf32>
    %51 = arith.addf %49, %50 : vector<128x128xf32>
    %52 = arith.mulf %51, %44 : vector<128x128xf32>
    %cst_29 = arith.constant -0.284496725 : f32
    %53 = vector.broadcast %cst_29 : f32 to vector<128x128xf32>
    %54 = arith.addf %52, %53 : vector<128x128xf32>
    %55 = arith.mulf %54, %44 : vector<128x128xf32>
    %cst_30 = arith.constant 0.254829586 : f32
    %56 = vector.broadcast %cst_30 : f32 to vector<128x128xf32>
    %57 = arith.addf %55, %56 : vector<128x128xf32>
    %58 = arith.mulf %57, %44 : vector<128x128xf32>
    %cst_31 = arith.constant 0.000000e+00 : f32
    %59 = vector.broadcast %cst_31 : f32 to vector<128x128xf32>
    %60 = arith.subf %59, %38 : vector<128x128xf32>
    %61 = arith.mulf %60, %38 : vector<128x128xf32>
    %62 = math.exp %61 : vector<128x128xf32>
    %63 = arith.mulf %58, %62 : vector<128x128xf32>
    %cst_32 = arith.constant 1.000000e+00 : f32
    %64 = vector.broadcast %cst_32 : f32 to vector<128x128xf32>
    %65 = arith.subf %64, %63 : vector<128x128xf32>
    %cst_33 = arith.constant 0.000000e+00 : f32
    %66 = vector.broadcast %cst_33 : f32 to vector<128x128xf32>
    %67 = arith.cmpf oge, %37, %66 : vector<128x128xf32>
    %cst_34 = arith.constant 0.000000e+00 : f32
    %68 = vector.broadcast %cst_34 : f32 to vector<128x128xf32>
    %69 = arith.subf %68, %65 : vector<128x128xf32>
    %70 = arith.select %67, %65, %69 : vector<128x128xi1>, vector<128x128xf32>
    %cst_35 = arith.constant 1.000000e+00 : f32
    %71 = vector.broadcast %cst_35 : f32 to vector<128x128xf32>
    %72 = arith.addf %71, %70 : vector<128x128xf32>
    %73 = arith.mulf %35, %72 : vector<128x128xf32>
    %74 = arith.truncf %73 : vector<128x128xf32> to vector<128x128xbf16>
    %cst_36 = arith.constant dense<0.000000e+00> : vector<32x128xf32>
    %75 = tpu.matmul %9, %74, %cst_36 {dimension_numbers = #tpu.dot_dimension_numbers<[1], [0], [0], [1], [0, 0, 1, 1], [], []>} : vector<32x128xbf16>, vector<128x128xbf16>, vector<32x128xf32> -> vector<32x128xf32>
    %76 = vector.extract_strided_slice %75 {offsets = [0, 0], sizes = [16, 128], strides = [1, 1]} : vector<32x128xf32> to vector<16x128xf32>
    %77 = vector.shape_cast %76 : vector<16x128xf32> to vector<16x8x16xf32>
    %78 = vector.extract_strided_slice %75 {offsets = [16, 0], sizes = [16, 128], strides = [1, 1]} : vector<32x128xf32> to vector<16x128xf32>
    %79 = vector.shape_cast %78 : vector<16x128xf32> to vector<16x8x16xf32>
    %80 = tpu.concatenate %77, %79 in 2 : vector<16x8x16xf32>, vector<16x8x16xf32> -> vector<16x8x32xf32>
    %81 = arith.truncf %80 : vector<16x8x32xf32> to vector<16x8x32xbf16>
    %c0_37 = arith.constant 0 : index
    %c0_38 = arith.constant 0 : index
    %c0_39 = arith.constant 0 : index
    %82 = vector.load %arg9[%c0_37, %c0_38, %c0_39] : memref<16x32x32xbf16, #tpu.memory_space<vmem>>, vector<16x32x32xbf16>
    "tpu.trace_start"() <{level = 10 : i32, message = "mbc,mck->mbk"}> : () -> ()
    %cst_40 = arith.constant dense<0.000000e+00> : vector<16x8x32xf32>
    %83 = tpu.matmul %81, %82, %cst_40 {dimension_numbers = #tpu.dot_dimension_numbers<[2], [1], [1], [2], [0, 0, 0, 1, 1, 2], [0], [0]>} : vector<16x8x32xbf16>, vector<16x32x32xbf16>, vector<16x8x32xf32> -> vector<16x8x32xf32>
    "tpu.trace_stop"() : () -> ()
    %84 = vector.extract_strided_slice %83 {offsets = [0, 0, 0], sizes = [16, 8, 16], strides = [1, 1, 1]} : vector<16x8x32xf32> to vector<16x8x16xf32>
    %85 = vector.extract_strided_slice %83 {offsets = [0, 0, 16], sizes = [16, 8, 16], strides = [1, 1, 1]} : vector<16x8x32xf32> to vector<16x8x16xf32>
    %86 = tpu.concatenate %84, %85 in 0 : vector<16x8x16xf32>, vector<16x8x16xf32> -> vector<32x8x16xf32>
    %87 = vector.shape_cast %86 : vector<32x8x16xf32> to vector<32x128xf32>
    %88 = arith.truncf %87 : vector<32x128xf32> to vector<32x128xbf16>
    %cst_41 = arith.constant dense<0.000000e+00> : vector<128x128xf32>
    %89 = tpu.matmul %10, %88, %cst_41 {dimension_numbers = #tpu.dot_dimension_numbers<[1], [0], [0], [1], [0, 0, 1, 1], [], []>} : vector<128x32xbf16>, vector<32x128xbf16>, vector<128x128xf32> -> vector<128x128xf32>
    %c0_42 = arith.constant 0 : index
    %c0_43 = arith.constant 0 : index
    %90 = vector.load %arg10[%c0_42, %c0_43] : memref<128x128xbf16, #tpu.memory_space<vmem>>, vector<128x128xbf16>
    %cst_44 = arith.constant dense<0.000000e+00> : vector<128x128xf32>
    %91 = tpu.matmul %74, %90, %cst_44 {dimension_numbers = #tpu.dot_dimension_numbers<[1], [0], [0], [1], [0, 0, 1, 1], [], []>} : vector<128x128xbf16>, vector<128x128xbf16>, vector<128x128xf32> -> vector<128x128xf32>
    %c0_45 = arith.constant 0 : index
    %c0_46 = arith.constant 0 : index
    %92 = vector.load %arg11[%c0_45, %c0_46] : memref<1x128xf32, #tpu.memory_space<vmem>>, vector<1x128xf32>
    %93 = vector.broadcast %92 : vector<1x128xf32> to vector<128x128xf32>
    %94 = arith.addf %91, %93 : vector<128x128xf32>
    %95 = arith.addf %73, %89 : vector<128x128xf32>
    %96 = arith.addf %95, %94 : vector<128x128xf32>
    %cst_47 = arith.constant 5.000000e-01 : f32
    %97 = vector.broadcast %cst_47 : f32 to vector<128x128xf32>
    %98 = arith.mulf %97, %96 : vector<128x128xf32>
    %cst_48 = arith.constant 0.707106769 : f32
    %99 = vector.broadcast %cst_48 : f32 to vector<128x128xf32>
    %100 = arith.mulf %96, %99 : vector<128x128xf32>
    %101 = math.absf %100 : vector<128x128xf32>
    %cst_49 = arith.constant 0.327591091 : f32
    %102 = vector.broadcast %cst_49 : f32 to vector<128x128xf32>
    %103 = arith.mulf %102, %101 : vector<128x128xf32>
    %cst_50 = arith.constant 1.000000e+00 : f32
    %104 = vector.broadcast %cst_50 : f32 to vector<128x128xf32>
    %105 = arith.addf %104, %103 : vector<128x128xf32>
    %cst_51 = arith.constant 1.000000e+00 : f32
    %106 = vector.broadcast %cst_51 : f32 to vector<128x128xf32>
    %107 = arith.divf %106, %105 : vector<128x128xf32>
    %cst_52 = arith.constant 1.06140542 : f32
    %108 = vector.broadcast %cst_52 : f32 to vector<128x128xf32>
    %109 = arith.mulf %108, %107 : vector<128x128xf32>
    %cst_53 = arith.constant -1.45315206 : f32
    %110 = vector.broadcast %cst_53 : f32 to vector<128x128xf32>
    %111 = arith.addf %109, %110 : vector<128x128xf32>
    %112 = arith.mulf %111, %107 : vector<128x128xf32>
    %cst_54 = arith.constant 1.42141378 : f32
    %113 = vector.broadcast %cst_54 : f32 to vector<128x128xf32>
    %114 = arith.addf %112, %113 : vector<128x128xf32>
    %115 = arith.mulf %114, %107 : vector<128x128xf32>
    %cst_55 = arith.constant -0.284496725 : f32
    %116 = vector.broadcast %cst_55 : f32 to vector<128x128xf32>
    %117 = arith.addf %115, %116 : vector<128x128xf32>
    %118 = arith.mulf %117, %107 : vector<128x128xf32>
    %cst_56 = arith.constant 0.254829586 : f32
    %119 = vector.broadcast %cst_56 : f32 to vector<128x128xf32>
    %120 = arith.addf %118, %119 : vector<128x128xf32>
    %121 = arith.mulf %120, %107 : vector<128x128xf32>
    %cst_57 = arith.constant 0.000000e+00 : f32
    %122 = vector.broadcast %cst_57 : f32 to vector<128x128xf32>
    %123 = arith.subf %122, %101 : vector<128x128xf32>
    %124 = arith.mulf %123, %101 : vector<128x128xf32>
    %125 = math.exp %124 : vector<128x128xf32>
    %126 = arith.mulf %121, %125 : vector<128x128xf32>
    %cst_58 = arith.constant 1.000000e+00 : f32
    %127 = vector.broadcast %cst_58 : f32 to vector<128x128xf32>
    %128 = arith.subf %127, %126 : vector<128x128xf32>
    %cst_59 = arith.constant 0.000000e+00 : f32
    %129 = vector.broadcast %cst_59 : f32 to vector<128x128xf32>
    %130 = arith.cmpf oge, %100, %129 : vector<128x128xf32>
    %cst_60 = arith.constant 0.000000e+00 : f32
    %131 = vector.broadcast %cst_60 : f32 to vector<128x128xf32>
    %132 = arith.subf %131, %128 : vector<128x128xf32>
    %133 = arith.select %130, %128, %132 : vector<128x128xi1>, vector<128x128xf32>
    %cst_61 = arith.constant 1.000000e+00 : f32
    %134 = vector.broadcast %cst_61 : f32 to vector<128x128xf32>
    %135 = arith.addf %134, %133 : vector<128x128xf32>
    %136 = arith.mulf %98, %135 : vector<128x128xf32>
    %137 = arith.truncf %136 : vector<128x128xf32> to vector<128x128xbf16>
    %c0_62 = arith.constant 0 : index
    %c0_63 = arith.constant 0 : index
    %138 = vector.load %arg12[%c0_62, %c0_63] : memref<128x64xbf16, #tpu.memory_space<vmem>>, vector<128x64xbf16>
    %cst_64 = arith.constant dense<0.000000e+00> : vector<128x64xf32>
    %139 = tpu.matmul %137, %138, %cst_64 {dimension_numbers = #tpu.dot_dimension_numbers<[1], [0], [0], [1], [0, 0, 1, 1], [], []>} : vector<128x128xbf16>, vector<128x64xbf16>, vector<128x64xf32> -> vector<128x64xf32>
    %c0_65 = arith.constant 0 : index
    %c0_66 = arith.constant 0 : index
    %140 = vector.load %arg13[%c0_65, %c0_66] : memref<1x64xf32, #tpu.memory_space<vmem>>, vector<1x64xf32>
    %141 = vector.broadcast %140 : vector<1x64xf32> to vector<128x64xf32>
    %142 = arith.addf %139, %141 : vector<128x64xf32>
    %cst_67 = arith.constant 5.000000e-01 : f32
    %143 = vector.broadcast %cst_67 : f32 to vector<128x64xf32>
    %144 = arith.mulf %143, %142 : vector<128x64xf32>
    %cst_68 = arith.constant 0.707106769 : f32
    %145 = vector.broadcast %cst_68 : f32 to vector<128x64xf32>
    %146 = arith.mulf %142, %145 : vector<128x64xf32>
    %147 = math.absf %146 : vector<128x64xf32>
    %cst_69 = arith.constant 0.327591091 : f32
    %148 = vector.broadcast %cst_69 : f32 to vector<128x64xf32>
    %149 = arith.mulf %148, %147 : vector<128x64xf32>
    %cst_70 = arith.constant 1.000000e+00 : f32
    %150 = vector.broadcast %cst_70 : f32 to vector<128x64xf32>
    %151 = arith.addf %150, %149 : vector<128x64xf32>
    %cst_71 = arith.constant 1.000000e+00 : f32
    %152 = vector.broadcast %cst_71 : f32 to vector<128x64xf32>
    %153 = arith.divf %152, %151 : vector<128x64xf32>
    %cst_72 = arith.constant 1.06140542 : f32
    %154 = vector.broadcast %cst_72 : f32 to vector<128x64xf32>
    %155 = arith.mulf %154, %153 : vector<128x64xf32>
    %cst_73 = arith.constant -1.45315206 : f32
    %156 = vector.broadcast %cst_73 : f32 to vector<128x64xf32>
    %157 = arith.addf %155, %156 : vector<128x64xf32>
    %158 = arith.mulf %157, %153 : vector<128x64xf32>
    %cst_74 = arith.constant 1.42141378 : f32
    %159 = vector.broadcast %cst_74 : f32 to vector<128x64xf32>
    %160 = arith.addf %158, %159 : vector<128x64xf32>
    %161 = arith.mulf %160, %153 : vector<128x64xf32>
    %cst_75 = arith.constant -0.284496725 : f32
    %162 = vector.broadcast %cst_75 : f32 to vector<128x64xf32>
    %163 = arith.addf %161, %162 : vector<128x64xf32>
    %164 = arith.mulf %163, %153 : vector<128x64xf32>
    %cst_76 = arith.constant 0.254829586 : f32
    %165 = vector.broadcast %cst_76 : f32 to vector<128x64xf32>
    %166 = arith.addf %164, %165 : vector<128x64xf32>
    %167 = arith.mulf %166, %153 : vector<128x64xf32>
    %cst_77 = arith.constant 0.000000e+00 : f32
    %168 = vector.broadcast %cst_77 : f32 to vector<128x64xf32>
    %169 = arith.subf %168, %147 : vector<128x64xf32>
    %170 = arith.mulf %169, %147 : vector<128x64xf32>
    %171 = math.exp %170 : vector<128x64xf32>
    %172 = arith.mulf %167, %171 : vector<128x64xf32>
    %cst_78 = arith.constant 1.000000e+00 : f32
    %173 = vector.broadcast %cst_78 : f32 to vector<128x64xf32>
    %174 = arith.subf %173, %172 : vector<128x64xf32>
    %cst_79 = arith.constant 0.000000e+00 : f32
    %175 = vector.broadcast %cst_79 : f32 to vector<128x64xf32>
    %176 = arith.cmpf oge, %146, %175 : vector<128x64xf32>
    %cst_80 = arith.constant 0.000000e+00 : f32
    %177 = vector.broadcast %cst_80 : f32 to vector<128x64xf32>
    %178 = arith.subf %177, %174 : vector<128x64xf32>
    %179 = arith.select %176, %174, %178 : vector<128x64xi1>, vector<128x64xf32>
    %cst_81 = arith.constant 1.000000e+00 : f32
    %180 = vector.broadcast %cst_81 : f32 to vector<128x64xf32>
    %181 = arith.addf %180, %179 : vector<128x64xf32>
    %182 = arith.mulf %144, %181 : vector<128x64xf32>
    %183 = arith.truncf %182 : vector<128x64xf32> to vector<128x64xbf16>
    %c0_82 = arith.constant 0 : index
    %c0_83 = arith.constant 0 : index
    %184 = vector.load %arg14[%c0_82, %c0_83] : memref<64x16xbf16, #tpu.memory_space<vmem>>, vector<64x16xbf16>
    %cst_84 = arith.constant dense<0.000000e+00> : vector<128x16xf32>
    %185 = tpu.matmul %183, %184, %cst_84 {dimension_numbers = #tpu.dot_dimension_numbers<[1], [0], [0], [1], [0, 0, 1, 1], [], []>} : vector<128x64xbf16>, vector<64x16xbf16>, vector<128x16xf32> -> vector<128x16xf32>
    %c0_85 = arith.constant 0 : index
    %c0_86 = arith.constant 0 : index
    %186 = vector.load %arg15[%c0_85, %c0_86] : memref<1x16xf32, #tpu.memory_space<vmem>>, vector<1x16xf32>
    %187 = vector.broadcast %186 : vector<1x16xf32> to vector<128x16xf32>
    %188 = arith.addf %185, %187 : vector<128x16xf32>
    %189 = tpu.transpose %188, [1, 0] : vector<128x16xf32> -> vector<16x128xf32>
    %190 = vector.shape_cast %189 : vector<16x128xf32> to vector<8x2x128xf32>
    %c0_87 = arith.constant 0 : index
    %c0_88 = arith.constant 0 : index
    %c0_89 = arith.constant 0 : index
    %191 = vector.load %arg16[%c0_87, %c0_88, %c0_89] : memref<8x2x128xf32, #tpu.memory_space<vmem>>, vector<8x2x128xf32>
    tpu.vector_store %arg16[%c0_87, %c0_88, %c0_89], %190 {strides = array<i32>} : memref<8x2x128xf32, #tpu.memory_space<vmem>>, vector<8x2x128xf32>,
    return
  }
  func.func @transform_0(%arg0: i32) -> (i32, i32, i32) {
    %c0_i32 = arith.constant 0 : i32
    %c0_i32_0 = arith.constant 0 : i32
    %c0_i32_1 = arith.constant 0 : i32
    return %arg0, %c0_i32, %c0_i32_0 : i32, i32, i32
  }
  func.func @transform_1(%arg0: i32) -> (i32, i32) {
    %c0_i32 = arith.constant 0 : i32
    %c0_i32_0 = arith.constant 0 : i32
    %c0_i32_1 = arith.constant 0 : i32
    return %c0_i32, %c0_i32_0 : i32, i32
  }
  func.func @transform_2(%arg0: i32) -> (i32, i32) {
    %c0_i32 = arith.constant 0 : i32
    %c0_i32_0 = arith.constant 0 : i32
    %c0_i32_1 = arith.constant 0 : i32
    return %c0_i32, %c0_i32_0 : i32, i32
  }
  func.func @transform_3(%arg0: i32) -> (i32, i32) {
    %c0_i32 = arith.constant 0 : i32
    %c0_i32_0 = arith.constant 0 : i32
    %c0_i32_1 = arith.constant 0 : i32
    return %c0_i32, %c0_i32_0 : i32, i32
  }
  func.func @transform_4(%arg0: i32) -> (i32, i32) {
    %c0_i32 = arith.constant 0 : i32
    %c0_i32_0 = arith.constant 0 : i32
    %c0_i32_1 = arith.constant 0 : i32
    return %c0_i32, %c0_i32_0 : i32, i32
  }
  func.func @transform_5(%arg0: i32) -> (i32, i32, i32) {
    %c0_i32 = arith.constant 0 : i32
    %c0_i32_0 = arith.constant 0 : i32
    %c0_i32_1 = arith.constant 0 : i32
    %c0_i32_2 = arith.constant 0 : i32
    return %c0_i32, %c0_i32_0, %c0_i32_1 : i32, i32, i32
  }
  func.func @transform_6(%arg0: i32) -> (i32, i32) {
    %c0_i32 = arith.constant 0 : i32
    %c0_i32_0 = arith.constant 0 : i32
    %c0_i32_1 = arith.constant 0 : i32
    return %c0_i32, %c0_i32_0 : i32, i32
  }
  func.func @transform_7(%arg0: i32) -> (i32, i32) {
    %c0_i32 = arith.constant 0 : i32
    %c0_i32_0 = arith.constant 0 : i32
    %c0_i32_1 = arith.constant 0 : i32
    return %c0_i32, %c0_i32_0 : i32, i32
  }
  func.func @transform_8(%arg0: i32) -> (i32, i32, i32) {
    %c0_i32 = arith.constant 0 : i32
    %c0_i32_0 = arith.constant 0 : i32
    %c0_i32_1 = arith.constant 0 : i32
    %c0_i32_2 = arith.constant 0 : i32
    return %c0_i32, %c0_i32_0, %c0_i32_1 : i32, i32, i32
  }
  func.func @transform_9(%arg0: i32) -> (i32, i32) {
    %c0_i32 = arith.constant 0 : i32
    %c0_i32_0 = arith.constant 0 : i32
    %c0_i32_1 = arith.constant 0 : i32
    return %c0_i32, %c0_i32_0 : i32, i32
  }
  func.func @transform_10(%arg0: i32) -> (i32, i32) {
    %c0_i32 = arith.constant 0 : i32
    %c0_i32_0 = arith.constant 0 : i32
    %c0_i32_1 = arith.constant 0 : i32
    return %c0_i32, %c0_i32_0 : i32, i32
  }
  func.func @transform_11(%arg0: i32) -> (i32, i32) {
    %c0_i32 = arith.constant 0 : i32
    %c0_i32_0 = arith.constant 0 : i32
    %c0_i32_1 = arith.constant 0 : i32
    return %c0_i32, %c0_i32_0 : i32, i32
  }
  func.func @transform_12(%arg0: i32) -> (i32, i32) {
    %c0_i32 = arith.constant 0 : i32
    %c0_i32_0 = arith.constant 0 : i32
    %c0_i32_1 = arith.constant 0 : i32
    return %c0_i32, %c0_i32_0 : i32, i32
  }
  func.func @transform_13(%arg0: i32) -> (i32, i32) {
    %c0_i32 = arith.constant 0 : i32
    %c0_i32_0 = arith.constant 0 : i32
    %c0_i32_1 = arith.constant 0 : i32
    return %c0_i32, %c0_i32_0 : i32, i32
  }
  func.func @transform_14(%arg0: i32) -> (i32, i32) {
    %c0_i32 = arith.constant 0 : i32
    %c0_i32_0 = arith.constant 0 : i32
    %c0_i32_1 = arith.constant 0 : i32
    return %c0_i32, %c0_i32_0 : i32, i32
  }
  func.func @transform_15(%arg0: i32) -> (i32, i32, i32) {
    %c0_i32 = arith.constant 0 : i32
    %c0_i32_0 = arith.constant 0 : i32
    %c0_i32_1 = arith.constant 0 : i32
    return %arg0, %c0_i32, %c0_i32_0 : i32, i32, i32
  }
}

</mosaic_0001>

<llo_original>
// kernel: fno1d_forward.1
$region0: #{fno1d_forward.1}
  #allocation0 [shape = 'u32[]', space=smem, size = 0x4, offset = 0x4, fixed_abs, tag = 'smem constant byte address 0x4 - core index']
  #allocation1 [shape = 'u32[144,128]{1,0:T(1,128)}', space=vmem, size = 0x12000, scoped, tag = 'internal scratch']
  %s0 = inlined_call_operand.vmem [shape: f32[16,3,128], index: 0, kind: input, shape index: {}]
  %s1 = inlined_call_operand.hbm [shape: bf16[24,128], index: 1, kind: input, shape index: {}]
  %s2 = inlined_call_operand.vmem [shape: f32[1,128], index: 2, kind: input, shape index: {}]
  %s3 = inlined_call_operand.hbm [shape: bf16[32,128], index: 3, kind: input, shape index: {}]
  %s4 = inlined_call_operand.vmem [shape: bf16[128,32], index: 4, kind: input, shape index: {}]
  %s5 = inlined_call_operand.vmem [shape: bf16[16,32,32], index: 5, kind: input, shape index: {}]
  %s6 = inlined_call_operand.vmem [shape: bf16[128,128], index: 6, kind: input, shape index: {}]
  %s7 = inlined_call_operand.hbm [shape: f32[1,128], index: 7, kind: input, shape index: {}]
  %s8 = inlined_call_operand.hbm [shape: bf16[16,32,32], index: 8, kind: input, shape index: {}]
  %s9 = inlined_call_operand.hbm [shape: bf16[128,128], index: 9, kind: input, shape index: {}]
  %s10 = inlined_call_operand.hbm [shape: f32[1,128], index: 10, kind: input, shape index: {}]
  %s11 = inlined_call_operand.vmem [shape: bf16[128,64], index: 11, kind: input, shape index: {}]
  %s12 = inlined_call_operand.hbm [shape: f32[1,64], index: 12, kind: input, shape index: {}]
  %s13 = inlined_call_operand.vmem [shape: bf16[64,16], index: 13, kind: input, shape index: {}]
  %s14 = inlined_call_operand.vmem [shape: f32[1,16], index: 14, kind: input, shape index: {}]
  %s15 = inlined_call_operand.hbm [shape: f32[16,2,128], index: 15, kind: output, shape index: {}]
  %s16 = sld [smem:[#allocation0]]
  $region121: #{fno1d_forward.1} parent=0
    _
  %s18 = ssub.s32 1, %s16
  %s19 = scalar_select 0, %s18, %s16
  $region1: #{fno1d_forward.1} parent=0
    #allocation2 [shape = 'u8[6144]{0}', space=vmem, size = 0x1800, scoped, tag = 'input window, operand 1, single buffered']
    #allocation3 [shape = 's32[2]{0}', space=sflag, size = 0x8, scoped, tag = 'scoped memory for fno1d_forward.1']
    #allocation4 [shape = 's32[2]{0}', space=sflag, size = 0x8, scoped, tag = 'scoped memory for fno1d_forward.1']
    #allocation5 [shape = 'u8[8192]{0}', space=vmem, size = 0x2000, scoped, tag = 'input window, operand 3, single buffered']
    #allocation6 [shape = 's32[1]{0}', space=sflag, size = 0x4, scoped, tag = 'scoped memory for fno1d_forward.1']
    #allocation7 [shape = 'u8[512]{0}', space=vmem, size = 0x400, scoped, tag = 'input window, operand 7, single buffered']
    #allocation8 [shape = 'u8[131072]{0}', space=vmem, size = 0x20000, scoped, tag = 'input window, operand 8, single buffered']
    #allocation9 [shape = 's32[1]{0}', space=sflag, size = 0x4, scoped, tag = 'scoped memory for fno1d_forward.1']
    #allocation10 [shape = 'u8[32768]{0}', space=vmem, size = 0x8000, scoped, tag = 'input window, operand 9, single buffered']
    #allocation11 [shape = 'u8[512]{0}', space=vmem, size = 0x400, scoped, tag = 'input window, operand 10, single buffered']
    #allocation12 [shape = 's32[1]{0}', space=sflag, size = 0x4, scoped, tag = 'scoped memory for fno1d_forward.1']
    #allocation13 [shape = 'u8[512]{0}', space=vmem, size = 0x400, scoped, tag = 'input window, operand 12, single buffered']
    #allocation14 [shape = 'u8[16384]{0}', space=vmem, size = 0x4000, scoped, tag = 'output window, operand 0']
    %20 = vsyncpa [#allocation3], 0
    %21 = vsyncpa [#allocation6], 0
    %22 = vsyncpa [#allocation9], 0
    %23 = vsyncpa [#allocation12], 0
    %24 = vsyncpa [#allocation4], 0
    %s25 = scalar_lea.sflag [#allocation4], 1
    %26 = vsyncpa %s25, 0
    loop: start=0, step=1, limit=4
    $region2: #{fno1d_forward.1} parent=1 // loop_pre_header
      _
    $region3: #{fno1d_forward.1} parent=1 // loop_header
      %s28 = sphi 0, %s32
      %p29 = scmp.ge.s32.totalorder %s28, 4
      %s38 = sphi 0, %s40
      %s41 = sphi 0, %s38
      %s42 = sphi 0, %s41
      %s58 = sphi 0, %s42
      %s62 = sphi 0, %s62
      %s64 = sphi 0, %s62
      %s65 = sphi 0, %s64
      %s79 = sphi 0, %s65
      %s83 = sphi 0, %s83
      %s85 = sphi 0, %s83
      %s86 = sphi 0, %s85
      %s100 = sphi 0, %s86
      %s104 = sphi 0, %s104
      %s106 = sphi 0, %s104
      %s107 = sphi 0, %s106
      %s121 = sphi 0, %s107
      %s125 = sphi 0, %s125
      %s127 = sphi 0, %s125
      %s128 = sphi 0, %s127
      %s142 = sphi 0, %s128
      %s146 = sphi 0, %s146
      %s148 = sphi 0, %s146
      %s149 = sphi 0, %s148
      %s163 = sphi 0, %s149
      %s167 = sphi 0, %s167
      %s169 = sphi 0, %s167
      %s170 = sphi 0, %s169
      %s184 = sphi 0, %s170
      %s188 = sphi 0, %s188
      %s190 = sphi 0, %s188
      %s191 = sphi 0, %s190
      %s205 = sphi 0, %s191
      %s209 = sphi 0, %s209
      %s211 = sphi 0, %s209
      %s212 = sphi 0, %s211
      %s226 = sphi 0, %s212
      %s230 = sphi 0, %s230
      %s232 = sphi 0, %s230
      %s233 = sphi 0, %s232
      %s247 = sphi 0, %s233
      %s251 = sphi 0, %s251
      %s253 = sphi 0, %s251
      %s254 = sphi 0, %s253
      %s268 = sphi 0, %s254
      %s272 = sphi 0, %s272
      %s274 = sphi 0, %s272
      %s275 = sphi 0, %s274
      %s289 = sphi 0, %s275
      %s293 = sphi 0, %s293
      %s295 = sphi 0, %s293
      %s296 = sphi 0, %s295
      %s310 = sphi 0, %s296
      %s314 = sphi 0, %s314
      %s316 = sphi 0, %s314
      %s317 = sphi 0, %s316
      %s331 = sphi 0, %s317
      %s335 = sphi 0, %s335
      %s337 = sphi 0, %s335
      %s338 = sphi 0, %s337
      %s352 = sphi 0, %s338
      %s358 = sphi 0, %s360
      %s361 = sphi 0, %s358
      %s362 = sphi 0, %s361
      %s378 = sphi 0, %s362
    $region4: #{fno1d_forward.1} parent=1 // loop_header_branch
      %31 = sbr.rel (%p29) target = $region8
    $region5: #{fno1d_forward.1} parent=1 // loop_body
      %s33 = ssub.s32 %s28, 1
      %s34 = ssub.s32 %s28, 2
      %s35 = sadd.s32 %s28, 1
      %s36 = ssub.s32 %s28, %s35
      %p37 = scmp.eq.s32.totalorder %s36, 0
      %s39 = sadd.s32 %s38, 1
      %s40 = scalar_select %p37, %s38, %s39
      %p43 = pneg %p37
      %p44 = scmp.eq.s32.totalorder %s28, 1
      %p45 = por %p43, %p44
      %p46 = scmp.ne.s32.totalorder %s38, %s41
      %p47 = scmp.eq.s32.totalorder %s28, 0
      %p48 = por %p46, %p47
      %p49 = scmp.ne.s32.totalorder %s38, %s41
      %p50 = scmp.eq.s32.totalorder %s33, 1
      %p51 = por %p49, %p50
      %p52 = scmp.ne.s32.totalorder %s41, %s42
      %p53 = scmp.eq.s32.totalorder %s33, 0
      %p54 = por %p52, %p53
      %p55 = scmp.ne.s32.totalorder %s41, %s42
      %p56 = scmp.eq.s32.totalorder %s34, 1
      %p57 = por %p55, %p56
      %p59 = scmp.ne.s32.totalorder %s42, %s58
      %p60 = scmp.eq.s32.totalorder %s34, 0
      %p61 = por %p59, %p60
      %s63 = sadd.s32 %s62, 1
      %p66 = scmp.eq.s32.totalorder %s28, 1
      %p67 = scmp.ne.s32.totalorder %s62, %s64
      %p68 = scmp.eq.s32.totalorder %s28, 0
      %p69 = por %p67, %p68
      %p70 = scmp.ne.s32.totalorder %s62, %s64
      %p71 = scmp.eq.s32.totalorder %s33, 1
      %p72 = por %p70, %p71
      %p73 = scmp.ne.s32.totalorder %s64, %s65
      %p74 = scmp.eq.s32.totalorder %s33, 0
      %p75 = por %p73, %p74
      %p76 = scmp.ne.s32.totalorder %s64, %s65
      %p77 = scmp.eq.s32.totalorder %s34, 1
      %p78 = por %p76, %p77
      %p80 = scmp.ne.s32.totalorder %s65, %s79
      %p81 = scmp.eq.s32.totalorder %s34, 0
      %p82 = por %p80, %p81
      %s84 = sadd.s32 %s83, 1
      %p87 = scmp.eq.s32.totalorder %s28, 1
      %p88 = scmp.ne.s32.totalorder %s83, %s85
      %p89 = scmp.eq.s32.totalorder %s28, 0
      %p90 = por %p88, %p89
      %p91 = scmp.ne.s32.totalorder %s83, %s85
      %p92 = scmp.eq.s32.totalorder %s33, 1
      %p93 = por %p91, %p92
      %p94 = scmp.ne.s32.totalorder %s85, %s86
      %p95 = scmp.eq.s32.totalorder %s33, 0
      %p96 = por %p94, %p95
      %p97 = scmp.ne.s32.totalorder %s85, %s86
      %p98 = scmp.eq.s32.totalorder %s34, 1
      %p99 = por %p97, %p98
      %p101 = scmp.ne.s32.totalorder %s86, %s100
      %p102 = scmp.eq.s32.totalorder %s34, 0
      %p103 = por %p101, %p102
      %s105 = sadd.s32 %s104, 1
      %p108 = scmp.eq.s32.totalorder %s28, 1
      %p109 = scmp.ne.s32.totalorder %s104, %s106
      %p110 = scmp.eq.s32.totalorder %s28, 0
      %p111 = por %p109, %p110
      %p112 = scmp.ne.s32.totalorder %s104, %s106
      %p113 = scmp.eq.s32.totalorder %s33, 1
      %p114 = por %p112, %p113
      %p115 = scmp.ne.s32.totalorder %s106, %s107
      %p116 = scmp.eq.s32.totalorder %s33, 0
      %p117 = por %p115, %p116
      %p118 = scmp.ne.s32.totalorder %s106, %s107
      %p119 = scmp.eq.s32.totalorder %s34, 1
      %p120 = por %p118, %p119
      %p122 = scmp.ne.s32.totalorder %s107, %s121
      %p123 = scmp.eq.s32.totalorder %s34, 0
      %p124 = por %p122, %p123
      %s126 = sadd.s32 %s125, 1
      %p129 = scmp.eq.s32.totalorder %s28, 1
      %p130 = scmp.ne.s32.totalorder %s125, %s127
      %p131 = scmp.eq.s32.totalorder %s28, 0
      %p132 = por %p130, %p131
      %p133 = scmp.ne.s32.totalorder %s125, %s127
      %p134 = scmp.eq.s32.totalorder %s33, 1
      %p135 = por %p133, %p134
      %p136 = scmp.ne.s32.totalorder %s127, %s128
      %p137 = scmp.eq.s32.totalorder %s33, 0
      %p138 = por %p136, %p137
      %p139 = scmp.ne.s32.totalorder %s127, %s128
      %p140 = scmp.eq.s32.totalorder %s34, 1
      %p141 = por %p139, %p140
      %p143 = scmp.ne.s32.totalorder %s128, %s142
      %p144 = scmp.eq.s32.totalorder %s34, 0
      %p145 = por %p143, %p144
      %s147 = sadd.s32 %s146, 1
      %p150 = scmp.eq.s32.totalorder %s28, 1
      %p151 = scmp.ne.s32.totalorder %s146, %s148
      %p152 = scmp.eq.s32.totalorder %s28, 0
      %p153 = por %p151, %p152
      %p154 = scmp.ne.s32.totalorder %s146, %s148
      %p155 = scmp.eq.s32.totalorder %s33, 1
      %p156 = por %p154, %p155
      %p157 = scmp.ne.s32.totalorder %s148, %s149
      %p158 = scmp.eq.s32.totalorder %s33, 0
      %p159 = por %p157, %p158
      %p160 = scmp.ne.s32.totalorder %s148, %s149
      %p161 = scmp.eq.s32.totalorder %s34, 1
      %p162 = por %p160, %p161
      %p164 = scmp.ne.s32.totalorder %s149, %s163
      %p165 = scmp.eq.s32.totalorder %s34, 0
      %p166 = por %p164, %p165
      %s168 = sadd.s32 %s167, 1
      %p171 = scmp.eq.s32.totalorder %s28, 1
      %p172 = scmp.ne.s32.totalorder %s167, %s169
      %p173 = scmp.eq.s32.totalorder %s28, 0
      %p174 = por %p172, %p173
      %p175 = scmp.ne.s32.totalorder %s167, %s169
      %p176 = scmp.eq.s32.totalorder %s33, 1
      %p177 = por %p175, %p176
      %p178 = scmp.ne.s32.totalorder %s169, %s170
      %p179 = scmp.eq.s32.totalorder %s33, 0
      %p180 = por %p178, %p179
      %p181 = scmp.ne.s32.totalorder %s169, %s170
      %p182 = scmp.eq.s32.totalorder %s34, 1
      %p183 = por %p181, %p182
      %p185 = scmp.ne.s32.totalorder %s170, %s184
      %p186 = scmp.eq.s32.totalorder %s34, 0
      %p187 = por %p185, %p186
      %s189 = sadd.s32 %s188, 1
      %p192 = scmp.eq.s32.totalorder %s28, 1
      %p193 = scmp.ne.s32.totalorder %s188, %s190
      %p194 = scmp.eq.s32.totalorder %s28, 0
      %p195 = por %p193, %p194
      %p196 = scmp.ne.s32.totalorder %s188, %s190
      %p197 = scmp.eq.s32.totalorder %s33, 1
      %p198 = por %p196, %p197
      %p199 = scmp.ne.s32.totalorder %s190, %s191
      %p200 = scmp.eq.s32.totalorder %s33, 0
      %p201 = por %p199, %p200
      %p202 = scmp.ne.s32.totalorder %s190, %s191
      %p203 = scmp.eq.s32.totalorder %s34, 1
      %p204 = por %p202, %p203
      %p206 = scmp.ne.s32.totalorder %s191, %s205
      %p207 = scmp.eq.s32.totalorder %s34, 0
      %p208 = por %p206, %p207
      %s210 = sadd.s32 %s209, 1
      %p213 = scmp.eq.s32.totalorder %s28, 1
      %p214 = scmp.ne.s32.totalorder %s209, %s211
      %p215 = scmp.eq.s32.totalorder %s28, 0
      %p216 = por %p214, %p215
      %p217 = scmp.ne.s32.totalorder %s209, %s211
      %p218 = scmp.eq.s32.totalorder %s33, 1
      %p219 = por %p217, %p218
      %p220 = scmp.ne.s32.totalorder %s211, %s212
      %p221 = scmp.eq.s32.totalorder %s33, 0
      %p222 = por %p220, %p221
      %p223 = scmp.ne.s32.totalorder %s211, %s212
      %p224 = scmp.eq.s32.totalorder %s34, 1
      %p225 = por %p223, %p224
      %p227 = scmp.ne.s32.totalorder %s212, %s226
      %p228 = scmp.eq.s32.totalorder %s34, 0
      %p229 = por %p227, %p228
      %s231 = sadd.s32 %s230, 1
      %p234 = scmp.eq.s32.totalorder %s28, 1
      %p235 = scmp.ne.s32.totalorder %s230, %s232
      %p236 = scmp.eq.s32.totalorder %s28, 0
      %p237 = por %p235, %p236
      %p238 = scmp.ne.s32.totalorder %s230, %s232
      %p239 = scmp.eq.s32.totalorder %s33, 1
      %p240 = por %p238, %p239
      %p241 = scmp.ne.s32.totalorder %s232, %s233
      %p242 = scmp.eq.s32.totalorder %s33, 0
      %p243 = por %p241, %p242
      %p244 = scmp.ne.s32.totalorder %s232, %s233
      %p245 = scmp.eq.s32.totalorder %s34, 1
      %p246 = por %p244, %p245
      %p248 = scmp.ne.s32.totalorder %s233, %s247
      %p249 = scmp.eq.s32.totalorder %s34, 0
      %p250 = por %p248, %p249
      %s252 = sadd.s32 %s251, 1
      %p255 = scmp.eq.s32.totalorder %s28, 1
      %p256 = scmp.ne.s32.totalorder %s251, %s253
      %p257 = scmp.eq.s32.totalorder %s28, 0
      %p258 = por %p256, %p257
      %p259 = scmp.ne.s32.totalorder %s251, %s253
      %p260 = scmp.eq.s32.totalorder %s33, 1
      %p261 = por %p259, %p260
      %p262 = scmp.ne.s32.totalorder %s253, %s254
      %p263 = scmp.eq.s32.totalorder %s33, 0
      %p264 = por %p262, %p263
      %p265 = scmp.ne.s32.totalorder %s253, %s254
      %p266 = scmp.eq.s32.totalorder %s34, 1
      %p267 = por %p265, %p266
      %p269 = scmp.ne.s32.totalorder %s254, %s268
      %p270 = scmp.eq.s32.totalorder %s34, 0
      %p271 = por %p269, %p270
      %s273 = sadd.s32 %s272, 1
      %p276 = scmp.eq.s32.totalorder %s28, 1
      %p277 = scmp.ne.s32.totalorder %s272, %s274
      %p278 = scmp.eq.s32.totalorder %s28, 0
      %p279 = por %p277, %p278
      %p280 = scmp.ne.s32.totalorder %s272, %s274
      %p281 = scmp.eq.s32.totalorder %s33, 1
      %p282 = por %p280, %p281
      %p283 = scmp.ne.s32.totalorder %s274, %s275
      %p284 = scmp.eq.s32.totalorder %s33, 0
      %p285 = por %p283, %p284
      %p286 = scmp.ne.s32.totalorder %s274, %s275
      %p287 = scmp.eq.s32.totalorder %s34, 1
      %p288 = por %p286, %p287
      %p290 = scmp.ne.s32.totalorder %s275, %s289
      %p291 = scmp.eq.s32.totalorder %s34, 0
      %p292 = por %p290, %p291
      %s294 = sadd.s32 %s293, 1
      %p297 = scmp.eq.s32.totalorder %s28, 1
      %p298 = scmp.ne.s32.totalorder %s293, %s295
      %p299 = scmp.eq.s32.totalorder %s28, 0
      %p300 = por %p298, %p299
      %p301 = scmp.ne.s32.totalorder %s293, %s295
      %p302 = scmp.eq.s32.totalorder %s33, 1
      %p303 = por %p301, %p302
      %p304 = scmp.ne.s32.totalorder %s295, %s296
      %p305 = scmp.eq.s32.totalorder %s33, 0
      %p306 = por %p304, %p305
      %p307 = scmp.ne.s32.totalorder %s295, %s296
      %p308 = scmp.eq.s32.totalorder %s34, 1
      %p309 = por %p307, %p308
      %p311 = scmp.ne.s32.totalorder %s296, %s310
      %p312 = scmp.eq.s32.totalorder %s34, 0
      %p313 = por %p311, %p312
      %s315 = sadd.s32 %s314, 1
      %p318 = scmp.eq.s32.totalorder %s28, 1
      %p319 = scmp.ne.s32.totalorder %s314, %s316
      %p320 = scmp.eq.s32.totalorder %s28, 0
      %p321 = por %p319, %p320
      %p322 = scmp.ne.s32.totalorder %s314, %s316
      %p323 = scmp.eq.s32.totalorder %s33, 1
      %p324 = por %p322, %p323
      %p325 = scmp.ne.s32.totalorder %s316, %s317
      %p326 = scmp.eq.s32.totalorder %s33, 0
      %p327 = por %p325, %p326
      %p328 = scmp.ne.s32.totalorder %s316, %s317
      %p329 = scmp.eq.s32.totalorder %s34, 1
      %p330 = por %p328, %p329
      %p332 = scmp.ne.s32.totalorder %s317, %s331
      %p333 = scmp.eq.s32.totalorder %s34, 0
      %p334 = por %p332, %p333
      %s336 = sadd.s32 %s335, 1
      %p339 = scmp.eq.s32.totalorder %s28, 1
      %p340 = scmp.ne.s32.totalorder %s335, %s337
      %p341 = scmp.eq.s32.totalorder %s28, 0
      %p342 = por %p340, %p341
      %p343 = scmp.ne.s32.totalorder %s335, %s337
      %p344 = scmp.eq.s32.totalorder %s33, 1
      %p345 = por %p343, %p344
      %p346 = scmp.ne.s32.totalorder %s337, %s338
      %p347 = scmp.eq.s32.totalorder %s33, 0
      %p348 = por %p346, %p347
      %p349 = scmp.ne.s32.totalorder %s337, %s338
      %p350 = scmp.eq.s32.totalorder %s34, 1
      %p351 = por %p349, %p350
      %p353 = scmp.ne.s32.totalorder %s338, %s352
      %p354 = scmp.eq.s32.totalorder %s34, 0
      %p355 = por %p353, %p354
      %s356 = ssub.s32 %s28, %s35
      %p357 = scmp.eq.s32.totalorder %s356, 0
      %s359 = sadd.s32 %s358, 1
      %s360 = scalar_select %p357, %s358, %s359
      %p363 = pneg %p357
      %p364 = scmp.eq.s32.totalorder %s28, 1
      %p365 = por %p363, %p364
      %p366 = scmp.ne.s32.totalorder %s358, %s361
      %p367 = scmp.eq.s32.totalorder %s28, 0
      %p368 = por %p366, %p367
      %p369 = scmp.ne.s32.totalorder %s358, %s361
      %p370 = scmp.eq.s32.totalorder %s33, 1
      %p371 = por %p369, %p370
      %p372 = scmp.ne.s32.totalorder %s361, %s362
      %p373 = scmp.eq.s32.totalorder %s33, 0
      %p374 = por %p372, %p373
      %p375 = scmp.ne.s32.totalorder %s361, %s362
      %p376 = scmp.eq.s32.totalorder %s34, 1
      %p377 = por %p375, %p376
      %p379 = scmp.ne.s32.totalorder %s362, %s378
      %p380 = scmp.eq.s32.totalorder %s34, 0
      %p381 = por %p379, %p380
      %p382 = scmp.le.s32.totalorder 1, %s28
      %p383 = scmp.lt.s32.totalorder %s28, 3
      %p384 = pnand %p382, %p383
      %p385 = pneg %p384
      // Predicated region
      $region9: #{fno1d_forward.1} parent=5 // pred_check
        _
      $region10: #{fno1d_forward.1} parent=5 // pred_check_branch
        %387 = sbr.rel (%p384) target = $region12
      $region11: #{fno1d_forward.1} parent=5 // pred_region
        %s388 = ssub.s32 %s28, 1
        // Predicated region
        $region13: #{fno1d_forward.1} parent=11 // pred_check
          %p389 = pneg %p75
        $region14: #{fno1d_forward.1} parent=11 // pred_check_branch
          %391 = sbr.rel (%p389) target = $region16
        $region15: #{fno1d_forward.1} parent=11 // pred_region
          %s393 = ssub.s32 192, 192
          %394 = vsyncadd [#allocation3], %s393
          %s395 = sshll.u32 [#allocation2], 4
          %s396 = int_to_ptr.vmem [resolvable:$true] %s395
          %401 = dma.hbm_to_vmem [thread:$0]  %s1, 192, %s396, [#allocation3], 64, 64, 4
        $region16: #{fno1d_forward.1} parent=11 // pred_fallthru
          _
        // Predicated region
        $region17: #{fno1d_forward.1} parent=11 // pred_check
          %p402 = pneg %p96
        $region18: #{fno1d_forward.1} parent=11 // pred_check_branch
          %404 = sbr.rel (%p402) target = $region20
        $region19: #{fno1d_forward.1} parent=11 // pred_region
          _
        $region20: #{fno1d_forward.1} parent=11 // pred_fallthru
          _
        // Predicated region
        $region21: #{fno1d_forward.1} parent=11 // pred_check
          %p405 = pneg %p117
        $region22: #{fno1d_forward.1} parent=11 // pred_check_branch
          %407 = sbr.rel (%p405) target = $region24
        $region23: #{fno1d_forward.1} parent=11 // pred_region
          %s409 = ssub.s32 256, 256
          %410 = vsyncadd [#allocation6], %s409
          %s411 = sshll.u32 [#allocation5], 4
          %s412 = int_to_ptr.vmem [resolvable:$true] %s411
          %417 = dma.hbm_to_vmem [thread:$0]  %s3, 256, %s412, [#allocation6], 64, 64, 4
        $region24: #{fno1d_forward.1} parent=11 // pred_fallthru
          _
        // Predicated region
        $region25: #{fno1d_forward.1} parent=11 // pred_check
          %p418 = pneg %p138
        $region26: #{fno1d_forward.1} parent=11 // pred_check_branch
          %420 = sbr.rel (%p418) target = $region28
        $region27: #{fno1d_forward.1} parent=11 // pred_region
          _
        $region28: #{fno1d_forward.1} parent=11 // pred_fallthru
          _
        // Predicated region
        $region29: #{fno1d_forward.1} parent=11 // pred_check
          %p421 = pneg %p159
        $region30: #{fno1d_forward.1} parent=11 // pred_check_branch
          %423 = sbr.rel (%p421) target = $region32
        $region31: #{fno1d_forward.1} parent=11 // pred_region
          _
        $region32: #{fno1d_forward.1} parent=11 // pred_fallthru
          _
        // Predicated region
        $region33: #{fno1d_forward.1} parent=11 // pred_check
          %p424 = pneg %p180
        $region34: #{fno1d_forward.1} parent=11 // pred_check_branch
          %426 = sbr.rel (%p424) target = $region36
        $region35: #{fno1d_forward.1} parent=11 // pred_region
          _
        $region36: #{fno1d_forward.1} parent=11 // pred_fallthru
          _
        // Predicated region
        $region37: #{fno1d_forward.1} parent=11 // pred_check
          %p427 = pneg %p201
        $region38: #{fno1d_forward.1} parent=11 // pred_check_branch
          %429 = sbr.rel (%p427) target = $region40
        $region39: #{fno1d_forward.1} parent=11 // pred_region
          %s431 = ssub.s32 16, 16
          %432 = vsyncadd [#allocation6], %s431
          %s434 = sshll.u32 [#allocation7], 4
          %s435 = int_to_ptr.vmem [resolvable:$true] %s434
          %437 = dma.hbm_to_vmem [thread:$0]  %s7, 16, %s435, [#allocation6]
        $region40: #{fno1d_forward.1} parent=11 // pred_fallthru
          _
        // Predicated region
        $region41: #{fno1d_forward.1} parent=11 // pred_check
          %p438 = pneg %p222
        $region42: #{fno1d_forward.1} parent=11 // pred_check_branch
          %440 = sbr.rel (%p438) target = $region44
        $region43: #{fno1d_forward.1} parent=11 // pred_region
          %s442 = ssub.s32 4096, 4096
          %443 = vsyncadd [#allocation9], %s442
          %s444 = sshll.u32 [#allocation8], 4
          %s445 = int_to_ptr.vmem [resolvable:$true] %s444
          %450 = dma.hbm_to_vmem [thread:$0]  %s8, 4096, %s445, [#allocation9], 64, 64, 4
        $region44: #{fno1d_forward.1} parent=11 // pred_fallthru
          _
        // Predicated region
        $region45: #{fno1d_forward.1} parent=11 // pred_check
          %p451 = pneg %p243
        $region46: #{fno1d_forward.1} parent=11 // pred_check_branch
          %453 = sbr.rel (%p451) target = $region48
        $region47: #{fno1d_forward.1} parent=11 // pred_region
          %s455 = ssub.s32 1024, 1024
          %456 = vsyncadd [#allocation9], %s455
          %s457 = sshll.u32 [#allocation10], 4
          %s458 = int_to_ptr.vmem [resolvable:$true] %s457
          %463 = dma.hbm_to_vmem [thread:$0]  %s9, 1024, %s458, [#allocation9], 64, 64, 4
        $region48: #{fno1d_forward.1} parent=11 // pred_fallthru
          _
        // Predicated region
        $region49: #{fno1d_forward.1} parent=11 // pred_check
          %p464 = pneg %p264
        $region50: #{fno1d_forward.1} parent=11 // pred_check_branch
          %466 = sbr.rel (%p464) target = $region52
        $region51: #{fno1d_forward.1} parent=11 // pred_region
          %s468 = ssub.s32 16, 16
          %469 = vsyncadd [#allocation12], %s468
          %s471 = sshll.u32 [#allocation11], 4
          %s472 = int_to_ptr.vmem [resolvable:$true] %s471
          %474 = dma.hbm_to_vmem [thread:$0]  %s10, 16, %s472, [#allocation12]
        $region52: #{fno1d_forward.1} parent=11 // pred_fallthru
          _
        // Predicated region
        $region53: #{fno1d_forward.1} parent=11 // pred_check
          %p475 = pneg %p285
        $region54: #{fno1d_forward.1} parent=11 // pred_check_branch
          %477 = sbr.rel (%p475) target = $region56
        $region55: #{fno1d_forward.1} parent=11 // pred_region
          _
        $region56: #{fno1d_forward.1} parent=11 // pred_fallthru
          _
        // Predicated region
        $region57: #{fno1d_forward.1} parent=11 // pred_check
          %p478 = pneg %p306
        $region58: #{fno1d_forward.1} parent=11 // pred_check_branch
          %480 = sbr.rel (%p478) target = $region60
        $region59: #{fno1d_forward.1} parent=11 // pred_region
          %s482 = ssub.s32 16, 16
          %483 = vsyncadd [#allocation12], %s482
          %s485 = sshll.u32 [#allocation13], 4
          %s486 = int_to_ptr.vmem [resolvable:$true] %s485
          %488 = dma.hbm_to_vmem [thread:$0]  %s12, 16, %s486, [#allocation12]
        $region60: #{fno1d_forward.1} parent=11 // pred_fallthru
          _
        // Predicated region
        $region61: #{fno1d_forward.1} parent=11 // pred_check
          %p489 = pneg %p327
        $region62: #{fno1d_forward.1} parent=11 // pred_check_branch
          %491 = sbr.rel (%p489) target = $region64
        $region63: #{fno1d_forward.1} parent=11 // pred_region
          _
        $region64: #{fno1d_forward.1} parent=11 // pred_fallthru
          _
        // Predicated region
        $region65: #{fno1d_forward.1} parent=11 // pred_check
          %p492 = pneg %p348
        $region66: #{fno1d_forward.1} parent=11 // pred_check_branch
          %494 = sbr.rel (%p492) target = $region68
        $region67: #{fno1d_forward.1} parent=11 // pred_region
          _
        $region68: #{fno1d_forward.1} parent=11 // pred_fallthru
          _
      $region12: #{fno1d_forward.1} parent=5 // pred_fallthru
        _
      %p495 = scmp.lt.s32.totalorder %s28, 2
      // Predicated region
      $region69: #{fno1d_forward.1} parent=5 // pred_check
        %p496 = pneg %p495
      $region70: #{fno1d_forward.1} parent=5 // pred_check_branch
        %498 = sbr.rel (%p496) target = $region72
      $region71: #{fno1d_forward.1} parent=5 // pred_region
        // Predicated region
        $region73: #{fno1d_forward.1} parent=71 // pred_check
          %p499 = pneg %p48
        $region74: #{fno1d_forward.1} parent=71 // pred_check_branch
          %501 = sbr.rel (%p499) target = $region76
        $region75: #{fno1d_forward.1} parent=71 // pred_region
          %s502 = smul.u32 8, %s28
          %p503 = scmp.lt.s32.totalorder %s502, 15
          %s504 = scalar_select %p503, %s502, 15
          %s505 = smul.addr %s504, 4
          %s506 = scalar_lea.vmem %s0, %s505
          %s507 = smul.u32 8, %s28
        $region76: #{fno1d_forward.1} parent=71 // pred_fallthru
          _
      $region72: #{fno1d_forward.1} parent=5 // pred_fallthru
        _
      %p508 = scmp.le.s32.totalorder 1, %s28
      %p509 = scmp.lt.s32.totalorder %s28, 3
      %p510 = pnand %p508, %p509
      %p511 = pneg %p510
      // Predicated region
      $region77: #{fno1d_forward.1} parent=5 // pred_check
        _
      $region78: #{fno1d_forward.1} parent=5 // pred_check_branch
        %513 = sbr.rel (%p510) target = $region80
      $region79: #{fno1d_forward.1} parent=5 // pred_region
        %s514 = ssub.s32 %s28, 1
        // Predicated region
        $region81: #{fno1d_forward.1} parent=79 // pred_check
          %p515 = pneg %p75
        $region82: #{fno1d_forward.1} parent=79 // pred_check_branch
          %517 = sbr.rel (%p515) target = $region84
        $region83: #{fno1d_forward.1} parent=79 // pred_region
          %518 = dma.done [#allocation3], 192
        $region84: #{fno1d_forward.1} parent=79 // pred_fallthru
          _
        // Predicated region
        $region85: #{fno1d_forward.1} parent=79 // pred_check
          %p519 = pneg %p117
        $region86: #{fno1d_forward.1} parent=79 // pred_check_branch
          %521 = sbr.rel (%p519) target = $region88
        $region87: #{fno1d_forward.1} parent=79 // pred_region
          %522 = dma.done [#allocation6], 256
        $region88: #{fno1d_forward.1} parent=79 // pred_fallthru
          _
        // Predicated region
        $region89: #{fno1d_forward.1} parent=79 // pred_check
          %p523 = pneg %p201
        $region90: #{fno1d_forward.1} parent=79 // pred_check_branch
          %525 = sbr.rel (%p523) target = $region92
        $region91: #{fno1d_forward.1} parent=79 // pred_region
          %526 = dma.done [#allocation6], 16
        $region92: #{fno1d_forward.1} parent=79 // pred_fallthru
          _
        // Predicated region
        $region93: #{fno1d_forward.1} parent=79 // pred_check
          %p527 = pneg %p222
        $region94: #{fno1d_forward.1} parent=79 // pred_check_branch
          %529 = sbr.rel (%p527) target = $region96
        $region95: #{fno1d_forward.1} parent=79 // pred_region
          %530 = dma.done [#allocation9], 4096
        $region96: #{fno1d_forward.1} parent=79 // pred_fallthru
          _
        // Predicated region
        $region97: #{fno1d_forward.1} parent=79 // pred_check
          %p531 = pneg %p243
        $region98: #{fno1d_forward.1} parent=79 // pred_check_branch
          %533 = sbr.rel (%p531) target = $region100
        $region99: #{fno1d_forward.1} parent=79 // pred_region
          %534 = dma.done [#allocation9], 1024
        $region100: #{fno1d_forward.1} parent=79 // pred_fallthru
          _
        // Predicated region
        $region101: #{fno1d_forward.1} parent=79 // pred_check
          %p535 = pneg %p264
        $region102: #{fno1d_forward.1} parent=79 // pred_check_branch
          %537 = sbr.rel (%p535) target = $region104
        $region103: #{fno1d_forward.1} parent=79 // pred_region
          %538 = dma.done [#allocation12], 16
        $region104: #{fno1d_forward.1} parent=79 // pred_fallthru
          _
        // Predicated region
        $region105: #{fno1d_forward.1} parent=79 // pred_check
          %p539 = pneg %p306
        $region106: #{fno1d_forward.1} parent=79 // pred_check_branch
          %541 = sbr.rel (%p539) target = $region108
        $region107: #{fno1d_forward.1} parent=79 // pred_region
          %542 = dma.done [#allocation12], 16
        $region108: #{fno1d_forward.1} parent=79 // pred_fallthru
          _
        %s543 = smul.u32 8, %s33
        %p544 = scmp.lt.s32.totalorder %s543, 15
        %s545 = scalar_select %p544, %s543, 15
        %s546 = smul.addr %s545, 4
        %s547 = scalar_lea.vmem %s0, %s546
        %p548 = pneg %p54
        %p549 = pneg %p51
        %p550 = pneg %p75
        %p551 = pneg %p72
        %p552 = pneg %p96
        %p553 = pneg %p93
        %p554 = pneg %p117
        %p555 = pneg %p114
        %p556 = pneg %p138
        %p557 = pneg %p135
        %p558 = pneg %p159
        %p559 = pneg %p156
        %p560 = pneg %p180
        %p561 = pneg %p177
        %p562 = pneg %p201
        %p563 = pneg %p198
        %p564 = pneg %p222
        %p565 = pneg %p219
        %p566 = pneg %p243
        %p567 = pneg %p240
        %p568 = pneg %p264
        %p569 = pneg %p261
        %p570 = pneg %p285
        %p571 = pneg %p282
        %p572 = pneg %p306
        %p573 = pneg %p303
        %p574 = pneg %p327
        %p575 = pneg %p324
        %p576 = pneg %p348
        %p577 = pneg %p345
        %p578 = pneg %p374
        %p579 = pneg %p371
        %s580 = sand.u32 %s361, 1
        %s581 = scalar_lea.sflag [#allocation4], %s580
        %s582 = sand.u32 %s361, 1
        %s583 = smul.addr %s582, 16
        %s584 = scalar_lea.vmem [#allocation14], %s583
        %s585 = smul.u32 8, %s33
        %p586 = scmp.lt.s32.totalorder %s585, 15
        %s587 = scalar_select %p586, %s585, 15
        %s588 = smul.addr %s587, 4
        %s589 = scalar_lea.vmem %s0, %s588
        %s590 = smul.u32 8, %s33
        %s591 = smul.u32 8, %s33
        %v593 = vld [vmem:[%s589] sm:$0x7]
        %v594 = vld [vmem:[%s589 + $0x4] sm:$0x7]
        %v595 = vld [vmem:[%s589 + $0x8] sm:$0x7]
        %v596 = vld [vmem:[%s589 + $0xc] sm:$0x7]
        %v597 = vld [vmem:[%s589 + $0x10] sm:$0x7]
        %v598 = vld [vmem:[%s589 + $0x14] sm:$0x7]
        %v599 = vld [vmem:[%s589 + $0x18] sm:$0x7]
        %v600 = vld [vmem:[%s589 + $0x1c] sm:$0x7]
        %v610 = vunpack.c.l.s4 1966171168
        %v611 = vunpack.c.0.s8 %v610
        %v612 = vlaneseq
        %v613 = vshrl.u32 %v612, 7
        %v614 = vsub.s32 %v611, %v613
        %v615 = vrot.slane %v593, %v614
        %v616 = vcombine.high %v615, %v615
        %v618 = vunpack.c.l.s4 1966171168
        %v619 = vunpack.c.0.s8 %v618
        %v620 = vlaneseq
        %v621 = vshrl.u32 %v620, 7
        %v622 = vsub.s32 %v619, %v621
        %v623 = vrot.slane %v615, %v622
        %v625 = vunpack.c.l.s4 1966171168
        %v626 = vunpack.c.0.s8 %v625
        %v627 = vlaneseq
        %v628 = vshrl.u32 %v627, 7
        %v629 = vsub.s32 %v626, %v628
        %v630 = vrot.slane %v616, %v629
        %v631 = vcombine.high %v623, %v623
        %v633 = vunpack.c.l.s4 1966171168
        %v634 = vunpack.c.0.s8 %v633
        %v635 = vlaneseq
        %v636 = vshrl.u32 %v635, 7
        %v637 = vsub.s32 %v634, %v636
        %v638 = vrot.slane %v594, %v637
        %v639 = vcombine.high %v638, %v638
        %v641 = vunpack.c.l.s4 1966171168
        %v642 = vunpack.c.0.s8 %v641
        %v643 = vlaneseq
        %v644 = vshrl.u32 %v643, 7
        %v645 = vsub.s32 %v642, %v644
        %v646 = vrot.slane %v638, %v645
        %v648 = vunpack.c.l.s4 1966171168
        %v649 = vunpack.c.0.s8 %v648
        %v650 = vlaneseq
        %v651 = vshrl.u32 %v650, 7
        %v652 = vsub.s32 %v649, %v651
        %v653 = vrot.slane %v639, %v652
        %v654 = vcombine.high %v646, %v646
        %v656 = vunpack.c.l.s4 1966171168
        %v657 = vunpack.c.0.s8 %v656
        %v658 = vlaneseq
        %v659 = vshrl.u32 %v658, 7
        %v660 = vsub.s32 %v657, %v659
        %v661 = vrot.slane %v595, %v660
        %v662 = vcombine.high %v661, %v661
        %v664 = vunpack.c.l.s4 1966171168
        %v665 = vunpack.c.0.s8 %v664
        %v666 = vlaneseq
        %v667 = vshrl.u32 %v666, 7
        %v668 = vsub.s32 %v665, %v667
        %v669 = vrot.slane %v661, %v668
        %v671 = vunpack.c.l.s4 1966171168
        %v672 = vunpack.c.0.s8 %v671
        %v673 = vlaneseq
        %v674 = vshrl.u32 %v673, 7
        %v675 = vsub.s32 %v672, %v674
        %v676 = vrot.slane %v662, %v675
        %v677 = vcombine.high %v669, %v669
        %v679 = vunpack.c.l.s4 1966171168
        %v680 = vunpack.c.0.s8 %v679
        %v681 = vlaneseq
        %v682 = vshrl.u32 %v681, 7
        %v683 = vsub.s32 %v680, %v682
        %v684 = vrot.slane %v596, %v683
        %v685 = vcombine.high %v684, %v684
        %v687 = vunpack.c.l.s4 1966171168
        %v688 = vunpack.c.0.s8 %v687
        %v689 = vlaneseq
        %v690 = vshrl.u32 %v689, 7
        %v691 = vsub.s32 %v688, %v690
        %v692 = vrot.slane %v684, %v691
        %v694 = vunpack.c.l.s4 1966171168
        %v695 = vunpack.c.0.s8 %v694
        %v696 = vlaneseq
        %v697 = vshrl.u32 %v696, 7
        %v698 = vsub.s32 %v695, %v697
        %v699 = vrot.slane %v685, %v698
        %v700 = vcombine.high %v692, %v692
        %v702 = vunpack.c.l.s4 1966171168
        %v703 = vunpack.c.0.s8 %v702
        %v704 = vlaneseq
        %v705 = vshrl.u32 %v704, 7
        %v706 = vsub.s32 %v703, %v705
        %v707 = vrot.slane %v597, %v706
        %v708 = vcombine.high %v707, %v707
        %v710 = vunpack.c.l.s4 1966171168
        %v711 = vunpack.c.0.s8 %v710
        %v712 = vlaneseq
        %v713 = vshrl.u32 %v712, 7
        %v714 = vsub.s32 %v711, %v713
        %v715 = vrot.slane %v707, %v714
        %v717 = vunpack.c.l.s4 1966171168
        %v718 = vunpack.c.0.s8 %v717
        %v719 = vlaneseq
        %v720 = vshrl.u32 %v719, 7
        %v721 = vsub.s32 %v718, %v720
        %v722 = vrot.slane %v708, %v721
        %v723 = vcombine.high %v715, %v715
        %v725 = vunpack.c.l.s4 1966171168
        %v726 = vunpack.c.0.s8 %v725
        %v727 = vlaneseq
        %v728 = vshrl.u32 %v727, 7
        %v729 = vsub.s32 %v726, %v728
        %v730 = vrot.slane %v598, %v729
        %v731 = vcombine.high %v730, %v730
        %v733 = vunpack.c.l.s4 1966171168
        %v734 = vunpack.c.0.s8 %v733
        %v735 = vlaneseq
        %v736 = vshrl.u32 %v735, 7
        %v737 = vsub.s32 %v734, %v736
        %v738 = vrot.slane %v730, %v737
        %v740 = vunpack.c.l.s4 1966171168
        %v741 = vunpack.c.0.s8 %v740
        %v742 = vlaneseq
        %v743 = vshrl.u32 %v742, 7
        %v744 = vsub.s32 %v741, %v743
        %v745 = vrot.slane %v731, %v744
        %v746 = vcombine.high %v738, %v738
        %v748 = vunpack.c.l.s4 1966171168
        %v749 = vunpack.c.0.s8 %v748
        %v750 = vlaneseq
        %v751 = vshrl.u32 %v750, 7
        %v752 = vsub.s32 %v749, %v751
        %v753 = vrot.slane %v599, %v752
        %v754 = vcombine.high %v753, %v753
        %v756 = vunpack.c.l.s4 1966171168
        %v757 = vunpack.c.0.s8 %v756
        %v758 = vlaneseq
        %v759 = vshrl.u32 %v758, 7
        %v760 = vsub.s32 %v757, %v759
        %v761 = vrot.slane %v753, %v760
        %v763 = vunpack.c.l.s4 1966171168
        %v764 = vunpack.c.0.s8 %v763
        %v765 = vlaneseq
        %v766 = vshrl.u32 %v765, 7
        %v767 = vsub.s32 %v764, %v766
        %v768 = vrot.slane %v754, %v767
        %v769 = vcombine.high %v761, %v761
        %v771 = vunpack.c.l.s4 1966171168
        %v772 = vunpack.c.0.s8 %v771
        %v773 = vlaneseq
        %v774 = vshrl.u32 %v773, 7
        %v775 = vsub.s32 %v772, %v774
        %v776 = vrot.slane %v600, %v775
        %v777 = vcombine.high %v776, %v776
        %v779 = vunpack.c.l.s4 1966171168
        %v780 = vunpack.c.0.s8 %v779
        %v781 = vlaneseq
        %v782 = vshrl.u32 %v781, 7
        %v783 = vsub.s32 %v780, %v782
        %v784 = vrot.slane %v776, %v783
        %v786 = vunpack.c.l.s4 1966171168
        %v787 = vunpack.c.0.s8 %v786
        %v788 = vlaneseq
        %v789 = vshrl.u32 %v788, 7
        %v790 = vsub.s32 %v787, %v789
        %v791 = vrot.slane %v777, %v790
        %v792 = vcombine.high %v784, %v784
        %v793 = vcombine.low %v623, %v630
        %v794 = vcombine.low %v631, %v646
        %v795 = vcombine.low %v653, %v654
        %v796 = vcombine.low %v669, %v676
        %v798 = vunpack.c.l.s4 1966171168
        %v799 = vunpack.c.0.s8 %v798
        %v800 = vlaneseq
        %v801 = vshrl.u32 %v800, 7
        %v802 = vsub.s32 %v799, %v801
        %v803 = vrot.slane %v793, %v802
        %v805 = vunpack.c.l.s4 1966171168
        %v806 = vunpack.c.0.s8 %v805
        %v807 = vlaneseq
        %v808 = vshrl.u32 %v807, 7
        %v809 = vsub.s32 %v806, %v808
        %v810 = vrot.slane %v794, %v809
        %v812 = vunpack.c.l.s4 1966171168
        %v813 = vunpack.c.0.s8 %v812
        %v814 = vlaneseq
        %v815 = vshrl.u32 %v814, 7
        %v816 = vsub.s32 %v813, %v815
        %v817 = vrot.slane %v795, %v816
        %v819 = vunpack.c.l.s4 1966171168
        %v820 = vunpack.c.0.s8 %v819
        %v821 = vlaneseq
        %v822 = vshrl.u32 %v821, 7
        %v823 = vsub.s32 %v820, %v822
        %v824 = vrot.slane %v796, %v823
        %v825 = vcombine.low %v803, %v810
        %v826 = vcombine.low %v817, %v824
        %v828 = vunpack.c.l.s4 1966171168
        %v829 = vunpack.c.0.s8 %v828
        %v830 = vlaneseq
        %v831 = vshrl.u32 %v830, 7
        %v832 = vsub.s32 %v829, %v831
        %v833 = vrot.slane %v825, %v832
        %v835 = vunpack.c.l.s4 1966171168
        %v836 = vunpack.c.0.s8 %v835
        %v837 = vlaneseq
        %v838 = vshrl.u32 %v837, 7
        %v839 = vsub.s32 %v836, %v838
        %v840 = vrot.slane %v826, %v839
        %v841 = vcombine.low %v833, %v840
        %v842 = vcombine.low %v677, %v692
        %v843 = vcombine.low %v699, %v700
        %v844 = vcombine.low %v715, %v722
        %v845 = vcombine.low %v723, %v738
        %v847 = vunpack.c.l.s4 1966171168
        %v848 = vunpack.c.0.s8 %v847
        %v849 = vlaneseq
        %v850 = vshrl.u32 %v849, 7
        %v851 = vsub.s32 %v848, %v850
        %v852 = vrot.slane %v842, %v851
        %v854 = vunpack.c.l.s4 1966171168
        %v855 = vunpack.c.0.s8 %v854
        %v856 = vlaneseq
        %v857 = vshrl.u32 %v856, 7
        %v858 = vsub.s32 %v855, %v857
        %v859 = vrot.slane %v843, %v858
        %v861 = vunpack.c.l.s4 1966171168
        %v862 = vunpack.c.0.s8 %v861
        %v863 = vlaneseq
        %v864 = vshrl.u32 %v863, 7
        %v865 = vsub.s32 %v862, %v864
        %v866 = vrot.slane %v844, %v865
        %v868 = vunpack.c.l.s4 1966171168
        %v869 = vunpack.c.0.s8 %v868
        %v870 = vlaneseq
        %v871 = vshrl.u32 %v870, 7
        %v872 = vsub.s32 %v869, %v871
        %v873 = vrot.slane %v845, %v872
        %v874 = vcombine.low %v852, %v859
        %v875 = vcombine.low %v866, %v873
        %v877 = vunpack.c.l.s4 1966171168
        %v878 = vunpack.c.0.s8 %v877
        %v879 = vlaneseq
        %v880 = vshrl.u32 %v879, 7
        %v881 = vsub.s32 %v878, %v880
        %v882 = vrot.slane %v874, %v881
        %v884 = vunpack.c.l.s4 1966171168
        %v885 = vunpack.c.0.s8 %v884
        %v886 = vlaneseq
        %v887 = vshrl.u32 %v886, 7
        %v888 = vsub.s32 %v885, %v887
        %v889 = vrot.slane %v875, %v888
        %v890 = vcombine.low %v882, %v889
        %v891 = vcombine.low %v745, %v746
        %v892 = vcombine.low %v761, %v768
        %v893 = vcombine.low %v769, %v784
        %v894 = vcombine.low %v791, %v792
        %v896 = vunpack.c.l.s4 1966171168
        %v897 = vunpack.c.0.s8 %v896
        %v898 = vlaneseq
        %v899 = vshrl.u32 %v898, 7
        %v900 = vsub.s32 %v897, %v899
        %v901 = vrot.slane %v891, %v900
        %v903 = vunpack.c.l.s4 1966171168
        %v904 = vunpack.c.0.s8 %v903
        %v905 = vlaneseq
        %v906 = vshrl.u32 %v905, 7
        %v907 = vsub.s32 %v904, %v906
        %v908 = vrot.slane %v892, %v907
        %v910 = vunpack.c.l.s4 1966171168
        %v911 = vunpack.c.0.s8 %v910
        %v912 = vlaneseq
        %v913 = vshrl.u32 %v912, 7
        %v914 = vsub.s32 %v911, %v913
        %v915 = vrot.slane %v893, %v914
        %v917 = vunpack.c.l.s4 1966171168
        %v918 = vunpack.c.0.s8 %v917
        %v919 = vlaneseq
        %v920 = vshrl.u32 %v919, 7
        %v921 = vsub.s32 %v918, %v920
        %v922 = vrot.slane %v894, %v921
        %v923 = vcombine.low %v901, %v908
        %v924 = vcombine.low %v915, %v922
        %v926 = vunpack.c.l.s4 1966171168
        %v927 = vunpack.c.0.s8 %v926
        %v928 = vlaneseq
        %v929 = vshrl.u32 %v928, 7
        %v930 = vsub.s32 %v927, %v929
        %v931 = vrot.slane %v923, %v930
        %v933 = vunpack.c.l.s4 1966171168
        %v934 = vunpack.c.0.s8 %v933
        %v935 = vlaneseq
        %v936 = vshrl.u32 %v935, 7
        %v937 = vsub.s32 %v934, %v936
        %v938 = vrot.slane %v924, %v937
        %v939 = vcombine.low %v931, %v938
        %943 = vxpose.xlu0.b32.start [1/16] %v841, 128
        %944 = vxpose.xlu0.b32.cont [2/16] %v890, 128
        %945 = vxpose.xlu0.b32.cont [3/16] %v939, 128
        %946 = vxpose.xlu0.b32.cont [4/16] 0.0, 128
        %947 = vxpose.xlu0.b32.cont [5/16] 0.0, 128
        %948 = vxpose.xlu0.b32.cont [6/16] 0.0, 128
        %949 = vxpose.xlu0.b32.cont [7/16] 0.0, 128
        %950 = vxpose.xlu0.b32.cont [8/16] 0.0, 128
        %951 = vxpose.xlu0.b32.cont [9/16] 0.0, 128
        %952 = vxpose.xlu0.b32.cont [10/16] 0.0, 128
        %953 = vxpose.xlu0.b32.cont [11/16] 0.0, 128
        %954 = vxpose.xlu0.b32.cont [12/16] 0.0, 128
        %955 = vxpose.xlu0.b32.cont [13/16] 0.0, 128
        %956 = vxpose.xlu0.b32.cont [14/16] 0.0, 128
        %957 = vxpose.xlu0.b32.cont [15/16] 0.0, 128
        %958 = vxpose.xlu0.b32.end [16/16] 0.0, 128
        %v959 = vpop.trf.xlu0
        %v960 = vpop.trf.xlu0
        %v961 = vpop.trf.xlu0
        %v962 = vpop.trf.xlu0
        %v963 = vpop.trf.xlu0
        %v964 = vpop.trf.xlu0
        %v965 = vpop.trf.xlu0
        %v966 = vpop.trf.xlu0
        %v967 = vpop.trf.xlu0
        %v968 = vpop.trf.xlu0
        %v969 = vpop.trf.xlu0
        %v970 = vpop.trf.xlu0
        %v971 = vpop.trf.xlu0
        %v972 = vpop.trf.xlu0
        %v973 = vpop.trf.xlu0
        %v974 = vpop.trf.xlu0
        %v975 = vpack.c.bf16 %v960, %v959
        %v976 = vpack.c.bf16 %v962, %v961
        %v977 = vpack.c.bf16 %v964, %v963
        %v978 = vpack.c.bf16 %v966, %v965
        %v979 = vpack.c.bf16 %v968, %v967
        %v980 = vpack.c.bf16 %v970, %v969
        %v981 = vpack.c.bf16 %v972, %v971
        %v982 = vpack.c.bf16 %v974, %v973
        %v983 = vld [vmem:[#allocation2] sm:$0xf]
        %v984 = vld [vmem:[#allocation2 + $0x4] sm:$0xf]
        %v985 = vld [vmem:[#allocation2 + $0x8] sm:$0xf]
        %v986 = vld [vmem:[%s2] sm:$0x1]
        %v988 = vlaneseq
        %v989 = vshrl.u32 %v988, 7
        %v990 = vsub.s32 0, %v989
        %v991 = vrot.slane %v986, %v990
        %v996 = vunpack.c.l.b16 %v983
        %v997 = vunpack.c.l.b16 %v984
        %v998 = vunpack.c.l.b16 %v985
        %v999 = vpack.c.b16 %v997, %v996
        %v1000 = vpack.c.b16 %v998, %v998
        %vm1002 = vcmask 195584
        %v1004 = vsel %vm1002, %v975, 0
        %v1007 = vsel %vm1002, %v976, 0
        %v1010 = vsel %vm1002, %v977, 0
        %v1013 = vsel %vm1002, %v978, 0
        %v1016 = vsel %vm1002, %v979, 0
        %v1019 = vsel %vm1002, %v980, 0
        %v1022 = vsel %vm1002, %v981, 0
        %v1025 = vsel %vm1002, %v982, 0
        %vm1027 = vcmask 1043456
        %v1029 = vsel %vm1027, %v1000, 0
        %1031 = vmatprep.subr.bf16.mxu0 0
        %1032 = vmatpush1.bf16.msra.mxu0 %v999
        %1033 = vmatprep.subr.bf16.mxu0 0
        %1034 = vmatpush1.bf16.msra.mxu0 %v1029
        %1035 = vmatprep.subr.bf16.mxu0 0
        %1036 = vmatpush1.bf16.msra.mxu0 0
        %1037 = vmatprep.subr.bf16.mxu0 0
        %1038 = vmatpush1.bf16.msra.mxu0 0
        %1039 = vmatprep.subr.bf16.mxu0 0
        %1040 = vmatpush1.bf16.msra.mxu0 0
        %1041 = vmatprep.subr.bf16.mxu0 0
        %1042 = vmatpush1.bf16.msra.mxu0 0
        %1043 = vmatprep.subr.bf16.mxu0 0
        %1044 = vmatpush1.bf16.msra.mxu0 0
        %1045 = vmatprep.subr.bf16.mxu0 0
        %1046 = vmatpush1.bf16.msra.mxu0 0
        %1047 = vmatprep.subr.bf16.mxu0 0
        %1048 = vmatpush1.bf16.msra.mxu0 0
        %1049 = vmatprep.subr.bf16.mxu0 0
        %1050 = vmatpush1.bf16.msra.mxu0 0
        %1051 = vmatprep.subr.bf16.mxu0 0
        %1052 = vmatpush1.bf16.msra.mxu0 0
        %1053 = vmatprep.subr.bf16.mxu0 0
        %1054 = vmatpush1.bf16.msra.mxu0 0
        %1055 = vmatprep.subr.bf16.mxu0 0
        %1056 = vmatpush1.bf16.msra.mxu0 0
        %1057 = vmatprep.subr.bf16.mxu0 0
        %1058 = vmatpush1.bf16.msra.mxu0 0
        %1059 = vmatprep.subr.bf16.mxu0 0
        %1060 = vmatpush1.bf16.msra.mxu0 0
        %1061 = vmatprep.subr.bf16.mxu0 0
        %1062 = vmatpush1.bf16.msra.mxu0 0
        %1063 = vmatprep.mubr.bf16.mxu0 0
        %1064 = vmatmul.mubr.bf16.gmra.mrb[0].mxu0 %v1004
        %v1065 = vpop.f32.mrb[0].mxu0
        %v1066 = vadd.f32 %v991, %v1065
        %v1067 = vpop.f32.mrb[0].mxu0
        %v1068 = vpop.f32.mrb[0].mxu0
        %v1069 = vadd.f32 %v991, %v1068
        %v1070 = vpop.f32.mrb[0].mxu0
        %1071 = vmatprep.mubr.bf16.mxu0 0
        %1072 = vmatmul.mubr.bf16.gmra.mrb[0].mxu0 %v1007
        %v1073 = vpop.f32.mrb[0].mxu0
        %v1074 = vadd.f32 %v991, %v1073
        %v1075 = vpop.f32.mrb[0].mxu0
        %v1076 = vpop.f32.mrb[0].mxu0
        %v1077 = vadd.f32 %v991, %v1076
        %v1078 = vpop.f32.mrb[0].mxu0
        %1079 = vmatprep.mubr.bf16.mxu0 0
        %1080 = vmatmul.mubr.bf16.gmra.mrb[0].mxu0 %v1010
        %v1081 = vpop.f32.mrb[0].mxu0
        %v1082 = vadd.f32 %v991, %v1081
        %v1083 = vpop.f32.mrb[0].mxu0
        %v1084 = vpop.f32.mrb[0].mxu0
        %v1085 = vadd.f32 %v991, %v1084
        %v1086 = vpop.f32.mrb[0].mxu0
        %1087 = vmatprep.mubr.bf16.mxu0 0
        %1088 = vmatmul.mubr.bf16.gmra.mrb[0].mxu0 %v1013
        %v1089 = vpop.f32.mrb[0].mxu0
        %v1090 = vadd.f32 %v991, %v1089
        %v1091 = vpop.f32.mrb[0].mxu0
        %v1092 = vpop.f32.mrb[0].mxu0
        %v1093 = vadd.f32 %v991, %v1092
        %v1094 = vpop.f32.mrb[0].mxu0
        %1095 = vmatprep.mubr.bf16.mxu0 0
        %1096 = vmatmul.mubr.bf16.gmra.mrb[0].mxu0 %v1016
        %v1097 = vpop.f32.mrb[0].mxu0
        %v1098 = vadd.f32 %v991, %v1097
        %v1099 = vpop.f32.mrb[0].mxu0
        %v1100 = vpop.f32.mrb[0].mxu0
        %v1101 = vadd.f32 %v991, %v1100
        %v1102 = vpop.f32.mrb[0].mxu0
        %1103 = vmatprep.mubr.bf16.mxu0 0
        %1104 = vmatmul.mubr.bf16.gmra.mrb[0].mxu0 %v1019
        %v1105 = vpop.f32.mrb[0].mxu0
        %v1106 = vadd.f32 %v991, %v1105
        %v1107 = vpop.f32.mrb[0].mxu0
        %v1108 = vpop.f32.mrb[0].mxu0
        %v1109 = vadd.f32 %v991, %v1108
        %v1110 = vpop.f32.mrb[0].mxu0
        %1111 = vmatprep.mubr.bf16.mxu0 0
        %1112 = vmatmul.mubr.bf16.gmra.mrb[0].mxu0 %v1022
        %v1113 = vpop.f32.mrb[0].mxu0
        %v1114 = vadd.f32 %v991, %v1113
        %v1115 = vpop.f32.mrb[0].mxu0
        %v1116 = vpop.f32.mrb[0].mxu0
        %v1117 = vadd.f32 %v991, %v1116
        %v1118 = vpop.f32.mrb[0].mxu0
        %1119 = vmatprep.mubr.bf16.mxu0 0
        %1120 = vmatmul.mubr.bf16.gmra.mrb[0].mxu0 %v1025
        %v1121 = vpop.f32.mrb[0].mxu0
        %v1122 = vadd.f32 %v991, %v1121
        %v1123 = vpop.f32.mrb[0].mxu0
        %v1124 = vpop.f32.mrb[0].mxu0
        %v1125 = vadd.f32 %v991, %v1124
        %v1126 = vpop.f32.mrb[0].mxu0
        %1127 = vdwg.mxu0
        %v1128 = vld [vmem:[#allocation5] sm:$0xf]
        %v1129 = vld [vmem:[#allocation5 + $0x4] sm:$0xf]
        %v1130 = vld [vmem:[#allocation5 + $0x8] sm:$0xf]
        %v1131 = vld [vmem:[#allocation5 + $0xc] sm:$0xf]
        %v1132 = vld [vmem:[%s4] sm:$0xf]
        %v1133 = vld [vmem:[%s4 + $0x4] sm:$0xf]
        %v1134 = vld [vmem:[%s4 + $0x8] sm:$0xf]
        %v1135 = vld [vmem:[%s4 + $0xc] sm:$0xf]
        %v1136 = vld [vmem:[%s4 + $0x10] sm:$0xf]
        %v1137 = vld [vmem:[%s4 + $0x14] sm:$0xf]
        %v1138 = vld [vmem:[%s4 + $0x18] sm:$0xf]
        %v1139 = vld [vmem:[%s4 + $0x1c] sm:$0xf]
        %v1140 = vld [vmem:[%s4 + $0x20] sm:$0xf]
        %v1141 = vld [vmem:[%s4 + $0x24] sm:$0xf]
        %v1142 = vld [vmem:[%s4 + $0x28] sm:$0xf]
        %v1143 = vld [vmem:[%s4 + $0x2c] sm:$0xf]
        %v1144 = vld [vmem:[%s4 + $0x30] sm:$0xf]
        %v1145 = vld [vmem:[%s4 + $0x34] sm:$0xf]
        %v1146 = vld [vmem:[%s4 + $0x38] sm:$0xf]
        %v1147 = vld [vmem:[%s4 + $0x3c] sm:$0xf]
        %v1148 = vpack.c.bf16 %v1069, %v1066
        %v1149 = vpack.c.bf16 %v1077, %v1074
        %v1150 = vpack.c.bf16 %v1085, %v1082
        %v1151 = vpack.c.bf16 %v1093, %v1090
        %v1152 = vpack.c.bf16 %v1101, %v1098
        %v1153 = vpack.c.bf16 %v1109, %v1106
        %v1154 = vpack.c.bf16 %v1117, %v1114
        %v1155 = vpack.c.bf16 %v1125, %v1122
        %v1160 = vunpack.c.l.b16 %v1128
        %v1161 = vunpack.c.l.b16 %v1129
        %v1162 = vunpack.c.l.b16 %v1130
        %v1163 = vunpack.c.l.b16 %v1131
        %v1164 = vpack.c.b16 %v1161, %v1160
        %v1165 = vpack.c.b16 %v1163, %v1162
        %1168 = vmatprep.subr.bf16.mxu0 0
        %1169 = vmatpush1.bf16.msra.mxu0 %v1148
        %1170 = vmatprep.subr.bf16.mxu0 0
        %1171 = vmatpush1.bf16.msra.mxu0 %v1149
        %1172 = vmatprep.subr.bf16.mxu0 0
        %1173 = vmatpush1.bf16.msra.mxu0 %v1150
        %1174 = vmatprep.subr.bf16.mxu0 0
        %1175 = vmatpush1.bf16.msra.mxu0 %v1151
        %1176 = vmatprep.subr.bf16.mxu0 0
        %1177 = vmatpush1.bf16.msra.mxu0 %v1152
        %1178 = vmatprep.subr.bf16.mxu0 0
        %1179 = vmatpush1.bf16.msra.mxu0 %v1153
        %1180 = vmatprep.subr.bf16.mxu0 0
        %1181 = vmatpush1.bf16.msra.mxu0 %v1154
        %1182 = vmatprep.subr.bf16.mxu0 0
        %1183 = vmatpush1.bf16.msra.mxu0 %v1155
        %1184 = vmatprep.subr.bf16.mxu0 0
        %1185 = vmatpush1.bf16.msra.mxu0 0
        %1186 = vmatprep.subr.bf16.mxu0 0
        %1187 = vmatpush1.bf16.msra.mxu0 0
        %1188 = vmatprep.subr.bf16.mxu0 0
        %1189 = vmatpush1.bf16.msra.mxu0 0
        %1190 = vmatprep.subr.bf16.mxu0 0
        %1191 = vmatpush1.bf16.msra.mxu0 0
        %1192 = vmatprep.subr.bf16.mxu0 0
        %1193 = vmatpush1.bf16.msra.mxu0 0
        %1194 = vmatprep.subr.bf16.mxu0 0
        %1195 = vmatpush1.bf16.msra.mxu0 0
        %1196 = vmatprep.subr.bf16.mxu0 0
        %1197 = vmatpush1.bf16.msra.mxu0 0
        %1198 = vmatprep.subr.bf16.mxu0 0
        %1199 = vmatpush1.bf16.msra.mxu0 0
        %1200 = vmatprep.mubr.bf16.mxu0 0
        %1201 = vmatmul.mubr.bf16.gmra.mrb[0].mxu0 %v1164
        %v1202 = vpop.f32.mrb[0].mxu0
        %v1203 = vadd.f32 0.0, %v1202
        %v1204 = vpop.f32.mrb[0].mxu0
        %v1205 = vpop.f32.mrb[0].mxu0
        %v1206 = vadd.f32 0.0, %v1205
        %v1207 = vpop.f32.mrb[0].mxu0
        %1208 = vmatprep.mubr.bf16.mxu0 0
        %1209 = vmatmul.mubr.bf16.gmra.mrb[0].mxu0 %v1165
        %v1210 = vpop.f32.mrb[0].mxu0
        %v1211 = vadd.f32 0.0, %v1210
        %v1212 = vpop.f32.mrb[0].mxu0
        %v1213 = vpop.f32.mrb[0].mxu0
        %v1214 = vadd.f32 0.0, %v1213
        %v1215 = vpop.f32.mrb[0].mxu0
        %1216 = vdwg.mxu0
        %1219 = vrot.lane.b32.xlu0 %v1203, 112
        %v1220 = vpop.permute.xlu0 %1219
        %1221 = vrot.lane.b32.xlu0 %v1206, 112
        %v1222 = vpop.permute.xlu0 %1221
        %1225 = vrot.lane.b32.xlu0 %v1203, 96
        %v1226 = vpop.permute.xlu0 %1225
        %1227 = vrot.lane.b32.xlu0 %v1206, 96
        %v1228 = vpop.permute.xlu0 %1227
        %1231 = vrot.lane.b32.xlu0 %v1203, 80
        %v1232 = vpop.permute.xlu0 %1231
        %1233 = vrot.lane.b32.xlu0 %v1206, 80
        %v1234 = vpop.permute.xlu0 %1233
        %1237 = vrot.lane.b32.xlu0 %v1203, 64
        %v1238 = vpop.permute.xlu0 %1237
        %1239 = vrot.lane.b32.xlu0 %v1206, 64
        %v1240 = vpop.permute.xlu0 %1239
        %1243 = vrot.lane.b32.xlu0 %v1203, 48
        %v1244 = vpop.permute.xlu0 %1243
        %1245 = vrot.lane.b32.xlu0 %v1206, 48
        %v1246 = vpop.permute.xlu0 %1245
        %1249 = vrot.lane.b32.xlu0 %v1203, 32
        %v1250 = vpop.permute.xlu0 %1249
        %1251 = vrot.lane.b32.xlu0 %v1206, 32
        %v1252 = vpop.permute.xlu0 %1251
        %1255 = vrot.lane.b32.xlu0 %v1203, 16
        %v1256 = vpop.permute.xlu0 %1255
        %1257 = vrot.lane.b32.xlu0 %v1206, 16
        %v1258 = vpop.permute.xlu0 %1257
        %v1261 = vcombine.low %v1203, %v1226
        %v1262 = vcombine.high %v1203, %v1226
        %v1264 = vunpack.c.l.s4 1983009808
        %v1265 = vunpack.c.0.s8 %v1264
        %v1266 = vlaneseq
        %v1267 = vshrl.u32 %v1266, 7
        %v1268 = vsub.s32 %v1265, %v1267
        %v1269 = vrot.slane %v1261, %v1268
        %v1271 = vunpack.c.l.s4 1983009808
        %v1272 = vunpack.c.0.s8 %v1271
        %v1273 = vlaneseq
        %v1274 = vshrl.u32 %v1273, 7
        %v1275 = vsub.s32 %v1272, %v1274
        %v1276 = vrot.slane %v1262, %v1275
        %v1277 = vcombine.low %v1220, %v1232
        %v1278 = vcombine.high %v1220, %v1232
        %v1280 = vunpack.c.l.s4 1983009808
        %v1281 = vunpack.c.0.s8 %v1280
        %v1282 = vlaneseq
        %v1283 = vshrl.u32 %v1282, 7
        %v1284 = vsub.s32 %v1281, %v1283
        %v1285 = vrot.slane %v1277, %v1284
        %v1287 = vunpack.c.l.s4 1983009808
        %v1288 = vunpack.c.0.s8 %v1287
        %v1289 = vlaneseq
        %v1290 = vshrl.u32 %v1289, 7
        %v1291 = vsub.s32 %v1288, %v1290
        %v1292 = vrot.slane %v1278, %v1291
        %v1293 = vcombine.low %v1238, %v1250
        %v1294 = vcombine.high %v1238, %v1250
        %v1296 = vunpack.c.l.s4 1983009808
        %v1297 = vunpack.c.0.s8 %v1296
        %v1298 = vlaneseq
        %v1299 = vshrl.u32 %v1298, 7
        %v1300 = vsub.s32 %v1297, %v1299
        %v1301 = vrot.slane %v1293, %v1300
        %v1303 = vunpack.c.l.s4 1983009808
        %v1304 = vunpack.c.0.s8 %v1303
        %v1305 = vlaneseq
        %v1306 = vshrl.u32 %v1305, 7
        %v1307 = vsub.s32 %v1304, %v1306
        %v1308 = vrot.slane %v1294, %v1307
        %v1309 = vcombine.low %v1244, %v1256
        %v1310 = vcombine.high %v1244, %v1256
        %v1312 = vunpack.c.l.s4 1983009808
        %v1313 = vunpack.c.0.s8 %v1312
        %v1314 = vlaneseq
        %v1315 = vshrl.u32 %v1314, 7
        %v1316 = vsub.s32 %v1313, %v1315
        %v1317 = vrot.slane %v1309, %v1316
        %v1319 = vunpack.c.l.s4 1983009808
        %v1320 = vunpack.c.0.s8 %v1319
        %v1321 = vlaneseq
        %v1322 = vshrl.u32 %v1321, 7
        %v1323 = vsub.s32 %v1320, %v1322
        %v1324 = vrot.slane %v1310, %v1323
        %v1325 = vcombine.low %v1269, %v1285
        %v1326 = vcombine.high %v1269, %v1285
        %v1328 = vunpack.c.l.s4 1934713408
        %v1329 = vunpack.c.0.s8 %v1328
        %v1330 = vlaneseq
        %v1331 = vshrl.u32 %v1330, 7
        %v1332 = vsub.s32 %v1329, %v1331
        %v1333 = vrot.slane %v1325, %v1332
        %v1335 = vunpack.c.l.s4 1934713408
        %v1336 = vunpack.c.0.s8 %v1335
        %v1337 = vlaneseq
        %v1338 = vshrl.u32 %v1337, 7
        %v1339 = vsub.s32 %v1336, %v1338
        %v1340 = vrot.slane %v1326, %v1339
        %v1341 = vcombine.low %v1276, %v1292
        %v1342 = vcombine.high %v1276, %v1292
        %v1344 = vunpack.c.l.s4 1934713408
        %v1345 = vunpack.c.0.s8 %v1344
        %v1346 = vlaneseq
        %v1347 = vshrl.u32 %v1346, 7
        %v1348 = vsub.s32 %v1345, %v1347
        %v1349 = vrot.slane %v1341, %v1348
        %v1351 = vunpack.c.l.s4 1934713408
        %v1352 = vunpack.c.0.s8 %v1351
        %v1353 = vlaneseq
        %v1354 = vshrl.u32 %v1353, 7
        %v1355 = vsub.s32 %v1352, %v1354
        %v1356 = vrot.slane %v1342, %v1355
        %v1357 = vcombine.low %v1301, %v1317
        %v1358 = vcombine.high %v1301, %v1317
        %v1360 = vunpack.c.l.s4 1934713408
        %v1361 = vunpack.c.0.s8 %v1360
        %v1362 = vlaneseq
        %v1363 = vshrl.u32 %v1362, 7
        %v1364 = vsub.s32 %v1361, %v1363
        %v1365 = vrot.slane %v1357, %v1364
        %v1367 = vunpack.c.l.s4 1934713408
        %v1368 = vunpack.c.0.s8 %v1367
        %v1369 = vlaneseq
        %v1370 = vshrl.u32 %v1369, 7
        %v1371 = vsub.s32 %v1368, %v1370
        %v1372 = vrot.slane %v1358, %v1371
        %v1373 = vcombine.low %v1308, %v1324
        %v1374 = vcombine.high %v1308, %v1324
        %v1376 = vunpack.c.l.s4 1934713408
        %v1377 = vunpack.c.0.s8 %v1376
        %v1378 = vlaneseq
        %v1379 = vshrl.u32 %v1378, 7
        %v1380 = vsub.s32 %v1377, %v1379
        %v1381 = vrot.slane %v1373, %v1380
        %v1383 = vunpack.c.l.s4 1934713408
        %v1384 = vunpack.c.0.s8 %v1383
        %v1385 = vlaneseq
        %v1386 = vshrl.u32 %v1385, 7
        %v1387 = vsub.s32 %v1384, %v1386
        %v1388 = vrot.slane %v1374, %v1387
        %v1389 = vcombine.low %v1333, %v1365
        %v1390 = vcombine.high %v1333, %v1365
        %v1391 = vcombine.low %v1340, %v1372
        %v1392 = vcombine.high %v1340, %v1372
        %v1393 = vcombine.low %v1349, %v1381
        %v1394 = vcombine.high %v1349, %v1381
        %v1395 = vcombine.low %v1356, %v1388
        %v1396 = vcombine.high %v1356, %v1388
        %v1397 = vcombine.low %v1206, %v1228
        %v1398 = vcombine.high %v1206, %v1228
        %v1400 = vunpack.c.l.s4 1983009808
        %v1401 = vunpack.c.0.s8 %v1400
        %v1402 = vlaneseq
        %v1403 = vshrl.u32 %v1402, 7
        %v1404 = vsub.s32 %v1401, %v1403
        %v1405 = vrot.slane %v1397, %v1404
        %v1407 = vunpack.c.l.s4 1983009808
        %v1408 = vunpack.c.0.s8 %v1407
        %v1409 = vlaneseq
        %v1410 = vshrl.u32 %v1409, 7
        %v1411 = vsub.s32 %v1408, %v1410
        %v1412 = vrot.slane %v1398, %v1411
        %v1413 = vcombine.low %v1222, %v1234
        %v1414 = vcombine.high %v1222, %v1234
        %v1416 = vunpack.c.l.s4 1983009808
        %v1417 = vunpack.c.0.s8 %v1416
        %v1418 = vlaneseq
        %v1419 = vshrl.u32 %v1418, 7
        %v1420 = vsub.s32 %v1417, %v1419
        %v1421 = vrot.slane %v1413, %v1420
        %v1423 = vunpack.c.l.s4 1983009808
        %v1424 = vunpack.c.0.s8 %v1423
        %v1425 = vlaneseq
        %v1426 = vshrl.u32 %v1425, 7
        %v1427 = vsub.s32 %v1424, %v1426
        %v1428 = vrot.slane %v1414, %v1427
        %v1429 = vcombine.low %v1240, %v1252
        %v1430 = vcombine.high %v1240, %v1252
        %v1432 = vunpack.c.l.s4 1983009808
        %v1433 = vunpack.c.0.s8 %v1432
        %v1434 = vlaneseq
        %v1435 = vshrl.u32 %v1434, 7
        %v1436 = vsub.s32 %v1433, %v1435
        %v1437 = vrot.slane %v1429, %v1436
        %v1439 = vunpack.c.l.s4 1983009808
        %v1440 = vunpack.c.0.s8 %v1439
        %v1441 = vlaneseq
        %v1442 = vshrl.u32 %v1441, 7
        %v1443 = vsub.s32 %v1440, %v1442
        %v1444 = vrot.slane %v1430, %v1443
        %v1445 = vcombine.low %v1246, %v1258
        %v1446 = vcombine.high %v1246, %v1258
        %v1448 = vunpack.c.l.s4 1983009808
        %v1449 = vunpack.c.0.s8 %v1448
        %v1450 = vlaneseq
        %v1451 = vshrl.u32 %v1450, 7
        %v1452 = vsub.s32 %v1449, %v1451
        %v1453 = vrot.slane %v1445, %v1452
        %v1455 = vunpack.c.l.s4 1983009808
        %v1456 = vunpack.c.0.s8 %v1455
        %v1457 = vlaneseq
        %v1458 = vshrl.u32 %v1457, 7
        %v1459 = vsub.s32 %v1456, %v1458
        %v1460 = vrot.slane %v1446, %v1459
        %v1461 = vcombine.low %v1405, %v1421
        %v1462 = vcombine.high %v1405, %v1421
        %v1464 = vunpack.c.l.s4 1934713408
        %v1465 = vunpack.c.0.s8 %v1464
        %v1466 = vlaneseq
        %v1467 = vshrl.u32 %v1466, 7
        %v1468 = vsub.s32 %v1465, %v1467
        %v1469 = vrot.slane %v1461, %v1468
        %v1471 = vunpack.c.l.s4 1934713408
        %v1472 = vunpack.c.0.s8 %v1471
        %v1473 = vlaneseq
        %v1474 = vshrl.u32 %v1473, 7
        %v1475 = vsub.s32 %v1472, %v1474
        %v1476 = vrot.slane %v1462, %v1475
        %v1477 = vcombine.low %v1412, %v1428
        %v1478 = vcombine.high %v1412, %v1428
        %v1480 = vunpack.c.l.s4 1934713408
        %v1481 = vunpack.c.0.s8 %v1480
        %v1482 = vlaneseq
        %v1483 = vshrl.u32 %v1482, 7
        %v1484 = vsub.s32 %v1481, %v1483
        %v1485 = vrot.slane %v1477, %v1484
        %v1487 = vunpack.c.l.s4 1934713408
        %v1488 = vunpack.c.0.s8 %v1487
        %v1489 = vlaneseq
        %v1490 = vshrl.u32 %v1489, 7
        %v1491 = vsub.s32 %v1488, %v1490
        %v1492 = vrot.slane %v1478, %v1491
        %v1493 = vcombine.low %v1437, %v1453
        %v1494 = vcombine.high %v1437, %v1453
        %v1496 = vunpack.c.l.s4 1934713408
        %v1497 = vunpack.c.0.s8 %v1496
        %v1498 = vlaneseq
        %v1499 = vshrl.u32 %v1498, 7
        %v1500 = vsub.s32 %v1497, %v1499
        %v1501 = vrot.slane %v1493, %v1500
        %v1503 = vunpack.c.l.s4 1934713408
        %v1504 = vunpack.c.0.s8 %v1503
        %v1505 = vlaneseq
        %v1506 = vshrl.u32 %v1505, 7
        %v1507 = vsub.s32 %v1504, %v1506
        %v1508 = vrot.slane %v1494, %v1507
        %v1509 = vcombine.low %v1444, %v1460
        %v1510 = vcombine.high %v1444, %v1460
        %v1512 = vunpack.c.l.s4 1934713408
        %v1513 = vunpack.c.0.s8 %v1512
        %v1514 = vlaneseq
        %v1515 = vshrl.u32 %v1514, 7
        %v1516 = vsub.s32 %v1513, %v1515
        %v1517 = vrot.slane %v1509, %v1516
        %v1519 = vunpack.c.l.s4 1934713408
        %v1520 = vunpack.c.0.s8 %v1519
        %v1521 = vlaneseq
        %v1522 = vshrl.u32 %v1521, 7
        %v1523 = vsub.s32 %v1520, %v1522
        %v1524 = vrot.slane %v1510, %v1523
        %v1525 = vcombine.low %v1469, %v1501
        %v1526 = vcombine.high %v1469, %v1501
        %v1527 = vcombine.low %v1476, %v1508
        %v1528 = vcombine.high %v1476, %v1508
        %v1529 = vcombine.low %v1485, %v1517
        %v1530 = vcombine.high %v1485, %v1517
        %v1531 = vcombine.low %v1492, %v1524
        %v1532 = vcombine.high %v1492, %v1524
        %1535 = vrot.lane.b32.xlu0 %v1211, 112
        %v1536 = vpop.permute.xlu0 %1535
        %1537 = vrot.lane.b32.xlu0 %v1214, 112
        %v1538 = vpop.permute.xlu0 %1537
        %1541 = vrot.lane.b32.xlu0 %v1211, 96
        %v1542 = vpop.permute.xlu0 %1541
        %1543 = vrot.lane.b32.xlu0 %v1214, 96
        %v1544 = vpop.permute.xlu0 %1543
        %1547 = vrot.lane.b32.xlu0 %v1211, 80
        %v1548 = vpop.permute.xlu0 %1547
        %1549 = vrot.lane.b32.xlu0 %v1214, 80
        %v1550 = vpop.permute.xlu0 %1549
        %1553 = vrot.lane.b32.xlu0 %v1211, 64
        %v1554 = vpop.permute.xlu0 %1553
        %1555 = vrot.lane.b32.xlu0 %v1214, 64
        %v1556 = vpop.permute.xlu0 %1555
        %1559 = vrot.lane.b32.xlu0 %v1211, 48
        %v1560 = vpop.permute.xlu0 %1559
        %1561 = vrot.lane.b32.xlu0 %v1214, 48
        %v1562 = vpop.permute.xlu0 %1561
        %1565 = vrot.lane.b32.xlu0 %v1211, 32
        %v1566 = vpop.permute.xlu0 %1565
        %1567 = vrot.lane.b32.xlu0 %v1214, 32
        %v1568 = vpop.permute.xlu0 %1567
        %1571 = vrot.lane.b32.xlu0 %v1211, 16
        %v1572 = vpop.permute.xlu0 %1571
        %1573 = vrot.lane.b32.xlu0 %v1214, 16
        %v1574 = vpop.permute.xlu0 %1573
        %v1577 = vcombine.low %v1211, %v1542
        %v1578 = vcombine.high %v1211, %v1542
        %v1580 = vunpack.c.l.s4 1983009808
        %v1581 = vunpack.c.0.s8 %v1580
        %v1582 = vlaneseq
        %v1583 = vshrl.u32 %v1582, 7
        %v1584 = vsub.s32 %v1581, %v1583
        %v1585 = vrot.slane %v1577, %v1584
        %v1587 = vunpack.c.l.s4 1983009808
        %v1588 = vunpack.c.0.s8 %v1587
        %v1589 = vlaneseq
        %v1590 = vshrl.u32 %v1589, 7
        %v1591 = vsub.s32 %v1588, %v1590
        %v1592 = vrot.slane %v1578, %v1591
        %v1593 = vcombine.low %v1536, %v1548
        %v1594 = vcombine.high %v1536, %v1548
        %v1596 = vunpack.c.l.s4 1983009808
        %v1597 = vunpack.c.0.s8 %v1596
        %v1598 = vlaneseq
        %v1599 = vshrl.u32 %v1598, 7
        %v1600 = vsub.s32 %v1597, %v1599
        %v1601 = vrot.slane %v1593, %v1600
        %v1603 = vunpack.c.l.s4 1983009808
        %v1604 = vunpack.c.0.s8 %v1603
        %v1605 = vlaneseq
        %v1606 = vshrl.u32 %v1605, 7
        %v1607 = vsub.s32 %v1604, %v1606
        %v1608 = vrot.slane %v1594, %v1607
        %v1609 = vcombine.low %v1554, %v1566
        %v1610 = vcombine.high %v1554, %v1566
        %v1612 = vunpack.c.l.s4 1983009808
        %v1613 = vunpack.c.0.s8 %v1612
        %v1614 = vlaneseq
        %v1615 = vshrl.u32 %v1614, 7
        %v1616 = vsub.s32 %v1613, %v1615
        %v1617 = vrot.slane %v1609, %v1616
        %v1619 = vunpack.c.l.s4 1983009808
        %v1620 = vunpack.c.0.s8 %v1619
        %v1621 = vlaneseq
        %v1622 = vshrl.u32 %v1621, 7
        %v1623 = vsub.s32 %v1620, %v1622
        %v1624 = vrot.slane %v1610, %v1623
        %v1625 = vcombine.low %v1560, %v1572
        %v1626 = vcombine.high %v1560, %v1572
        %v1628 = vunpack.c.l.s4 1983009808
        %v1629 = vunpack.c.0.s8 %v1628
        %v1630 = vlaneseq
        %v1631 = vshrl.u32 %v1630, 7
        %v1632 = vsub.s32 %v1629, %v1631
        %v1633 = vrot.slane %v1625, %v1632
        %v1635 = vunpack.c.l.s4 1983009808
        %v1636 = vunpack.c.0.s8 %v1635
        %v1637 = vlaneseq
        %v1638 = vshrl.u32 %v1637, 7
        %v1639 = vsub.s32 %v1636, %v1638
        %v1640 = vrot.slane %v1626, %v1639
        %v1641 = vcombine.low %v1585, %v1601
        %v1642 = vcombine.high %v1585, %v1601
        %v1644 = vunpack.c.l.s4 1934713408
        %v1645 = vunpack.c.0.s8 %v1644
        %v1646 = vlaneseq
        %v1647 = vshrl.u32 %v1646, 7
        %v1648 = vsub.s32 %v1645, %v1647
        %v1649 = vrot.slane %v1641, %v1648
        %v1651 = vunpack.c.l.s4 1934713408
        %v1652 = vunpack.c.0.s8 %v1651
        %v1653 = vlaneseq
        %v1654 = vshrl.u32 %v1653, 7
        %v1655 = vsub.s32 %v1652, %v1654
        %v1656 = vrot.slane %v1642, %v1655
        %v1657 = vcombine.low %v1592, %v1608
        %v1658 = vcombine.high %v1592, %v1608
        %v1660 = vunpack.c.l.s4 1934713408
        %v1661 = vunpack.c.0.s8 %v1660
        %v1662 = vlaneseq
        %v1663 = vshrl.u32 %v1662, 7
        %v1664 = vsub.s32 %v1661, %v1663
        %v1665 = vrot.slane %v1657, %v1664
        %v1667 = vunpack.c.l.s4 1934713408
        %v1668 = vunpack.c.0.s8 %v1667
        %v1669 = vlaneseq
        %v1670 = vshrl.u32 %v1669, 7
        %v1671 = vsub.s32 %v1668, %v1670
        %v1672 = vrot.slane %v1658, %v1671
        %v1673 = vcombine.low %v1617, %v1633
        %v1674 = vcombine.high %v1617, %v1633
        %v1676 = vunpack.c.l.s4 1934713408
        %v1677 = vunpack.c.0.s8 %v1676
        %v1678 = vlaneseq
        %v1679 = vshrl.u32 %v1678, 7
        %v1680 = vsub.s32 %v1677, %v1679
        %v1681 = vrot.slane %v1673, %v1680
        %v1683 = vunpack.c.l.s4 1934713408
        %v1684 = vunpack.c.0.s8 %v1683
        %v1685 = vlaneseq
        %v1686 = vshrl.u32 %v1685, 7
        %v1687 = vsub.s32 %v1684, %v1686
        %v1688 = vrot.slane %v1674, %v1687
        %v1689 = vcombine.low %v1624, %v1640
        %v1690 = vcombine.high %v1624, %v1640
        %v1692 = vunpack.c.l.s4 1934713408
        %v1693 = vunpack.c.0.s8 %v1692
        %v1694 = vlaneseq
        %v1695 = vshrl.u32 %v1694, 7
        %v1696 = vsub.s32 %v1693, %v1695
        %v1697 = vrot.slane %v1689, %v1696
        %v1699 = vunpack.c.l.s4 1934713408
        %v1700 = vunpack.c.0.s8 %v1699
        %v1701 = vlaneseq
        %v1702 = vshrl.u32 %v1701, 7
        %v1703 = vsub.s32 %v1700, %v1702
        %v1704 = vrot.slane %v1690, %v1703
        %v1705 = vcombine.low %v1649, %v1681
        %v1706 = vcombine.high %v1649, %v1681
        %v1707 = vcombine.low %v1656, %v1688
        %v1708 = vcombine.high %v1656, %v1688
        %v1709 = vcombine.low %v1665, %v1697
        %v1710 = vcombine.high %v1665, %v1697
        %v1711 = vcombine.low %v1672, %v1704
        %v1712 = vcombine.high %v1672, %v1704
        %v1713 = vcombine.low %v1214, %v1544
        %v1714 = vcombine.high %v1214, %v1544
        %v1716 = vunpack.c.l.s4 1983009808
        %v1717 = vunpack.c.0.s8 %v1716
        %v1718 = vlaneseq
        %v1719 = vshrl.u32 %v1718, 7
        %v1720 = vsub.s32 %v1717, %v1719
        %v1721 = vrot.slane %v1713, %v1720
        %v1723 = vunpack.c.l.s4 1983009808
        %v1724 = vunpack.c.0.s8 %v1723
        %v1725 = vlaneseq
        %v1726 = vshrl.u32 %v1725, 7
        %v1727 = vsub.s32 %v1724, %v1726
        %v1728 = vrot.slane %v1714, %v1727
        %v1729 = vcombine.low %v1538, %v1550
        %v1730 = vcombine.high %v1538, %v1550
        %v1732 = vunpack.c.l.s4 1983009808
        %v1733 = vunpack.c.0.s8 %v1732
        %v1734 = vlaneseq
        %v1735 = vshrl.u32 %v1734, 7
        %v1736 = vsub.s32 %v1733, %v1735
        %v1737 = vrot.slane %v1729, %v1736
        %v1739 = vunpack.c.l.s4 1983009808
        %v1740 = vunpack.c.0.s8 %v1739
        %v1741 = vlaneseq
        %v1742 = vshrl.u32 %v1741, 7
        %v1743 = vsub.s32 %v1740, %v1742
        %v1744 = vrot.slane %v1730, %v1743
        %v1745 = vcombine.low %v1556, %v1568
        %v1746 = vcombine.high %v1556, %v1568
        %v1748 = vunpack.c.l.s4 1983009808
        %v1749 = vunpack.c.0.s8 %v1748
        %v1750 = vlaneseq
        %v1751 = vshrl.u32 %v1750, 7
        %v1752 = vsub.s32 %v1749, %v1751
        %v1753 = vrot.slane %v1745, %v1752
        %v1755 = vunpack.c.l.s4 1983009808
        %v1756 = vunpack.c.0.s8 %v1755
        %v1757 = vlaneseq
        %v1758 = vshrl.u32 %v1757, 7
        %v1759 = vsub.s32 %v1756, %v1758
        %v1760 = vrot.slane %v1746, %v1759
        %v1761 = vcombine.low %v1562, %v1574
        %v1762 = vcombine.high %v1562, %v1574
        %v1764 = vunpack.c.l.s4 1983009808
        %v1765 = vunpack.c.0.s8 %v1764
        %v1766 = vlaneseq
        %v1767 = vshrl.u32 %v1766, 7
        %v1768 = vsub.s32 %v1765, %v1767
        %v1769 = vrot.slane %v1761, %v1768
        %v1771 = vunpack.c.l.s4 1983009808
        %v1772 = vunpack.c.0.s8 %v1771
        %v1773 = vlaneseq
        %v1774 = vshrl.u32 %v1773, 7
        %v1775 = vsub.s32 %v1772, %v1774
        %v1776 = vrot.slane %v1762, %v1775
        %v1777 = vcombine.low %v1721, %v1737
        %v1778 = vcombine.high %v1721, %v1737
        %v1780 = vunpack.c.l.s4 1934713408
        %v1781 = vunpack.c.0.s8 %v1780
        %v1782 = vlaneseq
        %v1783 = vshrl.u32 %v1782, 7
        %v1784 = vsub.s32 %v1781, %v1783
        %v1785 = vrot.slane %v1777, %v1784
        %v1787 = vunpack.c.l.s4 1934713408
        %v1788 = vunpack.c.0.s8 %v1787
        %v1789 = vlaneseq
        %v1790 = vshrl.u32 %v1789, 7
        %v1791 = vsub.s32 %v1788, %v1790
        %v1792 = vrot.slane %v1778, %v1791
        %v1793 = vcombine.low %v1728, %v1744
        %v1794 = vcombine.high %v1728, %v1744
        %v1796 = vunpack.c.l.s4 1934713408
        %v1797 = vunpack.c.0.s8 %v1796
        %v1798 = vlaneseq
        %v1799 = vshrl.u32 %v1798, 7
        %v1800 = vsub.s32 %v1797, %v1799
        %v1801 = vrot.slane %v1793, %v1800
        %v1803 = vunpack.c.l.s4 1934713408
        %v1804 = vunpack.c.0.s8 %v1803
        %v1805 = vlaneseq
        %v1806 = vshrl.u32 %v1805, 7
        %v1807 = vsub.s32 %v1804, %v1806
        %v1808 = vrot.slane %v1794, %v1807
        %v1809 = vcombine.low %v1753, %v1769
        %v1810 = vcombine.high %v1753, %v1769
        %v1812 = vunpack.c.l.s4 1934713408
        %v1813 = vunpack.c.0.s8 %v1812
        %v1814 = vlaneseq
        %v1815 = vshrl.u32 %v1814, 7
        %v1816 = vsub.s32 %v1813, %v1815
        %v1817 = vrot.slane %v1809, %v1816
        %v1819 = vunpack.c.l.s4 1934713408
        %v1820 = vunpack.c.0.s8 %v1819
        %v1821 = vlaneseq
        %v1822 = vshrl.u32 %v1821, 7
        %v1823 = vsub.s32 %v1820, %v1822
        %v1824 = vrot.slane %v1810, %v1823
        %v1825 = vcombine.low %v1760, %v1776
        %v1826 = vcombine.high %v1760, %v1776
        %v1828 = vunpack.c.l.s4 1934713408
        %v1829 = vunpack.c.0.s8 %v1828
        %v1830 = vlaneseq
        %v1831 = vshrl.u32 %v1830, 7
        %v1832 = vsub.s32 %v1829, %v1831
        %v1833 = vrot.slane %v1825, %v1832
        %v1835 = vunpack.c.l.s4 1934713408
        %v1836 = vunpack.c.0.s8 %v1835
        %v1837 = vlaneseq
        %v1838 = vshrl.u32 %v1837, 7
        %v1839 = vsub.s32 %v1836, %v1838
        %v1840 = vrot.slane %v1826, %v1839
        %v1841 = vcombine.low %v1785, %v1817
        %v1842 = vcombine.high %v1785, %v1817
        %v1843 = vcombine.low %v1792, %v1824
        %v1844 = vcombine.high %v1792, %v1824
        %v1845 = vcombine.low %v1801, %v1833
        %v1846 = vcombine.high %v1801, %v1833
        %v1847 = vcombine.low %v1808, %v1840
        %v1848 = vcombine.high %v1808, %v1840
        %1865 = vrot.lane.b32.xlu0 %v1705, 16
        %v1866 = vpop.permute.xlu0 %1865
        %1867 = vrot.lane.b32.xlu0 %v1706, 16
        %v1868 = vpop.permute.xlu0 %1867
        %1869 = vrot.lane.b32.xlu0 %v1707, 16
        %v1870 = vpop.permute.xlu0 %1869
        %1871 = vrot.lane.b32.xlu0 %v1708, 16
        %v1872 = vpop.permute.xlu0 %1871
        %1873 = vrot.lane.b32.xlu0 %v1709, 16
        %v1874 = vpop.permute.xlu0 %1873
        %1875 = vrot.lane.b32.xlu0 %v1710, 16
        %v1876 = vpop.permute.xlu0 %1875
        %1877 = vrot.lane.b32.xlu0 %v1711, 16
        %v1878 = vpop.permute.xlu0 %1877
        %1879 = vrot.lane.b32.xlu0 %v1712, 16
        %v1880 = vpop.permute.xlu0 %1879
        %1881 = vrot.lane.b32.xlu0 %v1841, 16
        %v1882 = vpop.permute.xlu0 %1881
        %1883 = vrot.lane.b32.xlu0 %v1842, 16
        %v1884 = vpop.permute.xlu0 %1883
        %1885 = vrot.lane.b32.xlu0 %v1843, 16
        %v1886 = vpop.permute.xlu0 %1885
        %1887 = vrot.lane.b32.xlu0 %v1844, 16
        %v1888 = vpop.permute.xlu0 %1887
        %1889 = vrot.lane.b32.xlu0 %v1845, 16
        %v1890 = vpop.permute.xlu0 %1889
        %1891 = vrot.lane.b32.xlu0 %v1846, 16
        %v1892 = vpop.permute.xlu0 %1891
        %1893 = vrot.lane.b32.xlu0 %v1847, 16
        %v1894 = vpop.permute.xlu0 %1893
        %1895 = vrot.lane.b32.xlu0 %v1848, 16
        %v1896 = vpop.permute.xlu0 %1895
        %vm1913 = vcmask 130048
        %v1914 = vsel %vm1913, %v1389, %v1866
        %v1915 = vsel %vm1913, %v1390, %v1868
        %v1916 = vsel %vm1913, %v1391, %v1870
        %v1917 = vsel %vm1913, %v1392, %v1872
        %v1918 = vsel %vm1913, %v1393, %v1874
        %v1919 = vsel %vm1913, %v1394, %v1876
        %v1920 = vsel %vm1913, %v1395, %v1878
        %v1921 = vsel %vm1913, %v1396, %v1880
        %v1922 = vsel %vm1913, %v1525, %v1882
        %v1923 = vsel %vm1913, %v1526, %v1884
        %v1924 = vsel %vm1913, %v1527, %v1886
        %v1925 = vsel %vm1913, %v1528, %v1888
        %v1926 = vsel %vm1913, %v1529, %v1890
        %v1927 = vsel %vm1913, %v1530, %v1892
        %v1928 = vsel %vm1913, %v1531, %v1894
        %v1929 = vsel %vm1913, %v1532, %v1896
        %v1930 = vpack.c.bf16 %v1914, %v1914
        %v1931 = vpack.c.bf16 %v1915, %v1915
        %v1932 = vpack.c.bf16 %v1916, %v1916
        %v1933 = vpack.c.bf16 %v1917, %v1917
        %v1934 = vpack.c.bf16 %v1918, %v1918
        %v1935 = vpack.c.bf16 %v1919, %v1919
        %v1936 = vpack.c.bf16 %v1920, %v1920
        %v1937 = vpack.c.bf16 %v1921, %v1921
        %v1938 = vpack.c.bf16 %v1922, %v1922
        %v1939 = vpack.c.bf16 %v1923, %v1923
        %v1940 = vpack.c.bf16 %v1924, %v1924
        %v1941 = vpack.c.bf16 %v1925, %v1925
        %v1942 = vpack.c.bf16 %v1926, %v1926
        %v1943 = vpack.c.bf16 %v1927, %v1927
        %v1944 = vpack.c.bf16 %v1928, %v1928
        %v1945 = vpack.c.bf16 %v1929, %v1929
        %v1946 = vld [vmem:[%s5] sm:$0xf]
        %v1947 = vld [vmem:[%s5 + $0x4] sm:$0xf]
        %v1948 = vld [vmem:[%s5 + $0x8] sm:$0xf]
        %v1949 = vld [vmem:[%s5 + $0xc] sm:$0xf]
        %v1950 = vld [vmem:[%s5 + $0x10] sm:$0xf]
        %v1951 = vld [vmem:[%s5 + $0x14] sm:$0xf]
        %v1952 = vld [vmem:[%s5 + $0x18] sm:$0xf]
        %v1953 = vld [vmem:[%s5 + $0x1c] sm:$0xf]
        %v1954 = vld [vmem:[%s5 + $0x20] sm:$0xf]
        %v1955 = vld [vmem:[%s5 + $0x24] sm:$0xf]
        %v1956 = vld [vmem:[%s5 + $0x28] sm:$0xf]
        %v1957 = vld [vmem:[%s5 + $0x2c] sm:$0xf]
        %v1958 = vld [vmem:[%s5 + $0x30] sm:$0xf]
        %v1959 = vld [vmem:[%s5 + $0x34] sm:$0xf]
        %v1960 = vld [vmem:[%s5 + $0x38] sm:$0xf]
        %v1961 = vld [vmem:[%s5 + $0x3c] sm:$0xf]
        %v1962 = vld [vmem:[%s5 + $0x40] sm:$0xf]
        %v1963 = vld [vmem:[%s5 + $0x44] sm:$0xf]
        %v1964 = vld [vmem:[%s5 + $0x48] sm:$0xf]
        %v1965 = vld [vmem:[%s5 + $0x4c] sm:$0xf]
        %v1966 = vld [vmem:[%s5 + $0x50] sm:$0xf]
        %v1967 = vld [vmem:[%s5 + $0x54] sm:$0xf]
        %v1968 = vld [vmem:[%s5 + $0x58] sm:$0xf]
        %v1969 = vld [vmem:[%s5 + $0x5c] sm:$0xf]
        %v1970 = vld [vmem:[%s5 + $0x60] sm:$0xf]
        %v1971 = vld [vmem:[%s5 + $0x64] sm:$0xf]
        %v1972 = vld [vmem:[%s5 + $0x68] sm:$0xf]
        %v1973 = vld [vmem:[%s5 + $0x6c] sm:$0xf]
        %v1974 = vld [vmem:[%s5 + $0x70] sm:$0xf]
        %v1975 = vld [vmem:[%s5 + $0x74] sm:$0xf]
        %v1976 = vld [vmem:[%s5 + $0x78] sm:$0xf]
        %v1977 = vld [vmem:[%s5 + $0x7c] sm:$0xf]
        %v1978 = vld [vmem:[%s5 + $0x80] sm:$0xf]
        %v1979 = vld [vmem:[%s5 + $0x84] sm:$0xf]
        %v1980 = vld [vmem:[%s5 + $0x88] sm:$0xf]
        %v1981 = vld [vmem:[%s5 + $0x8c] sm:$0xf]
        %v1982 = vld [vmem:[%s5 + $0x90] sm:$0xf]
        %v1983 = vld [vmem:[%s5 + $0x94] sm:$0xf]
        %v1984 = vld [vmem:[%s5 + $0x98] sm:$0xf]
        %v1985 = vld [vmem:[%s5 + $0x9c] sm:$0xf]
        %v1986 = vld [vmem:[%s5 + $0xa0] sm:$0xf]
        %v1987 = vld [vmem:[%s5 + $0xa4] sm:$0xf]
        %v1988 = vld [vmem:[%s5 + $0xa8] sm:$0xf]
        %v1989 = vld [vmem:[%s5 + $0xac] sm:$0xf]
        %v1990 = vld [vmem:[%s5 + $0xb0] sm:$0xf]
        %v1991 = vld [vmem:[%s5 + $0xb4] sm:$0xf]
        %v1992 = vld [vmem:[%s5 + $0xb8] sm:$0xf]
        %v1993 = vld [vmem:[%s5 + $0xbc] sm:$0xf]
        %v1994 = vld [vmem:[%s5 + $0xc0] sm:$0xf]
        %v1995 = vld [vmem:[%s5 + $0xc4] sm:$0xf]
        %v1996 = vld [vmem:[%s5 + $0xc8] sm:$0xf]
        %v1997 = vld [vmem:[%s5 + $0xcc] sm:$0xf]
        %v1998 = vld [vmem:[%s5 + $0xd0] sm:$0xf]
        %v1999 = vld [vmem:[%s5 + $0xd4] sm:$0xf]
        %v2000 = vld [vmem:[%s5 + $0xd8] sm:$0xf]
        %v2001 = vld [vmem:[%s5 + $0xdc] sm:$0xf]
        %v2002 = vld [vmem:[%s5 + $0xe0] sm:$0xf]
        %v2003 = vld [vmem:[%s5 + $0xe4] sm:$0xf]
        %v2004 = vld [vmem:[%s5 + $0xe8] sm:$0xf]
        %v2005 = vld [vmem:[%s5 + $0xec] sm:$0xf]
        %v2006 = vld [vmem:[%s5 + $0xf0] sm:$0xf]
        %v2007 = vld [vmem:[%s5 + $0xf4] sm:$0xf]
        %v2008 = vld [vmem:[%s5 + $0xf8] sm:$0xf]
        %v2009 = vld [vmem:[%s5 + $0xfc] sm:$0xf]
        %v2014 = vunpack.c.l.b16 %v1946
        %v2015 = vunpack.c.l.b16 %v1947
        %v2016 = vunpack.c.l.b16 %v1948
        %v2017 = vunpack.c.l.b16 %v1949
        %v2018 = vpack.c.b16 %v2015, %v2014
        %v2019 = vpack.c.b16 %v2017, %v2016
        %vm2022 = vcmask 261120
        %v2024 = vsel %vm2022, %v1930, 0
        %2026 = vmatprep.subr.bf16.mxu0 0
        %2027 = vmatpush1.bf16.msra.mxu0 %v2018
        %2028 = vmatprep.subr.bf16.mxu0 0
        %2029 = vmatpush1.bf16.msra.mxu0 %v2019
        %2030 = vmatprep.subr.bf16.mxu0 0
        %2031 = vmatpush1.bf16.msra.mxu0 0
        %2032 = vmatprep.subr.bf16.mxu0 0
        %2033 = vmatpush1.bf16.msra.mxu0 0
        %2034 = vmatprep.subr.bf16.mxu0 0
        %2035 = vmatpush1.bf16.msra.mxu0 0
        %2036 = vmatprep.subr.bf16.mxu0 0
        %2037 = vmatpush1.bf16.msra.mxu0 0
        %2038 = vmatprep.subr.bf16.mxu0 0
        %2039 = vmatpush1.bf16.msra.mxu0 0
        %2040 = vmatprep.subr.bf16.mxu0 0
        %2041 = vmatpush1.bf16.msra.mxu0 0
        %2042 = vmatprep.subr.bf16.mxu0 0
        %2043 = vmatpush1.bf16.msra.mxu0 0
        %2044 = vmatprep.subr.bf16.mxu0 0
        %2045 = vmatpush1.bf16.msra.mxu0 0
        %2046 = vmatprep.subr.bf16.mxu0 0
        %2047 = vmatpush1.bf16.msra.mxu0 0
        %2048 = vmatprep.subr.bf16.mxu0 0
        %2049 = vmatpush1.bf16.msra.mxu0 0
        %2050 = vmatprep.subr.bf16.mxu0 0
        %2051 = vmatpush1.bf16.msra.mxu0 0
        %2052 = vmatprep.subr.bf16.mxu0 0
        %2053 = vmatpush1.bf16.msra.mxu0 0
        %2054 = vmatprep.subr.bf16.mxu0 0
        %2055 = vmatpush1.bf16.msra.mxu0 0
        %2056 = vmatprep.subr.bf16.mxu0 0
        %2057 = vmatpush1.bf16.msra.mxu0 0
        %2058 = vmatprep.mubr.bf16.mxu0 0
        %2059 = vmatmul.mubr.bf16.gmra.mrb[0].mxu0 %v2024
        %v2060 = vpop.f32.mrb[0].mxu0
        %v2061 = vadd.f32 0.0, %v2060
        %v2062 = vpop.f32.mrb[0].mxu0
        %v2063 = vpop.f32.mrb[0].mxu0
        %v2064 = vpop.f32.mrb[0].mxu0
        %2065 = vdwg.mxu0
        %v2070 = vunpack.c.l.b16 %v1950
        %v2071 = vunpack.c.l.b16 %v1951
        %v2072 = vunpack.c.l.b16 %v1952
        %v2073 = vunpack.c.l.b16 %v1953
        %v2074 = vpack.c.b16 %v2071, %v2070
        %v2075 = vpack.c.b16 %v2073, %v2072
        %v2079 = vsel %vm2022, %v1931, 0
        %2081 = vmatprep.subr.bf16.mxu0 0
        %2082 = vmatpush1.bf16.msra.mxu0 %v2074
        %2083 = vmatprep.subr.bf16.mxu0 0
        %2084 = vmatpush1.bf16.msra.mxu0 %v2075
        %2085 = vmatprep.subr.bf16.mxu0 0
        %2086 = vmatpush1.bf16.msra.mxu0 0
        %2087 = vmatprep.subr.bf16.mxu0 0
        %2088 = vmatpush1.bf16.msra.mxu0 0
        %2089 = vmatprep.subr.bf16.mxu0 0
        %2090 = vmatpush1.bf16.msra.mxu0 0
        %2091 = vmatprep.subr.bf16.mxu0 0
        %2092 = vmatpush1.bf16.msra.mxu0 0
        %2093 = vmatprep.subr.bf16.mxu0 0
        %2094 = vmatpush1.bf16.msra.mxu0 0
        %2095 = vmatprep.subr.bf16.mxu0 0
        %2096 = vmatpush1.bf16.msra.mxu0 0
        %2097 = vmatprep.subr.bf16.mxu0 0
        %2098 = vmatpush1.bf16.msra.mxu0 0
        %2099 = vmatprep.subr.bf16.mxu0 0
        %2100 = vmatpush1.bf16.msra.mxu0 0
        %2101 = vmatprep.subr.bf16.mxu0 0
        %2102 = vmatpush1.bf16.msra.mxu0 0
        %2103 = vmatprep.subr.bf16.mxu0 0
        %2104 = vmatpush1.bf16.msra.mxu0 0
        %2105 = vmatprep.subr.bf16.mxu0 0
        %2106 = vmatpush1.bf16.msra.mxu0 0
        %2107 = vmatprep.subr.bf16.mxu0 0
        %2108 = vmatpush1.bf16.msra.mxu0 0
        %2109 = vmatprep.subr.bf16.mxu0 0
        %2110 = vmatpush1.bf16.msra.mxu0 0
        %2111 = vmatprep.subr.bf16.mxu0 0
        %2112 = vmatpush1.bf16.msra.mxu0 0
        %2113 = vmatprep.mubr.bf16.mxu0 0
        %2114 = vmatmul.mubr.bf16.gmra.mrb[0].mxu0 %v2079
        %v2115 = vpop.f32.mrb[0].mxu0
        %v2116 = vadd.f32 0.0, %v2115
        %v2117 = vpop.f32.mrb[0].mxu0
        %v2118 = vpop.f32.mrb[0].mxu0
        %v2119 = vpop.f32.mrb[0].mxu0
        %2120 = vdwg.mxu0
        %v2125 = vunpack.c.l.b16 %v1954
        %v2126 = vunpack.c.l.b16 %v1955
        %v2127 = vunpack.c.l.b16 %v1956
        %v2128 = vunpack.c.l.b16 %v1957
        %v2129 = vpack.c.b16 %v2126, %v2125
        %v2130 = vpack.c.b16 %v2128, %v2127
        %v2134 = vsel %vm2022, %v1932, 0
        %2136 = vmatprep.subr.bf16.mxu0 0
        %2137 = vmatpush1.bf16.msra.mxu0 %v2129
        %2138 = vmatprep.subr.bf16.mxu0 0
        %2139 = vmatpush1.bf16.msra.mxu0 %v2130
        %2140 = vmatprep.subr.bf16.mxu0 0
        %2141 = vmatpush1.bf16.msra.mxu0 0
        %2142 = vmatprep.subr.bf16.mxu0 0
        %2143 = vmatpush1.bf16.msra.mxu0 0
        %2144 = vmatprep.subr.bf16.mxu0 0
        %2145 = vmatpush1.bf16.msra.mxu0 0
        %2146 = vmatprep.subr.bf16.mxu0 0
        %2147 = vmatpush1.bf16.msra.mxu0 0
        %2148 = vmatprep.subr.bf16.mxu0 0
        %2149 = vmatpush1.bf16.msra.mxu0 0
        %2150 = vmatprep.subr.bf16.mxu0 0
        %2151 = vmatpush1.bf16.msra.mxu0 0
        %2152 = vmatprep.subr.bf16.mxu0 0
        %2153 = vmatpush1.bf16.msra.mxu0 0
        %2154 = vmatprep.subr.bf16.mxu0 0
        %2155 = vmatpush1.bf16.msra.mxu0 0
        %2156 = vmatprep.subr.bf16.mxu0 0
        %2157 = vmatpush1.bf16.msra.mxu0 0
        %2158 = vmatprep.subr.bf16.mxu0 0
        %2159 = vmatpush1.bf16.msra.mxu0 0
        %2160 = vmatprep.subr.bf16.mxu0 0
        %2161 = vmatpush1.bf16.msra.mxu0 0
        %2162 = vmatprep.subr.bf16.mxu0 0
        %2163 = vmatpush1.bf16.msra.mxu0 0
        %2164 = vmatprep.subr.bf16.mxu0 0
        %2165 = vmatpush1.bf16.msra.mxu0 0
        %2166 = vmatprep.subr.bf16.mxu0 0
        %2167 = vmatpush1.bf16.msra.mxu0 0
        %2168 = vmatprep.mubr.bf16.mxu0 0
        %2169 = vmatmul.mubr.bf16.gmra.mrb[0].mxu0 %v2134
        %v2170 = vpop.f32.mrb[0].mxu0
        %v2171 = vadd.f32 0.0, %v2170
        %v2172 = vpop.f32.mrb[0].mxu0
        %v2173 = vpop.f32.mrb[0].mxu0
        %v2174 = vpop.f32.mrb[0].mxu0
        %2175 = vdwg.mxu0
        %v2180 = vunpack.c.l.b16 %v1958
        %v2181 = vunpack.c.l.b16 %v1959
        %v2182 = vunpack.c.l.b16 %v1960
        %v2183 = vunpack.c.l.b16 %v1961
        %v2184 = vpack.c.b16 %v2181, %v2180
        %v2185 = vpack.c.b16 %v2183, %v2182
        %v2189 = vsel %vm2022, %v1933, 0
        %2191 = vmatprep.subr.bf16.mxu0 0
        %2192 = vmatpush1.bf16.msra.mxu0 %v2184
        %2193 = vmatprep.subr.bf16.mxu0 0
        %2194 = vmatpush1.bf16.msra.mxu0 %v2185
        %2195 = vmatprep.subr.bf16.mxu0 0
        %2196 = vmatpush1.bf16.msra.mxu0 0
        %2197 = vmatprep.subr.bf16.mxu0 0
        %2198 = vmatpush1.bf16.msra.mxu0 0
        %2199 = vmatprep.subr.bf16.mxu0 0
        %2200 = vmatpush1.bf16.msra.mxu0 0
        %2201 = vmatprep.subr.bf16.mxu0 0
        %2202 = vmatpush1.bf16.msra.mxu0 0
        %2203 = vmatprep.subr.bf16.mxu0 0
        %2204 = vmatpush1.bf16.msra.mxu0 0
        %2205 = vmatprep.subr.bf16.mxu0 0
        %2206 = vmatpush1.bf16.msra.mxu0 0
        %2207 = vmatprep.subr.bf16.mxu0 0
        %2208 = vmatpush1.bf16.msra.mxu0 0
        %2209 = vmatprep.subr.bf16.mxu0 0
        %2210 = vmatpush1.bf16.msra.mxu0 0
        %2211 = vmatprep.subr.bf16.mxu0 0
        %2212 = vmatpush1.bf16.msra.mxu0 0
        %2213 = vmatprep.subr.bf16.mxu0 0
        %2214 = vmatpush1.bf16.msra.mxu0 0
        %2215 = vmatprep.subr.bf16.mxu0 0
        %2216 = vmatpush1.bf16.msra.mxu0 0
        %2217 = vmatprep.subr.bf16.mxu0 0
        %2218 = vmatpush1.bf16.msra.mxu0 0
        %2219 = vmatprep.subr.bf16.mxu0 0
        %2220 = vmatpush1.bf16.msra.mxu0 0
        %2221 = vmatprep.subr.bf16.mxu0 0
        %2222 = vmatpush1.bf16.msra.mxu0 0
        %2223 = vmatprep.mubr.bf16.mxu0 0
        %2224 = vmatmul.mubr.bf16.gmra.mrb[0].mxu0 %v2189
        %v2225 = vpop.f32.mrb[0].mxu0
        %v2226 = vadd.f32 0.0, %v2225
        %v2227 = vpop.f32.mrb[0].mxu0
        %v2228 = vpop.f32.mrb[0].mxu0
        %v2229 = vpop.f32.mrb[0].mxu0
        %2230 = vdwg.mxu0
        %v2235 = vunpack.c.l.b16 %v1962
        %v2236 = vunpack.c.l.b16 %v1963
        %v2237 = vunpack.c.l.b16 %v1964
        %v2238 = vunpack.c.l.b16 %v1965
        %v2239 = vpack.c.b16 %v2236, %v2235
        %v2240 = vpack.c.b16 %v2238, %v2237
        %v2244 = vsel %vm2022, %v1934, 0
        %2246 = vmatprep.subr.bf16.mxu0 0
        %2247 = vmatpush1.bf16.msra.mxu0 %v2239
        %2248 = vmatprep.subr.bf16.mxu0 0
        %2249 = vmatpush1.bf16.msra.mxu0 %v2240
        %2250 = vmatprep.subr.bf16.mxu0 0
        %2251 = vmatpush1.bf16.msra.mxu0 0
        %2252 = vmatprep.subr.bf16.mxu0 0
        %2253 = vmatpush1.bf16.msra.mxu0 0
        %2254 = vmatprep.subr.bf16.mxu0 0
        %2255 = vmatpush1.bf16.msra.mxu0 0
        %2256 = vmatprep.subr.bf16.mxu0 0
        %2257 = vmatpush1.bf16.msra.mxu0 0
        %2258 = vmatprep.subr.bf16.mxu0 0
        %2259 = vmatpush1.bf16.msra.mxu0 0
        %2260 = vmatprep.subr.bf16.mxu0 0
        %2261 = vmatpush1.bf16.msra.mxu0 0
        %2262 = vmatprep.subr.bf16.mxu0 0
        %2263 = vmatpush1.bf16.msra.mxu0 0
        %2264 = vmatprep.subr.bf16.mxu0 0
        %2265 = vmatpush1.bf16.msra.mxu0 0
        %2266 = vmatprep.subr.bf16.mxu0 0
        %2267 = vmatpush1.bf16.msra.mxu0 0
        %2268 = vmatprep.subr.bf16.mxu0 0
        %2269 = vmatpush1.bf16.msra.mxu0 0
        %2270 = vmatprep.subr.bf16.mxu0 0
        %2271 = vmatpush1.bf16.msra.mxu0 0
        %2272 = vmatprep.subr.bf16.mxu0 0
        %2273 = vmatpush1.bf16.msra.mxu0 0
        %2274 = vmatprep.subr.bf16.mxu0 0
        %2275 = vmatpush1.bf16.msra.mxu0 0
        %2276 = vmatprep.subr.bf16.mxu0 0
        %2277 = vmatpush1.bf16.msra.mxu0 0
        %2278 = vmatprep.mubr.bf16.mxu0 0
        %2279 = vmatmul.mubr.bf16.gmra.mrb[0].mxu0 %v2244
        %v2280 = vpop.f32.mrb[0].mxu0
        %v2281 = vadd.f32 0.0, %v2280
        %v2282 = vpop.f32.mrb[0].mxu0
        %v2283 = vpop.f32.mrb[0].mxu0
        %v2284 = vpop.f32.mrb[0].mxu0
        %2285 = vdwg.mxu0
        %v2290 = vunpack.c.l.b16 %v1966
        %v2291 = vunpack.c.l.b16 %v1967
        %v2292 = vunpack.c.l.b16 %v1968
        %v2293 = vunpack.c.l.b16 %v1969
        %v2294 = vpack.c.b16 %v2291, %v2290
        %v2295 = vpack.c.b16 %v2293, %v2292
        %v2299 = vsel %vm2022, %v1935, 0
        %2301 = vmatprep.subr.bf16.mxu0 0
        %2302 = vmatpush1.bf16.msra.mxu0 %v2294
        %2303 = vmatprep.subr.bf16.mxu0 0
        %2304 = vmatpush1.bf16.msra.mxu0 %v2295
        %2305 = vmatprep.subr.bf16.mxu0 0
        %2306 = vmatpush1.bf16.msra.mxu0 0
        %2307 = vmatprep.subr.bf16.mxu0 0
        %2308 = vmatpush1.bf16.msra.mxu0 0
        %2309 = vmatprep.subr.bf16.mxu0 0
        %2310 = vmatpush1.bf16.msra.mxu0 0
        %2311 = vmatprep.subr.bf16.mxu0 0
        %2312 = vmatpush1.bf16.msra.mxu0 0
        %2313 = vmatprep.subr.bf16.mxu0 0
        %2314 = vmatpush1.bf16.msra.mxu0 0
        %2315 = vmatprep.subr.bf16.mxu0 0
        %2316 = vmatpush1.bf16.msra.mxu0 0
        %2317 = vmatprep.subr.bf16.mxu0 0
        %2318 = vmatpush1.bf16.msra.mxu0 0
        %2319 = vmatprep.subr.bf16.mxu0 0
        %2320 = vmatpush1.bf16.msra.mxu0 0
        %2321 = vmatprep.subr.bf16.mxu0 0
        %2322 = vmatpush1.bf16.msra.mxu0 0
        %2323 = vmatprep.subr.bf16.mxu0 0
        %2324 = vmatpush1.bf16.msra.mxu0 0
        %2325 = vmatprep.subr.bf16.mxu0 0
        %2326 = vmatpush1.bf16.msra.mxu0 0
        %2327 = vmatprep.subr.bf16.mxu0 0
        %2328 = vmatpush1.bf16.msra.mxu0 0
        %2329 = vmatprep.subr.bf16.mxu0 0
        %2330 = vmatpush1.bf16.msra.mxu0 0
        %2331 = vmatprep.subr.bf16.mxu0 0
        %2332 = vmatpush1.bf16.msra.mxu0 0
        %2333 = vmatprep.mubr.bf16.mxu0 0
        %2334 = vmatmul.mubr.bf16.gmra.mrb[0].mxu0 %v2299
        %v2335 = vpop.f32.mrb[0].mxu0
        %v2336 = vadd.f32 0.0, %v2335
        %v2337 = vpop.f32.mrb[0].mxu0
        %v2338 = vpop.f32.mrb[0].mxu0
        %v2339 = vpop.f32.mrb[0].mxu0
        %2340 = vdwg.mxu0
        %v2345 = vunpack.c.l.b16 %v1970
        %v2346 = vunpack.c.l.b16 %v1971
        %v2347 = vunpack.c.l.b16 %v1972
        %v2348 = vunpack.c.l.b16 %v1973
        %v2349 = vpack.c.b16 %v2346, %v2345
        %v2350 = vpack.c.b16 %v2348, %v2347
        %v2354 = vsel %vm2022, %v1936, 0
        %2356 = vmatprep.subr.bf16.mxu0 0
        %2357 = vmatpush1.bf16.msra.mxu0 %v2349
        %2358 = vmatprep.subr.bf16.mxu0 0
        %2359 = vmatpush1.bf16.msra.mxu0 %v2350
        %2360 = vmatprep.subr.bf16.mxu0 0
        %2361 = vmatpush1.bf16.msra.mxu0 0
        %2362 = vmatprep.subr.bf16.mxu0 0
        %2363 = vmatpush1.bf16.msra.mxu0 0
        %2364 = vmatprep.subr.bf16.mxu0 0
        %2365 = vmatpush1.bf16.msra.mxu0 0
        %2366 = vmatprep.subr.bf16.mxu0 0
        %2367 = vmatpush1.bf16.msra.mxu0 0
        %2368 = vmatprep.subr.bf16.mxu0 0
        %2369 = vmatpush1.bf16.msra.mxu0 0
        %2370 = vmatprep.subr.bf16.mxu0 0
        %2371 = vmatpush1.bf16.msra.mxu0 0
        %2372 = vmatprep.subr.bf16.mxu0 0
        %2373 = vmatpush1.bf16.msra.mxu0 0
        %2374 = vmatprep.subr.bf16.mxu0 0
        %2375 = vmatpush1.bf16.msra.mxu0 0
        %2376 = vmatprep.subr.bf16.mxu0 0
        %2377 = vmatpush1.bf16.msra.mxu0 0
        %2378 = vmatprep.subr.bf16.mxu0 0
        %2379 = vmatpush1.bf16.msra.mxu0 0
        %2380 = vmatprep.subr.bf16.mxu0 0
        %2381 = vmatpush1.bf16.msra.mxu0 0
        %2382 = vmatprep.subr.bf16.mxu0 0
        %2383 = vmatpush1.bf16.msra.mxu0 0
        %2384 = vmatprep.subr.bf16.mxu0 0
        %2385 = vmatpush1.bf16.msra.mxu0 0
        %2386 = vmatprep.subr.bf16.mxu0 0
        %2387 = vmatpush1.bf16.msra.mxu0 0
        %2388 = vmatprep.mubr.bf16.mxu0 0
        %2389 = vmatmul.mubr.bf16.gmra.mrb[0].mxu0 %v2354
        %v2390 = vpop.f32.mrb[0].mxu0
        %v2391 = vadd.f32 0.0, %v2390
        %v2392 = vpop.f32.mrb[0].mxu0
        %v2393 = vpop.f32.mrb[0].mxu0
        %v2394 = vpop.f32.mrb[0].mxu0
        %2395 = vdwg.mxu0
        %v2400 = vunpack.c.l.b16 %v1974
        %v2401 = vunpack.c.l.b16 %v1975
        %v2402 = vunpack.c.l.b16 %v1976
        %v2403 = vunpack.c.l.b16 %v1977
        %v2404 = vpack.c.b16 %v2401, %v2400
        %v2405 = vpack.c.b16 %v2403, %v2402
        %v2409 = vsel %vm2022, %v1937, 0
        %2411 = vmatprep.subr.bf16.mxu0 0
        %2412 = vmatpush1.bf16.msra.mxu0 %v2404
        %2413 = vmatprep.subr.bf16.mxu0 0
        %2414 = vmatpush1.bf16.msra.mxu0 %v2405
        %2415 = vmatprep.subr.bf16.mxu0 0
        %2416 = vmatpush1.bf16.msra.mxu0 0
        %2417 = vmatprep.subr.bf16.mxu0 0
        %2418 = vmatpush1.bf16.msra.mxu0 0
        %2419 = vmatprep.subr.bf16.mxu0 0
        %2420 = vmatpush1.bf16.msra.mxu0 0
        %2421 = vmatprep.subr.bf16.mxu0 0
        %2422 = vmatpush1.bf16.msra.mxu0 0
        %2423 = vmatprep.subr.bf16.mxu0 0
        %2424 = vmatpush1.bf16.msra.mxu0 0
        %2425 = vmatprep.subr.bf16.mxu0 0
        %2426 = vmatpush1.bf16.msra.mxu0 0
        %2427 = vmatprep.subr.bf16.mxu0 0
        %2428 = vmatpush1.bf16.msra.mxu0 0
        %2429 = vmatprep.subr.bf16.mxu0 0
        %2430 = vmatpush1.bf16.msra.mxu0 0
        %2431 = vmatprep.subr.bf16.mxu0 0
        %2432 = vmatpush1.bf16.msra.mxu0 0
        %2433 = vmatprep.subr.bf16.mxu0 0
        %2434 = vmatpush1.bf16.msra.mxu0 0
        %2435 = vmatprep.subr.bf16.mxu0 0
        %2436 = vmatpush1.bf16.msra.mxu0 0
        %2437 = vmatprep.subr.bf16.mxu0 0
        %2438 = vmatpush1.bf16.msra.mxu0 0
        %2439 = vmatprep.subr.bf16.mxu0 0
        %2440 = vmatpush1.bf16.msra.mxu0 0
        %2441 = vmatprep.subr.bf16.mxu0 0
        %2442 = vmatpush1.bf16.msra.mxu0 0
        %2443 = vmatprep.mubr.bf16.mxu0 0
        %2444 = vmatmul.mubr.bf16.gmra.mrb[0].mxu0 %v2409
        %v2445 = vpop.f32.mrb[0].mxu0
        %v2446 = vadd.f32 0.0, %v2445
        %v2447 = vpop.f32.mrb[0].mxu0
        %v2448 = vpop.f32.mrb[0].mxu0
        %v2449 = vpop.f32.mrb[0].mxu0
        %2450 = vdwg.mxu0
        %v2455 = vunpack.c.l.b16 %v1978
        %v2456 = vunpack.c.l.b16 %v1979
        %v2457 = vunpack.c.l.b16 %v1980
        %v2458 = vunpack.c.l.b16 %v1981
        %v2459 = vpack.c.b16 %v2456, %v2455
        %v2460 = vpack.c.b16 %v2458, %v2457
        %v2464 = vsel %vm2022, %v1938, 0
        %2466 = vmatprep.subr.bf16.mxu0 0
        %2467 = vmatpush1.bf16.msra.mxu0 %v2459
        %2468 = vmatprep.subr.bf16.mxu0 0
        %2469 = vmatpush1.bf16.msra.mxu0 %v2460
        %2470 = vmatprep.subr.bf16.mxu0 0
        %2471 = vmatpush1.bf16.msra.mxu0 0
        %2472 = vmatprep.subr.bf16.mxu0 0
        %2473 = vmatpush1.bf16.msra.mxu0 0
        %2474 = vmatprep.subr.bf16.mxu0 0
        %2475 = vmatpush1.bf16.msra.mxu0 0
        %2476 = vmatprep.subr.bf16.mxu0 0
        %2477 = vmatpush1.bf16.msra.mxu0 0
        %2478 = vmatprep.subr.bf16.mxu0 0
        %2479 = vmatpush1.bf16.msra.mxu0 0
        %2480 = vmatprep.subr.bf16.mxu0 0
        %2481 = vmatpush1.bf16.msra.mxu0 0
        %2482 = vmatprep.subr.bf16.mxu0 0
        %2483 = vmatpush1.bf16.msra.mxu0 0
        %2484 = vmatprep.subr.bf16.mxu0 0
        %2485 = vmatpush1.bf16.msra.mxu0 0
        %2486 = vmatprep.subr.bf16.mxu0 0
        %2487 = vmatpush1.bf16.msra.mxu0 0
        %2488 = vmatprep.subr.bf16.mxu0 0
        %2489 = vmatpush1.bf16.msra.mxu0 0
        %2490 = vmatprep.subr.bf16.mxu0 0
        %2491 = vmatpush1.bf16.msra.mxu0 0
        %2492 = vmatprep.subr.bf16.mxu0 0
        %2493 = vmatpush1.bf16.msra.mxu0 0
        %2494 = vmatprep.subr.bf16.mxu0 0
        %2495 = vmatpush1.bf16.msra.mxu0 0
        %2496 = vmatprep.subr.bf16.mxu0 0
        %2497 = vmatpush1.bf16.msra.mxu0 0
        %2498 = vmatprep.mubr.bf16.mxu0 0
        %2499 = vmatmul.mubr.bf16.gmra.mrb[0].mxu0 %v2464
        %v2500 = vpop.f32.mrb[0].mxu0
        %v2501 = vadd.f32 0.0, %v2500
        %v2502 = vpop.f32.mrb[0].mxu0
        %v2503 = vpop.f32.mrb[0].mxu0
        %v2504 = vpop.f32.mrb[0].mxu0
        %2505 = vdwg.mxu0
        %v2510 = vunpack.c.l.b16 %v1982
        %v2511 = vunpack.c.l.b16 %v1983
        %v2512 = vunpack.c.l.b16 %v1984
        %v2513 = vunpack.c.l.b16 %v1985
        %v2514 = vpack.c.b16 %v2511, %v2510
        %v2515 = vpack.c.b16 %v2513, %v2512
        %v2519 = vsel %vm2022, %v1939, 0
        %2521 = vmatprep.subr.bf16.mxu0 0
        %2522 = vmatpush1.bf16.msra.mxu0 %v2514
        %2523 = vmatprep.subr.bf16.mxu0 0
        %2524 = vmatpush1.bf16.msra.mxu0 %v2515
        %2525 = vmatprep.subr.bf16.mxu0 0
        %2526 = vmatpush1.bf16.msra.mxu0 0
        %2527 = vmatprep.subr.bf16.mxu0 0
        %2528 = vmatpush1.bf16.msra.mxu0 0
        %2529 = vmatprep.subr.bf16.mxu0 0
        %2530 = vmatpush1.bf16.msra.mxu0 0
        %2531 = vmatprep.subr.bf16.mxu0 0
        %2532 = vmatpush1.bf16.msra.mxu0 0
        %2533 = vmatprep.subr.bf16.mxu0 0
        %2534 = vmatpush1.bf16.msra.mxu0 0
        %2535 = vmatprep.subr.bf16.mxu0 0
        %2536 = vmatpush1.bf16.msra.mxu0 0
        %2537 = vmatprep.subr.bf16.mxu0 0
        %2538 = vmatpush1.bf16.msra.mxu0 0
        %2539 = vmatprep.subr.bf16.mxu0 0
        %2540 = vmatpush1.bf16.msra.mxu0 0
        %2541 = vmatprep.subr.bf16.mxu0 0
        %2542 = vmatpush1.bf16.msra.mxu0 0
        %2543 = vmatprep.subr.bf16.mxu0 0
        %2544 = vmatpush1.bf16.msra.mxu0 0
        %2545 = vmatprep.subr.bf16.mxu0 0
        %2546 = vmatpush1.bf16.msra.mxu0 0
        %2547 = vmatprep.subr.bf16.mxu0 0
        %2548 = vmatpush1.bf16.msra.mxu0 0
        %2549 = vmatprep.subr.bf16.mxu0 0
        %2550 = vmatpush1.bf16.msra.mxu0 0
        %2551 = vmatprep.subr.bf16.mxu0 0
        %2552 = vmatpush1.bf16.msra.mxu0 0
        %2553 = vmatprep.mubr.bf16.mxu0 0
        %2554 = vmatmul.mubr.bf16.gmra.mrb[0].mxu0 %v2519
        %v2555 = vpop.f32.mrb[0].mxu0
        %v2556 = vadd.f32 0.0, %v2555
        %v2557 = vpop.f32.mrb[0].mxu0
        %v2558 = vpop.f32.mrb[0].mxu0
        %v2559 = vpop.f32.mrb[0].mxu0
        %2560 = vdwg.mxu0
        %v2565 = vunpack.c.l.b16 %v1986
        %v2566 = vunpack.c.l.b16 %v1987
        %v2567 = vunpack.c.l.b16 %v1988
        %v2568 = vunpack.c.l.b16 %v1989
        %v2569 = vpack.c.b16 %v2566, %v2565
        %v2570 = vpack.c.b16 %v2568, %v2567
        %v2574 = vsel %vm2022, %v1940, 0
        %2576 = vmatprep.subr.bf16.mxu0 0
        %2577 = vmatpush1.bf16.msra.mxu0 %v2569
        %2578 = vmatprep.subr.bf16.mxu0 0
        %2579 = vmatpush1.bf16.msra.mxu0 %v2570
        %2580 = vmatprep.subr.bf16.mxu0 0
        %2581 = vmatpush1.bf16.msra.mxu0 0
        %2582 = vmatprep.subr.bf16.mxu0 0
        %2583 = vmatpush1.bf16.msra.mxu0 0
        %2584 = vmatprep.subr.bf16.mxu0 0
        %2585 = vmatpush1.bf16.msra.mxu0 0
        %2586 = vmatprep.subr.bf16.mxu0 0
        %2587 = vmatpush1.bf16.msra.mxu0 0
        %2588 = vmatprep.subr.bf16.mxu0 0
        %2589 = vmatpush1.bf16.msra.mxu0 0
        %2590 = vmatprep.subr.bf16.mxu0 0
        %2591 = vmatpush1.bf16.msra.mxu0 0
        %2592 = vmatprep.subr.bf16.mxu0 0
        %2593 = vmatpush1.bf16.msra.mxu0 0
        %2594 = vmatprep.subr.bf16.mxu0 0
        %2595 = vmatpush1.bf16.msra.mxu0 0
        %2596 = vmatprep.subr.bf16.mxu0 0
        %2597 = vmatpush1.bf16.msra.mxu0 0
        %2598 = vmatprep.subr.bf16.mxu0 0
        %2599 = vmatpush1.bf16.msra.mxu0 0
        %2600 = vmatprep.subr.bf16.mxu0 0
        %2601 = vmatpush1.bf16.msra.mxu0 0
        %2602 = vmatprep.subr.bf16.mxu0 0
        %2603 = vmatpush1.bf16.msra.mxu0 0
        %2604 = vmatprep.subr.bf16.mxu0 0
        %2605 = vmatpush1.bf16.msra.mxu0 0
        %2606 = vmatprep.subr.bf16.mxu0 0
        %2607 = vmatpush1.bf16.msra.mxu0 0
        %2608 = vmatprep.mubr.bf16.mxu0 0
        %2609 = vmatmul.mubr.bf16.gmra.mrb[0].mxu0 %v2574
        %v2610 = vpop.f32.mrb[0].mxu0
        %v2611 = vadd.f32 0.0, %v2610
        %v2612 = vpop.f32.mrb[0].mxu0
        %v2613 = vpop.f32.mrb[0].mxu0
        %v2614 = vpop.f32.mrb[0].mxu0
        %2615 = vdwg.mxu0
        %v2620 = vunpack.c.l.b16 %v1990
        %v2621 = vunpack.c.l.b16 %v1991
        %v2622 = vunpack.c.l.b16 %v1992
        %v2623 = vunpack.c.l.b16 %v1993
        %v2624 = vpack.c.b16 %v2621, %v2620
        %v2625 = vpack.c.b16 %v2623, %v2622
        %v2629 = vsel %vm2022, %v1941, 0
        %2631 = vmatprep.subr.bf16.mxu0 0
        %2632 = vmatpush1.bf16.msra.mxu0 %v2624
        %2633 = vmatprep.subr.bf16.mxu0 0
        %2634 = vmatpush1.bf16.msra.mxu0 %v2625
        %2635 = vmatprep.subr.bf16.mxu0 0
        %2636 = vmatpush1.bf16.msra.mxu0 0
        %2637 = vmatprep.subr.bf16.mxu0 0
        %2638 = vmatpush1.bf16.msra.mxu0 0
        %2639 = vmatprep.subr.bf16.mxu0 0
        %2640 = vmatpush1.bf16.msra.mxu0 0
        %2641 = vmatprep.subr.bf16.mxu0 0
        %2642 = vmatpush1.bf16.msra.mxu0 0
        %2643 = vmatprep.subr.bf16.mxu0 0
        %2644 = vmatpush1.bf16.msra.mxu0 0
        %2645 = vmatprep.subr.bf16.mxu0 0
        %2646 = vmatpush1.bf16.msra.mxu0 0
        %2647 = vmatprep.subr.bf16.mxu0 0
        %2648 = vmatpush1.bf16.msra.mxu0 0
        %2649 = vmatprep.subr.bf16.mxu0 0
        %2650 = vmatpush1.bf16.msra.mxu0 0
        %2651 = vmatprep.subr.bf16.mxu0 0
        %2652 = vmatpush1.bf16.msra.mxu0 0
        %2653 = vmatprep.subr.bf16.mxu0 0
        %2654 = vmatpush1.bf16.msra.mxu0 0
        %2655 = vmatprep.subr.bf16.mxu0 0
        %2656 = vmatpush1.bf16.msra.mxu0 0
        %2657 = vmatprep.subr.bf16.mxu0 0
        %2658 = vmatpush1.bf16.msra.mxu0 0
        %2659 = vmatprep.subr.bf16.mxu0 0
        %2660 = vmatpush1.bf16.msra.mxu0 0
        %2661 = vmatprep.subr.bf16.mxu0 0
        %2662 = vmatpush1.bf16.msra.mxu0 0
        %2663 = vmatprep.mubr.bf16.mxu0 0
        %2664 = vmatmul.mubr.bf16.gmra.mrb[0].mxu0 %v2629
        %v2665 = vpop.f32.mrb[0].mxu0
        %v2666 = vadd.f32 0.0, %v2665
        %v2667 = vpop.f32.mrb[0].mxu0
        %v2668 = vpop.f32.mrb[0].mxu0
        %v2669 = vpop.f32.mrb[0].mxu0
        %2670 = vdwg.mxu0
        %v2675 = vunpack.c.l.b16 %v1994
        %v2676 = vunpack.c.l.b16 %v1995
        %v2677 = vunpack.c.l.b16 %v1996
        %v2678 = vunpack.c.l.b16 %v1997
        %v2679 = vpack.c.b16 %v2676, %v2675
        %v2680 = vpack.c.b16 %v2678, %v2677
        %v2684 = vsel %vm2022, %v1942, 0
        %2686 = vmatprep.subr.bf16.mxu0 0
        %2687 = vmatpush1.bf16.msra.mxu0 %v2679
        %2688 = vmatprep.subr.bf16.mxu0 0
        %2689 = vmatpush1.bf16.msra.mxu0 %v2680
        %2690 = vmatprep.subr.bf16.mxu0 0
        %2691 = vmatpush1.bf16.msra.mxu0 0
        %2692 = vmatprep.subr.bf16.mxu0 0
        %2693 = vmatpush1.bf16.msra.mxu0 0
        %2694 = vmatprep.subr.bf16.mxu0 0
        %2695 = vmatpush1.bf16.msra.mxu0 0
        %2696 = vmatprep.subr.bf16.mxu0 0
        %2697 = vmatpush1.bf16.msra.mxu0 0
        %2698 = vmatprep.subr.bf16.mxu0 0
        %2699 = vmatpush1.bf16.msra.mxu0 0
        %2700 = vmatprep.subr.bf16.mxu0 0
        %2701 = vmatpush1.bf16.msra.mxu0 0
        %2702 = vmatprep.subr.bf16.mxu0 0
        %2703 = vmatpush1.bf16.msra.mxu0 0
        %2704 = vmatprep.subr.bf16.mxu0 0
        %2705 = vmatpush1.bf16.msra.mxu0 0
        %2706 = vmatprep.subr.bf16.mxu0 0
        %2707 = vmatpush1.bf16.msra.mxu0 0
        %2708 = vmatprep.subr.bf16.mxu0 0
        %2709 = vmatpush1.bf16.msra.mxu0 0
        %2710 = vmatprep.subr.bf16.mxu0 0
        %2711 = vmatpush1.bf16.msra.mxu0 0
        %2712 = vmatprep.subr.bf16.mxu0 0
        %2713 = vmatpush1.bf16.msra.mxu0 0
        %2714 = vmatprep.subr.bf16.mxu0 0
        %2715 = vmatpush1.bf16.msra.mxu0 0
        %2716 = vmatprep.subr.bf16.mxu0 0
        %2717 = vmatpush1.bf16.msra.mxu0 0
        %2718 = vmatprep.mubr.bf16.mxu0 0
        %2719 = vmatmul.mubr.bf16.gmra.mrb[0].mxu0 %v2684
        %v2720 = vpop.f32.mrb[0].mxu0
        %v2721 = vadd.f32 0.0, %v2720
        %v2722 = vpop.f32.mrb[0].mxu0
        %v2723 = vpop.f32.mrb[0].mxu0
        %v2724 = vpop.f32.mrb[0].mxu0
        %2725 = vdwg.mxu0
        %v2730 = vunpack.c.l.b16 %v1998
        %v2731 = vunpack.c.l.b16 %v1999
        %v2732 = vunpack.c.l.b16 %v2000
        %v2733 = vunpack.c.l.b16 %v2001
        %v2734 = vpack.c.b16 %v2731, %v2730
        %v2735 = vpack.c.b16 %v2733, %v2732
        %v2739 = vsel %vm2022, %v1943, 0
        %2741 = vmatprep.subr.bf16.mxu0 0
        %2742 = vmatpush1.bf16.msra.mxu0 %v2734
        %2743 = vmatprep.subr.bf16.mxu0 0
        %2744 = vmatpush1.bf16.msra.mxu0 %v2735
        %2745 = vmatprep.subr.bf16.mxu0 0
        %2746 = vmatpush1.bf16.msra.mxu0 0
        %2747 = vmatprep.subr.bf16.mxu0 0
        %2748 = vmatpush1.bf16.msra.mxu0 0
        %2749 = vmatprep.subr.bf16.mxu0 0
        %2750 = vmatpush1.bf16.msra.mxu0 0
        %2751 = vmatprep.subr.bf16.mxu0 0
        %2752 = vmatpush1.bf16.msra.mxu0 0
        %2753 = vmatprep.subr.bf16.mxu0 0
        %2754 = vmatpush1.bf16.msra.mxu0 0
        %2755 = vmatprep.subr.bf16.mxu0 0
        %2756 = vmatpush1.bf16.msra.mxu0 0
        %2757 = vmatprep.subr.bf16.mxu0 0
        %2758 = vmatpush1.bf16.msra.mxu0 0
        %2759 = vmatprep.subr.bf16.mxu0 0
        %2760 = vmatpush1.bf16.msra.mxu0 0
        %2761 = vmatprep.subr.bf16.mxu0 0
        %2762 = vmatpush1.bf16.msra.mxu0 0
        %2763 = vmatprep.subr.bf16.mxu0 0
        %2764 = vmatpush1.bf16.msra.mxu0 0
        %2765 = vmatprep.subr.bf16.mxu0 0
        %2766 = vmatpush1.bf16.msra.mxu0 0
        %2767 = vmatprep.subr.bf16.mxu0 0
        %2768 = vmatpush1.bf16.msra.mxu0 0
        %2769 = vmatprep.subr.bf16.mxu0 0
        %2770 = vmatpush1.bf16.msra.mxu0 0
        %2771 = vmatprep.subr.bf16.mxu0 0
        %2772 = vmatpush1.bf16.msra.mxu0 0
        %2773 = vmatprep.mubr.bf16.mxu0 0
        %2774 = vmatmul.mubr.bf16.gmra.mrb[0].mxu0 %v2739
        %v2775 = vpop.f32.mrb[0].mxu0
        %v2776 = vadd.f32 0.0, %v2775
        %v2777 = vpop.f32.mrb[0].mxu0
        %v2778 = vpop.f32.mrb[0].mxu0
        %v2779 = vpop.f32.mrb[0].mxu0
        %2780 = vdwg.mxu0
        %v2785 = vunpack.c.l.b16 %v2002
        %v2786 = vunpack.c.l.b16 %v2003
        %v2787 = vunpack.c.l.b16 %v2004
        %v2788 = vunpack.c.l.b16 %v2005
        %v2789 = vpack.c.b16 %v2786, %v2785
        %v2790 = vpack.c.b16 %v2788, %v2787
        %v2794 = vsel %vm2022, %v1944, 0
        %2796 = vmatprep.subr.bf16.mxu0 0
        %2797 = vmatpush1.bf16.msra.mxu0 %v2789
        %2798 = vmatprep.subr.bf16.mxu0 0
        %2799 = vmatpush1.bf16.msra.mxu0 %v2790
        %2800 = vmatprep.subr.bf16.mxu0 0
        %2801 = vmatpush1.bf16.msra.mxu0 0
        %2802 = vmatprep.subr.bf16.mxu0 0
        %2803 = vmatpush1.bf16.msra.mxu0 0
        %2804 = vmatprep.subr.bf16.mxu0 0
        %2805 = vmatpush1.bf16.msra.mxu0 0
        %2806 = vmatprep.subr.bf16.mxu0 0
        %2807 = vmatpush1.bf16.msra.mxu0 0
        %2808 = vmatprep.subr.bf16.mxu0 0
        %2809 = vmatpush1.bf16.msra.mxu0 0
        %2810 = vmatprep.subr.bf16.mxu0 0
        %2811 = vmatpush1.bf16.msra.mxu0 0
        %2812 = vmatprep.subr.bf16.mxu0 0
        %2813 = vmatpush1.bf16.msra.mxu0 0
        %2814 = vmatprep.subr.bf16.mxu0 0
        %2815 = vmatpush1.bf16.msra.mxu0 0
        %2816 = vmatprep.subr.bf16.mxu0 0
        %2817 = vmatpush1.bf16.msra.mxu0 0
        %2818 = vmatprep.subr.bf16.mxu0 0
        %2819 = vmatpush1.bf16.msra.mxu0 0
        %2820 = vmatprep.subr.bf16.mxu0 0
        %2821 = vmatpush1.bf16.msra.mxu0 0
        %2822 = vmatprep.subr.bf16.mxu0 0
        %2823 = vmatpush1.bf16.msra.mxu0 0
        %2824 = vmatprep.subr.bf16.mxu0 0
        %2825 = vmatpush1.bf16.msra.mxu0 0
        %2826 = vmatprep.subr.bf16.mxu0 0
        %2827 = vmatpush1.bf16.msra.mxu0 0
        %2828 = vmatprep.mubr.bf16.mxu0 0
        %2829 = vmatmul.mubr.bf16.gmra.mrb[0].mxu0 %v2794
        %v2830 = vpop.f32.mrb[0].mxu0
        %v2831 = vadd.f32 0.0, %v2830
        %v2832 = vpop.f32.mrb[0].mxu0
        %v2833 = vpop.f32.mrb[0].mxu0
        %v2834 = vpop.f32.mrb[0].mxu0
        %2835 = vdwg.mxu0
        %v2840 = vunpack.c.l.b16 %v2006
        %v2841 = vunpack.c.l.b16 %v2007
        %v2842 = vunpack.c.l.b16 %v2008
        %v2843 = vunpack.c.l.b16 %v2009
        %v2844 = vpack.c.b16 %v2841, %v2840
        %v2845 = vpack.c.b16 %v2843, %v2842
        %v2849 = vsel %vm2022, %v1945, 0
        %2851 = vmatprep.subr.bf16.mxu0 0
        %2852 = vmatpush1.bf16.msra.mxu0 %v2844
        %2853 = vmatprep.subr.bf16.mxu0 0
        %2854 = vmatpush1.bf16.msra.mxu0 %v2845
        %2855 = vmatprep.subr.bf16.mxu0 0
        %2856 = vmatpush1.bf16.msra.mxu0 0
        %2857 = vmatprep.subr.bf16.mxu0 0
        %2858 = vmatpush1.bf16.msra.mxu0 0
        %2859 = vmatprep.subr.bf16.mxu0 0
        %2860 = vmatpush1.bf16.msra.mxu0 0
        %2861 = vmatprep.subr.bf16.mxu0 0
        %2862 = vmatpush1.bf16.msra.mxu0 0
        %2863 = vmatprep.subr.bf16.mxu0 0
        %2864 = vmatpush1.bf16.msra.mxu0 0
        %2865 = vmatprep.subr.bf16.mxu0 0
        %2866 = vmatpush1.bf16.msra.mxu0 0
        %2867 = vmatprep.subr.bf16.mxu0 0
        %2868 = vmatpush1.bf16.msra.mxu0 0
        %2869 = vmatprep.subr.bf16.mxu0 0
        %2870 = vmatpush1.bf16.msra.mxu0 0
        %2871 = vmatprep.subr.bf16.mxu0 0
        %2872 = vmatpush1.bf16.msra.mxu0 0
        %2873 = vmatprep.subr.bf16.mxu0 0
        %2874 = vmatpush1.bf16.msra.mxu0 0
        %2875 = vmatprep.subr.bf16.mxu0 0
        %2876 = vmatpush1.bf16.msra.mxu0 0
        %2877 = vmatprep.subr.bf16.mxu0 0
        %2878 = vmatpush1.bf16.msra.mxu0 0
        %2879 = vmatprep.subr.bf16.mxu0 0
        %2880 = vmatpush1.bf16.msra.mxu0 0
        %2881 = vmatprep.subr.bf16.mxu0 0
        %2882 = vmatpush1.bf16.msra.mxu0 0
        %2883 = vmatprep.mubr.bf16.mxu0 0
        %2884 = vmatmul.mubr.bf16.gmra.mrb[0].mxu0 %v2849
        %v2885 = vpop.f32.mrb[0].mxu0
        %v2886 = vadd.f32 0.0, %v2885
        %v2887 = vpop.f32.mrb[0].mxu0
        %v2888 = vpop.f32.mrb[0].mxu0
        %v2889 = vpop.f32.mrb[0].mxu0
        %2890 = vdwg.mxu0
        %2907 = vrot.lane.b32.xlu0 %v2061, 112
        %v2908 = vpop.permute.xlu0 %2907
        %2909 = vrot.lane.b32.xlu0 %v2116, 112
        %v2910 = vpop.permute.xlu0 %2909
        %2911 = vrot.lane.b32.xlu0 %v2171, 112
        %v2912 = vpop.permute.xlu0 %2911
        %2913 = vrot.lane.b32.xlu0 %v2226, 112
        %v2914 = vpop.permute.xlu0 %2913
        %2915 = vrot.lane.b32.xlu0 %v2281, 112
        %v2916 = vpop.permute.xlu0 %2915
        %2917 = vrot.lane.b32.xlu0 %v2336, 112
        %v2918 = vpop.permute.xlu0 %2917
        %2919 = vrot.lane.b32.xlu0 %v2391, 112
        %v2920 = vpop.permute.xlu0 %2919
        %2921 = vrot.lane.b32.xlu0 %v2446, 112
        %v2922 = vpop.permute.xlu0 %2921
        %2923 = vrot.lane.b32.xlu0 %v2501, 112
        %v2924 = vpop.permute.xlu0 %2923
        %2925 = vrot.lane.b32.xlu0 %v2556, 112
        %v2926 = vpop.permute.xlu0 %2925
        %2927 = vrot.lane.b32.xlu0 %v2611, 112
        %v2928 = vpop.permute.xlu0 %2927
        %2929 = vrot.lane.b32.xlu0 %v2666, 112
        %v2930 = vpop.permute.xlu0 %2929
        %2931 = vrot.lane.b32.xlu0 %v2721, 112
        %v2932 = vpop.permute.xlu0 %2931
        %2933 = vrot.lane.b32.xlu0 %v2776, 112
        %v2934 = vpop.permute.xlu0 %2933
        %2935 = vrot.lane.b32.xlu0 %v2831, 112
        %v2936 = vpop.permute.xlu0 %2935
        %2937 = vrot.lane.b32.xlu0 %v2886, 112
        %v2938 = vpop.permute.xlu0 %2937
        %v2955 = vcombine.low %v2061, %v2171
        %v2956 = vcombine.high %v2061, %v2171
        %v2958 = vunpack.c.l.s4 1983009808
        %v2959 = vunpack.c.0.s8 %v2958
        %v2960 = vlaneseq
        %v2961 = vshrl.u32 %v2960, 7
        %v2962 = vsub.s32 %v2959, %v2961
        %v2963 = vrot.slane %v2955, %v2962
        %v2965 = vunpack.c.l.s4 1983009808
        %v2966 = vunpack.c.0.s8 %v2965
        %v2967 = vlaneseq
        %v2968 = vshrl.u32 %v2967, 7
        %v2969 = vsub.s32 %v2966, %v2968
        %v2970 = vrot.slane %v2956, %v2969
        %v2971 = vcombine.low %v2116, %v2226
        %v2972 = vcombine.high %v2116, %v2226
        %v2974 = vunpack.c.l.s4 1983009808
        %v2975 = vunpack.c.0.s8 %v2974
        %v2976 = vlaneseq
        %v2977 = vshrl.u32 %v2976, 7
        %v2978 = vsub.s32 %v2975, %v2977
        %v2979 = vrot.slane %v2971, %v2978
        %v2981 = vunpack.c.l.s4 1983009808
        %v2982 = vunpack.c.0.s8 %v2981
        %v2983 = vlaneseq
        %v2984 = vshrl.u32 %v2983, 7
        %v2985 = vsub.s32 %v2982, %v2984
        %v2986 = vrot.slane %v2972, %v2985
        %v2987 = vcombine.low %v2281, %v2391
        %v2988 = vcombine.high %v2281, %v2391
        %v2990 = vunpack.c.l.s4 1983009808
        %v2991 = vunpack.c.0.s8 %v2990
        %v2992 = vlaneseq
        %v2993 = vshrl.u32 %v2992, 7
        %v2994 = vsub.s32 %v2991, %v2993
        %v2995 = vrot.slane %v2987, %v2994
        %v2997 = vunpack.c.l.s4 1983009808
        %v2998 = vunpack.c.0.s8 %v2997
        %v2999 = vlaneseq
        %v3000 = vshrl.u32 %v2999, 7
        %v3001 = vsub.s32 %v2998, %v3000
        %v3002 = vrot.slane %v2988, %v3001
        %v3003 = vcombine.low %v2336, %v2446
        %v3004 = vcombine.high %v2336, %v2446
        %v3006 = vunpack.c.l.s4 1983009808
        %v3007 = vunpack.c.0.s8 %v3006
        %v3008 = vlaneseq
        %v3009 = vshrl.u32 %v3008, 7
        %v3010 = vsub.s32 %v3007, %v3009
        %v3011 = vrot.slane %v3003, %v3010
        %v3013 = vunpack.c.l.s4 1983009808
        %v3014 = vunpack.c.0.s8 %v3013
        %v3015 = vlaneseq
        %v3016 = vshrl.u32 %v3015, 7
        %v3017 = vsub.s32 %v3014, %v3016
        %v3018 = vrot.slane %v3004, %v3017
        %v3019 = vcombine.low %v2963, %v2979
        %v3020 = vcombine.high %v2963, %v2979
        %v3022 = vunpack.c.l.s4 1934713408
        %v3023 = vunpack.c.0.s8 %v3022
        %v3024 = vlaneseq
        %v3025 = vshrl.u32 %v3024, 7
        %v3026 = vsub.s32 %v3023, %v3025
        %v3027 = vrot.slane %v3019, %v3026
        %v3029 = vunpack.c.l.s4 1934713408
        %v3030 = vunpack.c.0.s8 %v3029
        %v3031 = vlaneseq
        %v3032 = vshrl.u32 %v3031, 7
        %v3033 = vsub.s32 %v3030, %v3032
        %v3034 = vrot.slane %v3020, %v3033
        %v3035 = vcombine.low %v2970, %v2986
        %v3036 = vcombine.high %v2970, %v2986
        %v3038 = vunpack.c.l.s4 1934713408
        %v3039 = vunpack.c.0.s8 %v3038
        %v3040 = vlaneseq
        %v3041 = vshrl.u32 %v3040, 7
        %v3042 = vsub.s32 %v3039, %v3041
        %v3043 = vrot.slane %v3035, %v3042
        %v3045 = vunpack.c.l.s4 1934713408
        %v3046 = vunpack.c.0.s8 %v3045
        %v3047 = vlaneseq
        %v3048 = vshrl.u32 %v3047, 7
        %v3049 = vsub.s32 %v3046, %v3048
        %v3050 = vrot.slane %v3036, %v3049
        %v3051 = vcombine.low %v2995, %v3011
        %v3052 = vcombine.high %v2995, %v3011
        %v3054 = vunpack.c.l.s4 1934713408
        %v3055 = vunpack.c.0.s8 %v3054
        %v3056 = vlaneseq
        %v3057 = vshrl.u32 %v3056, 7
        %v3058 = vsub.s32 %v3055, %v3057
        %v3059 = vrot.slane %v3051, %v3058
        %v3061 = vunpack.c.l.s4 1934713408
        %v3062 = vunpack.c.0.s8 %v3061
        %v3063 = vlaneseq
        %v3064 = vshrl.u32 %v3063, 7
        %v3065 = vsub.s32 %v3062, %v3064
        %v3066 = vrot.slane %v3052, %v3065
        %v3067 = vcombine.low %v3002, %v3018
        %v3068 = vcombine.high %v3002, %v3018
        %v3070 = vunpack.c.l.s4 1934713408
        %v3071 = vunpack.c.0.s8 %v3070
        %v3072 = vlaneseq
        %v3073 = vshrl.u32 %v3072, 7
        %v3074 = vsub.s32 %v3071, %v3073
        %v3075 = vrot.slane %v3067, %v3074
        %v3077 = vunpack.c.l.s4 1934713408
        %v3078 = vunpack.c.0.s8 %v3077
        %v3079 = vlaneseq
        %v3080 = vshrl.u32 %v3079, 7
        %v3081 = vsub.s32 %v3078, %v3080
        %v3082 = vrot.slane %v3068, %v3081
        %v3083 = vcombine.low %v3027, %v3059
        %v3084 = vcombine.high %v3027, %v3059
        %v3085 = vcombine.low %v3034, %v3066
        %v3086 = vcombine.high %v3034, %v3066
        %v3087 = vcombine.low %v3043, %v3075
        %v3088 = vcombine.high %v3043, %v3075
        %v3089 = vcombine.low %v3050, %v3082
        %v3090 = vcombine.high %v3050, %v3082
        %v3091 = vcombine.low %v2501, %v2611
        %v3092 = vcombine.high %v2501, %v2611
        %v3094 = vunpack.c.l.s4 1983009808
        %v3095 = vunpack.c.0.s8 %v3094
        %v3096 = vlaneseq
        %v3097 = vshrl.u32 %v3096, 7
        %v3098 = vsub.s32 %v3095, %v3097
        %v3099 = vrot.slane %v3091, %v3098
        %v3101 = vunpack.c.l.s4 1983009808
        %v3102 = vunpack.c.0.s8 %v3101
        %v3103 = vlaneseq
        %v3104 = vshrl.u32 %v3103, 7
        %v3105 = vsub.s32 %v3102, %v3104
        %v3106 = vrot.slane %v3092, %v3105
        %v3107 = vcombine.low %v2556, %v2666
        %v3108 = vcombine.high %v2556, %v2666
        %v3110 = vunpack.c.l.s4 1983009808
        %v3111 = vunpack.c.0.s8 %v3110
        %v3112 = vlaneseq
        %v3113 = vshrl.u32 %v3112, 7
        %v3114 = vsub.s32 %v3111, %v3113
        %v3115 = vrot.slane %v3107, %v3114
        %v3117 = vunpack.c.l.s4 1983009808
        %v3118 = vunpack.c.0.s8 %v3117
        %v3119 = vlaneseq
        %v3120 = vshrl.u32 %v3119, 7
        %v3121 = vsub.s32 %v3118, %v3120
        %v3122 = vrot.slane %v3108, %v3121
        %v3123 = vcombine.low %v2721, %v2831
        %v3124 = vcombine.high %v2721, %v2831
        %v3126 = vunpack.c.l.s4 1983009808
        %v3127 = vunpack.c.0.s8 %v3126
        %v3128 = vlaneseq
        %v3129 = vshrl.u32 %v3128, 7
        %v3130 = vsub.s32 %v3127, %v3129
        %v3131 = vrot.slane %v3123, %v3130
        %v3133 = vunpack.c.l.s4 1983009808
        %v3134 = vunpack.c.0.s8 %v3133
        %v3135 = vlaneseq
        %v3136 = vshrl.u32 %v3135, 7
        %v3137 = vsub.s32 %v3134, %v3136
        %v3138 = vrot.slane %v3124, %v3137
        %v3139 = vcombine.low %v2776, %v2886
        %v3140 = vcombine.high %v2776, %v2886
        %v3142 = vunpack.c.l.s4 1983009808
        %v3143 = vunpack.c.0.s8 %v3142
        %v3144 = vlaneseq
        %v3145 = vshrl.u32 %v3144, 7
        %v3146 = vsub.s32 %v3143, %v3145
        %v3147 = vrot.slane %v3139, %v3146
        %v3149 = vunpack.c.l.s4 1983009808
        %v3150 = vunpack.c.0.s8 %v3149
        %v3151 = vlaneseq
        %v3152 = vshrl.u32 %v3151, 7
        %v3153 = vsub.s32 %v3150, %v3152
        %v3154 = vrot.slane %v3140, %v3153
        %v3155 = vcombine.low %v3099, %v3115
        %v3156 = vcombine.high %v3099, %v3115
        %v3158 = vunpack.c.l.s4 1934713408
        %v3159 = vunpack.c.0.s8 %v3158
        %v3160 = vlaneseq
        %v3161 = vshrl.u32 %v3160, 7
        %v3162 = vsub.s32 %v3159, %v3161
        %v3163 = vrot.slane %v3155, %v3162
        %v3165 = vunpack.c.l.s4 1934713408
        %v3166 = vunpack.c.0.s8 %v3165
        %v3167 = vlaneseq
        %v3168 = vshrl.u32 %v3167, 7
        %v3169 = vsub.s32 %v3166, %v3168
        %v3170 = vrot.slane %v3156, %v3169
        %v3171 = vcombine.low %v3106, %v3122
        %v3172 = vcombine.high %v3106, %v3122
        %v3174 = vunpack.c.l.s4 1934713408
        %v3175 = vunpack.c.0.s8 %v3174
        %v3176 = vlaneseq
        %v3177 = vshrl.u32 %v3176, 7
        %v3178 = vsub.s32 %v3175, %v3177
        %v3179 = vrot.slane %v3171, %v3178
        %v3181 = vunpack.c.l.s4 1934713408
        %v3182 = vunpack.c.0.s8 %v3181
        %v3183 = vlaneseq
        %v3184 = vshrl.u32 %v3183, 7
        %v3185 = vsub.s32 %v3182, %v3184
        %v3186 = vrot.slane %v3172, %v3185
        %v3187 = vcombine.low %v3131, %v3147
        %v3188 = vcombine.high %v3131, %v3147
        %v3190 = vunpack.c.l.s4 1934713408
        %v3191 = vunpack.c.0.s8 %v3190
        %v3192 = vlaneseq
        %v3193 = vshrl.u32 %v3192, 7
        %v3194 = vsub.s32 %v3191, %v3193
        %v3195 = vrot.slane %v3187, %v3194
        %v3197 = vunpack.c.l.s4 1934713408
        %v3198 = vunpack.c.0.s8 %v3197
        %v3199 = vlaneseq
        %v3200 = vshrl.u32 %v3199, 7
        %v3201 = vsub.s32 %v3198, %v3200
        %v3202 = vrot.slane %v3188, %v3201
        %v3203 = vcombine.low %v3138, %v3154
        %v3204 = vcombine.high %v3138, %v3154
        %v3206 = vunpack.c.l.s4 1934713408
        %v3207 = vunpack.c.0.s8 %v3206
        %v3208 = vlaneseq
        %v3209 = vshrl.u32 %v3208, 7
        %v3210 = vsub.s32 %v3207, %v3209
        %v3211 = vrot.slane %v3203, %v3210
        %v3213 = vunpack.c.l.s4 1934713408
        %v3214 = vunpack.c.0.s8 %v3213
        %v3215 = vlaneseq
        %v3216 = vshrl.u32 %v3215, 7
        %v3217 = vsub.s32 %v3214, %v3216
        %v3218 = vrot.slane %v3204, %v3217
        %v3219 = vcombine.low %v3163, %v3195
        %v3220 = vcombine.high %v3163, %v3195
        %v3221 = vcombine.low %v3170, %v3202
        %v3222 = vcombine.high %v3170, %v3202
        %v3223 = vcombine.low %v3179, %v3211
        %v3224 = vcombine.high %v3179, %v3211
        %v3225 = vcombine.low %v3186, %v3218
        %v3226 = vcombine.high %v3186, %v3218
        %v3227 = vcombine.low %v2908, %v2912
        %v3228 = vcombine.high %v2908, %v2912
        %v3230 = vunpack.c.l.s4 1983009808
        %v3231 = vunpack.c.0.s8 %v3230
        %v3232 = vlaneseq
        %v3233 = vshrl.u32 %v3232, 7
        %v3234 = vsub.s32 %v3231, %v3233
        %v3235 = vrot.slane %v3227, %v3234
        %v3237 = vunpack.c.l.s4 1983009808
        %v3238 = vunpack.c.0.s8 %v3237
        %v3239 = vlaneseq
        %v3240 = vshrl.u32 %v3239, 7
        %v3241 = vsub.s32 %v3238, %v3240
        %v3242 = vrot.slane %v3228, %v3241
        %v3243 = vcombine.low %v2910, %v2914
        %v3244 = vcombine.high %v2910, %v2914
        %v3246 = vunpack.c.l.s4 1983009808
        %v3247 = vunpack.c.0.s8 %v3246
        %v3248 = vlaneseq
        %v3249 = vshrl.u32 %v3248, 7
        %v3250 = vsub.s32 %v3247, %v3249
        %v3251 = vrot.slane %v3243, %v3250
        %v3253 = vunpack.c.l.s4 1983009808
        %v3254 = vunpack.c.0.s8 %v3253
        %v3255 = vlaneseq
        %v3256 = vshrl.u32 %v3255, 7
        %v3257 = vsub.s32 %v3254, %v3256
        %v3258 = vrot.slane %v3244, %v3257
        %v3259 = vcombine.low %v2916, %v2920
        %v3260 = vcombine.high %v2916, %v2920
        %v3262 = vunpack.c.l.s4 1983009808
        %v3263 = vunpack.c.0.s8 %v3262
        %v3264 = vlaneseq
        %v3265 = vshrl.u32 %v3264, 7
        %v3266 = vsub.s32 %v3263, %v3265
        %v3267 = vrot.slane %v3259, %v3266
        %v3269 = vunpack.c.l.s4 1983009808
        %v3270 = vunpack.c.0.s8 %v3269
        %v3271 = vlaneseq
        %v3272 = vshrl.u32 %v3271, 7
        %v3273 = vsub.s32 %v3270, %v3272
        %v3274 = vrot.slane %v3260, %v3273
        %v3275 = vcombine.low %v2918, %v2922
        %v3276 = vcombine.high %v2918, %v2922
        %v3278 = vunpack.c.l.s4 1983009808
        %v3279 = vunpack.c.0.s8 %v3278
        %v3280 = vlaneseq
        %v3281 = vshrl.u32 %v3280, 7
        %v3282 = vsub.s32 %v3279, %v3281
        %v3283 = vrot.slane %v3275, %v3282
        %v3285 = vunpack.c.l.s4 1983009808
        %v3286 = vunpack.c.0.s8 %v3285
        %v3287 = vlaneseq
        %v3288 = vshrl.u32 %v3287, 7
        %v3289 = vsub.s32 %v3286, %v3288
        %v3290 = vrot.slane %v3276, %v3289
        %v3291 = vcombine.low %v3235, %v3251
        %v3292 = vcombine.high %v3235, %v3251
        %v3294 = vunpack.c.l.s4 1934713408
        %v3295 = vunpack.c.0.s8 %v3294
        %v3296 = vlaneseq
        %v3297 = vshrl.u32 %v3296, 7
        %v3298 = vsub.s32 %v3295, %v3297
        %v3299 = vrot.slane %v3291, %v3298
        %v3301 = vunpack.c.l.s4 1934713408
        %v3302 = vunpack.c.0.s8 %v3301
        %v3303 = vlaneseq
        %v3304 = vshrl.u32 %v3303, 7
        %v3305 = vsub.s32 %v3302, %v3304
        %v3306 = vrot.slane %v3292, %v3305
        %v3307 = vcombine.low %v3242, %v3258
        %v3308 = vcombine.high %v3242, %v3258
        %v3310 = vunpack.c.l.s4 1934713408
        %v3311 = vunpack.c.0.s8 %v3310
        %v3312 = vlaneseq
        %v3313 = vshrl.u32 %v3312, 7
        %v3314 = vsub.s32 %v3311, %v3313
        %v3315 = vrot.slane %v3307, %v3314
        %v3317 = vunpack.c.l.s4 1934713408
        %v3318 = vunpack.c.0.s8 %v3317
        %v3319 = vlaneseq
        %v3320 = vshrl.u32 %v3319, 7
        %v3321 = vsub.s32 %v3318, %v3320
        %v3322 = vrot.slane %v3308, %v3321
        %v3323 = vcombine.low %v3267, %v3283
        %v3324 = vcombine.high %v3267, %v3283
        %v3326 = vunpack.c.l.s4 1934713408
        %v3327 = vunpack.c.0.s8 %v3326
        %v3328 = vlaneseq
        %v3329 = vshrl.u32 %v3328, 7
        %v3330 = vsub.s32 %v3327, %v3329
        %v3331 = vrot.slane %v3323, %v3330
        %v3333 = vunpack.c.l.s4 1934713408
        %v3334 = vunpack.c.0.s8 %v3333
        %v3335 = vlaneseq
        %v3336 = vshrl.u32 %v3335, 7
        %v3337 = vsub.s32 %v3334, %v3336
        %v3338 = vrot.slane %v3324, %v3337
        %v3339 = vcombine.low %v3274, %v3290
        %v3340 = vcombine.high %v3274, %v3290
        %v3342 = vunpack.c.l.s4 1934713408
        %v3343 = vunpack.c.0.s8 %v3342
        %v3344 = vlaneseq
        %v3345 = vshrl.u32 %v3344, 7
        %v3346 = vsub.s32 %v3343, %v3345
        %v3347 = vrot.slane %v3339, %v3346
        %v3349 = vunpack.c.l.s4 1934713408
        %v3350 = vunpack.c.0.s8 %v3349
        %v3351 = vlaneseq
        %v3352 = vshrl.u32 %v3351, 7
        %v3353 = vsub.s32 %v3350, %v3352
        %v3354 = vrot.slane %v3340, %v3353
        %v3355 = vcombine.low %v3299, %v3331
        %v3356 = vcombine.high %v3299, %v3331
        %v3357 = vcombine.low %v3306, %v3338
        %v3358 = vcombine.high %v3306, %v3338
        %v3359 = vcombine.low %v3315, %v3347
        %v3360 = vcombine.high %v3315, %v3347
        %v3361 = vcombine.low %v3322, %v3354
        %v3362 = vcombine.high %v3322, %v3354
        %v3363 = vcombine.low %v2924, %v2928
        %v3364 = vcombine.high %v2924, %v2928
        %v3366 = vunpack.c.l.s4 1983009808
        %v3367 = vunpack.c.0.s8 %v3366
        %v3368 = vlaneseq
        %v3369 = vshrl.u32 %v3368, 7
        %v3370 = vsub.s32 %v3367, %v3369
        %v3371 = vrot.slane %v3363, %v3370
        %v3373 = vunpack.c.l.s4 1983009808
        %v3374 = vunpack.c.0.s8 %v3373
        %v3375 = vlaneseq
        %v3376 = vshrl.u32 %v3375, 7
        %v3377 = vsub.s32 %v3374, %v3376
        %v3378 = vrot.slane %v3364, %v3377
        %v3379 = vcombine.low %v2926, %v2930
        %v3380 = vcombine.high %v2926, %v2930
        %v3382 = vunpack.c.l.s4 1983009808
        %v3383 = vunpack.c.0.s8 %v3382
        %v3384 = vlaneseq
        %v3385 = vshrl.u32 %v3384, 7
        %v3386 = vsub.s32 %v3383, %v3385
        %v3387 = vrot.slane %v3379, %v3386
        %v3389 = vunpack.c.l.s4 1983009808
        %v3390 = vunpack.c.0.s8 %v3389
        %v3391 = vlaneseq
        %v3392 = vshrl.u32 %v3391, 7
        %v3393 = vsub.s32 %v3390, %v3392
        %v3394 = vrot.slane %v3380, %v3393
        %v3395 = vcombine.low %v2932, %v2936
        %v3396 = vcombine.high %v2932, %v2936
        %v3398 = vunpack.c.l.s4 1983009808
        %v3399 = vunpack.c.0.s8 %v3398
        %v3400 = vlaneseq
        %v3401 = vshrl.u32 %v3400, 7
        %v3402 = vsub.s32 %v3399, %v3401
        %v3403 = vrot.slane %v3395, %v3402
        %v3405 = vunpack.c.l.s4 1983009808
        %v3406 = vunpack.c.0.s8 %v3405
        %v3407 = vlaneseq
        %v3408 = vshrl.u32 %v3407, 7
        %v3409 = vsub.s32 %v3406, %v3408
        %v3410 = vrot.slane %v3396, %v3409
        %v3411 = vcombine.low %v2934, %v2938
        %v3412 = vcombine.high %v2934, %v2938
        %v3414 = vunpack.c.l.s4 1983009808
        %v3415 = vunpack.c.0.s8 %v3414
        %v3416 = vlaneseq
        %v3417 = vshrl.u32 %v3416, 7
        %v3418 = vsub.s32 %v3415, %v3417
        %v3419 = vrot.slane %v3411, %v3418
        %v3421 = vunpack.c.l.s4 1983009808
        %v3422 = vunpack.c.0.s8 %v3421
        %v3423 = vlaneseq
        %v3424 = vshrl.u32 %v3423, 7
        %v3425 = vsub.s32 %v3422, %v3424
        %v3426 = vrot.slane %v3412, %v3425
        %v3427 = vcombine.low %v3371, %v3387
        %v3428 = vcombine.high %v3371, %v3387
        %v3430 = vunpack.c.l.s4 1934713408
        %v3431 = vunpack.c.0.s8 %v3430
        %v3432 = vlaneseq
        %v3433 = vshrl.u32 %v3432, 7
        %v3434 = vsub.s32 %v3431, %v3433
        %v3435 = vrot.slane %v3427, %v3434
        %v3437 = vunpack.c.l.s4 1934713408
        %v3438 = vunpack.c.0.s8 %v3437
        %v3439 = vlaneseq
        %v3440 = vshrl.u32 %v3439, 7
        %v3441 = vsub.s32 %v3438, %v3440
        %v3442 = vrot.slane %v3428, %v3441
        %v3443 = vcombine.low %v3378, %v3394
        %v3444 = vcombine.high %v3378, %v3394
        %v3446 = vunpack.c.l.s4 1934713408
        %v3447 = vunpack.c.0.s8 %v3446
        %v3448 = vlaneseq
        %v3449 = vshrl.u32 %v3448, 7
        %v3450 = vsub.s32 %v3447, %v3449
        %v3451 = vrot.slane %v3443, %v3450
        %v3453 = vunpack.c.l.s4 1934713408
        %v3454 = vunpack.c.0.s8 %v3453
        %v3455 = vlaneseq
        %v3456 = vshrl.u32 %v3455, 7
        %v3457 = vsub.s32 %v3454, %v3456
        %v3458 = vrot.slane %v3444, %v3457
        %v3459 = vcombine.low %v3403, %v3419
        %v3460 = vcombine.high %v3403, %v3419
        %v3462 = vunpack.c.l.s4 1934713408
        %v3463 = vunpack.c.0.s8 %v3462
        %v3464 = vlaneseq
        %v3465 = vshrl.u32 %v3464, 7
        %v3466 = vsub.s32 %v3463, %v3465
        %v3467 = vrot.slane %v3459, %v3466
        %v3469 = vunpack.c.l.s4 1934713408
        %v3470 = vunpack.c.0.s8 %v3469
        %v3471 = vlaneseq
        %v3472 = vshrl.u32 %v3471, 7
        %v3473 = vsub.s32 %v3470, %v3472
        %v3474 = vrot.slane %v3460, %v3473
        %v3475 = vcombine.low %v3410, %v3426
        %v3476 = vcombine.high %v3410, %v3426
        %v3478 = vunpack.c.l.s4 1934713408
        %v3479 = vunpack.c.0.s8 %v3478
        %v3480 = vlaneseq
        %v3481 = vshrl.u32 %v3480, 7
        %v3482 = vsub.s32 %v3479, %v3481
        %v3483 = vrot.slane %v3475, %v3482
        %v3485 = vunpack.c.l.s4 1934713408
        %v3486 = vunpack.c.0.s8 %v3485
        %v3487 = vlaneseq
        %v3488 = vshrl.u32 %v3487, 7
        %v3489 = vsub.s32 %v3486, %v3488
        %v3490 = vrot.slane %v3476, %v3489
        %v3491 = vcombine.low %v3435, %v3467
        %v3492 = vcombine.high %v3435, %v3467
        %v3493 = vcombine.low %v3442, %v3474
        %v3494 = vcombine.high %v3442, %v3474
        %v3495 = vcombine.low %v3451, %v3483
        %v3496 = vcombine.high %v3451, %v3483
        %v3497 = vcombine.low %v3458, %v3490
        %v3498 = vcombine.high %v3458, %v3490
        %3503 = vrot.lane.b32.xlu0 %v3084, 16
        %v3504 = vpop.permute.xlu0 %3503
        %3505 = vrot.lane.b32.xlu0 %v3220, 16
        %v3506 = vpop.permute.xlu0 %3505
        %3507 = vrot.lane.b32.xlu0 %v3356, 16
        %v3508 = vpop.permute.xlu0 %3507
        %3509 = vrot.lane.b32.xlu0 %v3492, 16
        %v3510 = vpop.permute.xlu0 %3509
        %3519 = vrot.lane.b32.xlu0 %v3085, 32
        %v3520 = vpop.permute.xlu0 %3519
        %3521 = vrot.lane.b32.xlu0 %v3221, 32
        %v3522 = vpop.permute.xlu0 %3521
        %3523 = vrot.lane.b32.xlu0 %v3357, 32
        %v3524 = vpop.permute.xlu0 %3523
        %3525 = vrot.lane.b32.xlu0 %v3493, 32
        %v3526 = vpop.permute.xlu0 %3525
        %3535 = vrot.lane.b32.xlu0 %v3086, 48
        %v3536 = vpop.permute.xlu0 %3535
        %3537 = vrot.lane.b32.xlu0 %v3222, 48
        %v3538 = vpop.permute.xlu0 %3537
        %3539 = vrot.lane.b32.xlu0 %v3358, 48
        %v3540 = vpop.permute.xlu0 %3539
        %3541 = vrot.lane.b32.xlu0 %v3494, 48
        %v3542 = vpop.permute.xlu0 %3541
        %3551 = vrot.lane.b32.xlu0 %v3087, 64
        %v3552 = vpop.permute.xlu0 %3551
        %3553 = vrot.lane.b32.xlu0 %v3223, 64
        %v3554 = vpop.permute.xlu0 %3553
        %3555 = vrot.lane.b32.xlu0 %v3359, 64
        %v3556 = vpop.permute.xlu0 %3555
        %3557 = vrot.lane.b32.xlu0 %v3495, 64
        %v3558 = vpop.permute.xlu0 %3557
        %3567 = vrot.lane.b32.xlu0 %v3088, 80
        %v3568 = vpop.permute.xlu0 %3567
        %3569 = vrot.lane.b32.xlu0 %v3224, 80
        %v3570 = vpop.permute.xlu0 %3569
        %3571 = vrot.lane.b32.xlu0 %v3360, 80
        %v3572 = vpop.permute.xlu0 %3571
        %3573 = vrot.lane.b32.xlu0 %v3496, 80
        %v3574 = vpop.permute.xlu0 %3573
        %3583 = vrot.lane.b32.xlu0 %v3089, 96
        %v3584 = vpop.permute.xlu0 %3583
        %3585 = vrot.lane.b32.xlu0 %v3225, 96
        %v3586 = vpop.permute.xlu0 %3585
        %3587 = vrot.lane.b32.xlu0 %v3361, 96
        %v3588 = vpop.permute.xlu0 %3587
        %3589 = vrot.lane.b32.xlu0 %v3497, 96
        %v3590 = vpop.permute.xlu0 %3589
        %3599 = vrot.lane.b32.xlu0 %v3090, 112
        %v3600 = vpop.permute.xlu0 %3599
        %3601 = vrot.lane.b32.xlu0 %v3226, 112
        %v3602 = vpop.permute.xlu0 %3601
        %3603 = vrot.lane.b32.xlu0 %v3362, 112
        %v3604 = vpop.permute.xlu0 %3603
        %3605 = vrot.lane.b32.xlu0 %v3498, 112
        %v3606 = vpop.permute.xlu0 %3605
        %v3611 = vsel %vm1913, %v3083, %v3504
        %v3612 = vsel %vm1913, %v3219, %v3506
        %v3613 = vsel %vm1913, %v3355, %v3508
        %v3614 = vsel %vm1913, %v3491, %v3510
        %v3615 = vsel %vm2022, %v3611, %v3520
        %v3616 = vsel %vm2022, %v3612, %v3522
        %v3617 = vsel %vm2022, %v3613, %v3524
        %v3618 = vsel %vm2022, %v3614, %v3526
        %vm3619 = vcmask 392192
        %v3620 = vsel %vm3619, %v3615, %v3536
        %v3621 = vsel %vm3619, %v3616, %v3538
        %v3622 = vsel %vm3619, %v3617, %v3540
        %v3623 = vsel %vm3619, %v3618, %v3542
        %vm3624 = vcmask 523264
        %v3625 = vsel %vm3624, %v3620, %v3552
        %v3626 = vsel %vm3624, %v3621, %v3554
        %v3627 = vsel %vm3624, %v3622, %v3556
        %v3628 = vsel %vm3624, %v3623, %v3558
        %vm3629 = vcmask 654336
        %v3630 = vsel %vm3629, %v3625, %v3568
        %v3631 = vsel %vm3629, %v3626, %v3570
        %v3632 = vsel %vm3629, %v3627, %v3572
        %v3633 = vsel %vm3629, %v3628, %v3574
        %vm3634 = vcmask 785408
        %v3635 = vsel %vm3634, %v3630, %v3584
        %v3636 = vsel %vm3634, %v3631, %v3586
        %v3637 = vsel %vm3634, %v3632, %v3588
        %v3638 = vsel %vm3634, %v3633, %v3590
        %vm3639 = vcmask 916480
        %v3640 = vsel %vm3639, %v3635, %v3600
        %v3641 = vsel %vm3639, %v3636, %v3602
        %v3642 = vsel %vm3639, %v3637, %v3604
        %v3643 = vsel %vm3639, %v3638, %v3606
        %v3644 = vpack.c.bf16 %v3641, %v3640
        %v3645 = vpack.c.bf16 %v3643, %v3642
        %v3662 = vunpack.c.l.b16 %v1132
        %v3663 = vunpack.c.l.b16 %v1133
        %v3664 = vunpack.c.l.b16 %v1134
        %v3665 = vunpack.c.l.b16 %v1135
        %v3666 = vunpack.c.l.b16 %v1136
        %v3667 = vunpack.c.l.b16 %v1137
        %v3668 = vunpack.c.l.b16 %v1138
        %v3669 = vunpack.c.l.b16 %v1139
        %v3670 = vunpack.c.l.b16 %v1140
        %v3671 = vunpack.c.l.b16 %v1141
        %v3672 = vunpack.c.l.b16 %v1142
        %v3673 = vunpack.c.l.b16 %v1143
        %v3674 = vunpack.c.l.b16 %v1144
        %v3675 = vunpack.c.l.b16 %v1145
        %v3676 = vunpack.c.l.b16 %v1146
        %v3677 = vunpack.c.l.b16 %v1147
        %v3678 = vpack.c.b16 %v3663, %v3662
        %v3679 = vpack.c.b16 %v3665, %v3664
        %v3680 = vpack.c.b16 %v3667, %v3666
        %v3681 = vpack.c.b16 %v3669, %v3668
        %v3682 = vpack.c.b16 %v3671, %v3670
        %v3683 = vpack.c.b16 %v3673, %v3672
        %v3684 = vpack.c.b16 %v3675, %v3674
        %v3685 = vpack.c.b16 %v3677, %v3676
        %v3687 = vsel %vm2022, %v3678, 0
        %v3690 = vsel %vm2022, %v3679, 0
        %v3693 = vsel %vm2022, %v3680, 0
        %v3696 = vsel %vm2022, %v3681, 0
        %v3699 = vsel %vm2022, %v3682, 0
        %v3702 = vsel %vm2022, %v3683, 0
        %v3705 = vsel %vm2022, %v3684, 0
        %v3708 = vsel %vm2022, %v3685, 0
        %3710 = vmatprep.subr.bf16.mxu0 0
        %3711 = vmatpush1.bf16.msra.mxu0 %v3644
        %3712 = vmatprep.subr.bf16.mxu0 0
        %3713 = vmatpush1.bf16.msra.mxu0 %v3645
        %3714 = vmatprep.subr.bf16.mxu0 0
        %3715 = vmatpush1.bf16.msra.mxu0 0
        %3716 = vmatprep.subr.bf16.mxu0 0
        %3717 = vmatpush1.bf16.msra.mxu0 0
        %3718 = vmatprep.subr.bf16.mxu0 0
        %3719 = vmatpush1.bf16.msra.mxu0 0
        %3720 = vmatprep.subr.bf16.mxu0 0
        %3721 = vmatpush1.bf16.msra.mxu0 0
        %3722 = vmatprep.subr.bf16.mxu0 0
        %3723 = vmatpush1.bf16.msra.mxu0 0
        %3724 = vmatprep.subr.bf16.mxu0 0
        %3725 = vmatpush1.bf16.msra.mxu0 0
        %3726 = vmatprep.subr.bf16.mxu0 0
        %3727 = vmatpush1.bf16.msra.mxu0 0
        %3728 = vmatprep.subr.bf16.mxu0 0
        %3729 = vmatpush1.bf16.msra.mxu0 0
        %3730 = vmatprep.subr.bf16.mxu0 0
        %3731 = vmatpush1.bf16.msra.mxu0 0
        %3732 = vmatprep.subr.bf16.mxu0 0
        %3733 = vmatpush1.bf16.msra.mxu0 0
        %3734 = vmatprep.subr.bf16.mxu0 0
        %3735 = vmatpush1.bf16.msra.mxu0 0
        %3736 = vmatprep.subr.bf16.mxu0 0
        %3737 = vmatpush1.bf16.msra.mxu0 0
        %3738 = vmatprep.subr.bf16.mxu0 0
        %3739 = vmatpush1.bf16.msra.mxu0 0
        %3740 = vmatprep.subr.bf16.mxu0 0
        %3741 = vmatpush1.bf16.msra.mxu0 0
        %3742 = vmatprep.mubr.bf16.mxu0 0
        %3743 = vmatmul.mubr.bf16.gmra.mrb[0].mxu0 %v3687
        %v3744 = vpop.f32.mrb[0].mxu0
        %v3745 = vadd.f32 0.0, %v3744
        %v3746 = vpop.f32.mrb[0].mxu0
        %v3747 = vpop.f32.mrb[0].mxu0
        %v3748 = vadd.f32 0.0, %v3747
        %v3749 = vpop.f32.mrb[0].mxu0
        %3750 = vmatprep.mubr.bf16.mxu0 0
        %3751 = vmatmul.mubr.bf16.gmra.mrb[0].mxu0 %v3690
        %v3752 = vpop.f32.mrb[0].mxu0
        %v3753 = vadd.f32 0.0, %v3752
        %v3754 = vpop.f32.mrb[0].mxu0
        %v3755 = vpop.f32.mrb[0].mxu0
        %v3756 = vadd.f32 0.0, %v3755
        %v3757 = vpop.f32.mrb[0].mxu0
        %3758 = vmatprep.mubr.bf16.mxu0 0
        %3759 = vmatmul.mubr.bf16.gmra.mrb[0].mxu0 %v3693
        %v3760 = vpop.f32.mrb[0].mxu0
        %v3761 = vadd.f32 0.0, %v3760
        %v3762 = vpop.f32.mrb[0].mxu0
        %v3763 = vpop.f32.mrb[0].mxu0
        %v3764 = vadd.f32 0.0, %v3763
        %v3765 = vpop.f32.mrb[0].mxu0
        %3766 = vmatprep.mubr.bf16.mxu0 0
        %3767 = vmatmul.mubr.bf16.gmra.mrb[0].mxu0 %v3696
        %v3768 = vpop.f32.mrb[0].mxu0
        %v3769 = vadd.f32 0.0, %v3768
        %v3770 = vpop.f32.mrb[0].mxu0
        %v3771 = vpop.f32.mrb[0].mxu0
        %v3772 = vadd.f32 0.0, %v3771
        %v3773 = vpop.f32.mrb[0].mxu0
        %3774 = vmatprep.mubr.bf16.mxu0 0
        %3775 = vmatmul.mubr.bf16.gmra.mrb[0].mxu0 %v3699
        %v3776 = vpop.f32.mrb[0].mxu0
        %v3777 = vadd.f32 0.0, %v3776
        %v3778 = vpop.f32.mrb[0].mxu0
        %v3779 = vpop.f32.mrb[0].mxu0
        %v3780 = vadd.f32 0.0, %v3779
        %v3781 = vpop.f32.mrb[0].mxu0
        %3782 = vmatprep.mubr.bf16.mxu0 0
        %3783 = vmatmul.mubr.bf16.gmra.mrb[0].mxu0 %v3702
        %v3784 = vpop.f32.mrb[0].mxu0
        %v3785 = vadd.f32 0.0, %v3784
        %v3786 = vpop.f32.mrb[0].mxu0
        %v3787 = vpop.f32.mrb[0].mxu0
        %v3788 = vadd.f32 0.0, %v3787
        %v3789 = vpop.f32.mrb[0].mxu0
        %3790 = vmatprep.mubr.bf16.mxu0 0
        %3791 = vmatmul.mubr.bf16.gmra.mrb[0].mxu0 %v3705
        %v3792 = vpop.f32.mrb[0].mxu0
        %v3793 = vadd.f32 0.0, %v3792
        %v3794 = vpop.f32.mrb[0].mxu0
        %v3795 = vpop.f32.mrb[0].mxu0
        %v3796 = vadd.f32 0.0, %v3795
        %v3797 = vpop.f32.mrb[0].mxu0
        %3798 = vmatprep.mubr.bf16.mxu0 0
        %3799 = vmatmul.mubr.bf16.gmra.mrb[0].mxu0 %v3708
        %v3800 = vpop.f32.mrb[0].mxu0
        %v3801 = vadd.f32 0.0, %v3800
        %v3802 = vpop.f32.mrb[0].mxu0
        %v3803 = vpop.f32.mrb[0].mxu0
        %v3804 = vadd.f32 0.0, %v3803
        %v3805 = vpop.f32.mrb[0].mxu0
        %3806 = vdwg.mxu0
        %v3807 = vld [vmem:[%s6] sm:$0xf]
        %v3808 = vld [vmem:[%s6 + $0x4] sm:$0xf]
        %v3809 = vld [vmem:[%s6 + $0x8] sm:$0xf]
        %v3810 = vld [vmem:[%s6 + $0xc] sm:$0xf]
        %v3811 = vld [vmem:[%s6 + $0x10] sm:$0xf]
        %v3812 = vld [vmem:[%s6 + $0x14] sm:$0xf]
        %v3813 = vld [vmem:[%s6 + $0x18] sm:$0xf]
        %v3814 = vld [vmem:[%s6 + $0x1c] sm:$0xf]
        %v3815 = vld [vmem:[%s6 + $0x20] sm:$0xf]
        %v3816 = vld [vmem:[%s6 + $0x24] sm:$0xf]
        %v3817 = vld [vmem:[%s6 + $0x28] sm:$0xf]
        %v3818 = vld [vmem:[%s6 + $0x2c] sm:$0xf]
        %v3819 = vld [vmem:[%s6 + $0x30] sm:$0xf]
        %v3820 = vld [vmem:[%s6 + $0x34] sm:$0xf]
        %v3821 = vld [vmem:[%s6 + $0x38] sm:$0xf]
        %v3822 = vld [vmem:[%s6 + $0x3c] sm:$0xf]
        %v3823 = vld [vmem:[#allocation7] sm:$0x1]
        %v3825 = vlaneseq
        %v3826 = vshrl.u32 %v3825, 7
        %v3827 = vsub.s32 0, %v3826
        %v3828 = vrot.slane %v3823, %v3827
        %v3846 = vunpack.c.l.b16 %v3807
        %v3847 = vunpack.c.l.b16 %v3808
        %v3848 = vunpack.c.l.b16 %v3809
        %v3849 = vunpack.c.l.b16 %v3810
        %v3850 = vunpack.c.l.b16 %v3811
        %v3851 = vunpack.c.l.b16 %v3812
        %v3852 = vunpack.c.l.b16 %v3813
        %v3853 = vunpack.c.l.b16 %v3814
        %v3854 = vunpack.c.l.b16 %v3815
        %v3855 = vunpack.c.l.b16 %v3816
        %v3856 = vunpack.c.l.b16 %v3817
        %v3857 = vunpack.c.l.b16 %v3818
        %v3858 = vunpack.c.l.b16 %v3819
        %v3859 = vunpack.c.l.b16 %v3820
        %v3860 = vunpack.c.l.b16 %v3821
        %v3861 = vunpack.c.l.b16 %v3822
        %v3862 = vpack.c.b16 %v3847, %v3846
        %v3863 = vpack.c.b16 %v3849, %v3848
        %v3864 = vpack.c.b16 %v3851, %v3850
        %v3865 = vpack.c.b16 %v3853, %v3852
        %v3866 = vpack.c.b16 %v3855, %v3854
        %v3867 = vpack.c.b16 %v3857, %v3856
        %v3868 = vpack.c.b16 %v3859, %v3858
        %v3869 = vpack.c.b16 %v3861, %v3860
        %3878 = vmatprep.subr.bf16.mxu0 0
        %3879 = vmatpush1.bf16.msra.mxu0 %v3862
        %3880 = vmatprep.subr.bf16.mxu0 0
        %3881 = vmatpush1.bf16.msra.mxu0 %v3863
        %3882 = vmatprep.subr.bf16.mxu0 0
        %3883 = vmatpush1.bf16.msra.mxu0 %v3864
        %3884 = vmatprep.subr.bf16.mxu0 0
        %3885 = vmatpush1.bf16.msra.mxu0 %v3865
        %3886 = vmatprep.subr.bf16.mxu0 0
        %3887 = vmatpush1.bf16.msra.mxu0 %v3866
        %3888 = vmatprep.subr.bf16.mxu0 0
        %3889 = vmatpush1.bf16.msra.mxu0 %v3867
        %3890 = vmatprep.subr.bf16.mxu0 0
        %3891 = vmatpush1.bf16.msra.mxu0 %v3868
        %3892 = vmatprep.subr.bf16.mxu0 0
        %3893 = vmatpush1.bf16.msra.mxu0 %v3869
        %3894 = vmatprep.subr.bf16.mxu0 0
        %3895 = vmatpush1.bf16.msra.mxu0 0
        %3896 = vmatprep.subr.bf16.mxu0 0
        %3897 = vmatpush1.bf16.msra.mxu0 0
        %3898 = vmatprep.subr.bf16.mxu0 0
        %3899 = vmatpush1.bf16.msra.mxu0 0
        %3900 = vmatprep.subr.bf16.mxu0 0
        %3901 = vmatpush1.bf16.msra.mxu0 0
        %3902 = vmatprep.subr.bf16.mxu0 0
        %3903 = vmatpush1.bf16.msra.mxu0 0
        %3904 = vmatprep.subr.bf16.mxu0 0
        %3905 = vmatpush1.bf16.msra.mxu0 0
        %3906 = vmatprep.subr.bf16.mxu0 0
        %3907 = vmatpush1.bf16.msra.mxu0 0
        %3908 = vmatprep.subr.bf16.mxu0 0
        %3909 = vmatpush1.bf16.msra.mxu0 0
        %3910 = vmatprep.mubr.bf16.mxu0 0
        %3911 = vmatmul.mubr.bf16.gmra.mrb[0].mxu0 %v1148
        %v3912 = vpop.f32.mrb[0].mxu0
        %v3913 = vadd.f32 %v3828, %v3912
        %v3914 = vpop.f32.mrb[0].mxu0
        %v3915 = vpop.f32.mrb[0].mxu0
        %v3916 = vadd.f32 %v3828, %v3915
        %v3917 = vpop.f32.mrb[0].mxu0
        %3918 = vmatprep.mubr.bf16.mxu0 0
        %3919 = vmatmul.mubr.bf16.gmra.mrb[0].mxu0 %v1149
        %v3920 = vpop.f32.mrb[0].mxu0
        %v3921 = vadd.f32 %v3828, %v3920
        %v3922 = vpop.f32.mrb[0].mxu0
        %v3923 = vpop.f32.mrb[0].mxu0
        %v3924 = vadd.f32 %v3828, %v3923
        %v3925 = vpop.f32.mrb[0].mxu0
        %3926 = vmatprep.mubr.bf16.mxu0 0
        %3927 = vmatmul.mubr.bf16.gmra.mrb[0].mxu0 %v1150
        %v3928 = vpop.f32.mrb[0].mxu0
        %v3929 = vadd.f32 %v3828, %v3928
        %v3930 = vpop.f32.mrb[0].mxu0
        %v3931 = vpop.f32.mrb[0].mxu0
        %v3932 = vadd.f32 %v3828, %v3931
        %v3933 = vpop.f32.mrb[0].mxu0
        %3934 = vmatprep.mubr.bf16.mxu0 0
        %3935 = vmatmul.mubr.bf16.gmra.mrb[0].mxu0 %v1151
        %v3936 = vpop.f32.mrb[0].mxu0
        %v3937 = vadd.f32 %v3828, %v3936
        %v3938 = vpop.f32.mrb[0].mxu0
        %v3939 = vpop.f32.mrb[0].mxu0
        %v3940 = vadd.f32 %v3828, %v3939
        %v3941 = vpop.f32.mrb[0].mxu0
        %3942 = vmatprep.mubr.bf16.mxu0 0
        %3943 = vmatmul.mubr.bf16.gmra.mrb[0].mxu0 %v1152
        %v3944 = vpop.f32.mrb[0].mxu0
        %v3945 = vadd.f32 %v3828, %v3944
        %v3946 = vpop.f32.mrb[0].mxu0
        %v3947 = vpop.f32.mrb[0].mxu0
        %v3948 = vadd.f32 %v3828, %v3947
        %v3949 = vpop.f32.mrb[0].mxu0
        %3950 = vmatprep.mubr.bf16.mxu0 0
        %3951 = vmatmul.mubr.bf16.gmra.mrb[0].mxu0 %v1153
        %v3952 = vpop.f32.mrb[0].mxu0
        %v3953 = vadd.f32 %v3828, %v3952
        %v3954 = vpop.f32.mrb[0].mxu0
        %v3955 = vpop.f32.mrb[0].mxu0
        %v3956 = vadd.f32 %v3828, %v3955
        %v3957 = vpop.f32.mrb[0].mxu0
        %3958 = vmatprep.mubr.bf16.mxu0 0
        %3959 = vmatmul.mubr.bf16.gmra.mrb[0].mxu0 %v1154
        %v3960 = vpop.f32.mrb[0].mxu0
        %v3961 = vadd.f32 %v3828, %v3960
        %v3962 = vpop.f32.mrb[0].mxu0
        %v3963 = vpop.f32.mrb[0].mxu0
        %v3964 = vadd.f32 %v3828, %v3963
        %v3965 = vpop.f32.mrb[0].mxu0
        %3966 = vmatprep.mubr.bf16.mxu0 0
        %3967 = vmatmul.mubr.bf16.gmra.mrb[0].mxu0 %v1155
        %v3968 = vpop.f32.mrb[0].mxu0
        %v3969 = vadd.f32 %v3828, %v3968
        %v3970 = vpop.f32.mrb[0].mxu0
        %v3971 = vpop.f32.mrb[0].mxu0
        %v3972 = vadd.f32 %v3828, %v3971
        %v3973 = vpop.f32.mrb[0].mxu0
        %3974 = vdwg.mxu0
        %v3975 = vadd.f32 %v1066, %v3745
        %v3976 = vadd.f32 %v1069, %v3748
        %v3977 = vadd.f32 %v1074, %v3753
        %v3978 = vadd.f32 %v1077, %v3756
        %v3979 = vadd.f32 %v1082, %v3761
        %v3980 = vadd.f32 %v1085, %v3764
        %v3981 = vadd.f32 %v1090, %v3769
        %v3982 = vadd.f32 %v1093, %v3772
        %v3983 = vadd.f32 %v1098, %v3777
        %v3984 = vadd.f32 %v1101, %v3780
        %v3985 = vadd.f32 %v1106, %v3785
        %v3986 = vadd.f32 %v1109, %v3788
        %v3987 = vadd.f32 %v1114, %v3793
        %v3988 = vadd.f32 %v1117, %v3796
        %v3989 = vadd.f32 %v1122, %v3801
        %v3990 = vadd.f32 %v1125, %v3804
        %v3991 = vadd.f32 %v3975, %v3913
        %v3992 = vadd.f32 %v3976, %v3916
        %v3993 = vadd.f32 %v3977, %v3921
        %v3994 = vadd.f32 %v3978, %v3924
        %v3995 = vadd.f32 %v3979, %v3929
        %v3996 = vadd.f32 %v3980, %v3932
        %v3997 = vadd.f32 %v3981, %v3937
        %v3998 = vadd.f32 %v3982, %v3940
        %v3999 = vadd.f32 %v3983, %v3945
        %v4000 = vadd.f32 %v3984, %v3948
        %v4001 = vadd.f32 %v3985, %v3953
        %v4002 = vadd.f32 %v3986, %v3956
        %v4003 = vadd.f32 %v3987, %v3961
        %v4004 = vadd.f32 %v3988, %v3964
        %v4005 = vadd.f32 %v3989, %v3969
        %v4006 = vadd.f32 %v3990, %v3972
        %v4007 = vmul.f32 %v3991, 0.5
        %v4008 = vmul.f32 %v3992, 0.5
        %v4009 = vmul.f32 %v3993, 0.5
        %v4010 = vmul.f32 %v3994, 0.5
        %v4011 = vmul.f32 %v3995, 0.5
        %v4012 = vmul.f32 %v3996, 0.5
        %v4013 = vmul.f32 %v3997, 0.5
        %v4014 = vmul.f32 %v3998, 0.5
        %v4015 = vmul.f32 %v3999, 0.5
        %v4016 = vmul.f32 %v4000, 0.5
        %v4017 = vmul.f32 %v4001, 0.5
        %v4018 = vmul.f32 %v4002, 0.5
        %v4019 = vmul.f32 %v4003, 0.5
        %v4020 = vmul.f32 %v4004, 0.5
        %v4021 = vmul.f32 %v4005, 0.5
        %v4022 = vmul.f32 %v4006, 0.5
        %v4023 = vmul.f32 %v3991, 0.70710677
        %v4024 = vmul.f32 %v3992, 0.70710677
        %v4025 = vmul.f32 %v3993, 0.70710677
        %v4026 = vmul.f32 %v3994, 0.70710677
        %v4027 = vmul.f32 %v3995, 0.70710677
        %v4028 = vmul.f32 %v3996, 0.70710677
        %v4029 = vmul.f32 %v3997, 0.70710677
        %v4030 = vmul.f32 %v3998, 0.70710677
        %v4031 = vmul.f32 %v3999, 0.70710677
        %v4032 = vmul.f32 %v4000, 0.70710677
        %v4033 = vmul.f32 %v4001, 0.70710677
        %v4034 = vmul.f32 %v4002, 0.70710677
        %v4035 = vmul.f32 %v4003, 0.70710677
        %v4036 = vmul.f32 %v4004, 0.70710677
        %v4037 = vmul.f32 %v4005, 0.70710677
        %v4038 = vmul.f32 %v4006, 0.70710677
        %v4039 = vand.u32 2147483647, %v4023
        %v4040 = vand.u32 2147483647, %v4024
        %v4041 = vand.u32 2147483647, %v4025
        %v4042 = vand.u32 2147483647, %v4026
        %v4043 = vand.u32 2147483647, %v4027
        %v4044 = vand.u32 2147483647, %v4028
        %v4045 = vand.u32 2147483647, %v4029
        %v4046 = vand.u32 2147483647, %v4030
        %v4047 = vand.u32 2147483647, %v4031
        %v4048 = vand.u32 2147483647, %v4032
        %v4049 = vand.u32 2147483647, %v4033
        %v4050 = vand.u32 2147483647, %v4034
        %v4051 = vand.u32 2147483647, %v4035
        %v4052 = vand.u32 2147483647, %v4036
        %v4053 = vand.u32 2147483647, %v4037
        %v4054 = vand.u32 2147483647, %v4038
        %v4055 = vmul.f32 %v4039, 0.3275911
        %v4056 = vmul.f32 %v4040, 0.3275911
        %v4057 = vmul.f32 %v4041, 0.3275911
        %v4058 = vmul.f32 %v4042, 0.3275911
        %v4059 = vmul.f32 %v4043, 0.3275911
        %v4060 = vmul.f32 %v4044, 0.3275911
        %v4061 = vmul.f32 %v4045, 0.3275911
        %v4062 = vmul.f32 %v4046, 0.3275911
        %v4063 = vmul.f32 %v4047, 0.3275911
        %v4064 = vmul.f32 %v4048, 0.3275911
        %v4065 = vmul.f32 %v4049, 0.3275911
        %v4066 = vmul.f32 %v4050, 0.3275911
        %v4067 = vmul.f32 %v4051, 0.3275911
        %v4068 = vmul.f32 %v4052, 0.3275911
        %v4069 = vmul.f32 %v4053, 0.3275911
        %v4070 = vmul.f32 %v4054, 0.3275911
        %v4071 = vadd.f32 %v4055, 1.0
        %v4072 = vadd.f32 %v4056, 1.0
        %v4073 = vadd.f32 %v4057, 1.0
        %v4074 = vadd.f32 %v4058, 1.0
        %v4075 = vadd.f32 %v4059, 1.0
        %v4076 = vadd.f32 %v4060, 1.0
        %v4077 = vadd.f32 %v4061, 1.0
        %v4078 = vadd.f32 %v4062, 1.0
        %v4079 = vadd.f32 %v4063, 1.0
        %v4080 = vadd.f32 %v4064, 1.0
        %v4081 = vadd.f32 %v4065, 1.0
        %v4082 = vadd.f32 %v4066, 1.0
        %v4083 = vadd.f32 %v4067, 1.0
        %v4084 = vadd.f32 %v4068, 1.0
        %v4085 = vadd.f32 %v4069, 1.0
        %v4086 = vadd.f32 %v4070, 1.0
        %v4087 = vrcp.pop %v4071
        %v4088 = vmul.f32 1.0, %v4087
        %v4089 = vrcp.pop %v4072
        %v4090 = vmul.f32 1.0, %v4089
        %v4091 = vrcp.pop %v4073
        %v4092 = vmul.f32 1.0, %v4091
        %v4093 = vrcp.pop %v4074
        %v4094 = vmul.f32 1.0, %v4093
        %v4095 = vrcp.pop %v4075
        %v4096 = vmul.f32 1.0, %v4095
        %v4097 = vrcp.pop %v4076
        %v4098 = vmul.f32 1.0, %v4097
        %v4099 = vrcp.pop %v4077
        %v4100 = vmul.f32 1.0, %v4099
        %v4101 = vrcp.pop %v4078
        %v4102 = vmul.f32 1.0, %v4101
        %v4103 = vrcp.pop %v4079
        %v4104 = vmul.f32 1.0, %v4103
        %v4105 = vrcp.pop %v4080
        %v4106 = vmul.f32 1.0, %v4105
        %v4107 = vrcp.pop %v4081
        %v4108 = vmul.f32 1.0, %v4107
        %v4109 = vrcp.pop %v4082
        %v4110 = vmul.f32 1.0, %v4109
        %v4111 = vrcp.pop %v4083
        %v4112 = vmul.f32 1.0, %v4111
        %v4113 = vrcp.pop %v4084
        %v4114 = vmul.f32 1.0, %v4113
        %v4115 = vrcp.pop %v4085
        %v4116 = vmul.f32 1.0, %v4115
        %v4117 = vrcp.pop %v4086
        %v4118 = vmul.f32 1.0, %v4117
        %v4119 = vmul.f32 %v4088, 1.0614054
        %v4120 = vmul.f32 %v4090, 1.0614054
        %v4121 = vmul.f32 %v4092, 1.0614054
        %v4122 = vmul.f32 %v4094, 1.0614054
        %v4123 = vmul.f32 %v4096, 1.0614054
        %v4124 = vmul.f32 %v4098, 1.0614054
        %v4125 = vmul.f32 %v4100, 1.0614054
        %v4126 = vmul.f32 %v4102, 1.0614054
        %v4127 = vmul.f32 %v4104, 1.0614054
        %v4128 = vmul.f32 %v4106, 1.0614054
        %v4129 = vmul.f32 %v4108, 1.0614054
        %v4130 = vmul.f32 %v4110, 1.0614054
        %v4131 = vmul.f32 %v4112, 1.0614054
        %v4132 = vmul.f32 %v4114, 1.0614054
        %v4133 = vmul.f32 %v4116, 1.0614054
        %v4134 = vmul.f32 %v4118, 1.0614054
        %v4135 = vadd.f32 %v4119, -1.4531521
        %v4136 = vadd.f32 %v4120, -1.4531521
        %v4137 = vadd.f32 %v4121, -1.4531521
        %v4138 = vadd.f32 %v4122, -1.4531521
        %v4139 = vadd.f32 %v4123, -1.4531521
        %v4140 = vadd.f32 %v4124, -1.4531521
        %v4141 = vadd.f32 %v4125, -1.4531521
        %v4142 = vadd.f32 %v4126, -1.4531521
        %v4143 = vadd.f32 %v4127, -1.4531521
        %v4144 = vadd.f32 %v4128, -1.4531521
        %v4145 = vadd.f32 %v4129, -1.4531521
        %v4146 = vadd.f32 %v4130, -1.4531521
        %v4147 = vadd.f32 %v4131, -1.4531521
        %v4148 = vadd.f32 %v4132, -1.4531521
        %v4149 = vadd.f32 %v4133, -1.4531521
        %v4150 = vadd.f32 %v4134, -1.4531521
        %v4151 = vmul.f32 %v4135, %v4088
        %v4152 = vmul.f32 %v4136, %v4090
        %v4153 = vmul.f32 %v4137, %v4092
        %v4154 = vmul.f32 %v4138, %v4094
        %v4155 = vmul.f32 %v4139, %v4096
        %v4156 = vmul.f32 %v4140, %v4098
        %v4157 = vmul.f32 %v4141, %v4100
        %v4158 = vmul.f32 %v4142, %v4102
        %v4159 = vmul.f32 %v4143, %v4104
        %v4160 = vmul.f32 %v4144, %v4106
        %v4161 = vmul.f32 %v4145, %v4108
        %v4162 = vmul.f32 %v4146, %v4110
        %v4163 = vmul.f32 %v4147, %v4112
        %v4164 = vmul.f32 %v4148, %v4114
        %v4165 = vmul.f32 %v4149, %v4116
        %v4166 = vmul.f32 %v4150, %v4118
        %v4167 = vadd.f32 %v4151, 1.4214138
        %v4168 = vadd.f32 %v4152, 1.4214138
        %v4169 = vadd.f32 %v4153, 1.4214138
        %v4170 = vadd.f32 %v4154, 1.4214138
        %v4171 = vadd.f32 %v4155, 1.4214138
        %v4172 = vadd.f32 %v4156, 1.4214138
        %v4173 = vadd.f32 %v4157, 1.4214138
        %v4174 = vadd.f32 %v4158, 1.4214138
        %v4175 = vadd.f32 %v4159, 1.4214138
        %v4176 = vadd.f32 %v4160, 1.4214138
        %v4177 = vadd.f32 %v4161, 1.4214138
        %v4178 = vadd.f32 %v4162, 1.4214138
        %v4179 = vadd.f32 %v4163, 1.4214138
        %v4180 = vadd.f32 %v4164, 1.4214138
        %v4181 = vadd.f32 %v4165, 1.4214138
        %v4182 = vadd.f32 %v4166, 1.4214138
        %v4183 = vmul.f32 %v4167, %v4088
        %v4184 = vmul.f32 %v4168, %v4090
        %v4185 = vmul.f32 %v4169, %v4092
        %v4186 = vmul.f32 %v4170, %v4094
        %v4187 = vmul.f32 %v4171, %v4096
        %v4188 = vmul.f32 %v4172, %v4098
        %v4189 = vmul.f32 %v4173, %v4100
        %v4190 = vmul.f32 %v4174, %v4102
        %v4191 = vmul.f32 %v4175, %v4104
        %v4192 = vmul.f32 %v4176, %v4106
        %v4193 = vmul.f32 %v4177, %v4108
        %v4194 = vmul.f32 %v4178, %v4110
        %v4195 = vmul.f32 %v4179, %v4112
        %v4196 = vmul.f32 %v4180, %v4114
        %v4197 = vmul.f32 %v4181, %v4116
        %v4198 = vmul.f32 %v4182, %v4118
        %v4199 = vadd.f32 %v4183, -0.28449672
        %v4200 = vadd.f32 %v4184, -0.28449672
        %v4201 = vadd.f32 %v4185, -0.28449672
        %v4202 = vadd.f32 %v4186, -0.28449672
        %v4203 = vadd.f32 %v4187, -0.28449672
        %v4204 = vadd.f32 %v4188, -0.28449672
        %v4205 = vadd.f32 %v4189, -0.28449672
        %v4206 = vadd.f32 %v4190, -0.28449672
        %v4207 = vadd.f32 %v4191, -0.28449672
        %v4208 = vadd.f32 %v4192, -0.28449672
        %v4209 = vadd.f32 %v4193, -0.28449672
        %v4210 = vadd.f32 %v4194, -0.28449672
        %v4211 = vadd.f32 %v4195, -0.28449672
        %v4212 = vadd.f32 %v4196, -0.28449672
        %v4213 = vadd.f32 %v4197, -0.28449672
        %v4214 = vadd.f32 %v4198, -0.28449672
        %v4215 = vmul.f32 %v4199, %v4088
        %v4216 = vmul.f32 %v4200, %v4090
        %v4217 = vmul.f32 %v4201, %v4092
        %v4218 = vmul.f32 %v4202, %v4094
        %v4219 = vmul.f32 %v4203, %v4096
        %v4220 = vmul.f32 %v4204, %v4098
        %v4221 = vmul.f32 %v4205, %v4100
        %v4222 = vmul.f32 %v4206, %v4102
        %v4223 = vmul.f32 %v4207, %v4104
        %v4224 = vmul.f32 %v4208, %v4106
        %v4225 = vmul.f32 %v4209, %v4108
        %v4226 = vmul.f32 %v4210, %v4110
        %v4227 = vmul.f32 %v4211, %v4112
        %v4228 = vmul.f32 %v4212, %v4114
        %v4229 = vmul.f32 %v4213, %v4116
        %v4230 = vmul.f32 %v4214, %v4118
        %v4231 = vadd.f32 %v4215, 0.2548296
        %v4232 = vadd.f32 %v4216, 0.2548296
        %v4233 = vadd.f32 %v4217, 0.2548296
        %v4234 = vadd.f32 %v4218, 0.2548296
        %v4235 = vadd.f32 %v4219, 0.2548296
        %v4236 = vadd.f32 %v4220, 0.2548296
        %v4237 = vadd.f32 %v4221, 0.2548296
        %v4238 = vadd.f32 %v4222, 0.2548296
        %v4239 = vadd.f32 %v4223, 0.2548296
        %v4240 = vadd.f32 %v4224, 0.2548296
        %v4241 = vadd.f32 %v4225, 0.2548296
        %v4242 = vadd.f32 %v4226, 0.2548296
        %v4243 = vadd.f32 %v4227, 0.2548296
        %v4244 = vadd.f32 %v4228, 0.2548296
        %v4245 = vadd.f32 %v4229, 0.2548296
        %v4246 = vadd.f32 %v4230, 0.2548296
        %v4247 = vmul.f32 %v4231, %v4088
        %v4248 = vmul.f32 %v4232, %v4090
        %v4249 = vmul.f32 %v4233, %v4092
        %v4250 = vmul.f32 %v4234, %v4094
        %v4251 = vmul.f32 %v4235, %v4096
        %v4252 = vmul.f32 %v4236, %v4098
        %v4253 = vmul.f32 %v4237, %v4100
        %v4254 = vmul.f32 %v4238, %v4102
        %v4255 = vmul.f32 %v4239, %v4104
        %v4256 = vmul.f32 %v4240, %v4106
        %v4257 = vmul.f32 %v4241, %v4108
        %v4258 = vmul.f32 %v4242, %v4110
        %v4259 = vmul.f32 %v4243, %v4112
        %v4260 = vmul.f32 %v4244, %v4114
        %v4261 = vmul.f32 %v4245, %v4116
        %v4262 = vmul.f32 %v4246, %v4118
        %v4263 = vsub.f32 0.0, %v4039
        %v4264 = vsub.f32 0.0, %v4040
        %v4265 = vsub.f32 0.0, %v4041
        %v4266 = vsub.f32 0.0, %v4042
        %v4267 = vsub.f32 0.0, %v4043
        %v4268 = vsub.f32 0.0, %v4044
        %v4269 = vsub.f32 0.0, %v4045
        %v4270 = vsub.f32 0.0, %v4046
        %v4271 = vsub.f32 0.0, %v4047
        %v4272 = vsub.f32 0.0, %v4048
        %v4273 = vsub.f32 0.0, %v4049
        %v4274 = vsub.f32 0.0, %v4050
        %v4275 = vsub.f32 0.0, %v4051
        %v4276 = vsub.f32 0.0, %v4052
        %v4277 = vsub.f32 0.0, %v4053
        %v4278 = vsub.f32 0.0, %v4054
        %v4279 = vmul.f32 %v4263, %v4039
        %v4280 = vmul.f32 %v4264, %v4040
        %v4281 = vmul.f32 %v4265, %v4041
        %v4282 = vmul.f32 %v4266, %v4042
        %v4283 = vmul.f32 %v4267, %v4043
        %v4284 = vmul.f32 %v4268, %v4044
        %v4285 = vmul.f32 %v4269, %v4045
        %v4286 = vmul.f32 %v4270, %v4046
        %v4287 = vmul.f32 %v4271, %v4047
        %v4288 = vmul.f32 %v4272, %v4048
        %v4289 = vmul.f32 %v4273, %v4049
        %v4290 = vmul.f32 %v4274, %v4050
        %v4291 = vmul.f32 %v4275, %v4051
        %v4292 = vmul.f32 %v4276, %v4052
        %v4293 = vmul.f32 %v4277, %v4053
        %v4294 = vmul.f32 %v4278, %v4054
        %v4295 = vmul.f32 %v4279, 1.442695
        %v4296 = vpow.pop %v4295
        %v4297 = vmul.f32 %v4280, 1.442695
        %v4298 = vpow.pop %v4297
        %v4299 = vmul.f32 %v4281, 1.442695
        %v4300 = vpow.pop %v4299
        %v4301 = vmul.f32 %v4282, 1.442695
        %v4302 = vpow.pop %v4301
        %v4303 = vmul.f32 %v4283, 1.442695
        %v4304 = vpow.pop %v4303
        %v4305 = vmul.f32 %v4284, 1.442695
        %v4306 = vpow.pop %v4305
        %v4307 = vmul.f32 %v4285, 1.442695
        %v4308 = vpow.pop %v4307
        %v4309 = vmul.f32 %v4286, 1.442695
        %v4310 = vpow.pop %v4309
        %v4311 = vmul.f32 %v4287, 1.442695
        %v4312 = vpow.pop %v4311
        %v4313 = vmul.f32 %v4288, 1.442695
        %v4314 = vpow.pop %v4313
        %v4315 = vmul.f32 %v4289, 1.442695
        %v4316 = vpow.pop %v4315
        %v4317 = vmul.f32 %v4290, 1.442695
        %v4318 = vpow.pop %v4317
        %v4319 = vmul.f32 %v4291, 1.442695
        %v4320 = vpow.pop %v4319
        %v4321 = vmul.f32 %v4292, 1.442695
        %v4322 = vpow.pop %v4321
        %v4323 = vmul.f32 %v4293, 1.442695
        %v4324 = vpow.pop %v4323
        %v4325 = vmul.f32 %v4294, 1.442695
        %v4326 = vpow.pop %v4325
        %v4327 = vmul.f32 %v4247, %v4296
        %v4328 = vmul.f32 %v4248, %v4298
        %v4329 = vmul.f32 %v4249, %v4300
        %v4330 = vmul.f32 %v4250, %v4302
        %v4331 = vmul.f32 %v4251, %v4304
        %v4332 = vmul.f32 %v4252, %v4306
        %v4333 = vmul.f32 %v4253, %v4308
        %v4334 = vmul.f32 %v4254, %v4310
        %v4335 = vmul.f32 %v4255, %v4312
        %v4336 = vmul.f32 %v4256, %v4314
        %v4337 = vmul.f32 %v4257, %v4316
        %v4338 = vmul.f32 %v4258, %v4318
        %v4339 = vmul.f32 %v4259, %v4320
        %v4340 = vmul.f32 %v4260, %v4322
        %v4341 = vmul.f32 %v4261, %v4324
        %v4342 = vmul.f32 %v4262, %v4326
        %v4343 = vsub.f32 1.0, %v4327
        %v4344 = vsub.f32 1.0, %v4328
        %v4345 = vsub.f32 1.0, %v4329
        %v4346 = vsub.f32 1.0, %v4330
        %v4347 = vsub.f32 1.0, %v4331
        %v4348 = vsub.f32 1.0, %v4332
        %v4349 = vsub.f32 1.0, %v4333
        %v4350 = vsub.f32 1.0, %v4334
        %v4351 = vsub.f32 1.0, %v4335
        %v4352 = vsub.f32 1.0, %v4336
        %v4353 = vsub.f32 1.0, %v4337
        %v4354 = vsub.f32 1.0, %v4338
        %v4355 = vsub.f32 1.0, %v4339
        %v4356 = vsub.f32 1.0, %v4340
        %v4357 = vsub.f32 1.0, %v4341
        %v4358 = vsub.f32 1.0, %v4342
        %vm4359 = vcmp.ge.f32.partialorder %v4023, 0.0
        %vm4360 = vcmp.ge.f32.partialorder %v4024, 0.0
        %vm4361 = vcmp.ge.f32.partialorder %v4025, 0.0
        %vm4362 = vcmp.ge.f32.partialorder %v4026, 0.0
        %vm4363 = vcmp.ge.f32.partialorder %v4027, 0.0
        %vm4364 = vcmp.ge.f32.partialorder %v4028, 0.0
        %vm4365 = vcmp.ge.f32.partialorder %v4029, 0.0
        %vm4366 = vcmp.ge.f32.partialorder %v4030, 0.0
        %vm4367 = vcmp.ge.f32.partialorder %v4031, 0.0
        %vm4368 = vcmp.ge.f32.partialorder %v4032, 0.0
        %vm4369 = vcmp.ge.f32.partialorder %v4033, 0.0
        %vm4370 = vcmp.ge.f32.partialorder %v4034, 0.0
        %vm4371 = vcmp.ge.f32.partialorder %v4035, 0.0
        %vm4372 = vcmp.ge.f32.partialorder %v4036, 0.0
        %vm4373 = vcmp.ge.f32.partialorder %v4037, 0.0
        %vm4374 = vcmp.ge.f32.partialorder %v4038, 0.0
        %v4375 = vsub.f32 0.0, %v4343
        %v4376 = vsub.f32 0.0, %v4344
        %v4377 = vsub.f32 0.0, %v4345
        %v4378 = vsub.f32 0.0, %v4346
        %v4379 = vsub.f32 0.0, %v4347
        %v4380 = vsub.f32 0.0, %v4348
        %v4381 = vsub.f32 0.0, %v4349
        %v4382 = vsub.f32 0.0, %v4350
        %v4383 = vsub.f32 0.0, %v4351
        %v4384 = vsub.f32 0.0, %v4352
        %v4385 = vsub.f32 0.0, %v4353
        %v4386 = vsub.f32 0.0, %v4354
        %v4387 = vsub.f32 0.0, %v4355
        %v4388 = vsub.f32 0.0, %v4356
        %v4389 = vsub.f32 0.0, %v4357
        %v4390 = vsub.f32 0.0, %v4358
        %v4391 = vsel %vm4359, %v4343, %v4375
        %v4392 = vsel %vm4360, %v4344, %v4376
        %v4393 = vsel %vm4361, %v4345, %v4377
        %v4394 = vsel %vm4362, %v4346, %v4378
        %v4395 = vsel %vm4363, %v4347, %v4379
        %v4396 = vsel %vm4364, %v4348, %v4380
        %v4397 = vsel %vm4365, %v4349, %v4381
        %v4398 = vsel %vm4366, %v4350, %v4382
        %v4399 = vsel %vm4367, %v4351, %v4383
        %v4400 = vsel %vm4368, %v4352, %v4384
        %v4401 = vsel %vm4369, %v4353, %v4385
        %v4402 = vsel %vm4370, %v4354, %v4386
        %v4403 = vsel %vm4371, %v4355, %v4387
        %v4404 = vsel %vm4372, %v4356, %v4388
        %v4405 = vsel %vm4373, %v4357, %v4389
        %v4406 = vsel %vm4374, %v4358, %v4390
        %v4407 = vadd.f32 %v4391, 1.0
        %v4408 = vadd.f32 %v4392, 1.0
        %v4409 = vadd.f32 %v4393, 1.0
        %v4410 = vadd.f32 %v4394, 1.0
        %v4411 = vadd.f32 %v4395, 1.0
        %v4412 = vadd.f32 %v4396, 1.0
        %v4413 = vadd.f32 %v4397, 1.0
        %v4414 = vadd.f32 %v4398, 1.0
        %v4415 = vadd.f32 %v4399, 1.0
        %v4416 = vadd.f32 %v4400, 1.0
        %v4417 = vadd.f32 %v4401, 1.0
        %v4418 = vadd.f32 %v4402, 1.0
        %v4419 = vadd.f32 %v4403, 1.0
        %v4420 = vadd.f32 %v4404, 1.0
        %v4421 = vadd.f32 %v4405, 1.0
        %v4422 = vadd.f32 %v4406, 1.0
        %v4423 = vmul.f32 %v4007, %v4407
        %v4424 = vmul.f32 %v4008, %v4408
        %v4425 = vmul.f32 %v4009, %v4409
        %v4426 = vmul.f32 %v4010, %v4410
        %v4427 = vmul.f32 %v4011, %v4411
        %v4428 = vmul.f32 %v4012, %v4412
        %v4429 = vmul.f32 %v4013, %v4413
        %v4430 = vmul.f32 %v4014, %v4414
        %v4431 = vmul.f32 %v4015, %v4415
        %v4432 = vmul.f32 %v4016, %v4416
        %v4433 = vmul.f32 %v4017, %v4417
        %v4434 = vmul.f32 %v4018, %v4418
        %v4435 = vmul.f32 %v4019, %v4419
        %v4436 = vmul.f32 %v4020, %v4420
        %v4437 = vmul.f32 %v4021, %v4421
        %v4438 = vmul.f32 %v4022, %v4422
        %v4439 = vpack.c.bf16 %v4424, %v4423
        %v4440 = vpack.c.bf16 %v4426, %v4425
        %v4441 = vpack.c.bf16 %v4428, %v4427
        %v4442 = vpack.c.bf16 %v4430, %v4429
        %v4443 = vpack.c.bf16 %v4432, %v4431
        %v4444 = vpack.c.bf16 %v4434, %v4433
        %v4445 = vpack.c.bf16 %v4436, %v4435
        %v4446 = vpack.c.bf16 %v4438, %v4437
        %4447 = vmatprep.subr.bf16.mxu0 0
        %4448 = vmatpush1.bf16.msra.mxu0 %v4439
        %4449 = vmatprep.subr.bf16.mxu0 0
        %4450 = vmatpush1.bf16.msra.mxu0 %v4440
        %4451 = vmatprep.subr.bf16.mxu0 0
        %4452 = vmatpush1.bf16.msra.mxu0 %v4441
        %4453 = vmatprep.subr.bf16.mxu0 0
        %4454 = vmatpush1.bf16.msra.mxu0 %v4442
        %4455 = vmatprep.subr.bf16.mxu0 0
        %4456 = vmatpush1.bf16.msra.mxu0 %v4443
        %4457 = vmatprep.subr.bf16.mxu0 0
        %4458 = vmatpush1.bf16.msra.mxu0 %v4444
        %4459 = vmatprep.subr.bf16.mxu0 0
        %4460 = vmatpush1.bf16.msra.mxu0 %v4445
        %4461 = vmatprep.subr.bf16.mxu0 0
        %4462 = vmatpush1.bf16.msra.mxu0 %v4446
        %4463 = vmatprep.subr.bf16.mxu0 0
        %4464 = vmatpush1.bf16.msra.mxu0 0
        %4465 = vmatprep.subr.bf16.mxu0 0
        %4466 = vmatpush1.bf16.msra.mxu0 0
        %4467 = vmatprep.subr.bf16.mxu0 0
        %4468 = vmatpush1.bf16.msra.mxu0 0
        %4469 = vmatprep.subr.bf16.mxu0 0
        %4470 = vmatpush1.bf16.msra.mxu0 0
        %4471 = vmatprep.subr.bf16.mxu0 0
        %4472 = vmatpush1.bf16.msra.mxu0 0
        %4473 = vmatprep.subr.bf16.mxu0 0
        %4474 = vmatpush1.bf16.msra.mxu0 0
        %4475 = vmatprep.subr.bf16.mxu0 0
        %4476 = vmatpush1.bf16.msra.mxu0 0
        %4477 = vmatprep.subr.bf16.mxu0 0
        %4478 = vmatpush1.bf16.msra.mxu0 0
        %4479 = vmatprep.mubr.bf16.mxu0 0
        %4480 = vmatmul.mubr.bf16.gmra.mrb[0].mxu0 %v1164
        %v4481 = vpop.f32.mrb[0].mxu0
        %v4482 = vadd.f32 0.0, %v4481
        %v4483 = vpop.f32.mrb[0].mxu0
        %v4484 = vpop.f32.mrb[0].mxu0
        %v4485 = vadd.f32 0.0, %v4484
        %v4486 = vpop.f32.mrb[0].mxu0
        %4487 = vmatprep.mubr.bf16.mxu0 0
        %4488 = vmatmul.mubr.bf16.gmra.mrb[0].mxu0 %v1165
        %v4489 = vpop.f32.mrb[0].mxu0
        %v4490 = vadd.f32 0.0, %v4489
        %v4491 = vpop.f32.mrb[0].mxu0
        %v4492 = vpop.f32.mrb[0].mxu0
        %v4493 = vadd.f32 0.0, %v4492
        %v4494 = vpop.f32.mrb[0].mxu0
        %4495 = vdwg.mxu0
        %4498 = vrot.lane.b32.xlu0 %v4482, 112
        %v4499 = vpop.permute.xlu0 %4498
        %4500 = vrot.lane.b32.xlu0 %v4485, 112
        %v4501 = vpop.permute.xlu0 %4500
        %4504 = vrot.lane.b32.xlu0 %v4482, 96
        %v4505 = vpop.permute.xlu0 %4504
        %4506 = vrot.lane.b32.xlu0 %v4485, 96
        %v4507 = vpop.permute.xlu0 %4506
        %4510 = vrot.lane.b32.xlu0 %v4482, 80
        %v4511 = vpop.permute.xlu0 %4510
        %4512 = vrot.lane.b32.xlu0 %v4485, 80
        %v4513 = vpop.permute.xlu0 %4512
        %4516 = vrot.lane.b32.xlu0 %v4482, 64
        %v4517 = vpop.permute.xlu0 %4516
        %4518 = vrot.lane.b32.xlu0 %v4485, 64
        %v4519 = vpop.permute.xlu0 %4518
        %4522 = vrot.lane.b32.xlu0 %v4482, 48
        %v4523 = vpop.permute.xlu0 %4522
        %4524 = vrot.lane.b32.xlu0 %v4485, 48
        %v4525 = vpop.permute.xlu0 %4524
        %4528 = vrot.lane.b32.xlu0 %v4482, 32
        %v4529 = vpop.permute.xlu0 %4528
        %4530 = vrot.lane.b32.xlu0 %v4485, 32
        %v4531 = vpop.permute.xlu0 %4530
        %4534 = vrot.lane.b32.xlu0 %v4482, 16
        %v4535 = vpop.permute.xlu0 %4534
        %4536 = vrot.lane.b32.xlu0 %v4485, 16
        %v4537 = vpop.permute.xlu0 %4536
        %v4540 = vcombine.low %v4482, %v4505
        %v4541 = vcombine.high %v4482, %v4505
        %v4543 = vunpack.c.l.s4 1983009808
        %v4544 = vunpack.c.0.s8 %v4543
        %v4545 = vlaneseq
        %v4546 = vshrl.u32 %v4545, 7
        %v4547 = vsub.s32 %v4544, %v4546
        %v4548 = vrot.slane %v4540, %v4547
        %v4550 = vunpack.c.l.s4 1983009808
        %v4551 = vunpack.c.0.s8 %v4550
        %v4552 = vlaneseq
        %v4553 = vshrl.u32 %v4552, 7
        %v4554 = vsub.s32 %v4551, %v4553
        %v4555 = vrot.slane %v4541, %v4554
        %v4556 = vcombine.low %v4499, %v4511
        %v4557 = vcombine.high %v4499, %v4511
        %v4559 = vunpack.c.l.s4 1983009808
        %v4560 = vunpack.c.0.s8 %v4559
        %v4561 = vlaneseq
        %v4562 = vshrl.u32 %v4561, 7
        %v4563 = vsub.s32 %v4560, %v4562
        %v4564 = vrot.slane %v4556, %v4563
        %v4566 = vunpack.c.l.s4 1983009808
        %v4567 = vunpack.c.0.s8 %v4566
        %v4568 = vlaneseq
        %v4569 = vshrl.u32 %v4568, 7
        %v4570 = vsub.s32 %v4567, %v4569
        %v4571 = vrot.slane %v4557, %v4570
        %v4572 = vcombine.low %v4517, %v4529
        %v4573 = vcombine.high %v4517, %v4529
        %v4575 = vunpack.c.l.s4 1983009808
        %v4576 = vunpack.c.0.s8 %v4575
        %v4577 = vlaneseq
        %v4578 = vshrl.u32 %v4577, 7
        %v4579 = vsub.s32 %v4576, %v4578
        %v4580 = vrot.slane %v4572, %v4579
        %v4582 = vunpack.c.l.s4 1983009808
        %v4583 = vunpack.c.0.s8 %v4582
        %v4584 = vlaneseq
        %v4585 = vshrl.u32 %v4584, 7
        %v4586 = vsub.s32 %v4583, %v4585
        %v4587 = vrot.slane %v4573, %v4586
        %v4588 = vcombine.low %v4523, %v4535
        %v4589 = vcombine.high %v4523, %v4535
        %v4591 = vunpack.c.l.s4 1983009808
        %v4592 = vunpack.c.0.s8 %v4591
        %v4593 = vlaneseq
        %v4594 = vshrl.u32 %v4593, 7
        %v4595 = vsub.s32 %v4592, %v4594
        %v4596 = vrot.slane %v4588, %v4595
        %v4598 = vunpack.c.l.s4 1983009808
        %v4599 = vunpack.c.0.s8 %v4598
        %v4600 = vlaneseq
        %v4601 = vshrl.u32 %v4600, 7
        %v4602 = vsub.s32 %v4599, %v4601
        %v4603 = vrot.slane %v4589, %v4602
        %v4604 = vcombine.low %v4548, %v4564
        %v4605 = vcombine.high %v4548, %v4564
        %v4607 = vunpack.c.l.s4 1934713408
        %v4608 = vunpack.c.0.s8 %v4607
        %v4609 = vlaneseq
        %v4610 = vshrl.u32 %v4609, 7
        %v4611 = vsub.s32 %v4608, %v4610
        %v4612 = vrot.slane %v4604, %v4611
        %v4614 = vunpack.c.l.s4 1934713408
        %v4615 = vunpack.c.0.s8 %v4614
        %v4616 = vlaneseq
        %v4617 = vshrl.u32 %v4616, 7
        %v4618 = vsub.s32 %v4615, %v4617
        %v4619 = vrot.slane %v4605, %v4618
        %v4620 = vcombine.low %v4555, %v4571
        %v4621 = vcombine.high %v4555, %v4571
        %v4623 = vunpack.c.l.s4 1934713408
        %v4624 = vunpack.c.0.s8 %v4623
        %v4625 = vlaneseq
        %v4626 = vshrl.u32 %v4625, 7
        %v4627 = vsub.s32 %v4624, %v4626
        %v4628 = vrot.slane %v4620, %v4627
        %v4630 = vunpack.c.l.s4 1934713408
        %v4631 = vunpack.c.0.s8 %v4630
        %v4632 = vlaneseq
        %v4633 = vshrl.u32 %v4632, 7
        %v4634 = vsub.s32 %v4631, %v4633
        %v4635 = vrot.slane %v4621, %v4634
        %v4636 = vcombine.low %v4580, %v4596
        %v4637 = vcombine.high %v4580, %v4596
        %v4639 = vunpack.c.l.s4 1934713408
        %v4640 = vunpack.c.0.s8 %v4639
        %v4641 = vlaneseq
        %v4642 = vshrl.u32 %v4641, 7
        %v4643 = vsub.s32 %v4640, %v4642
        %v4644 = vrot.slane %v4636, %v4643
        %v4646 = vunpack.c.l.s4 1934713408
        %v4647 = vunpack.c.0.s8 %v4646
        %v4648 = vlaneseq
        %v4649 = vshrl.u32 %v4648, 7
        %v4650 = vsub.s32 %v4647, %v4649
        %v4651 = vrot.slane %v4637, %v4650
        %v4652 = vcombine.low %v4587, %v4603
        %v4653 = vcombine.high %v4587, %v4603
        %v4655 = vunpack.c.l.s4 1934713408
        %v4656 = vunpack.c.0.s8 %v4655
        %v4657 = vlaneseq
        %v4658 = vshrl.u32 %v4657, 7
        %v4659 = vsub.s32 %v4656, %v4658
        %v4660 = vrot.slane %v4652, %v4659
        %v4662 = vunpack.c.l.s4 1934713408
        %v4663 = vunpack.c.0.s8 %v4662
        %v4664 = vlaneseq
        %v4665 = vshrl.u32 %v4664, 7
        %v4666 = vsub.s32 %v4663, %v4665
        %v4667 = vrot.slane %v4653, %v4666
        %v4668 = vcombine.low %v4612, %v4644
        %v4669 = vcombine.high %v4612, %v4644
        %v4670 = vcombine.low %v4619, %v4651
        %v4671 = vcombine.high %v4619, %v4651
        %v4672 = vcombine.low %v4628, %v4660
        %v4673 = vcombine.high %v4628, %v4660
        %v4674 = vcombine.low %v4635, %v4667
        %v4675 = vcombine.high %v4635, %v4667
        %v4676 = vcombine.low %v4485, %v4507
        %v4677 = vcombine.high %v4485, %v4507
        %v4679 = vunpack.c.l.s4 1983009808
        %v4680 = vunpack.c.0.s8 %v4679
        %v4681 = vlaneseq
        %v4682 = vshrl.u32 %v4681, 7
        %v4683 = vsub.s32 %v4680, %v4682
        %v4684 = vrot.slane %v4676, %v4683
        %v4686 = vunpack.c.l.s4 1983009808
        %v4687 = vunpack.c.0.s8 %v4686
        %v4688 = vlaneseq
        %v4689 = vshrl.u32 %v4688, 7
        %v4690 = vsub.s32 %v4687, %v4689
        %v4691 = vrot.slane %v4677, %v4690
        %v4692 = vcombine.low %v4501, %v4513
        %v4693 = vcombine.high %v4501, %v4513
        %v4695 = vunpack.c.l.s4 1983009808
        %v4696 = vunpack.c.0.s8 %v4695
        %v4697 = vlaneseq
        %v4698 = vshrl.u32 %v4697, 7
        %v4699 = vsub.s32 %v4696, %v4698
        %v4700 = vrot.slane %v4692, %v4699
        %v4702 = vunpack.c.l.s4 1983009808
        %v4703 = vunpack.c.0.s8 %v4702
        %v4704 = vlaneseq
        %v4705 = vshrl.u32 %v4704, 7
        %v4706 = vsub.s32 %v4703, %v4705
        %v4707 = vrot.slane %v4693, %v4706
        %v4708 = vcombine.low %v4519, %v4531
        %v4709 = vcombine.high %v4519, %v4531
        %v4711 = vunpack.c.l.s4 1983009808
        %v4712 = vunpack.c.0.s8 %v4711
        %v4713 = vlaneseq
        %v4714 = vshrl.u32 %v4713, 7
        %v4715 = vsub.s32 %v4712, %v4714
        %v4716 = vrot.slane %v4708, %v4715
        %v4718 = vunpack.c.l.s4 1983009808
        %v4719 = vunpack.c.0.s8 %v4718
        %v4720 = vlaneseq
        %v4721 = vshrl.u32 %v4720, 7
        %v4722 = vsub.s32 %v4719, %v4721
        %v4723 = vrot.slane %v4709, %v4722
        %v4724 = vcombine.low %v4525, %v4537
        %v4725 = vcombine.high %v4525, %v4537
        %v4727 = vunpack.c.l.s4 1983009808
        %v4728 = vunpack.c.0.s8 %v4727
        %v4729 = vlaneseq
        %v4730 = vshrl.u32 %v4729, 7
        %v4731 = vsub.s32 %v4728, %v4730
        %v4732 = vrot.slane %v4724, %v4731
        %v4734 = vunpack.c.l.s4 1983009808
        %v4735 = vunpack.c.0.s8 %v4734
        %v4736 = vlaneseq
        %v4737 = vshrl.u32 %v4736, 7
        %v4738 = vsub.s32 %v4735, %v4737
        %v4739 = vrot.slane %v4725, %v4738
        %v4740 = vcombine.low %v4684, %v4700
        %v4741 = vcombine.high %v4684, %v4700
        %v4743 = vunpack.c.l.s4 1934713408
        %v4744 = vunpack.c.0.s8 %v4743
        %v4745 = vlaneseq
        %v4746 = vshrl.u32 %v4745, 7
        %v4747 = vsub.s32 %v4744, %v4746
        %v4748 = vrot.slane %v4740, %v4747
        %v4750 = vunpack.c.l.s4 1934713408
        %v4751 = vunpack.c.0.s8 %v4750
        %v4752 = vlaneseq
        %v4753 = vshrl.u32 %v4752, 7
        %v4754 = vsub.s32 %v4751, %v4753
        %v4755 = vrot.slane %v4741, %v4754
        %v4756 = vcombine.low %v4691, %v4707
        %v4757 = vcombine.high %v4691, %v4707
        %v4759 = vunpack.c.l.s4 1934713408
        %v4760 = vunpack.c.0.s8 %v4759
        %v4761 = vlaneseq
        %v4762 = vshrl.u32 %v4761, 7
        %v4763 = vsub.s32 %v4760, %v4762
        %v4764 = vrot.slane %v4756, %v4763
        %v4766 = vunpack.c.l.s4 1934713408
        %v4767 = vunpack.c.0.s8 %v4766
        %v4768 = vlaneseq
        %v4769 = vshrl.u32 %v4768, 7
        %v4770 = vsub.s32 %v4767, %v4769
        %v4771 = vrot.slane %v4757, %v4770
        %v4772 = vcombine.low %v4716, %v4732
        %v4773 = vcombine.high %v4716, %v4732
        %v4775 = vunpack.c.l.s4 1934713408
        %v4776 = vunpack.c.0.s8 %v4775
        %v4777 = vlaneseq
        %v4778 = vshrl.u32 %v4777, 7
        %v4779 = vsub.s32 %v4776, %v4778
        %v4780 = vrot.slane %v4772, %v4779
        %v4782 = vunpack.c.l.s4 1934713408
        %v4783 = vunpack.c.0.s8 %v4782
        %v4784 = vlaneseq
        %v4785 = vshrl.u32 %v4784, 7
        %v4786 = vsub.s32 %v4783, %v4785
        %v4787 = vrot.slane %v4773, %v4786
        %v4788 = vcombine.low %v4723, %v4739
        %v4789 = vcombine.high %v4723, %v4739
        %v4791 = vunpack.c.l.s4 1934713408
        %v4792 = vunpack.c.0.s8 %v4791
        %v4793 = vlaneseq
        %v4794 = vshrl.u32 %v4793, 7
        %v4795 = vsub.s32 %v4792, %v4794
        %v4796 = vrot.slane %v4788, %v4795
        %v4798 = vunpack.c.l.s4 1934713408
        %v4799 = vunpack.c.0.s8 %v4798
        %v4800 = vlaneseq
        %v4801 = vshrl.u32 %v4800, 7
        %v4802 = vsub.s32 %v4799, %v4801
        %v4803 = vrot.slane %v4789, %v4802
        %v4804 = vcombine.low %v4748, %v4780
        %v4805 = vcombine.high %v4748, %v4780
        %v4806 = vcombine.low %v4755, %v4787
        %v4807 = vcombine.high %v4755, %v4787
        %v4808 = vcombine.low %v4764, %v4796
        %v4809 = vcombine.high %v4764, %v4796
        %v4810 = vcombine.low %v4771, %v4803
        %v4811 = vcombine.high %v4771, %v4803
        %4814 = vrot.lane.b32.xlu0 %v4490, 112
        %v4815 = vpop.permute.xlu0 %4814
        %4816 = vrot.lane.b32.xlu0 %v4493, 112
        %v4817 = vpop.permute.xlu0 %4816
        %4820 = vrot.lane.b32.xlu0 %v4490, 96
        %v4821 = vpop.permute.xlu0 %4820
        %4822 = vrot.lane.b32.xlu0 %v4493, 96
        %v4823 = vpop.permute.xlu0 %4822
        %4826 = vrot.lane.b32.xlu0 %v4490, 80
        %v4827 = vpop.permute.xlu0 %4826
        %4828 = vrot.lane.b32.xlu0 %v4493, 80
        %v4829 = vpop.permute.xlu0 %4828
        %4832 = vrot.lane.b32.xlu0 %v4490, 64
        %v4833 = vpop.permute.xlu0 %4832
        %4834 = vrot.lane.b32.xlu0 %v4493, 64
        %v4835 = vpop.permute.xlu0 %4834
        %4838 = vrot.lane.b32.xlu0 %v4490, 48
        %v4839 = vpop.permute.xlu0 %4838
        %4840 = vrot.lane.b32.xlu0 %v4493, 48
        %v4841 = vpop.permute.xlu0 %4840
        %4844 = vrot.lane.b32.xlu0 %v4490, 32
        %v4845 = vpop.permute.xlu0 %4844
        %4846 = vrot.lane.b32.xlu0 %v4493, 32
        %v4847 = vpop.permute.xlu0 %4846
        %4850 = vrot.lane.b32.xlu0 %v4490, 16
        %v4851 = vpop.permute.xlu0 %4850
        %4852 = vrot.lane.b32.xlu0 %v4493, 16
        %v4853 = vpop.permute.xlu0 %4852
        %v4856 = vcombine.low %v4490, %v4821
        %v4857 = vcombine.high %v4490, %v4821
        %v4859 = vunpack.c.l.s4 1983009808
        %v4860 = vunpack.c.0.s8 %v4859
        %v4861 = vlaneseq
        %v4862 = vshrl.u32 %v4861, 7
        %v4863 = vsub.s32 %v4860, %v4862
        %v4864 = vrot.slane %v4856, %v4863
        %v4866 = vunpack.c.l.s4 1983009808
        %v4867 = vunpack.c.0.s8 %v4866
        %v4868 = vlaneseq
        %v4869 = vshrl.u32 %v4868, 7
        %v4870 = vsub.s32 %v4867, %v4869
        %v4871 = vrot.slane %v4857, %v4870
        %v4872 = vcombine.low %v4815, %v4827
        %v4873 = vcombine.high %v4815, %v4827
        %v4875 = vunpack.c.l.s4 1983009808
        %v4876 = vunpack.c.0.s8 %v4875
        %v4877 = vlaneseq
        %v4878 = vshrl.u32 %v4877, 7
        %v4879 = vsub.s32 %v4876, %v4878
        %v4880 = vrot.slane %v4872, %v4879
        %v4882 = vunpack.c.l.s4 1983009808
        %v4883 = vunpack.c.0.s8 %v4882
        %v4884 = vlaneseq
        %v4885 = vshrl.u32 %v4884, 7
        %v4886 = vsub.s32 %v4883, %v4885
        %v4887 = vrot.slane %v4873, %v4886
        %v4888 = vcombine.low %v4833, %v4845
        %v4889 = vcombine.high %v4833, %v4845
        %v4891 = vunpack.c.l.s4 1983009808
        %v4892 = vunpack.c.0.s8 %v4891
        %v4893 = vlaneseq
        %v4894 = vshrl.u32 %v4893, 7
        %v4895 = vsub.s32 %v4892, %v4894
        %v4896 = vrot.slane %v4888, %v4895
        %v4898 = vunpack.c.l.s4 1983009808
        %v4899 = vunpack.c.0.s8 %v4898
        %v4900 = vlaneseq
        %v4901 = vshrl.u32 %v4900, 7
        %v4902 = vsub.s32 %v4899, %v4901
        %v4903 = vrot.slane %v4889, %v4902
        %v4904 = vcombine.low %v4839, %v4851
        %v4905 = vcombine.high %v4839, %v4851
        %v4907 = vunpack.c.l.s4 1983009808
        %v4908 = vunpack.c.0.s8 %v4907
        %v4909 = vlaneseq
        %v4910 = vshrl.u32 %v4909, 7
        %v4911 = vsub.s32 %v4908, %v4910
        %v4912 = vrot.slane %v4904, %v4911
        %v4914 = vunpack.c.l.s4 1983009808
        %v4915 = vunpack.c.0.s8 %v4914
        %v4916 = vlaneseq
        %v4917 = vshrl.u32 %v4916, 7
        %v4918 = vsub.s32 %v4915, %v4917
        %v4919 = vrot.slane %v4905, %v4918
        %v4920 = vcombine.low %v4864, %v4880
        %v4921 = vcombine.high %v4864, %v4880
        %v4923 = vunpack.c.l.s4 1934713408
        %v4924 = vunpack.c.0.s8 %v4923
        %v4925 = vlaneseq
        %v4926 = vshrl.u32 %v4925, 7
        %v4927 = vsub.s32 %v4924, %v4926
        %v4928 = vrot.slane %v4920, %v4927
        %v4930 = vunpack.c.l.s4 1934713408
        %v4931 = vunpack.c.0.s8 %v4930
        %v4932 = vlaneseq
        %v4933 = vshrl.u32 %v4932, 7
        %v4934 = vsub.s32 %v4931, %v4933
        %v4935 = vrot.slane %v4921, %v4934
        %v4936 = vcombine.low %v4871, %v4887
        %v4937 = vcombine.high %v4871, %v4887
        %v4939 = vunpack.c.l.s4 1934713408
        %v4940 = vunpack.c.0.s8 %v4939
        %v4941 = vlaneseq
        %v4942 = vshrl.u32 %v4941, 7
        %v4943 = vsub.s32 %v4940, %v4942
        %v4944 = vrot.slane %v4936, %v4943
        %v4946 = vunpack.c.l.s4 1934713408
        %v4947 = vunpack.c.0.s8 %v4946
        %v4948 = vlaneseq
        %v4949 = vshrl.u32 %v4948, 7
        %v4950 = vsub.s32 %v4947, %v4949
        %v4951 = vrot.slane %v4937, %v4950
        %v4952 = vcombine.low %v4896, %v4912
        %v4953 = vcombine.high %v4896, %v4912
        %v4955 = vunpack.c.l.s4 1934713408
        %v4956 = vunpack.c.0.s8 %v4955
        %v4957 = vlaneseq
        %v4958 = vshrl.u32 %v4957, 7
        %v4959 = vsub.s32 %v4956, %v4958
        %v4960 = vrot.slane %v4952, %v4959
        %v4962 = vunpack.c.l.s4 1934713408
        %v4963 = vunpack.c.0.s8 %v4962
        %v4964 = vlaneseq
        %v4965 = vshrl.u32 %v4964, 7
        %v4966 = vsub.s32 %v4963, %v4965
        %v4967 = vrot.slane %v4953, %v4966
        %v4968 = vcombine.low %v4903, %v4919
        %v4969 = vcombine.high %v4903, %v4919
        %v4971 = vunpack.c.l.s4 1934713408
        %v4972 = vunpack.c.0.s8 %v4971
        %v4973 = vlaneseq
        %v4974 = vshrl.u32 %v4973, 7
        %v4975 = vsub.s32 %v4972, %v4974
        %v4976 = vrot.slane %v4968, %v4975
        %v4978 = vunpack.c.l.s4 1934713408
        %v4979 = vunpack.c.0.s8 %v4978
        %v4980 = vlaneseq
        %v4981 = vshrl.u32 %v4980, 7
        %v4982 = vsub.s32 %v4979, %v4981
        %v4983 = vrot.slane %v4969, %v4982
        %v4984 = vcombine.low %v4928, %v4960
        %v4985 = vcombine.high %v4928, %v4960
        %v4986 = vcombine.low %v4935, %v4967
        %v4987 = vcombine.high %v4935, %v4967
        %v4988 = vcombine.low %v4944, %v4976
        %v4989 = vcombine.high %v4944, %v4976
        %v4990 = vcombine.low %v4951, %v4983
        %v4991 = vcombine.high %v4951, %v4983
        %v4992 = vcombine.low %v4493, %v4823
        %v4993 = vcombine.high %v4493, %v4823
        %v4995 = vunpack.c.l.s4 1983009808
        %v4996 = vunpack.c.0.s8 %v4995
        %v4997 = vlaneseq
        %v4998 = vshrl.u32 %v4997, 7
        %v4999 = vsub.s32 %v4996, %v4998
        %v5000 = vrot.slane %v4992, %v4999
        %v5002 = vunpack.c.l.s4 1983009808
        %v5003 = vunpack.c.0.s8 %v5002
        %v5004 = vlaneseq
        %v5005 = vshrl.u32 %v5004, 7
        %v5006 = vsub.s32 %v5003, %v5005
        %v5007 = vrot.slane %v4993, %v5006
        %v5008 = vcombine.low %v4817, %v4829
        %v5009 = vcombine.high %v4817, %v4829
        %v5011 = vunpack.c.l.s4 1983009808
        %v5012 = vunpack.c.0.s8 %v5011
        %v5013 = vlaneseq
        %v5014 = vshrl.u32 %v5013, 7
        %v5015 = vsub.s32 %v5012, %v5014
        %v5016 = vrot.slane %v5008, %v5015
        %v5018 = vunpack.c.l.s4 1983009808
        %v5019 = vunpack.c.0.s8 %v5018
        %v5020 = vlaneseq
        %v5021 = vshrl.u32 %v5020, 7
        %v5022 = vsub.s32 %v5019, %v5021
        %v5023 = vrot.slane %v5009, %v5022
        %v5024 = vcombine.low %v4835, %v4847
        %v5025 = vcombine.high %v4835, %v4847
        %v5027 = vunpack.c.l.s4 1983009808
        %v5028 = vunpack.c.0.s8 %v5027
        %v5029 = vlaneseq
        %v5030 = vshrl.u32 %v5029, 7
        %v5031 = vsub.s32 %v5028, %v5030
        %v5032 = vrot.slane %v5024, %v5031
        %v5034 = vunpack.c.l.s4 1983009808
        %v5035 = vunpack.c.0.s8 %v5034
        %v5036 = vlaneseq
        %v5037 = vshrl.u32 %v5036, 7
        %v5038 = vsub.s32 %v5035, %v5037
        %v5039 = vrot.slane %v5025, %v5038
        %v5040 = vcombine.low %v4841, %v4853
        %v5041 = vcombine.high %v4841, %v4853
        %v5043 = vunpack.c.l.s4 1983009808
        %v5044 = vunpack.c.0.s8 %v5043
        %v5045 = vlaneseq
        %v5046 = vshrl.u32 %v5045, 7
        %v5047 = vsub.s32 %v5044, %v5046
        %v5048 = vrot.slane %v5040, %v5047
        %v5050 = vunpack.c.l.s4 1983009808
        %v5051 = vunpack.c.0.s8 %v5050
        %v5052 = vlaneseq
        %v5053 = vshrl.u32 %v5052, 7
        %v5054 = vsub.s32 %v5051, %v5053
        %v5055 = vrot.slane %v5041, %v5054
        %v5056 = vcombine.low %v5000, %v5016
        %v5057 = vcombine.high %v5000, %v5016
        %v5059 = vunpack.c.l.s4 1934713408
        %v5060 = vunpack.c.0.s8 %v5059
        %v5061 = vlaneseq
        %v5062 = vshrl.u32 %v5061, 7
        %v5063 = vsub.s32 %v5060, %v5062
        %v5064 = vrot.slane %v5056, %v5063
        %v5066 = vunpack.c.l.s4 1934713408
        %v5067 = vunpack.c.0.s8 %v5066
        %v5068 = vlaneseq
        %v5069 = vshrl.u32 %v5068, 7
        %v5070 = vsub.s32 %v5067, %v5069
        %v5071 = vrot.slane %v5057, %v5070
        %v5072 = vcombine.low %v5007, %v5023
        %v5073 = vcombine.high %v5007, %v5023
        %v5075 = vunpack.c.l.s4 1934713408
        %v5076 = vunpack.c.0.s8 %v5075
        %v5077 = vlaneseq
        %v5078 = vshrl.u32 %v5077, 7
        %v5079 = vsub.s32 %v5076, %v5078
        %v5080 = vrot.slane %v5072, %v5079
        %v5082 = vunpack.c.l.s4 1934713408
        %v5083 = vunpack.c.0.s8 %v5082
        %v5084 = vlaneseq
        %v5085 = vshrl.u32 %v5084, 7
        %v5086 = vsub.s32 %v5083, %v5085
        %v5087 = vrot.slane %v5073, %v5086
        %v5088 = vcombine.low %v5032, %v5048
        %v5089 = vcombine.high %v5032, %v5048
        %v5091 = vunpack.c.l.s4 1934713408
        %v5092 = vunpack.c.0.s8 %v5091
        %v5093 = vlaneseq
        %v5094 = vshrl.u32 %v5093, 7
        %v5095 = vsub.s32 %v5092, %v5094
        %v5096 = vrot.slane %v5088, %v5095
        %v5098 = vunpack.c.l.s4 1934713408
        %v5099 = vunpack.c.0.s8 %v5098
        %v5100 = vlaneseq
        %v5101 = vshrl.u32 %v5100, 7
        %v5102 = vsub.s32 %v5099, %v5101
        %v5103 = vrot.slane %v5089, %v5102
        %v5104 = vcombine.low %v5039, %v5055
        %v5105 = vcombine.high %v5039, %v5055
        %v5107 = vunpack.c.l.s4 1934713408
        %v5108 = vunpack.c.0.s8 %v5107
        %v5109 = vlaneseq
        %v5110 = vshrl.u32 %v5109, 7
        %v5111 = vsub.s32 %v5108, %v5110
        %v5112 = vrot.slane %v5104, %v5111
        %v5114 = vunpack.c.l.s4 1934713408
        %v5115 = vunpack.c.0.s8 %v5114
        %v5116 = vlaneseq
        %v5117 = vshrl.u32 %v5116, 7
        %v5118 = vsub.s32 %v5115, %v5117
        %v5119 = vrot.slane %v5105, %v5118
        %v5120 = vcombine.low %v5064, %v5096
        %v5121 = vcombine.high %v5064, %v5096
        %v5122 = vcombine.low %v5071, %v5103
        %v5123 = vcombine.high %v5071, %v5103
        %v5124 = vcombine.low %v5080, %v5112
        %v5125 = vcombine.high %v5080, %v5112
        %v5126 = vcombine.low %v5087, %v5119
        %v5127 = vcombine.high %v5087, %v5119
        %5144 = vrot.lane.b32.xlu0 %v4984, 16
        %v5145 = vpop.permute.xlu0 %5144
        %5146 = vrot.lane.b32.xlu0 %v4985, 16
        %v5147 = vpop.permute.xlu0 %5146
        %5148 = vrot.lane.b32.xlu0 %v4986, 16
        %v5149 = vpop.permute.xlu0 %5148
        %5150 = vrot.lane.b32.xlu0 %v4987, 16
        %v5151 = vpop.permute.xlu0 %5150
        %5152 = vrot.lane.b32.xlu0 %v4988, 16
        %v5153 = vpop.permute.xlu0 %5152
        %5154 = vrot.lane.b32.xlu0 %v4989, 16
        %v5155 = vpop.permute.xlu0 %5154
        %5156 = vrot.lane.b32.xlu0 %v4990, 16
        %v5157 = vpop.permute.xlu0 %5156
        %5158 = vrot.lane.b32.xlu0 %v4991, 16
        %v5159 = vpop.permute.xlu0 %5158
        %5160 = vrot.lane.b32.xlu0 %v5120, 16
        %v5161 = vpop.permute.xlu0 %5160
        %5162 = vrot.lane.b32.xlu0 %v5121, 16
        %v5163 = vpop.permute.xlu0 %5162
        %5164 = vrot.lane.b32.xlu0 %v5122, 16
        %v5165 = vpop.permute.xlu0 %5164
        %5166 = vrot.lane.b32.xlu0 %v5123, 16
        %v5167 = vpop.permute.xlu0 %5166
        %5168 = vrot.lane.b32.xlu0 %v5124, 16
        %v5169 = vpop.permute.xlu0 %5168
        %5170 = vrot.lane.b32.xlu0 %v5125, 16
        %v5171 = vpop.permute.xlu0 %5170
        %5172 = vrot.lane.b32.xlu0 %v5126, 16
        %v5173 = vpop.permute.xlu0 %5172
        %5174 = vrot.lane.b32.xlu0 %v5127, 16
        %v5175 = vpop.permute.xlu0 %5174
        %v5192 = vsel %vm1913, %v4668, %v5145
        %v5193 = vsel %vm1913, %v4669, %v5147
        %v5194 = vsel %vm1913, %v4670, %v5149
        %v5195 = vsel %vm1913, %v4671, %v5151
        %v5196 = vsel %vm1913, %v4672, %v5153
        %v5197 = vsel %vm1913, %v4673, %v5155
        %v5198 = vsel %vm1913, %v4674, %v5157
        %v5199 = vsel %vm1913, %v4675, %v5159
        %v5200 = vsel %vm1913, %v4804, %v5161
        %v5201 = vsel %vm1913, %v4805, %v5163
        %v5202 = vsel %vm1913, %v4806, %v5165
        %v5203 = vsel %vm1913, %v4807, %v5167
        %v5204 = vsel %vm1913, %v4808, %v5169
        %v5205 = vsel %vm1913, %v4809, %v5171
        %v5206 = vsel %vm1913, %v4810, %v5173
        %v5207 = vsel %vm1913, %v4811, %v5175
        %v5208 = vpack.c.bf16 %v5192, %v5192
        %v5209 = vpack.c.bf16 %v5193, %v5193
        %v5210 = vpack.c.bf16 %v5194, %v5194
        %v5211 = vpack.c.bf16 %v5195, %v5195
        %v5212 = vpack.c.bf16 %v5196, %v5196
        %v5213 = vpack.c.bf16 %v5197, %v5197
        %v5214 = vpack.c.bf16 %v5198, %v5198
        %v5215 = vpack.c.bf16 %v5199, %v5199
        %v5216 = vpack.c.bf16 %v5200, %v5200
        %v5217 = vpack.c.bf16 %v5201, %v5201
        %v5218 = vpack.c.bf16 %v5202, %v5202
        %v5219 = vpack.c.bf16 %v5203, %v5203
        %v5220 = vpack.c.bf16 %v5204, %v5204
        %v5221 = vpack.c.bf16 %v5205, %v5205
        %v5222 = vpack.c.bf16 %v5206, %v5206
        %v5223 = vpack.c.bf16 %v5207, %v5207
        %v5224 = vld [vmem:[#allocation8] sm:$0xf]
        %v5225 = vld [vmem:[#allocation8 + $0x4] sm:$0xf]
        %v5226 = vld [vmem:[#allocation8 + $0x8] sm:$0xf]
        %v5227 = vld [vmem:[#allocation8 + $0xc] sm:$0xf]
        %v5228 = vld [vmem:[#allocation8 + $0x10] sm:$0xf]
        %v5229 = vld [vmem:[#allocation8 + $0x14] sm:$0xf]
        %v5230 = vld [vmem:[#allocation8 + $0x18] sm:$0xf]
        %v5231 = vld [vmem:[#allocation8 + $0x1c] sm:$0xf]
        %v5232 = vld [vmem:[#allocation8 + $0x20] sm:$0xf]
        %v5233 = vld [vmem:[#allocation8 + $0x24] sm:$0xf]
        %v5234 = vld [vmem:[#allocation8 + $0x28] sm:$0xf]
        %v5235 = vld [vmem:[#allocation8 + $0x2c] sm:$0xf]
        %v5236 = vld [vmem:[#allocation8 + $0x30] sm:$0xf]
        %v5237 = vld [vmem:[#allocation8 + $0x34] sm:$0xf]
        %v5238 = vld [vmem:[#allocation8 + $0x38] sm:$0xf]
        %v5239 = vld [vmem:[#allocation8 + $0x3c] sm:$0xf]
        %v5240 = vld [vmem:[#allocation8 + $0x40] sm:$0xf]
        %v5241 = vld [vmem:[#allocation8 + $0x44] sm:$0xf]
        %v5242 = vld [vmem:[#allocation8 + $0x48] sm:$0xf]
        %v5243 = vld [vmem:[#allocation8 + $0x4c] sm:$0xf]
        %v5244 = vld [vmem:[#allocation8 + $0x50] sm:$0xf]
        %v5245 = vld [vmem:[#allocation8 + $0x54] sm:$0xf]
        %v5246 = vld [vmem:[#allocation8 + $0x58] sm:$0xf]
        %v5247 = vld [vmem:[#allocation8 + $0x5c] sm:$0xf]
        %v5248 = vld [vmem:[#allocation8 + $0x60] sm:$0xf]
        %v5249 = vld [vmem:[#allocation8 + $0x64] sm:$0xf]
        %v5250 = vld [vmem:[#allocation8 + $0x68] sm:$0xf]
        %v5251 = vld [vmem:[#allocation8 + $0x6c] sm:$0xf]
        %v5252 = vld [vmem:[#allocation8 + $0x70] sm:$0xf]
        %v5253 = vld [vmem:[#allocation8 + $0x74] sm:$0xf]
        %v5254 = vld [vmem:[#allocation8 + $0x78] sm:$0xf]
        %v5255 = vld [vmem:[#allocation8 + $0x7c] sm:$0xf]
        %v5256 = vld [vmem:[#allocation8 + $0x80] sm:$0xf]
        %v5257 = vld [vmem:[#allocation8 + $0x84] sm:$0xf]
        %v5258 = vld [vmem:[#allocation8 + $0x88] sm:$0xf]
        %v5259 = vld [vmem:[#allocation8 + $0x8c] sm:$0xf]
        %v5260 = vld [vmem:[#allocation8 + $0x90] sm:$0xf]
        %v5261 = vld [vmem:[#allocation8 + $0x94] sm:$0xf]
        %v5262 = vld [vmem:[#allocation8 + $0x98] sm:$0xf]
        %v5263 = vld [vmem:[#allocation8 + $0x9c] sm:$0xf]
        %v5264 = vld [vmem:[#allocation8 + $0xa0] sm:$0xf]
        %v5265 = vld [vmem:[#allocation8 + $0xa4] sm:$0xf]
        %v5266 = vld [vmem:[#allocation8 + $0xa8] sm:$0xf]
        %v5267 = vld [vmem:[#allocation8 + $0xac] sm:$0xf]
        %v5268 = vld [vmem:[#allocation8 + $0xb0] sm:$0xf]
        %v5269 = vld [vmem:[#allocation8 + $0xb4] sm:$0xf]
        %v5270 = vld [vmem:[#allocation8 + $0xb8] sm:$0xf]
        %v5271 = vld [vmem:[#allocation8 + $0xbc] sm:$0xf]
        %v5272 = vld [vmem:[#allocation8 + $0xc0] sm:$0xf]
        %v5273 = vld [vmem:[#allocation8 + $0xc4] sm:$0xf]
        %v5274 = vld [vmem:[#allocation8 + $0xc8] sm:$0xf]
        %v5275 = vld [vmem:[#allocation8 + $0xcc] sm:$0xf]
        %v5276 = vld [vmem:[#allocation8 + $0xd0] sm:$0xf]
        %v5277 = vld [vmem:[#allocation8 + $0xd4] sm:$0xf]
        %v5278 = vld [vmem:[#allocation8 + $0xd8] sm:$0xf]
        %v5279 = vld [vmem:[#allocation8 + $0xdc] sm:$0xf]
        %v5280 = vld [vmem:[#allocation8 + $0xe0] sm:$0xf]
        %v5281 = vld [vmem:[#allocation8 + $0xe4] sm:$0xf]
        %v5282 = vld [vmem:[#allocation8 + $0xe8] sm:$0xf]
        %v5283 = vld [vmem:[#allocation8 + $0xec] sm:$0xf]
        %v5284 = vld [vmem:[#allocation8 + $0xf0] sm:$0xf]
        %v5285 = vld [vmem:[#allocation8 + $0xf4] sm:$0xf]
        %v5286 = vld [vmem:[#allocation8 + $0xf8] sm:$0xf]
        %v5287 = vld [vmem:[#allocation8 + $0xfc] sm:$0xf]
        %v5292 = vunpack.c.l.b16 %v5224
        %v5293 = vunpack.c.l.b16 %v5225
        %v5294 = vunpack.c.l.b16 %v5226
        %v5295 = vunpack.c.l.b16 %v5227
        %v5296 = vpack.c.b16 %v5293, %v5292
        %v5297 = vpack.c.b16 %v5295, %v5294
        %v5301 = vsel %vm2022, %v5208, 0
        %5303 = vmatprep.subr.bf16.mxu0 0
        %5304 = vmatpush1.bf16.msra.mxu0 %v5296
        %5305 = vmatprep.subr.bf16.mxu0 0
        %5306 = vmatpush1.bf16.msra.mxu0 %v5297
        %5307 = vmatprep.subr.bf16.mxu0 0
        %5308 = vmatpush1.bf16.msra.mxu0 0
        %5309 = vmatprep.subr.bf16.mxu0 0
        %5310 = vmatpush1.bf16.msra.mxu0 0
        %5311 = vmatprep.subr.bf16.mxu0 0
        %5312 = vmatpush1.bf16.msra.mxu0 0
        %5313 = vmatprep.subr.bf16.mxu0 0
        %5314 = vmatpush1.bf16.msra.mxu0 0
        %5315 = vmatprep.subr.bf16.mxu0 0
        %5316 = vmatpush1.bf16.msra.mxu0 0
        %5317 = vmatprep.subr.bf16.mxu0 0
        %5318 = vmatpush1.bf16.msra.mxu0 0
        %5319 = vmatprep.subr.bf16.mxu0 0
        %5320 = vmatpush1.bf16.msra.mxu0 0
        %5321 = vmatprep.subr.bf16.mxu0 0
        %5322 = vmatpush1.bf16.msra.mxu0 0
        %5323 = vmatprep.subr.bf16.mxu0 0
        %5324 = vmatpush1.bf16.msra.mxu0 0
        %5325 = vmatprep.subr.bf16.mxu0 0
        %5326 = vmatpush1.bf16.msra.mxu0 0
        %5327 = vmatprep.subr.bf16.mxu0 0
        %5328 = vmatpush1.bf16.msra.mxu0 0
        %5329 = vmatprep.subr.bf16.mxu0 0
        %5330 = vmatpush1.bf16.msra.mxu0 0
        %5331 = vmatprep.subr.bf16.mxu0 0
        %5332 = vmatpush1.bf16.msra.mxu0 0
        %5333 = vmatprep.subr.bf16.mxu0 0
        %5334 = vmatpush1.bf16.msra.mxu0 0
        %5335 = vmatprep.mubr.bf16.mxu0 0
        %5336 = vmatmul.mubr.bf16.gmra.mrb[0].mxu0 %v5301
        %v5337 = vpop.f32.mrb[0].mxu0
        %v5338 = vadd.f32 0.0, %v5337
        %v5339 = vpop.f32.mrb[0].mxu0
        %v5340 = vpop.f32.mrb[0].mxu0
        %v5341 = vpop.f32.mrb[0].mxu0
        %5342 = vdwg.mxu0
        %v5347 = vunpack.c.l.b16 %v5228
        %v5348 = vunpack.c.l.b16 %v5229
        %v5349 = vunpack.c.l.b16 %v5230
        %v5350 = vunpack.c.l.b16 %v5231
        %v5351 = vpack.c.b16 %v5348, %v5347
        %v5352 = vpack.c.b16 %v5350, %v5349
        %v5356 = vsel %vm2022, %v5209, 0
        %5358 = vmatprep.subr.bf16.mxu0 0
        %5359 = vmatpush1.bf16.msra.mxu0 %v5351
        %5360 = vmatprep.subr.bf16.mxu0 0
        %5361 = vmatpush1.bf16.msra.mxu0 %v5352
        %5362 = vmatprep.subr.bf16.mxu0 0
        %5363 = vmatpush1.bf16.msra.mxu0 0
        %5364 = vmatprep.subr.bf16.mxu0 0
        %5365 = vmatpush1.bf16.msra.mxu0 0
        %5366 = vmatprep.subr.bf16.mxu0 0
        %5367 = vmatpush1.bf16.msra.mxu0 0
        %5368 = vmatprep.subr.bf16.mxu0 0
        %5369 = vmatpush1.bf16.msra.mxu0 0
        %5370 = vmatprep.subr.bf16.mxu0 0
        %5371 = vmatpush1.bf16.msra.mxu0 0
        %5372 = vmatprep.subr.bf16.mxu0 0
        %5373 = vmatpush1.bf16.msra.mxu0 0
        %5374 = vmatprep.subr.bf16.mxu0 0
        %5375 = vmatpush1.bf16.msra.mxu0 0
        %5376 = vmatprep.subr.bf16.mxu0 0
        %5377 = vmatpush1.bf16.msra.mxu0 0
        %5378 = vmatprep.subr.bf16.mxu0 0
        %5379 = vmatpush1.bf16.msra.mxu0 0
        %5380 = vmatprep.subr.bf16.mxu0 0
        %5381 = vmatpush1.bf16.msra.mxu0 0
        %5382 = vmatprep.subr.bf16.mxu0 0
        %5383 = vmatpush1.bf16.msra.mxu0 0
        %5384 = vmatprep.subr.bf16.mxu0 0
        %5385 = vmatpush1.bf16.msra.mxu0 0
        %5386 = vmatprep.subr.bf16.mxu0 0
        %5387 = vmatpush1.bf16.msra.mxu0 0
        %5388 = vmatprep.subr.bf16.mxu0 0
        %5389 = vmatpush1.bf16.msra.mxu0 0
        %5390 = vmatprep.mubr.bf16.mxu0 0
        %5391 = vmatmul.mubr.bf16.gmra.mrb[0].mxu0 %v5356
        %v5392 = vpop.f32.mrb[0].mxu0
        %v5393 = vadd.f32 0.0, %v5392
        %v5394 = vpop.f32.mrb[0].mxu0
        %v5395 = vpop.f32.mrb[0].mxu0
        %v5396 = vpop.f32.mrb[0].mxu0
        %5397 = vdwg.mxu0
        %v5402 = vunpack.c.l.b16 %v5232
        %v5403 = vunpack.c.l.b16 %v5233
        %v5404 = vunpack.c.l.b16 %v5234
        %v5405 = vunpack.c.l.b16 %v5235
        %v5406 = vpack.c.b16 %v5403, %v5402
        %v5407 = vpack.c.b16 %v5405, %v5404
        %v5411 = vsel %vm2022, %v5210, 0
        %5413 = vmatprep.subr.bf16.mxu0 0
        %5414 = vmatpush1.bf16.msra.mxu0 %v5406
        %5415 = vmatprep.subr.bf16.mxu0 0
        %5416 = vmatpush1.bf16.msra.mxu0 %v5407
        %5417 = vmatprep.subr.bf16.mxu0 0
        %5418 = vmatpush1.bf16.msra.mxu0 0
        %5419 = vmatprep.subr.bf16.mxu0 0
        %5420 = vmatpush1.bf16.msra.mxu0 0
        %5421 = vmatprep.subr.bf16.mxu0 0
        %5422 = vmatpush1.bf16.msra.mxu0 0
        %5423 = vmatprep.subr.bf16.mxu0 0
        %5424 = vmatpush1.bf16.msra.mxu0 0
        %5425 = vmatprep.subr.bf16.mxu0 0
        %5426 = vmatpush1.bf16.msra.mxu0 0
        %5427 = vmatprep.subr.bf16.mxu0 0
        %5428 = vmatpush1.bf16.msra.mxu0 0
        %5429 = vmatprep.subr.bf16.mxu0 0
        %5430 = vmatpush1.bf16.msra.mxu0 0
        %5431 = vmatprep.subr.bf16.mxu0 0
        %5432 = vmatpush1.bf16.msra.mxu0 0
        %5433 = vmatprep.subr.bf16.mxu0 0
        %5434 = vmatpush1.bf16.msra.mxu0 0
        %5435 = vmatprep.subr.bf16.mxu0 0
        %5436 = vmatpush1.bf16.msra.mxu0 0
        %5437 = vmatprep.subr.bf16.mxu0 0
        %5438 = vmatpush1.bf16.msra.mxu0 0
        %5439 = vmatprep.subr.bf16.mxu0 0
        %5440 = vmatpush1.bf16.msra.mxu0 0
        %5441 = vmatprep.subr.bf16.mxu0 0
        %5442 = vmatpush1.bf16.msra.mxu0 0
        %5443 = vmatprep.subr.bf16.mxu0 0
        %5444 = vmatpush1.bf16.msra.mxu0 0
        %5445 = vmatprep.mubr.bf16.mxu0 0
        %5446 = vmatmul.mubr.bf16.gmra.mrb[0].mxu0 %v5411
        %v5447 = vpop.f32.mrb[0].mxu0
        %v5448 = vadd.f32 0.0, %v5447
        %v5449 = vpop.f32.mrb[0].mxu0
        %v5450 = vpop.f32.mrb[0].mxu0
        %v5451 = vpop.f32.mrb[0].mxu0
        %5452 = vdwg.mxu0
        %v5457 = vunpack.c.l.b16 %v5236
        %v5458 = vunpack.c.l.b16 %v5237
        %v5459 = vunpack.c.l.b16 %v5238
        %v5460 = vunpack.c.l.b16 %v5239
        %v5461 = vpack.c.b16 %v5458, %v5457
        %v5462 = vpack.c.b16 %v5460, %v5459
        %v5466 = vsel %vm2022, %v5211, 0
        %5468 = vmatprep.subr.bf16.mxu0 0
        %5469 = vmatpush1.bf16.msra.mxu0 %v5461
        %5470 = vmatprep.subr.bf16.mxu0 0
        %5471 = vmatpush1.bf16.msra.mxu0 %v5462
        %5472 = vmatprep.subr.bf16.mxu0 0
        %5473 = vmatpush1.bf16.msra.mxu0 0
        %5474 = vmatprep.subr.bf16.mxu0 0
        %5475 = vmatpush1.bf16.msra.mxu0 0
        %5476 = vmatprep.subr.bf16.mxu0 0
        %5477 = vmatpush1.bf16.msra.mxu0 0
        %5478 = vmatprep.subr.bf16.mxu0 0
        %5479 = vmatpush1.bf16.msra.mxu0 0
        %5480 = vmatprep.subr.bf16.mxu0 0
        %5481 = vmatpush1.bf16.msra.mxu0 0
        %5482 = vmatprep.subr.bf16.mxu0 0
        %5483 = vmatpush1.bf16.msra.mxu0 0
        %5484 = vmatprep.subr.bf16.mxu0 0
        %5485 = vmatpush1.bf16.msra.mxu0 0
        %5486 = vmatprep.subr.bf16.mxu0 0
        %5487 = vmatpush1.bf16.msra.mxu0 0
        %5488 = vmatprep.subr.bf16.mxu0 0
        %5489 = vmatpush1.bf16.msra.mxu0 0
        %5490 = vmatprep.subr.bf16.mxu0 0
        %5491 = vmatpush1.bf16.msra.mxu0 0
        %5492 = vmatprep.subr.bf16.mxu0 0
        %5493 = vmatpush1.bf16.msra.mxu0 0
        %5494 = vmatprep.subr.bf16.mxu0 0
        %5495 = vmatpush1.bf16.msra.mxu0 0
        %5496 = vmatprep.subr.bf16.mxu0 0
        %5497 = vmatpush1.bf16.msra.mxu0 0
        %5498 = vmatprep.subr.bf16.mxu0 0
        %5499 = vmatpush1.bf16.msra.mxu0 0
        %5500 = vmatprep.mubr.bf16.mxu0 0
        %5501 = vmatmul.mubr.bf16.gmra.mrb[0].mxu0 %v5466
        %v5502 = vpop.f32.mrb[0].mxu0
        %v5503 = vadd.f32 0.0, %v5502
        %v5504 = vpop.f32.mrb[0].mxu0
        %v5505 = vpop.f32.mrb[0].mxu0
        %v5506 = vpop.f32.mrb[0].mxu0
        %5507 = vdwg.mxu0
        %v5512 = vunpack.c.l.b16 %v5240
        %v5513 = vunpack.c.l.b16 %v5241
        %v5514 = vunpack.c.l.b16 %v5242
        %v5515 = vunpack.c.l.b16 %v5243
        %v5516 = vpack.c.b16 %v5513, %v5512
        %v5517 = vpack.c.b16 %v5515, %v5514
        %v5521 = vsel %vm2022, %v5212, 0
        %5523 = vmatprep.subr.bf16.mxu0 0
        %5524 = vmatpush1.bf16.msra.mxu0 %v5516
        %5525 = vmatprep.subr.bf16.mxu0 0
        %5526 = vmatpush1.bf16.msra.mxu0 %v5517
        %5527 = vmatprep.subr.bf16.mxu0 0
        %5528 = vmatpush1.bf16.msra.mxu0 0
        %5529 = vmatprep.subr.bf16.mxu0 0
        %5530 = vmatpush1.bf16.msra.mxu0 0
        %5531 = vmatprep.subr.bf16.mxu0 0
        %5532 = vmatpush1.bf16.msra.mxu0 0
        %5533 = vmatprep.subr.bf16.mxu0 0
        %5534 = vmatpush1.bf16.msra.mxu0 0
        %5535 = vmatprep.subr.bf16.mxu0 0
        %5536 = vmatpush1.bf16.msra.mxu0 0
        %5537 = vmatprep.subr.bf16.mxu0 0
        %5538 = vmatpush1.bf16.msra.mxu0 0
        %5539 = vmatprep.subr.bf16.mxu0 0
        %5540 = vmatpush1.bf16.msra.mxu0 0
        %5541 = vmatprep.subr.bf16.mxu0 0
        %5542 = vmatpush1.bf16.msra.mxu0 0
        %5543 = vmatprep.subr.bf16.mxu0 0
        %5544 = vmatpush1.bf16.msra.mxu0 0
        %5545 = vmatprep.subr.bf16.mxu0 0
        %5546 = vmatpush1.bf16.msra.mxu0 0
        %5547 = vmatprep.subr.bf16.mxu0 0
        %5548 = vmatpush1.bf16.msra.mxu0 0
        %5549 = vmatprep.subr.bf16.mxu0 0
        %5550 = vmatpush1.bf16.msra.mxu0 0
        %5551 = vmatprep.subr.bf16.mxu0 0
        %5552 = vmatpush1.bf16.msra.mxu0 0
        %5553 = vmatprep.subr.bf16.mxu0 0
        %5554 = vmatpush1.bf16.msra.mxu0 0
        %5555 = vmatprep.mubr.bf16.mxu0 0
        %5556 = vmatmul.mubr.bf16.gmra.mrb[0].mxu0 %v5521
        %v5557 = vpop.f32.mrb[0].mxu0
        %v5558 = vadd.f32 0.0, %v5557
        %v5559 = vpop.f32.mrb[0].mxu0
        %v5560 = vpop.f32.mrb[0].mxu0
        %v5561 = vpop.f32.mrb[0].mxu0
        %5562 = vdwg.mxu0
        %v5567 = vunpack.c.l.b16 %v5244
        %v5568 = vunpack.c.l.b16 %v5245
        %v5569 = vunpack.c.l.b16 %v5246
        %v5570 = vunpack.c.l.b16 %v5247
        %v5571 = vpack.c.b16 %v5568, %v5567
        %v5572 = vpack.c.b16 %v5570, %v5569
        %v5576 = vsel %vm2022, %v5213, 0
        %5578 = vmatprep.subr.bf16.mxu0 0
        %5579 = vmatpush1.bf16.msra.mxu0 %v5571
        %5580 = vmatprep.subr.bf16.mxu0 0
        %5581 = vmatpush1.bf16.msra.mxu0 %v5572
        %5582 = vmatprep.subr.bf16.mxu0 0
        %5583 = vmatpush1.bf16.msra.mxu0 0
        %5584 = vmatprep.subr.bf16.mxu0 0
        %5585 = vmatpush1.bf16.msra.mxu0 0
        %5586 = vmatprep.subr.bf16.mxu0 0
        %5587 = vmatpush1.bf16.msra.mxu0 0
        %5588 = vmatprep.subr.bf16.mxu0 0
        %5589 = vmatpush1.bf16.msra.mxu0 0
        %5590 = vmatprep.subr.bf16.mxu0 0
        %5591 = vmatpush1.bf16.msra.mxu0 0
        %5592 = vmatprep.subr.bf16.mxu0 0
        %5593 = vmatpush1.bf16.msra.mxu0 0
        %5594 = vmatprep.subr.bf16.mxu0 0
        %5595 = vmatpush1.bf16.msra.mxu0 0
        %5596 = vmatprep.subr.bf16.mxu0 0
        %5597 = vmatpush1.bf16.msra.mxu0 0
        %5598 = vmatprep.subr.bf16.mxu0 0
        %5599 = vmatpush1.bf16.msra.mxu0 0
        %5600 = vmatprep.subr.bf16.mxu0 0
        %5601 = vmatpush1.bf16.msra.mxu0 0
        %5602 = vmatprep.subr.bf16.mxu0 0
        %5603 = vmatpush1.bf16.msra.mxu0 0
        %5604 = vmatprep.subr.bf16.mxu0 0
        %5605 = vmatpush1.bf16.msra.mxu0 0
        %5606 = vmatprep.subr.bf16.mxu0 0
        %5607 = vmatpush1.bf16.msra.mxu0 0
        %5608 = vmatprep.subr.bf16.mxu0 0
        %5609 = vmatpush1.bf16.msra.mxu0 0
        %5610 = vmatprep.mubr.bf16.mxu0 0
        %5611 = vmatmul.mubr.bf16.gmra.mrb[0].mxu0 %v5576
        %v5612 = vpop.f32.mrb[0].mxu0
        %v5613 = vadd.f32 0.0, %v5612
        %v5614 = vpop.f32.mrb[0].mxu0
        %v5615 = vpop.f32.mrb[0].mxu0
        %v5616 = vpop.f32.mrb[0].mxu0
        %5617 = vdwg.mxu0
        %v5622 = vunpack.c.l.b16 %v5248
        %v5623 = vunpack.c.l.b16 %v5249
        %v5624 = vunpack.c.l.b16 %v5250
        %v5625 = vunpack.c.l.b16 %v5251
        %v5626 = vpack.c.b16 %v5623, %v5622
        %v5627 = vpack.c.b16 %v5625, %v5624
        %v5631 = vsel %vm2022, %v5214, 0
        %5633 = vmatprep.subr.bf16.mxu0 0
        %5634 = vmatpush1.bf16.msra.mxu0 %v5626
        %5635 = vmatprep.subr.bf16.mxu0 0
        %5636 = vmatpush1.bf16.msra.mxu0 %v5627
        %5637 = vmatprep.subr.bf16.mxu0 0
        %5638 = vmatpush1.bf16.msra.mxu0 0
        %5639 = vmatprep.subr.bf16.mxu0 0
        %5640 = vmatpush1.bf16.msra.mxu0 0
        %5641 = vmatprep.subr.bf16.mxu0 0
        %5642 = vmatpush1.bf16.msra.mxu0 0
        %5643 = vmatprep.subr.bf16.mxu0 0
        %5644 = vmatpush1.bf16.msra.mxu0 0
        %5645 = vmatprep.subr.bf16.mxu0 0
        %5646 = vmatpush1.bf16.msra.mxu0 0
        %5647 = vmatprep.subr.bf16.mxu0 0
        %5648 = vmatpush1.bf16.msra.mxu0 0
        %5649 = vmatprep.subr.bf16.mxu0 0
        %5650 = vmatpush1.bf16.msra.mxu0 0
        %5651 = vmatprep.subr.bf16.mxu0 0
        %5652 = vmatpush1.bf16.msra.mxu0 0
        %5653 = vmatprep.subr.bf16.mxu0 0
        %5654 = vmatpush1.bf16.msra.mxu0 0
        %5655 = vmatprep.subr.bf16.mxu0 0
        %5656 = vmatpush1.bf16.msra.mxu0 0
        %5657 = vmatprep.subr.bf16.mxu0 0
        %5658 = vmatpush1.bf16.msra.mxu0 0
        %5659 = vmatprep.subr.bf16.mxu0 0
        %5660 = vmatpush1.bf16.msra.mxu0 0
        %5661 = vmatprep.subr.bf16.mxu0 0
        %5662 = vmatpush1.bf16.msra.mxu0 0
        %5663 = vmatprep.subr.bf16.mxu0 0
        %5664 = vmatpush1.bf16.msra.mxu0 0
        %5665 = vmatprep.mubr.bf16.mxu0 0
        %5666 = vmatmul.mubr.bf16.gmra.mrb[0].mxu0 %v5631
        %v5667 = vpop.f32.mrb[0].mxu0
        %v5668 = vadd.f32 0.0, %v5667
        %v5669 = vpop.f32.mrb[0].mxu0
        %v5670 = vpop.f32.mrb[0].mxu0
        %v5671 = vpop.f32.mrb[0].mxu0
        %5672 = vdwg.mxu0
        %v5677 = vunpack.c.l.b16 %v5252
        %v5678 = vunpack.c.l.b16 %v5253
        %v5679 = vunpack.c.l.b16 %v5254
        %v5680 = vunpack.c.l.b16 %v5255
        %v5681 = vpack.c.b16 %v5678, %v5677
        %v5682 = vpack.c.b16 %v5680, %v5679
        %v5686 = vsel %vm2022, %v5215, 0
        %5688 = vmatprep.subr.bf16.mxu0 0
        %5689 = vmatpush1.bf16.msra.mxu0 %v5681
        %5690 = vmatprep.subr.bf16.mxu0 0
        %5691 = vmatpush1.bf16.msra.mxu0 %v5682
        %5692 = vmatprep.subr.bf16.mxu0 0
        %5693 = vmatpush1.bf16.msra.mxu0 0
        %5694 = vmatprep.subr.bf16.mxu0 0
        %5695 = vmatpush1.bf16.msra.mxu0 0
        %5696 = vmatprep.subr.bf16.mxu0 0
        %5697 = vmatpush1.bf16.msra.mxu0 0
        %5698 = vmatprep.subr.bf16.mxu0 0
        %5699 = vmatpush1.bf16.msra.mxu0 0
        %5700 = vmatprep.subr.bf16.mxu0 0
        %5701 = vmatpush1.bf16.msra.mxu0 0
        %5702 = vmatprep.subr.bf16.mxu0 0
        %5703 = vmatpush1.bf16.msra.mxu0 0
        %5704 = vmatprep.subr.bf16.mxu0 0
        %5705 = vmatpush1.bf16.msra.mxu0 0
        %5706 = vmatprep.subr.bf16.mxu0 0
        %5707 = vmatpush1.bf16.msra.mxu0 0
        %5708 = vmatprep.subr.bf16.mxu0 0
        %5709 = vmatpush1.bf16.msra.mxu0 0
        %5710 = vmatprep.subr.bf16.mxu0 0
        %5711 = vmatpush1.bf16.msra.mxu0 0
        %5712 = vmatprep.subr.bf16.mxu0 0
        %5713 = vmatpush1.bf16.msra.mxu0 0
        %5714 = vmatprep.subr.bf16.mxu0 0
        %5715 = vmatpush1.bf16.msra.mxu0 0
        %5716 = vmatprep.subr.bf16.mxu0 0
        %5717 = vmatpush1.bf16.msra.mxu0 0
        %5718 = vmatprep.subr.bf16.mxu0 0
        %5719 = vmatpush1.bf16.msra.mxu0 0
        %5720 = vmatprep.mubr.bf16.mxu0 0
        %5721 = vmatmul.mubr.bf16.gmra.mrb[0].mxu0 %v5686
        %v5722 = vpop.f32.mrb[0].mxu0
        %v5723 = vadd.f32 0.0, %v5722
        %v5724 = vpop.f32.mrb[0].mxu0
        %v5725 = vpop.f32.mrb[0].mxu0
        %v5726 = vpop.f32.mrb[0].mxu0
        %5727 = vdwg.mxu0
        %v5732 = vunpack.c.l.b16 %v5256
        %v5733 = vunpack.c.l.b16 %v5257
        %v5734 = vunpack.c.l.b16 %v5258
        %v5735 = vunpack.c.l.b16 %v5259
        %v5736 = vpack.c.b16 %v5733, %v5732
        %v5737 = vpack.c.b16 %v5735, %v5734
        %v5741 = vsel %vm2022, %v5216, 0
        %5743 = vmatprep.subr.bf16.mxu0 0
        %5744 = vmatpush1.bf16.msra.mxu0 %v5736
        %5745 = vmatprep.subr.bf16.mxu0 0
        %5746 = vmatpush1.bf16.msra.mxu0 %v5737
        %5747 = vmatprep.subr.bf16.mxu0 0
        %5748 = vmatpush1.bf16.msra.mxu0 0
        %5749 = vmatprep.subr.bf16.mxu0 0
        %5750 = vmatpush1.bf16.msra.mxu0 0
        %5751 = vmatprep.subr.bf16.mxu0 0
        %5752 = vmatpush1.bf16.msra.mxu0 0
        %5753 = vmatprep.subr.bf16.mxu0 0
        %5754 = vmatpush1.bf16.msra.mxu0 0
        %5755 = vmatprep.subr.bf16.mxu0 0
        %5756 = vmatpush1.bf16.msra.mxu0 0
        %5757 = vmatprep.subr.bf16.mxu0 0
        %5758 = vmatpush1.bf16.msra.mxu0 0
        %5759 = vmatprep.subr.bf16.mxu0 0
        %5760 = vmatpush1.bf16.msra.mxu0 0
        %5761 = vmatprep.subr.bf16.mxu0 0
        %5762 = vmatpush1.bf16.msra.mxu0 0
        %5763 = vmatprep.subr.bf16.mxu0 0
        %5764 = vmatpush1.bf16.msra.mxu0 0
        %5765 = vmatprep.subr.bf16.mxu0 0
        %5766 = vmatpush1.bf16.msra.mxu0 0
        %5767 = vmatprep.subr.bf16.mxu0 0
        %5768 = vmatpush1.bf16.msra.mxu0 0
        %5769 = vmatprep.subr.bf16.mxu0 0
        %5770 = vmatpush1.bf16.msra.mxu0 0
        %5771 = vmatprep.subr.bf16.mxu0 0
        %5772 = vmatpush1.bf16.msra.mxu0 0
        %5773 = vmatprep.subr.bf16.mxu0 0
        %5774 = vmatpush1.bf16.msra.mxu0 0
        %5775 = vmatprep.mubr.bf16.mxu0 0
        %5776 = vmatmul.mubr.bf16.gmra.mrb[0].mxu0 %v5741
        %v5777 = vpop.f32.mrb[0].mxu0
        %v5778 = vadd.f32 0.0, %v5777
        %v5779 = vpop.f32.mrb[0].mxu0
        %v5780 = vpop.f32.mrb[0].mxu0
        %v5781 = vpop.f32.mrb[0].mxu0
        %5782 = vdwg.mxu0
        %v5787 = vunpack.c.l.b16 %v5260
        %v5788 = vunpack.c.l.b16 %v5261
        %v5789 = vunpack.c.l.b16 %v5262
        %v5790 = vunpack.c.l.b16 %v5263
        %v5791 = vpack.c.b16 %v5788, %v5787
        %v5792 = vpack.c.b16 %v5790, %v5789
        %v5796 = vsel %vm2022, %v5217, 0
        %5798 = vmatprep.subr.bf16.mxu0 0
        %5799 = vmatpush1.bf16.msra.mxu0 %v5791
        %5800 = vmatprep.subr.bf16.mxu0 0
        %5801 = vmatpush1.bf16.msra.mxu0 %v5792
        %5802 = vmatprep.subr.bf16.mxu0 0
        %5803 = vmatpush1.bf16.msra.mxu0 0
        %5804 = vmatprep.subr.bf16.mxu0 0
        %5805 = vmatpush1.bf16.msra.mxu0 0
        %5806 = vmatprep.subr.bf16.mxu0 0
        %5807 = vmatpush1.bf16.msra.mxu0 0
        %5808 = vmatprep.subr.bf16.mxu0 0
        %5809 = vmatpush1.bf16.msra.mxu0 0
        %5810 = vmatprep.subr.bf16.mxu0 0
        %5811 = vmatpush1.bf16.msra.mxu0 0
        %5812 = vmatprep.subr.bf16.mxu0 0
        %5813 = vmatpush1.bf16.msra.mxu0 0
        %5814 = vmatprep.subr.bf16.mxu0 0
        %5815 = vmatpush1.bf16.msra.mxu0 0
        %5816 = vmatprep.subr.bf16.mxu0 0
        %5817 = vmatpush1.bf16.msra.mxu0 0
        %5818 = vmatprep.subr.bf16.mxu0 0
        %5819 = vmatpush1.bf16.msra.mxu0 0
        %5820 = vmatprep.subr.bf16.mxu0 0
        %5821 = vmatpush1.bf16.msra.mxu0 0
        %5822 = vmatprep.subr.bf16.mxu0 0
        %5823 = vmatpush1.bf16.msra.mxu0 0
        %5824 = vmatprep.subr.bf16.mxu0 0
        %5825 = vmatpush1.bf16.msra.mxu0 0
        %5826 = vmatprep.subr.bf16.mxu0 0
        %5827 = vmatpush1.bf16.msra.mxu0 0
        %5828 = vmatprep.subr.bf16.mxu0 0
        %5829 = vmatpush1.bf16.msra.mxu0 0
        %5830 = vmatprep.mubr.bf16.mxu0 0
        %5831 = vmatmul.mubr.bf16.gmra.mrb[0].mxu0 %v5796
        %v5832 = vpop.f32.mrb[0].mxu0
        %v5833 = vadd.f32 0.0, %v5832
        %v5834 = vpop.f32.mrb[0].mxu0
        %v5835 = vpop.f32.mrb[0].mxu0
        %v5836 = vpop.f32.mrb[0].mxu0
        %5837 = vdwg.mxu0
        %v5842 = vunpack.c.l.b16 %v5264
        %v5843 = vunpack.c.l.b16 %v5265
        %v5844 = vunpack.c.l.b16 %v5266
        %v5845 = vunpack.c.l.b16 %v5267
        %v5846 = vpack.c.b16 %v5843, %v5842
        %v5847 = vpack.c.b16 %v5845, %v5844
        %v5851 = vsel %vm2022, %v5218, 0
        %5853 = vmatprep.subr.bf16.mxu0 0
        %5854 = vmatpush1.bf16.msra.mxu0 %v5846
        %5855 = vmatprep.subr.bf16.mxu0 0
        %5856 = vmatpush1.bf16.msra.mxu0 %v5847
        %5857 = vmatprep.subr.bf16.mxu0 0
        %5858 = vmatpush1.bf16.msra.mxu0 0
        %5859 = vmatprep.subr.bf16.mxu0 0
        %5860 = vmatpush1.bf16.msra.mxu0 0
        %5861 = vmatprep.subr.bf16.mxu0 0
        %5862 = vmatpush1.bf16.msra.mxu0 0
        %5863 = vmatprep.subr.bf16.mxu0 0
        %5864 = vmatpush1.bf16.msra.mxu0 0
        %5865 = vmatprep.subr.bf16.mxu0 0
        %5866 = vmatpush1.bf16.msra.mxu0 0
        %5867 = vmatprep.subr.bf16.mxu0 0
        %5868 = vmatpush1.bf16.msra.mxu0 0
        %5869 = vmatprep.subr.bf16.mxu0 0
        %5870 = vmatpush1.bf16.msra.mxu0 0
        %5871 = vmatprep.subr.bf16.mxu0 0
        %5872 = vmatpush1.bf16.msra.mxu0 0
        %5873 = vmatprep.subr.bf16.mxu0 0
        %5874 = vmatpush1.bf16.msra.mxu0 0
        %5875 = vmatprep.subr.bf16.mxu0 0
        %5876 = vmatpush1.bf16.msra.mxu0 0
        %5877 = vmatprep.subr.bf16.mxu0 0
        %5878 = vmatpush1.bf16.msra.mxu0 0
        %5879 = vmatprep.subr.bf16.mxu0 0
        %5880 = vmatpush1.bf16.msra.mxu0 0
        %5881 = vmatprep.subr.bf16.mxu0 0
        %5882 = vmatpush1.bf16.msra.mxu0 0
        %5883 = vmatprep.subr.bf16.mxu0 0
        %5884 = vmatpush1.bf16.msra.mxu0 0
        %5885 = vmatprep.mubr.bf16.mxu0 0
        %5886 = vmatmul.mubr.bf16.gmra.mrb[0].mxu0 %v5851
        %v5887 = vpop.f32.mrb[0].mxu0
        %v5888 = vadd.f32 0.0, %v5887
        %v5889 = vpop.f32.mrb[0].mxu0
        %v5890 = vpop.f32.mrb[0].mxu0
        %v5891 = vpop.f32.mrb[0].mxu0
        %5892 = vdwg.mxu0
        %v5897 = vunpack.c.l.b16 %v5268
        %v5898 = vunpack.c.l.b16 %v5269
        %v5899 = vunpack.c.l.b16 %v5270
        %v5900 = vunpack.c.l.b16 %v5271
        %v5901 = vpack.c.b16 %v5898, %v5897
        %v5902 = vpack.c.b16 %v5900, %v5899
        %v5906 = vsel %vm2022, %v5219, 0
        %5908 = vmatprep.subr.bf16.mxu0 0
        %5909 = vmatpush1.bf16.msra.mxu0 %v5901
        %5910 = vmatprep.subr.bf16.mxu0 0
        %5911 = vmatpush1.bf16.msra.mxu0 %v5902
        %5912 = vmatprep.subr.bf16.mxu0 0
        %5913 = vmatpush1.bf16.msra.mxu0 0
        %5914 = vmatprep.subr.bf16.mxu0 0
        %5915 = vmatpush1.bf16.msra.mxu0 0
        %5916 = vmatprep.subr.bf16.mxu0 0
        %5917 = vmatpush1.bf16.msra.mxu0 0
        %5918 = vmatprep.subr.bf16.mxu0 0
        %5919 = vmatpush1.bf16.msra.mxu0 0
        %5920 = vmatprep.subr.bf16.mxu0 0
        %5921 = vmatpush1.bf16.msra.mxu0 0
        %5922 = vmatprep.subr.bf16.mxu0 0
        %5923 = vmatpush1.bf16.msra.mxu0 0
        %5924 = vmatprep.subr.bf16.mxu0 0
        %5925 = vmatpush1.bf16.msra.mxu0 0
        %5926 = vmatprep.subr.bf16.mxu0 0
        %5927 = vmatpush1.bf16.msra.mxu0 0
        %5928 = vmatprep.subr.bf16.mxu0 0
        %5929 = vmatpush1.bf16.msra.mxu0 0
        %5930 = vmatprep.subr.bf16.mxu0 0
        %5931 = vmatpush1.bf16.msra.mxu0 0
        %5932 = vmatprep.subr.bf16.mxu0 0
        %5933 = vmatpush1.bf16.msra.mxu0 0
        %5934 = vmatprep.subr.bf16.mxu0 0
        %5935 = vmatpush1.bf16.msra.mxu0 0
        %5936 = vmatprep.subr.bf16.mxu0 0
        %5937 = vmatpush1.bf16.msra.mxu0 0
        %5938 = vmatprep.subr.bf16.mxu0 0
        %5939 = vmatpush1.bf16.msra.mxu0 0
        %5940 = vmatprep.mubr.bf16.mxu0 0
        %5941 = vmatmul.mubr.bf16.gmra.mrb[0].mxu0 %v5906
        %v5942 = vpop.f32.mrb[0].mxu0
        %v5943 = vadd.f32 0.0, %v5942
        %v5944 = vpop.f32.mrb[0].mxu0
        %v5945 = vpop.f32.mrb[0].mxu0
        %v5946 = vpop.f32.mrb[0].mxu0
        %5947 = vdwg.mxu0
        %v5952 = vunpack.c.l.b16 %v5272
        %v5953 = vunpack.c.l.b16 %v5273
        %v5954 = vunpack.c.l.b16 %v5274
        %v5955 = vunpack.c.l.b16 %v5275
        %v5956 = vpack.c.b16 %v5953, %v5952
        %v5957 = vpack.c.b16 %v5955, %v5954
        %v5961 = vsel %vm2022, %v5220, 0
        %5963 = vmatprep.subr.bf16.mxu0 0
        %5964 = vmatpush1.bf16.msra.mxu0 %v5956
        %5965 = vmatprep.subr.bf16.mxu0 0
        %5966 = vmatpush1.bf16.msra.mxu0 %v5957
        %5967 = vmatprep.subr.bf16.mxu0 0
        %5968 = vmatpush1.bf16.msra.mxu0 0
        %5969 = vmatprep.subr.bf16.mxu0 0
        %5970 = vmatpush1.bf16.msra.mxu0 0
        %5971 = vmatprep.subr.bf16.mxu0 0
        %5972 = vmatpush1.bf16.msra.mxu0 0
        %5973 = vmatprep.subr.bf16.mxu0 0
        %5974 = vmatpush1.bf16.msra.mxu0 0
        %5975 = vmatprep.subr.bf16.mxu0 0
        %5976 = vmatpush1.bf16.msra.mxu0 0
        %5977 = vmatprep.subr.bf16.mxu0 0
        %5978 = vmatpush1.bf16.msra.mxu0 0
        %5979 = vmatprep.subr.bf16.mxu0 0
        %5980 = vmatpush1.bf16.msra.mxu0 0
        %5981 = vmatprep.subr.bf16.mxu0 0
        %5982 = vmatpush1.bf16.msra.mxu0 0
        %5983 = vmatprep.subr.bf16.mxu0 0
        %5984 = vmatpush1.bf16.msra.mxu0 0
        %5985 = vmatprep.subr.bf16.mxu0 0
        %5986 = vmatpush1.bf16.msra.mxu0 0
        %5987 = vmatprep.subr.bf16.mxu0 0
        %5988 = vmatpush1.bf16.msra.mxu0 0
        %5989 = vmatprep.subr.bf16.mxu0 0
        %5990 = vmatpush1.bf16.msra.mxu0 0
        %5991 = vmatprep.subr.bf16.mxu0 0
        %5992 = vmatpush1.bf16.msra.mxu0 0
        %5993 = vmatprep.subr.bf16.mxu0 0
        %5994 = vmatpush1.bf16.msra.mxu0 0
        %5995 = vmatprep.mubr.bf16.mxu0 0
        %5996 = vmatmul.mubr.bf16.gmra.mrb[0].mxu0 %v5961
        %v5997 = vpop.f32.mrb[0].mxu0
        %v5998 = vadd.f32 0.0, %v5997
        %v5999 = vpop.f32.mrb[0].mxu0
        %v6000 = vpop.f32.mrb[0].mxu0
        %v6001 = vpop.f32.mrb[0].mxu0
        %6002 = vdwg.mxu0
        %v6007 = vunpack.c.l.b16 %v5276
        %v6008 = vunpack.c.l.b16 %v5277
        %v6009 = vunpack.c.l.b16 %v5278
        %v6010 = vunpack.c.l.b16 %v5279
        %v6011 = vpack.c.b16 %v6008, %v6007
        %v6012 = vpack.c.b16 %v6010, %v6009
        %v6016 = vsel %vm2022, %v5221, 0
        %6018 = vmatprep.subr.bf16.mxu0 0
        %6019 = vmatpush1.bf16.msra.mxu0 %v6011
        %6020 = vmatprep.subr.bf16.mxu0 0
        %6021 = vmatpush1.bf16.msra.mxu0 %v6012
        %6022 = vmatprep.subr.bf16.mxu0 0
        %6023 = vmatpush1.bf16.msra.mxu0 0
        %6024 = vmatprep.subr.bf16.mxu0 0
        %6025 = vmatpush1.bf16.msra.mxu0 0
        %6026 = vmatprep.subr.bf16.mxu0 0
        %6027 = vmatpush1.bf16.msra.mxu0 0
        %6028 = vmatprep.subr.bf16.mxu0 0
        %6029 = vmatpush1.bf16.msra.mxu0 0
        %6030 = vmatprep.subr.bf16.mxu0 0
        %6031 = vmatpush1.bf16.msra.mxu0 0
        %6032 = vmatprep.subr.bf16.mxu0 0
        %6033 = vmatpush1.bf16.msra.mxu0 0
        %6034 = vmatprep.subr.bf16.mxu0 0
        %6035 = vmatpush1.bf16.msra.mxu0 0
        %6036 = vmatprep.subr.bf16.mxu0 0
        %6037 = vmatpush1.bf16.msra.mxu0 0
        %6038 = vmatprep.subr.bf16.mxu0 0
        %6039 = vmatpush1.bf16.msra.mxu0 0
        %6040 = vmatprep.subr.bf16.mxu0 0
        %6041 = vmatpush1.bf16.msra.mxu0 0
        %6042 = vmatprep.subr.bf16.mxu0 0
        %6043 = vmatpush1.bf16.msra.mxu0 0
        %6044 = vmatprep.subr.bf16.mxu0 0
        %6045 = vmatpush1.bf16.msra.mxu0 0
        %6046 = vmatprep.subr.bf16.mxu0 0
        %6047 = vmatpush1.bf16.msra.mxu0 0
        %6048 = vmatprep.subr.bf16.mxu0 0
        %6049 = vmatpush1.bf16.msra.mxu0 0
        %6050 = vmatprep.mubr.bf16.mxu0 0
        %6051 = vmatmul.mubr.bf16.gmra.mrb[0].mxu0 %v6016
        %v6052 = vpop.f32.mrb[0].mxu0
        %v6053 = vadd.f32 0.0, %v6052
        %v6054 = vpop.f32.mrb[0].mxu0
        %v6055 = vpop.f32.mrb[0].mxu0
        %v6056 = vpop.f32.mrb[0].mxu0
        %6057 = vdwg.mxu0
        %v6062 = vunpack.c.l.b16 %v5280
        %v6063 = vunpack.c.l.b16 %v5281
        %v6064 = vunpack.c.l.b16 %v5282
        %v6065 = vunpack.c.l.b16 %v5283
        %v6066 = vpack.c.b16 %v6063, %v6062
        %v6067 = vpack.c.b16 %v6065, %v6064
        %v6071 = vsel %vm2022, %v5222, 0
        %6073 = vmatprep.subr.bf16.mxu0 0
        %6074 = vmatpush1.bf16.msra.mxu0 %v6066
        %6075 = vmatprep.subr.bf16.mxu0 0
        %6076 = vmatpush1.bf16.msra.mxu0 %v6067
        %6077 = vmatprep.subr.bf16.mxu0 0
        %6078 = vmatpush1.bf16.msra.mxu0 0
        %6079 = vmatprep.subr.bf16.mxu0 0
        %6080 = vmatpush1.bf16.msra.mxu0 0
        %6081 = vmatprep.subr.bf16.mxu0 0
        %6082 = vmatpush1.bf16.msra.mxu0 0
        %6083 = vmatprep.subr.bf16.mxu0 0
        %6084 = vmatpush1.bf16.msra.mxu0 0
        %6085 = vmatprep.subr.bf16.mxu0 0
        %6086 = vmatpush1.bf16.msra.mxu0 0
        %6087 = vmatprep.subr.bf16.mxu0 0
        %6088 = vmatpush1.bf16.msra.mxu0 0
        %6089 = vmatprep.subr.bf16.mxu0 0
        %6090 = vmatpush1.bf16.msra.mxu0 0
        %6091 = vmatprep.subr.bf16.mxu0 0
        %6092 = vmatpush1.bf16.msra.mxu0 0
        %6093 = vmatprep.subr.bf16.mxu0 0
        %6094 = vmatpush1.bf16.msra.mxu0 0
        %6095 = vmatprep.subr.bf16.mxu0 0
        %6096 = vmatpush1.bf16.msra.mxu0 0
        %6097 = vmatprep.subr.bf16.mxu0 0
        %6098 = vmatpush1.bf16.msra.mxu0 0
        %6099 = vmatprep.subr.bf16.mxu0 0
        %6100 = vmatpush1.bf16.msra.mxu0 0
        %6101 = vmatprep.subr.bf16.mxu0 0
        %6102 = vmatpush1.bf16.msra.mxu0 0
        %6103 = vmatprep.subr.bf16.mxu0 0
        %6104 = vmatpush1.bf16.msra.mxu0 0
        %6105 = vmatprep.mubr.bf16.mxu0 0
        %6106 = vmatmul.mubr.bf16.gmra.mrb[0].mxu0 %v6071
        %v6107 = vpop.f32.mrb[0].mxu0
        %v6108 = vadd.f32 0.0, %v6107
        %v6109 = vpop.f32.mrb[0].mxu0
        %v6110 = vpop.f32.mrb[0].mxu0
        %v6111 = vpop.f32.mrb[0].mxu0
        %6112 = vdwg.mxu0
        %v6117 = vunpack.c.l.b16 %v5284
        %v6118 = vunpack.c.l.b16 %v5285
        %v6119 = vunpack.c.l.b16 %v5286
        %v6120 = vunpack.c.l.b16 %v5287
        %v6121 = vpack.c.b16 %v6118, %v6117
        %v6122 = vpack.c.b16 %v6120, %v6119
        %v6126 = vsel %vm2022, %v5223, 0
        %6128 = vmatprep.subr.bf16.mxu0 0
        %6129 = vmatpush1.bf16.msra.mxu0 %v6121
        %6130 = vmatprep.subr.bf16.mxu0 0
        %6131 = vmatpush1.bf16.msra.mxu0 %v6122
        %6132 = vmatprep.subr.bf16.mxu0 0
        %6133 = vmatpush1.bf16.msra.mxu0 0
        %6134 = vmatprep.subr.bf16.mxu0 0
        %6135 = vmatpush1.bf16.msra.mxu0 0
        %6136 = vmatprep.subr.bf16.mxu0 0
        %6137 = vmatpush1.bf16.msra.mxu0 0
        %6138 = vmatprep.subr.bf16.mxu0 0
        %6139 = vmatpush1.bf16.msra.mxu0 0
        %6140 = vmatprep.subr.bf16.mxu0 0
        %6141 = vmatpush1.bf16.msra.mxu0 0
        %6142 = vmatprep.subr.bf16.mxu0 0
        %6143 = vmatpush1.bf16.msra.mxu0 0
        %6144 = vmatprep.subr.bf16.mxu0 0
        %6145 = vmatpush1.bf16.msra.mxu0 0
        %6146 = vmatprep.subr.bf16.mxu0 0
        %6147 = vmatpush1.bf16.msra.mxu0 0
        %6148 = vmatprep.subr.bf16.mxu0 0
        %6149 = vmatpush1.bf16.msra.mxu0 0
        %6150 = vmatprep.subr.bf16.mxu0 0
        %6151 = vmatpush1.bf16.msra.mxu0 0
        %6152 = vmatprep.subr.bf16.mxu0 0
        %6153 = vmatpush1.bf16.msra.mxu0 0
        %6154 = vmatprep.subr.bf16.mxu0 0
        %6155 = vmatpush1.bf16.msra.mxu0 0
        %6156 = vmatprep.subr.bf16.mxu0 0
        %6157 = vmatpush1.bf16.msra.mxu0 0
        %6158 = vmatprep.subr.bf16.mxu0 0
        %6159 = vmatpush1.bf16.msra.mxu0 0
        %6160 = vmatprep.mubr.bf16.mxu0 0
        %6161 = vmatmul.mubr.bf16.gmra.mrb[0].mxu0 %v6126
        %v6162 = vpop.f32.mrb[0].mxu0
        %v6163 = vadd.f32 0.0, %v6162
        %v6164 = vpop.f32.mrb[0].mxu0
        %v6165 = vpop.f32.mrb[0].mxu0
        %v6166 = vpop.f32.mrb[0].mxu0
        %6167 = vdwg.mxu0
        %6184 = vrot.lane.b32.xlu0 %v5338, 112
        %v6185 = vpop.permute.xlu0 %6184
        %6186 = vrot.lane.b32.xlu0 %v5393, 112
        %v6187 = vpop.permute.xlu0 %6186
        %6188 = vrot.lane.b32.xlu0 %v5448, 112
        %v6189 = vpop.permute.xlu0 %6188
        %6190 = vrot.lane.b32.xlu0 %v5503, 112
        %v6191 = vpop.permute.xlu0 %6190
        %6192 = vrot.lane.b32.xlu0 %v5558, 112
        %v6193 = vpop.permute.xlu0 %6192
        %6194 = vrot.lane.b32.xlu0 %v5613, 112
        %v6195 = vpop.permute.xlu0 %6194
        %6196 = vrot.lane.b32.xlu0 %v5668, 112
        %v6197 = vpop.permute.xlu0 %6196
        %6198 = vrot.lane.b32.xlu0 %v5723, 112
        %v6199 = vpop.permute.xlu0 %6198
        %6200 = vrot.lane.b32.xlu0 %v5778, 112
        %v6201 = vpop.permute.xlu0 %6200
        %6202 = vrot.lane.b32.xlu0 %v5833, 112
        %v6203 = vpop.permute.xlu0 %6202
        %6204 = vrot.lane.b32.xlu0 %v5888, 112
        %v6205 = vpop.permute.xlu0 %6204
        %6206 = vrot.lane.b32.xlu0 %v5943, 112
        %v6207 = vpop.permute.xlu0 %6206
        %6208 = vrot.lane.b32.xlu0 %v5998, 112
        %v6209 = vpop.permute.xlu0 %6208
        %6210 = vrot.lane.b32.xlu0 %v6053, 112
        %v6211 = vpop.permute.xlu0 %6210
        %6212 = vrot.lane.b32.xlu0 %v6108, 112
        %v6213 = vpop.permute.xlu0 %6212
        %6214 = vrot.lane.b32.xlu0 %v6163, 112
        %v6215 = vpop.permute.xlu0 %6214
        %v6232 = vcombine.low %v5338, %v5448
        %v6233 = vcombine.high %v5338, %v5448
        %v6235 = vunpack.c.l.s4 1983009808
        %v6236 = vunpack.c.0.s8 %v6235
        %v6237 = vlaneseq
        %v6238 = vshrl.u32 %v6237, 7
        %v6239 = vsub.s32 %v6236, %v6238
        %v6240 = vrot.slane %v6232, %v6239
        %v6242 = vunpack.c.l.s4 1983009808
        %v6243 = vunpack.c.0.s8 %v6242
        %v6244 = vlaneseq
        %v6245 = vshrl.u32 %v6244, 7
        %v6246 = vsub.s32 %v6243, %v6245
        %v6247 = vrot.slane %v6233, %v6246
        %v6248 = vcombine.low %v5393, %v5503
        %v6249 = vcombine.high %v5393, %v5503
        %v6251 = vunpack.c.l.s4 1983009808
        %v6252 = vunpack.c.0.s8 %v6251
        %v6253 = vlaneseq
        %v6254 = vshrl.u32 %v6253, 7
        %v6255 = vsub.s32 %v6252, %v6254
        %v6256 = vrot.slane %v6248, %v6255
        %v6258 = vunpack.c.l.s4 1983009808
        %v6259 = vunpack.c.0.s8 %v6258
        %v6260 = vlaneseq
        %v6261 = vshrl.u32 %v6260, 7
        %v6262 = vsub.s32 %v6259, %v6261
        %v6263 = vrot.slane %v6249, %v6262
        %v6264 = vcombine.low %v5558, %v5668
        %v6265 = vcombine.high %v5558, %v5668
        %v6267 = vunpack.c.l.s4 1983009808
        %v6268 = vunpack.c.0.s8 %v6267
        %v6269 = vlaneseq
        %v6270 = vshrl.u32 %v6269, 7
        %v6271 = vsub.s32 %v6268, %v6270
        %v6272 = vrot.slane %v6264, %v6271
        %v6274 = vunpack.c.l.s4 1983009808
        %v6275 = vunpack.c.0.s8 %v6274
        %v6276 = vlaneseq
        %v6277 = vshrl.u32 %v6276, 7
        %v6278 = vsub.s32 %v6275, %v6277
        %v6279 = vrot.slane %v6265, %v6278
        %v6280 = vcombine.low %v5613, %v5723
        %v6281 = vcombine.high %v5613, %v5723
        %v6283 = vunpack.c.l.s4 1983009808
        %v6284 = vunpack.c.0.s8 %v6283
        %v6285 = vlaneseq
        %v6286 = vshrl.u32 %v6285, 7
        %v6287 = vsub.s32 %v6284, %v6286
        %v6288 = vrot.slane %v6280, %v6287
        %v6290 = vunpack.c.l.s4 1983009808
        %v6291 = vunpack.c.0.s8 %v6290
        %v6292 = vlaneseq
        %v6293 = vshrl.u32 %v6292, 7
        %v6294 = vsub.s32 %v6291, %v6293
        %v6295 = vrot.slane %v6281, %v6294
        %v6296 = vcombine.low %v6240, %v6256
        %v6297 = vcombine.high %v6240, %v6256
        %v6299 = vunpack.c.l.s4 1934713408
        %v6300 = vunpack.c.0.s8 %v6299
        %v6301 = vlaneseq
        %v6302 = vshrl.u32 %v6301, 7
        %v6303 = vsub.s32 %v6300, %v6302
        %v6304 = vrot.slane %v6296, %v6303
        %v6306 = vunpack.c.l.s4 1934713408
        %v6307 = vunpack.c.0.s8 %v6306
        %v6308 = vlaneseq
        %v6309 = vshrl.u32 %v6308, 7
        %v6310 = vsub.s32 %v6307, %v6309
        %v6311 = vrot.slane %v6297, %v6310
        %v6312 = vcombine.low %v6247, %v6263
        %v6313 = vcombine.high %v6247, %v6263
        %v6315 = vunpack.c.l.s4 1934713408
        %v6316 = vunpack.c.0.s8 %v6315
        %v6317 = vlaneseq
        %v6318 = vshrl.u32 %v6317, 7
        %v6319 = vsub.s32 %v6316, %v6318
        %v6320 = vrot.slane %v6312, %v6319
        %v6322 = vunpack.c.l.s4 1934713408
        %v6323 = vunpack.c.0.s8 %v6322
        %v6324 = vlaneseq
        %v6325 = vshrl.u32 %v6324, 7
        %v6326 = vsub.s32 %v6323, %v6325
        %v6327 = vrot.slane %v6313, %v6326
        %v6328 = vcombine.low %v6272, %v6288
        %v6329 = vcombine.high %v6272, %v6288
        %v6331 = vunpack.c.l.s4 1934713408
        %v6332 = vunpack.c.0.s8 %v6331
        %v6333 = vlaneseq
        %v6334 = vshrl.u32 %v6333, 7
        %v6335 = vsub.s32 %v6332, %v6334
        %v6336 = vrot.slane %v6328, %v6335
        %v6338 = vunpack.c.l.s4 1934713408
        %v6339 = vunpack.c.0.s8 %v6338
        %v6340 = vlaneseq
        %v6341 = vshrl.u32 %v6340, 7
        %v6342 = vsub.s32 %v6339, %v6341
        %v6343 = vrot.slane %v6329, %v6342
        %v6344 = vcombine.low %v6279, %v6295
        %v6345 = vcombine.high %v6279, %v6295
        %v6347 = vunpack.c.l.s4 1934713408
        %v6348 = vunpack.c.0.s8 %v6347
        %v6349 = vlaneseq
        %v6350 = vshrl.u32 %v6349, 7
        %v6351 = vsub.s32 %v6348, %v6350
        %v6352 = vrot.slane %v6344, %v6351
        %v6354 = vunpack.c.l.s4 1934713408
        %v6355 = vunpack.c.0.s8 %v6354
        %v6356 = vlaneseq
        %v6357 = vshrl.u32 %v6356, 7
        %v6358 = vsub.s32 %v6355, %v6357
        %v6359 = vrot.slane %v6345, %v6358
        %v6360 = vcombine.low %v6304, %v6336
        %v6361 = vcombine.high %v6304, %v6336
        %v6362 = vcombine.low %v6311, %v6343
        %v6363 = vcombine.high %v6311, %v6343
        %v6364 = vcombine.low %v6320, %v6352
        %v6365 = vcombine.high %v6320, %v6352
        %v6366 = vcombine.low %v6327, %v6359
        %v6367 = vcombine.high %v6327, %v6359
        %v6368 = vcombine.low %v5778, %v5888
        %v6369 = vcombine.high %v5778, %v5888
        %v6371 = vunpack.c.l.s4 1983009808
        %v6372 = vunpack.c.0.s8 %v6371
        %v6373 = vlaneseq
        %v6374 = vshrl.u32 %v6373, 7
        %v6375 = vsub.s32 %v6372, %v6374
        %v6376 = vrot.slane %v6368, %v6375
        %v6378 = vunpack.c.l.s4 1983009808
        %v6379 = vunpack.c.0.s8 %v6378
        %v6380 = vlaneseq
        %v6381 = vshrl.u32 %v6380, 7
        %v6382 = vsub.s32 %v6379, %v6381
        %v6383 = vrot.slane %v6369, %v6382
        %v6384 = vcombine.low %v5833, %v5943
        %v6385 = vcombine.high %v5833, %v5943
        %v6387 = vunpack.c.l.s4 1983009808
        %v6388 = vunpack.c.0.s8 %v6387
        %v6389 = vlaneseq
        %v6390 = vshrl.u32 %v6389, 7
        %v6391 = vsub.s32 %v6388, %v6390
        %v6392 = vrot.slane %v6384, %v6391
        %v6394 = vunpack.c.l.s4 1983009808
        %v6395 = vunpack.c.0.s8 %v6394
        %v6396 = vlaneseq
        %v6397 = vshrl.u32 %v6396, 7
        %v6398 = vsub.s32 %v6395, %v6397
        %v6399 = vrot.slane %v6385, %v6398
        %v6400 = vcombine.low %v5998, %v6108
        %v6401 = vcombine.high %v5998, %v6108
        %v6403 = vunpack.c.l.s4 1983009808
        %v6404 = vunpack.c.0.s8 %v6403
        %v6405 = vlaneseq
        %v6406 = vshrl.u32 %v6405, 7
        %v6407 = vsub.s32 %v6404, %v6406
        %v6408 = vrot.slane %v6400, %v6407
        %v6410 = vunpack.c.l.s4 1983009808
        %v6411 = vunpack.c.0.s8 %v6410
        %v6412 = vlaneseq
        %v6413 = vshrl.u32 %v6412, 7
        %v6414 = vsub.s32 %v6411, %v6413
        %v6415 = vrot.slane %v6401, %v6414
        %v6416 = vcombine.low %v6053, %v6163
        %v6417 = vcombine.high %v6053, %v6163
        %v6419 = vunpack.c.l.s4 1983009808
        %v6420 = vunpack.c.0.s8 %v6419
        %v6421 = vlaneseq
        %v6422 = vshrl.u32 %v6421, 7
        %v6423 = vsub.s32 %v6420, %v6422
        %v6424 = vrot.slane %v6416, %v6423
        %v6426 = vunpack.c.l.s4 1983009808
        %v6427 = vunpack.c.0.s8 %v6426
        %v6428 = vlaneseq
        %v6429 = vshrl.u32 %v6428, 7
        %v6430 = vsub.s32 %v6427, %v6429
        %v6431 = vrot.slane %v6417, %v6430
        %v6432 = vcombine.low %v6376, %v6392
        %v6433 = vcombine.high %v6376, %v6392
        %v6435 = vunpack.c.l.s4 1934713408
        %v6436 = vunpack.c.0.s8 %v6435
        %v6437 = vlaneseq
        %v6438 = vshrl.u32 %v6437, 7
        %v6439 = vsub.s32 %v6436, %v6438
        %v6440 = vrot.slane %v6432, %v6439
        %v6442 = vunpack.c.l.s4 1934713408
        %v6443 = vunpack.c.0.s8 %v6442
        %v6444 = vlaneseq
        %v6445 = vshrl.u32 %v6444, 7
        %v6446 = vsub.s32 %v6443, %v6445
        %v6447 = vrot.slane %v6433, %v6446
        %v6448 = vcombine.low %v6383, %v6399
        %v6449 = vcombine.high %v6383, %v6399
        %v6451 = vunpack.c.l.s4 1934713408
        %v6452 = vunpack.c.0.s8 %v6451
        %v6453 = vlaneseq
        %v6454 = vshrl.u32 %v6453, 7
        %v6455 = vsub.s32 %v6452, %v6454
        %v6456 = vrot.slane %v6448, %v6455
        %v6458 = vunpack.c.l.s4 1934713408
        %v6459 = vunpack.c.0.s8 %v6458
        %v6460 = vlaneseq
        %v6461 = vshrl.u32 %v6460, 7
        %v6462 = vsub.s32 %v6459, %v6461
        %v6463 = vrot.slane %v6449, %v6462
        %v6464 = vcombine.low %v6408, %v6424
        %v6465 = vcombine.high %v6408, %v6424
        %v6467 = vunpack.c.l.s4 1934713408
        %v6468 = vunpack.c.0.s8 %v6467
        %v6469 = vlaneseq
        %v6470 = vshrl.u32 %v6469, 7
        %v6471 = vsub.s32 %v6468, %v6470
        %v6472 = vrot.slane %v6464, %v6471
        %v6474 = vunpack.c.l.s4 1934713408
        %v6475 = vunpack.c.0.s8 %v6474
        %v6476 = vlaneseq
        %v6477 = vshrl.u32 %v6476, 7
        %v6478 = vsub.s32 %v6475, %v6477
        %v6479 = vrot.slane %v6465, %v6478
        %v6480 = vcombine.low %v6415, %v6431
        %v6481 = vcombine.high %v6415, %v6431
        %v6483 = vunpack.c.l.s4 1934713408
        %v6484 = vunpack.c.0.s8 %v6483
        %v6485 = vlaneseq
        %v6486 = vshrl.u32 %v6485, 7
        %v6487 = vsub.s32 %v6484, %v6486
        %v6488 = vrot.slane %v6480, %v6487
        %v6490 = vunpack.c.l.s4 1934713408
        %v6491 = vunpack.c.0.s8 %v6490
        %v6492 = vlaneseq
        %v6493 = vshrl.u32 %v6492, 7
        %v6494 = vsub.s32 %v6491, %v6493
        %v6495 = vrot.slane %v6481, %v6494
        %v6496 = vcombine.low %v6440, %v6472
        %v6497 = vcombine.high %v6440, %v6472
        %v6498 = vcombine.low %v6447, %v6479
        %v6499 = vcombine.high %v6447, %v6479
        %v6500 = vcombine.low %v6456, %v6488
        %v6501 = vcombine.high %v6456, %v6488
        %v6502 = vcombine.low %v6463, %v6495
        %v6503 = vcombine.high %v6463, %v6495
        %v6504 = vcombine.low %v6185, %v6189
        %v6505 = vcombine.high %v6185, %v6189
        %v6507 = vunpack.c.l.s4 1983009808
        %v6508 = vunpack.c.0.s8 %v6507
        %v6509 = vlaneseq
        %v6510 = vshrl.u32 %v6509, 7
        %v6511 = vsub.s32 %v6508, %v6510
        %v6512 = vrot.slane %v6504, %v6511
        %v6514 = vunpack.c.l.s4 1983009808
        %v6515 = vunpack.c.0.s8 %v6514
        %v6516 = vlaneseq
        %v6517 = vshrl.u32 %v6516, 7
        %v6518 = vsub.s32 %v6515, %v6517
        %v6519 = vrot.slane %v6505, %v6518
        %v6520 = vcombine.low %v6187, %v6191
        %v6521 = vcombine.high %v6187, %v6191
        %v6523 = vunpack.c.l.s4 1983009808
        %v6524 = vunpack.c.0.s8 %v6523
        %v6525 = vlaneseq
        %v6526 = vshrl.u32 %v6525, 7
        %v6527 = vsub.s32 %v6524, %v6526
        %v6528 = vrot.slane %v6520, %v6527
        %v6530 = vunpack.c.l.s4 1983009808
        %v6531 = vunpack.c.0.s8 %v6530
        %v6532 = vlaneseq
        %v6533 = vshrl.u32 %v6532, 7
        %v6534 = vsub.s32 %v6531, %v6533
        %v6535 = vrot.slane %v6521, %v6534
        %v6536 = vcombine.low %v6193, %v6197
        %v6537 = vcombine.high %v6193, %v6197
        %v6539 = vunpack.c.l.s4 1983009808
        %v6540 = vunpack.c.0.s8 %v6539
        %v6541 = vlaneseq
        %v6542 = vshrl.u32 %v6541, 7
        %v6543 = vsub.s32 %v6540, %v6542
        %v6544 = vrot.slane %v6536, %v6543
        %v6546 = vunpack.c.l.s4 1983009808
        %v6547 = vunpack.c.0.s8 %v6546
        %v6548 = vlaneseq
        %v6549 = vshrl.u32 %v6548, 7
        %v6550 = vsub.s32 %v6547, %v6549
        %v6551 = vrot.slane %v6537, %v6550
        %v6552 = vcombine.low %v6195, %v6199
        %v6553 = vcombine.high %v6195, %v6199
        %v6555 = vunpack.c.l.s4 1983009808
        %v6556 = vunpack.c.0.s8 %v6555
        %v6557 = vlaneseq
        %v6558 = vshrl.u32 %v6557, 7
        %v6559 = vsub.s32 %v6556, %v6558
        %v6560 = vrot.slane %v6552, %v6559
        %v6562 = vunpack.c.l.s4 1983009808
        %v6563 = vunpack.c.0.s8 %v6562
        %v6564 = vlaneseq
        %v6565 = vshrl.u32 %v6564, 7
        %v6566 = vsub.s32 %v6563, %v6565
        %v6567 = vrot.slane %v6553, %v6566
        %v6568 = vcombine.low %v6512, %v6528
        %v6569 = vcombine.high %v6512, %v6528
        %v6571 = vunpack.c.l.s4 1934713408
        %v6572 = vunpack.c.0.s8 %v6571
        %v6573 = vlaneseq
        %v6574 = vshrl.u32 %v6573, 7
        %v6575 = vsub.s32 %v6572, %v6574
        %v6576 = vrot.slane %v6568, %v6575
        %v6578 = vunpack.c.l.s4 1934713408
        %v6579 = vunpack.c.0.s8 %v6578
        %v6580 = vlaneseq
        %v6581 = vshrl.u32 %v6580, 7
        %v6582 = vsub.s32 %v6579, %v6581
        %v6583 = vrot.slane %v6569, %v6582
        %v6584 = vcombine.low %v6519, %v6535
        %v6585 = vcombine.high %v6519, %v6535
        %v6587 = vunpack.c.l.s4 1934713408
        %v6588 = vunpack.c.0.s8 %v6587
        %v6589 = vlaneseq
        %v6590 = vshrl.u32 %v6589, 7
        %v6591 = vsub.s32 %v6588, %v6590
        %v6592 = vrot.slane %v6584, %v6591
        %v6594 = vunpack.c.l.s4 1934713408
        %v6595 = vunpack.c.0.s8 %v6594
        %v6596 = vlaneseq
        %v6597 = vshrl.u32 %v6596, 7
        %v6598 = vsub.s32 %v6595, %v6597
        %v6599 = vrot.slane %v6585, %v6598
        %v6600 = vcombine.low %v6544, %v6560
        %v6601 = vcombine.high %v6544, %v6560
        %v6603 = vunpack.c.l.s4 1934713408
        %v6604 = vunpack.c.0.s8 %v6603
        %v6605 = vlaneseq
        %v6606 = vshrl.u32 %v6605, 7
        %v6607 = vsub.s32 %v6604, %v6606
        %v6608 = vrot.slane %v6600, %v6607
        %v6610 = vunpack.c.l.s4 1934713408
        %v6611 = vunpack.c.0.s8 %v6610
        %v6612 = vlaneseq
        %v6613 = vshrl.u32 %v6612, 7
        %v6614 = vsub.s32 %v6611, %v6613
        %v6615 = vrot.slane %v6601, %v6614
        %v6616 = vcombine.low %v6551, %v6567
        %v6617 = vcombine.high %v6551, %v6567
        %v6619 = vunpack.c.l.s4 1934713408
        %v6620 = vunpack.c.0.s8 %v6619
        %v6621 = vlaneseq
        %v6622 = vshrl.u32 %v6621, 7
        %v6623 = vsub.s32 %v6620, %v6622
        %v6624 = vrot.slane %v6616, %v6623
        %v6626 = vunpack.c.l.s4 1934713408
        %v6627 = vunpack.c.0.s8 %v6626
        %v6628 = vlaneseq
        %v6629 = vshrl.u32 %v6628, 7
        %v6630 = vsub.s32 %v6627, %v6629
        %v6631 = vrot.slane %v6617, %v6630
        %v6632 = vcombine.low %v6576, %v6608
        %v6633 = vcombine.high %v6576, %v6608
        %v6634 = vcombine.low %v6583, %v6615
        %v6635 = vcombine.high %v6583, %v6615
        %v6636 = vcombine.low %v6592, %v6624
        %v6637 = vcombine.high %v6592, %v6624
        %v6638 = vcombine.low %v6599, %v6631
        %v6639 = vcombine.high %v6599, %v6631
        %v6640 = vcombine.low %v6201, %v6205
        %v6641 = vcombine.high %v6201, %v6205
        %v6643 = vunpack.c.l.s4 1983009808
        %v6644 = vunpack.c.0.s8 %v6643
        %v6645 = vlaneseq
        %v6646 = vshrl.u32 %v6645, 7
        %v6647 = vsub.s32 %v6644, %v6646
        %v6648 = vrot.slane %v6640, %v6647
        %v6650 = vunpack.c.l.s4 1983009808
        %v6651 = vunpack.c.0.s8 %v6650
        %v6652 = vlaneseq
        %v6653 = vshrl.u32 %v6652, 7
        %v6654 = vsub.s32 %v6651, %v6653
        %v6655 = vrot.slane %v6641, %v6654
        %v6656 = vcombine.low %v6203, %v6207
        %v6657 = vcombine.high %v6203, %v6207
        %v6659 = vunpack.c.l.s4 1983009808
        %v6660 = vunpack.c.0.s8 %v6659
        %v6661 = vlaneseq
        %v6662 = vshrl.u32 %v6661, 7
        %v6663 = vsub.s32 %v6660, %v6662
        %v6664 = vrot.slane %v6656, %v6663
        %v6666 = vunpack.c.l.s4 1983009808
        %v6667 = vunpack.c.0.s8 %v6666
        %v6668 = vlaneseq
        %v6669 = vshrl.u32 %v6668, 7
        %v6670 = vsub.s32 %v6667, %v6669
        %v6671 = vrot.slane %v6657, %v6670
        %v6672 = vcombine.low %v6209, %v6213
        %v6673 = vcombine.high %v6209, %v6213
        %v6675 = vunpack.c.l.s4 1983009808
        %v6676 = vunpack.c.0.s8 %v6675
        %v6677 = vlaneseq
        %v6678 = vshrl.u32 %v6677, 7
        %v6679 = vsub.s32 %v6676, %v6678
        %v6680 = vrot.slane %v6672, %v6679
        %v6682 = vunpack.c.l.s4 1983009808
        %v6683 = vunpack.c.0.s8 %v6682
        %v6684 = vlaneseq
        %v6685 = vshrl.u32 %v6684, 7
        %v6686 = vsub.s32 %v6683, %v6685
        %v6687 = vrot.slane %v6673, %v6686
        %v6688 = vcombine.low %v6211, %v6215
        %v6689 = vcombine.high %v6211, %v6215
        %v6691 = vunpack.c.l.s4 1983009808
        %v6692 = vunpack.c.0.s8 %v6691
        %v6693 = vlaneseq
        %v6694 = vshrl.u32 %v6693, 7
        %v6695 = vsub.s32 %v6692, %v6694
        %v6696 = vrot.slane %v6688, %v6695
        %v6698 = vunpack.c.l.s4 1983009808
        %v6699 = vunpack.c.0.s8 %v6698
        %v6700 = vlaneseq
        %v6701 = vshrl.u32 %v6700, 7
        %v6702 = vsub.s32 %v6699, %v6701
        %v6703 = vrot.slane %v6689, %v6702
        %v6704 = vcombine.low %v6648, %v6664
        %v6705 = vcombine.high %v6648, %v6664
        %v6707 = vunpack.c.l.s4 1934713408
        %v6708 = vunpack.c.0.s8 %v6707
        %v6709 = vlaneseq
        %v6710 = vshrl.u32 %v6709, 7
        %v6711 = vsub.s32 %v6708, %v6710
        %v6712 = vrot.slane %v6704, %v6711
        %v6714 = vunpack.c.l.s4 1934713408
        %v6715 = vunpack.c.0.s8 %v6714
        %v6716 = vlaneseq
        %v6717 = vshrl.u32 %v6716, 7
        %v6718 = vsub.s32 %v6715, %v6717
        %v6719 = vrot.slane %v6705, %v6718
        %v6720 = vcombine.low %v6655, %v6671
        %v6721 = vcombine.high %v6655, %v6671
        %v6723 = vunpack.c.l.s4 1934713408
        %v6724 = vunpack.c.0.s8 %v6723
        %v6725 = vlaneseq
        %v6726 = vshrl.u32 %v6725, 7
        %v6727 = vsub.s32 %v6724, %v6726
        %v6728 = vrot.slane %v6720, %v6727
        %v6730 = vunpack.c.l.s4 1934713408
        %v6731 = vunpack.c.0.s8 %v6730
        %v6732 = vlaneseq
        %v6733 = vshrl.u32 %v6732, 7
        %v6734 = vsub.s32 %v6731, %v6733
        %v6735 = vrot.slane %v6721, %v6734
        %v6736 = vcombine.low %v6680, %v6696
        %v6737 = vcombine.high %v6680, %v6696
        %v6739 = vunpack.c.l.s4 1934713408
        %v6740 = vunpack.c.0.s8 %v6739
        %v6741 = vlaneseq
        %v6742 = vshrl.u32 %v6741, 7
        %v6743 = vsub.s32 %v6740, %v6742
        %v6744 = vrot.slane %v6736, %v6743
        %v6746 = vunpack.c.l.s4 1934713408
        %v6747 = vunpack.c.0.s8 %v6746
        %v6748 = vlaneseq
        %v6749 = vshrl.u32 %v6748, 7
        %v6750 = vsub.s32 %v6747, %v6749
        %v6751 = vrot.slane %v6737, %v6750
        %v6752 = vcombine.low %v6687, %v6703
        %v6753 = vcombine.high %v6687, %v6703
        %v6755 = vunpack.c.l.s4 1934713408
        %v6756 = vunpack.c.0.s8 %v6755
        %v6757 = vlaneseq
        %v6758 = vshrl.u32 %v6757, 7
        %v6759 = vsub.s32 %v6756, %v6758
        %v6760 = vrot.slane %v6752, %v6759
        %v6762 = vunpack.c.l.s4 1934713408
        %v6763 = vunpack.c.0.s8 %v6762
        %v6764 = vlaneseq
        %v6765 = vshrl.u32 %v6764, 7
        %v6766 = vsub.s32 %v6763, %v6765
        %v6767 = vrot.slane %v6753, %v6766
        %v6768 = vcombine.low %v6712, %v6744
        %v6769 = vcombine.high %v6712, %v6744
        %v6770 = vcombine.low %v6719, %v6751
        %v6771 = vcombine.high %v6719, %v6751
        %v6772 = vcombine.low %v6728, %v6760
        %v6773 = vcombine.high %v6728, %v6760
        %v6774 = vcombine.low %v6735, %v6767
        %v6775 = vcombine.high %v6735, %v6767
        %6780 = vrot.lane.b32.xlu0 %v6361, 16
        %v6781 = vpop.permute.xlu0 %6780
        %6782 = vrot.lane.b32.xlu0 %v6497, 16
        %v6783 = vpop.permute.xlu0 %6782
        %6784 = vrot.lane.b32.xlu0 %v6633, 16
        %v6785 = vpop.permute.xlu0 %6784
        %6786 = vrot.lane.b32.xlu0 %v6769, 16
        %v6787 = vpop.permute.xlu0 %6786
        %6796 = vrot.lane.b32.xlu0 %v6362, 32
        %v6797 = vpop.permute.xlu0 %6796
        %6798 = vrot.lane.b32.xlu0 %v6498, 32
        %v6799 = vpop.permute.xlu0 %6798
        %6800 = vrot.lane.b32.xlu0 %v6634, 32
        %v6801 = vpop.permute.xlu0 %6800
        %6802 = vrot.lane.b32.xlu0 %v6770, 32
        %v6803 = vpop.permute.xlu0 %6802
        %6812 = vrot.lane.b32.xlu0 %v6363, 48
        %v6813 = vpop.permute.xlu0 %6812
        %6814 = vrot.lane.b32.xlu0 %v6499, 48
        %v6815 = vpop.permute.xlu0 %6814
        %6816 = vrot.lane.b32.xlu0 %v6635, 48
        %v6817 = vpop.permute.xlu0 %6816
        %6818 = vrot.lane.b32.xlu0 %v6771, 48
        %v6819 = vpop.permute.xlu0 %6818
        %6828 = vrot.lane.b32.xlu0 %v6364, 64
        %v6829 = vpop.permute.xlu0 %6828
        %6830 = vrot.lane.b32.xlu0 %v6500, 64
        %v6831 = vpop.permute.xlu0 %6830
        %6832 = vrot.lane.b32.xlu0 %v6636, 64
        %v6833 = vpop.permute.xlu0 %6832
        %6834 = vrot.lane.b32.xlu0 %v6772, 64
        %v6835 = vpop.permute.xlu0 %6834
        %6844 = vrot.lane.b32.xlu0 %v6365, 80
        %v6845 = vpop.permute.xlu0 %6844
        %6846 = vrot.lane.b32.xlu0 %v6501, 80
        %v6847 = vpop.permute.xlu0 %6846
        %6848 = vrot.lane.b32.xlu0 %v6637, 80
        %v6849 = vpop.permute.xlu0 %6848
        %6850 = vrot.lane.b32.xlu0 %v6773, 80
        %v6851 = vpop.permute.xlu0 %6850
        %6860 = vrot.lane.b32.xlu0 %v6366, 96
        %v6861 = vpop.permute.xlu0 %6860
        %6862 = vrot.lane.b32.xlu0 %v6502, 96
        %v6863 = vpop.permute.xlu0 %6862
        %6864 = vrot.lane.b32.xlu0 %v6638, 96
        %v6865 = vpop.permute.xlu0 %6864
        %6866 = vrot.lane.b32.xlu0 %v6774, 96
        %v6867 = vpop.permute.xlu0 %6866
        %6876 = vrot.lane.b32.xlu0 %v6367, 112
        %v6877 = vpop.permute.xlu0 %6876
        %6878 = vrot.lane.b32.xlu0 %v6503, 112
        %v6879 = vpop.permute.xlu0 %6878
        %6880 = vrot.lane.b32.xlu0 %v6639, 112
        %v6881 = vpop.permute.xlu0 %6880
        %6882 = vrot.lane.b32.xlu0 %v6775, 112
        %v6883 = vpop.permute.xlu0 %6882
        %v6888 = vsel %vm1913, %v6360, %v6781
        %v6889 = vsel %vm1913, %v6496, %v6783
        %v6890 = vsel %vm1913, %v6632, %v6785
        %v6891 = vsel %vm1913, %v6768, %v6787
        %v6892 = vsel %vm2022, %v6888, %v6797
        %v6893 = vsel %vm2022, %v6889, %v6799
        %v6894 = vsel %vm2022, %v6890, %v6801
        %v6895 = vsel %vm2022, %v6891, %v6803
        %v6896 = vsel %vm3619, %v6892, %v6813
        %v6897 = vsel %vm3619, %v6893, %v6815
        %v6898 = vsel %vm3619, %v6894, %v6817
        %v6899 = vsel %vm3619, %v6895, %v6819
        %v6900 = vsel %vm3624, %v6896, %v6829
        %v6901 = vsel %vm3624, %v6897, %v6831
        %v6902 = vsel %vm3624, %v6898, %v6833
        %v6903 = vsel %vm3624, %v6899, %v6835
        %v6904 = vsel %vm3629, %v6900, %v6845
        %v6905 = vsel %vm3629, %v6901, %v6847
        %v6906 = vsel %vm3629, %v6902, %v6849
        %v6907 = vsel %vm3629, %v6903, %v6851
        %v6908 = vsel %vm3634, %v6904, %v6861
        %v6909 = vsel %vm3634, %v6905, %v6863
        %v6910 = vsel %vm3634, %v6906, %v6865
        %v6911 = vsel %vm3634, %v6907, %v6867
        %v6912 = vsel %vm3639, %v6908, %v6877
        %v6913 = vsel %vm3639, %v6909, %v6879
        %v6914 = vsel %vm3639, %v6910, %v6881
        %v6915 = vsel %vm3639, %v6911, %v6883
        %v6916 = vpack.c.bf16 %v6913, %v6912
        %v6917 = vpack.c.bf16 %v6915, %v6914
        %6918 = vmatprep.subr.bf16.mxu0 0
        %6919 = vmatpush1.bf16.msra.mxu0 %v6916
        %6920 = vmatprep.subr.bf16.mxu0 0
        %6921 = vmatpush1.bf16.msra.mxu0 %v6917
        %6922 = vmatprep.subr.bf16.mxu0 0
        %6923 = vmatpush1.bf16.msra.mxu0 0
        %6924 = vmatprep.subr.bf16.mxu0 0
        %6925 = vmatpush1.bf16.msra.mxu0 0
        %6926 = vmatprep.subr.bf16.mxu0 0
        %6927 = vmatpush1.bf16.msra.mxu0 0
        %6928 = vmatprep.subr.bf16.mxu0 0
        %6929 = vmatpush1.bf16.msra.mxu0 0
        %6930 = vmatprep.subr.bf16.mxu0 0
        %6931 = vmatpush1.bf16.msra.mxu0 0
        %6932 = vmatprep.subr.bf16.mxu0 0
        %6933 = vmatpush1.bf16.msra.mxu0 0
        %6934 = vmatprep.subr.bf16.mxu0 0
        %6935 = vmatpush1.bf16.msra.mxu0 0
        %6936 = vmatprep.subr.bf16.mxu0 0
        %6937 = vmatpush1.bf16.msra.mxu0 0
        %6938 = vmatprep.subr.bf16.mxu0 0
        %6939 = vmatpush1.bf16.msra.mxu0 0
        %6940 = vmatprep.subr.bf16.mxu0 0
        %6941 = vmatpush1.bf16.msra.mxu0 0
        %6942 = vmatprep.subr.bf16.mxu0 0
        %6943 = vmatpush1.bf16.msra.mxu0 0
        %6944 = vmatprep.subr.bf16.mxu0 0
        %6945 = vmatpush1.bf16.msra.mxu0 0
        %6946 = vmatprep.subr.bf16.mxu0 0
        %6947 = vmatpush1.bf16.msra.mxu0 0
        %6948 = vmatprep.subr.bf16.mxu0 0
        %6949 = vmatpush1.bf16.msra.mxu0 0
        %6950 = vmatprep.mubr.bf16.mxu0 0
        %6951 = vmatmul.mubr.bf16.gmra.mrb[0].mxu0 %v3687
        %v6952 = vpop.f32.mrb[0].mxu0
        %v6953 = vadd.f32 0.0, %v6952
        %v6954 = vpop.f32.mrb[0].mxu0
        %v6955 = vpop.f32.mrb[0].mxu0
        %v6956 = vadd.f32 0.0, %v6955
        %v6957 = vpop.f32.mrb[0].mxu0
        %6958 = vmatprep.mubr.bf16.mxu0 0
        %6959 = vmatmul.mubr.bf16.gmra.mrb[0].mxu0 %v3690
        %v6960 = vpop.f32.mrb[0].mxu0
        %v6961 = vadd.f32 0.0, %v6960
        %v6962 = vpop.f32.mrb[0].mxu0
        %v6963 = vpop.f32.mrb[0].mxu0
        %v6964 = vadd.f32 0.0, %v6963
        %v6965 = vpop.f32.mrb[0].mxu0
        %6966 = vmatprep.mubr.bf16.mxu0 0
        %6967 = vmatmul.mubr.bf16.gmra.mrb[0].mxu0 %v3693
        %v6968 = vpop.f32.mrb[0].mxu0
        %v6969 = vadd.f32 0.0, %v6968
        %v6970 = vpop.f32.mrb[0].mxu0
        %v6971 = vpop.f32.mrb[0].mxu0
        %v6972 = vadd.f32 0.0, %v6971
        %v6973 = vpop.f32.mrb[0].mxu0
        %6974 = vmatprep.mubr.bf16.mxu0 0
        %6975 = vmatmul.mubr.bf16.gmra.mrb[0].mxu0 %v3696
        %v6976 = vpop.f32.mrb[0].mxu0
        %v6977 = vadd.f32 0.0, %v6976
        %v6978 = vpop.f32.mrb[0].mxu0
        %v6979 = vpop.f32.mrb[0].mxu0
        %v6980 = vadd.f32 0.0, %v6979
        %v6981 = vpop.f32.mrb[0].mxu0
        %6982 = vmatprep.mubr.bf16.mxu0 0
        %6983 = vmatmul.mubr.bf16.gmra.mrb[0].mxu0 %v3699
        %v6984 = vpop.f32.mrb[0].mxu0
        %v6985 = vadd.f32 0.0, %v6984
        %v6986 = vpop.f32.mrb[0].mxu0
        %v6987 = vpop.f32.mrb[0].mxu0
        %v6988 = vadd.f32 0.0, %v6987
        %v6989 = vpop.f32.mrb[0].mxu0
        %6990 = vmatprep.mubr.bf16.mxu0 0
        %6991 = vmatmul.mubr.bf16.gmra.mrb[0].mxu0 %v3702
        %v6992 = vpop.f32.mrb[0].mxu0
        %v6993 = vadd.f32 0.0, %v6992
        %v6994 = vpop.f32.mrb[0].mxu0
        %v6995 = vpop.f32.mrb[0].mxu0
        %v6996 = vadd.f32 0.0, %v6995
        %v6997 = vpop.f32.mrb[0].mxu0
        %6998 = vmatprep.mubr.bf16.mxu0 0
        %6999 = vmatmul.mubr.bf16.gmra.mrb[0].mxu0 %v3705
        %v7000 = vpop.f32.mrb[0].mxu0
        %v7001 = vadd.f32 0.0, %v7000
        %v7002 = vpop.f32.mrb[0].mxu0
        %v7003 = vpop.f32.mrb[0].mxu0
        %v7004 = vadd.f32 0.0, %v7003
        %v7005 = vpop.f32.mrb[0].mxu0
        %7006 = vmatprep.mubr.bf16.mxu0 0
        %7007 = vmatmul.mubr.bf16.gmra.mrb[0].mxu0 %v3708
        %v7008 = vpop.f32.mrb[0].mxu0
        %v7009 = vadd.f32 0.0, %v7008
        %v7010 = vpop.f32.mrb[0].mxu0
        %v7011 = vpop.f32.mrb[0].mxu0
        %v7012 = vadd.f32 0.0, %v7011
        %v7013 = vpop.f32.mrb[0].mxu0
        %7014 = vdwg.mxu0
        %v7015 = vld [vmem:[#allocation10] sm:$0xf]
        %v7016 = vld [vmem:[#allocation10 + $0x4] sm:$0xf]
        %v7017 = vld [vmem:[#allocation10 + $0x8] sm:$0xf]
        %v7018 = vld [vmem:[#allocation10 + $0xc] sm:$0xf]
        %v7019 = vld [vmem:[#allocation10 + $0x10] sm:$0xf]
        %v7020 = vld [vmem:[#allocation10 + $0x14] sm:$0xf]
        %v7021 = vld [vmem:[#allocation10 + $0x18] sm:$0xf]
        %v7022 = vld [vmem:[#allocation10 + $0x1c] sm:$0xf]
        %v7023 = vld [vmem:[#allocation10 + $0x20] sm:$0xf]
        %v7024 = vld [vmem:[#allocation10 + $0x24] sm:$0xf]
        %v7025 = vld [vmem:[#allocation10 + $0x28] sm:$0xf]
        %v7026 = vld [vmem:[#allocation10 + $0x2c] sm:$0xf]
        %v7027 = vld [vmem:[#allocation10 + $0x30] sm:$0xf]
        %v7028 = vld [vmem:[#allocation10 + $0x34] sm:$0xf]
        %v7029 = vld [vmem:[#allocation10 + $0x38] sm:$0xf]
        %v7030 = vld [vmem:[#allocation10 + $0x3c] sm:$0xf]
        %v7031 = vld [vmem:[#allocation11] sm:$0x1]
        %v7033 = vlaneseq
        %v7034 = vshrl.u32 %v7033, 7
        %v7035 = vsub.s32 0, %v7034
        %v7036 = vrot.slane %v7031, %v7035
        %v7054 = vunpack.c.l.b16 %v7015
        %v7055 = vunpack.c.l.b16 %v7016
        %v7056 = vunpack.c.l.b16 %v7017
        %v7057 = vunpack.c.l.b16 %v7018
        %v7058 = vunpack.c.l.b16 %v7019
        %v7059 = vunpack.c.l.b16 %v7020
        %v7060 = vunpack.c.l.b16 %v7021
        %v7061 = vunpack.c.l.b16 %v7022
        %v7062 = vunpack.c.l.b16 %v7023
        %v7063 = vunpack.c.l.b16 %v7024
        %v7064 = vunpack.c.l.b16 %v7025
        %v7065 = vunpack.c.l.b16 %v7026
        %v7066 = vunpack.c.l.b16 %v7027
        %v7067 = vunpack.c.l.b16 %v7028
        %v7068 = vunpack.c.l.b16 %v7029
        %v7069 = vunpack.c.l.b16 %v7030
        %v7070 = vpack.c.b16 %v7055, %v7054
        %v7071 = vpack.c.b16 %v7057, %v7056
        %v7072 = vpack.c.b16 %v7059, %v7058
        %v7073 = vpack.c.b16 %v7061, %v7060
        %v7074 = vpack.c.b16 %v7063, %v7062
        %v7075 = vpack.c.b16 %v7065, %v7064
        %v7076 = vpack.c.b16 %v7067, %v7066
        %v7077 = vpack.c.b16 %v7069, %v7068
        %7086 = vmatprep.subr.bf16.mxu0 0
        %7087 = vmatpush1.bf16.msra.mxu0 %v7070
        %7088 = vmatprep.subr.bf16.mxu0 0
        %7089 = vmatpush1.bf16.msra.mxu0 %v7071
        %7090 = vmatprep.subr.bf16.mxu0 0
        %7091 = vmatpush1.bf16.msra.mxu0 %v7072
        %7092 = vmatprep.subr.bf16.mxu0 0
        %7093 = vmatpush1.bf16.msra.mxu0 %v7073
        %7094 = vmatprep.subr.bf16.mxu0 0
        %7095 = vmatpush1.bf16.msra.mxu0 %v7074
        %7096 = vmatprep.subr.bf16.mxu0 0
        %7097 = vmatpush1.bf16.msra.mxu0 %v7075
        %7098 = vmatprep.subr.bf16.mxu0 0
        %7099 = vmatpush1.bf16.msra.mxu0 %v7076
        %7100 = vmatprep.subr.bf16.mxu0 0
        %7101 = vmatpush1.bf16.msra.mxu0 %v7077
        %7102 = vmatprep.subr.bf16.mxu0 0
        %7103 = vmatpush1.bf16.msra.mxu0 0
        %7104 = vmatprep.subr.bf16.mxu0 0
        %7105 = vmatpush1.bf16.msra.mxu0 0
        %7106 = vmatprep.subr.bf16.mxu0 0
        %7107 = vmatpush1.bf16.msra.mxu0 0
        %7108 = vmatprep.subr.bf16.mxu0 0
        %7109 = vmatpush1.bf16.msra.mxu0 0
        %7110 = vmatprep.subr.bf16.mxu0 0
        %7111 = vmatpush1.bf16.msra.mxu0 0
        %7112 = vmatprep.subr.bf16.mxu0 0
        %7113 = vmatpush1.bf16.msra.mxu0 0
        %7114 = vmatprep.subr.bf16.mxu0 0
        %7115 = vmatpush1.bf16.msra.mxu0 0
        %7116 = vmatprep.subr.bf16.mxu0 0
        %7117 = vmatpush1.bf16.msra.mxu0 0
        %7118 = vmatprep.mubr.bf16.mxu0 0
        %7119 = vmatmul.mubr.bf16.gmra.mrb[0].mxu0 %v4439
        %v7120 = vpop.f32.mrb[0].mxu0
        %v7121 = vadd.f32 %v7036, %v7120
        %v7122 = vpop.f32.mrb[0].mxu0
        %v7123 = vpop.f32.mrb[0].mxu0
        %v7124 = vadd.f32 %v7036, %v7123
        %v7125 = vpop.f32.mrb[0].mxu0
        %7126 = vmatprep.mubr.bf16.mxu0 0
        %7127 = vmatmul.mubr.bf16.gmra.mrb[0].mxu0 %v4440
        %v7128 = vpop.f32.mrb[0].mxu0
        %v7129 = vadd.f32 %v7036, %v7128
        %v7130 = vpop.f32.mrb[0].mxu0
        %v7131 = vpop.f32.mrb[0].mxu0
        %v7132 = vadd.f32 %v7036, %v7131
        %v7133 = vpop.f32.mrb[0].mxu0
        %7134 = vmatprep.mubr.bf16.mxu0 0
        %7135 = vmatmul.mubr.bf16.gmra.mrb[0].mxu0 %v4441
        %v7136 = vpop.f32.mrb[0].mxu0
        %v7137 = vadd.f32 %v7036, %v7136
        %v7138 = vpop.f32.mrb[0].mxu0
        %v7139 = vpop.f32.mrb[0].mxu0
        %v7140 = vadd.f32 %v7036, %v7139
        %v7141 = vpop.f32.mrb[0].mxu0
        %7142 = vmatprep.mubr.bf16.mxu0 0
        %7143 = vmatmul.mubr.bf16.gmra.mrb[0].mxu0 %v4442
        %v7144 = vpop.f32.mrb[0].mxu0
        %v7145 = vadd.f32 %v7036, %v7144
        %v7146 = vpop.f32.mrb[0].mxu0
        %v7147 = vpop.f32.mrb[0].mxu0
        %v7148 = vadd.f32 %v7036, %v7147
        %v7149 = vpop.f32.mrb[0].mxu0
        %7150 = vmatprep.mubr.bf16.mxu0 0
        %7151 = vmatmul.mubr.bf16.gmra.mrb[0].mxu0 %v4443
        %v7152 = vpop.f32.mrb[0].mxu0
        %v7153 = vadd.f32 %v7036, %v7152
        %v7154 = vpop.f32.mrb[0].mxu0
        %v7155 = vpop.f32.mrb[0].mxu0
        %v7156 = vadd.f32 %v7036, %v7155
        %v7157 = vpop.f32.mrb[0].mxu0
        %7158 = vmatprep.mubr.bf16.mxu0 0
        %7159 = vmatmul.mubr.bf16.gmra.mrb[0].mxu0 %v4444
        %v7160 = vpop.f32.mrb[0].mxu0
        %v7161 = vadd.f32 %v7036, %v7160
        %v7162 = vpop.f32.mrb[0].mxu0
        %v7163 = vpop.f32.mrb[0].mxu0
        %v7164 = vadd.f32 %v7036, %v7163
        %v7165 = vpop.f32.mrb[0].mxu0
        %7166 = vmatprep.mubr.bf16.mxu0 0
        %7167 = vmatmul.mubr.bf16.gmra.mrb[0].mxu0 %v4445
        %v7168 = vpop.f32.mrb[0].mxu0
        %v7169 = vadd.f32 %v7036, %v7168
        %v7170 = vpop.f32.mrb[0].mxu0
        %v7171 = vpop.f32.mrb[0].mxu0
        %v7172 = vadd.f32 %v7036, %v7171
        %v7173 = vpop.f32.mrb[0].mxu0
        %7174 = vmatprep.mubr.bf16.mxu0 0
        %7175 = vmatmul.mubr.bf16.gmra.mrb[0].mxu0 %v4446
        %v7176 = vpop.f32.mrb[0].mxu0
        %v7177 = vadd.f32 %v7036, %v7176
        %v7178 = vpop.f32.mrb[0].mxu0
        %v7179 = vpop.f32.mrb[0].mxu0
        %v7180 = vadd.f32 %v7036, %v7179
        %v7181 = vpop.f32.mrb[0].mxu0
        %7182 = vdwg.mxu0
        %v7183 = vadd.f32 %v4423, %v6953
        %v7184 = vadd.f32 %v4424, %v6956
        %v7185 = vadd.f32 %v4425, %v6961
        %v7186 = vadd.f32 %v4426, %v6964
        %v7187 = vadd.f32 %v4427, %v6969
        %v7188 = vadd.f32 %v4428, %v6972
        %v7189 = vadd.f32 %v4429, %v6977
        %v7190 = vadd.f32 %v4430, %v6980
        %v7191 = vadd.f32 %v4431, %v6985
        %v7192 = vadd.f32 %v4432, %v6988
        %v7193 = vadd.f32 %v4433, %v6993
        %v7194 = vadd.f32 %v4434, %v6996
        %v7195 = vadd.f32 %v4435, %v7001
        %v7196 = vadd.f32 %v4436, %v7004
        %v7197 = vadd.f32 %v4437, %v7009
        %v7198 = vadd.f32 %v4438, %v7012
        %v7199 = vadd.f32 %v7183, %v7121
        %v7200 = vadd.f32 %v7184, %v7124
        %v7201 = vadd.f32 %v7185, %v7129
        %v7202 = vadd.f32 %v7186, %v7132
        %v7203 = vadd.f32 %v7187, %v7137
        %v7204 = vadd.f32 %v7188, %v7140
        %v7205 = vadd.f32 %v7189, %v7145
        %v7206 = vadd.f32 %v7190, %v7148
        %v7207 = vadd.f32 %v7191, %v7153
        %v7208 = vadd.f32 %v7192, %v7156
        %v7209 = vadd.f32 %v7193, %v7161
        %v7210 = vadd.f32 %v7194, %v7164
        %v7211 = vadd.f32 %v7195, %v7169
        %v7212 = vadd.f32 %v7196, %v7172
        %v7213 = vadd.f32 %v7197, %v7177
        %v7214 = vadd.f32 %v7198, %v7180
        %v7215 = vmul.f32 %v7199, 0.5
        %v7216 = vmul.f32 %v7200, 0.5
        %v7217 = vmul.f32 %v7201, 0.5
        %v7218 = vmul.f32 %v7202, 0.5
        %v7219 = vmul.f32 %v7203, 0.5
        %v7220 = vmul.f32 %v7204, 0.5
        %v7221 = vmul.f32 %v7205, 0.5
        %v7222 = vmul.f32 %v7206, 0.5
        %v7223 = vmul.f32 %v7207, 0.5
        %v7224 = vmul.f32 %v7208, 0.5
        %v7225 = vmul.f32 %v7209, 0.5
        %v7226 = vmul.f32 %v7210, 0.5
        %v7227 = vmul.f32 %v7211, 0.5
        %v7228 = vmul.f32 %v7212, 0.5
        %v7229 = vmul.f32 %v7213, 0.5
        %v7230 = vmul.f32 %v7214, 0.5
        %v7231 = vmul.f32 %v7199, 0.70710677
        %v7232 = vmul.f32 %v7200, 0.70710677
        %v7233 = vmul.f32 %v7201, 0.70710677
        %v7234 = vmul.f32 %v7202, 0.70710677
        %v7235 = vmul.f32 %v7203, 0.70710677
        %v7236 = vmul.f32 %v7204, 0.70710677
        %v7237 = vmul.f32 %v7205, 0.70710677
        %v7238 = vmul.f32 %v7206, 0.70710677
        %v7239 = vmul.f32 %v7207, 0.70710677
        %v7240 = vmul.f32 %v7208, 0.70710677
        %v7241 = vmul.f32 %v7209, 0.70710677
        %v7242 = vmul.f32 %v7210, 0.70710677
        %v7243 = vmul.f32 %v7211, 0.70710677
        %v7244 = vmul.f32 %v7212, 0.70710677
        %v7245 = vmul.f32 %v7213, 0.70710677
        %v7246 = vmul.f32 %v7214, 0.70710677
        %v7247 = vand.u32 2147483647, %v7231
        %v7248 = vand.u32 2147483647, %v7232
        %v7249 = vand.u32 2147483647, %v7233
        %v7250 = vand.u32 2147483647, %v7234
        %v7251 = vand.u32 2147483647, %v7235
        %v7252 = vand.u32 2147483647, %v7236
        %v7253 = vand.u32 2147483647, %v7237
        %v7254 = vand.u32 2147483647, %v7238
        %v7255 = vand.u32 2147483647, %v7239
        %v7256 = vand.u32 2147483647, %v7240
        %v7257 = vand.u32 2147483647, %v7241
        %v7258 = vand.u32 2147483647, %v7242
        %v7259 = vand.u32 2147483647, %v7243
        %v7260 = vand.u32 2147483647, %v7244
        %v7261 = vand.u32 2147483647, %v7245
        %v7262 = vand.u32 2147483647, %v7246
        %v7263 = vmul.f32 %v7247, 0.3275911
        %v7264 = vmul.f32 %v7248, 0.3275911
        %v7265 = vmul.f32 %v7249, 0.3275911
        %v7266 = vmul.f32 %v7250, 0.3275911
        %v7267 = vmul.f32 %v7251, 0.3275911
        %v7268 = vmul.f32 %v7252, 0.3275911
        %v7269 = vmul.f32 %v7253, 0.3275911
        %v7270 = vmul.f32 %v7254, 0.3275911
        %v7271 = vmul.f32 %v7255, 0.3275911
        %v7272 = vmul.f32 %v7256, 0.3275911
        %v7273 = vmul.f32 %v7257, 0.3275911
        %v7274 = vmul.f32 %v7258, 0.3275911
        %v7275 = vmul.f32 %v7259, 0.3275911
        %v7276 = vmul.f32 %v7260, 0.3275911
        %v7277 = vmul.f32 %v7261, 0.3275911
        %v7278 = vmul.f32 %v7262, 0.3275911
        %v7279 = vadd.f32 %v7263, 1.0
        %v7280 = vadd.f32 %v7264, 1.0
        %v7281 = vadd.f32 %v7265, 1.0
        %v7282 = vadd.f32 %v7266, 1.0
        %v7283 = vadd.f32 %v7267, 1.0
        %v7284 = vadd.f32 %v7268, 1.0
        %v7285 = vadd.f32 %v7269, 1.0
        %v7286 = vadd.f32 %v7270, 1.0
        %v7287 = vadd.f32 %v7271, 1.0
        %v7288 = vadd.f32 %v7272, 1.0
        %v7289 = vadd.f32 %v7273, 1.0
        %v7290 = vadd.f32 %v7274, 1.0
        %v7291 = vadd.f32 %v7275, 1.0
        %v7292 = vadd.f32 %v7276, 1.0
        %v7293 = vadd.f32 %v7277, 1.0
        %v7294 = vadd.f32 %v7278, 1.0
        %v7295 = vrcp.pop %v7279
        %v7296 = vmul.f32 1.0, %v7295
        %v7297 = vrcp.pop %v7280
        %v7298 = vmul.f32 1.0, %v7297
        %v7299 = vrcp.pop %v7281
        %v7300 = vmul.f32 1.0, %v7299
        %v7301 = vrcp.pop %v7282
        %v7302 = vmul.f32 1.0, %v7301
        %v7303 = vrcp.pop %v7283
        %v7304 = vmul.f32 1.0, %v7303
        %v7305 = vrcp.pop %v7284
        %v7306 = vmul.f32 1.0, %v7305
        %v7307 = vrcp.pop %v7285
        %v7308 = vmul.f32 1.0, %v7307
        %v7309 = vrcp.pop %v7286
        %v7310 = vmul.f32 1.0, %v7309
        %v7311 = vrcp.pop %v7287
        %v7312 = vmul.f32 1.0, %v7311
        %v7313 = vrcp.pop %v7288
        %v7314 = vmul.f32 1.0, %v7313
        %v7315 = vrcp.pop %v7289
        %v7316 = vmul.f32 1.0, %v7315
        %v7317 = vrcp.pop %v7290
        %v7318 = vmul.f32 1.0, %v7317
        %v7319 = vrcp.pop %v7291
        %v7320 = vmul.f32 1.0, %v7319
        %v7321 = vrcp.pop %v7292
        %v7322 = vmul.f32 1.0, %v7321
        %v7323 = vrcp.pop %v7293
        %v7324 = vmul.f32 1.0, %v7323
        %v7325 = vrcp.pop %v7294
        %v7326 = vmul.f32 1.0, %v7325
        %v7327 = vmul.f32 %v7296, 1.0614054
        %v7328 = vmul.f32 %v7298, 1.0614054
        %v7329 = vmul.f32 %v7300, 1.0614054
        %v7330 = vmul.f32 %v7302, 1.0614054
        %v7331 = vmul.f32 %v7304, 1.0614054
        %v7332 = vmul.f32 %v7306, 1.0614054
        %v7333 = vmul.f32 %v7308, 1.0614054
        %v7334 = vmul.f32 %v7310, 1.0614054
        %v7335 = vmul.f32 %v7312, 1.0614054
        %v7336 = vmul.f32 %v7314, 1.0614054
        %v7337 = vmul.f32 %v7316, 1.0614054
        %v7338 = vmul.f32 %v7318, 1.0614054
        %v7339 = vmul.f32 %v7320, 1.0614054
        %v7340 = vmul.f32 %v7322, 1.0614054
        %v7341 = vmul.f32 %v7324, 1.0614054
        %v7342 = vmul.f32 %v7326, 1.0614054
        %v7343 = vadd.f32 %v7327, -1.4531521
        %v7344 = vadd.f32 %v7328, -1.4531521
        %v7345 = vadd.f32 %v7329, -1.4531521
        %v7346 = vadd.f32 %v7330, -1.4531521
        %v7347 = vadd.f32 %v7331, -1.4531521
        %v7348 = vadd.f32 %v7332, -1.4531521
        %v7349 = vadd.f32 %v7333, -1.4531521
        %v7350 = vadd.f32 %v7334, -1.4531521
        %v7351 = vadd.f32 %v7335, -1.4531521
        %v7352 = vadd.f32 %v7336, -1.4531521
        %v7353 = vadd.f32 %v7337, -1.4531521
        %v7354 = vadd.f32 %v7338, -1.4531521
        %v7355 = vadd.f32 %v7339, -1.4531521
        %v7356 = vadd.f32 %v7340, -1.4531521
        %v7357 = vadd.f32 %v7341, -1.4531521
        %v7358 = vadd.f32 %v7342, -1.4531521
        %v7359 = vmul.f32 %v7343, %v7296
        %v7360 = vmul.f32 %v7344, %v7298
        %v7361 = vmul.f32 %v7345, %v7300
        %v7362 = vmul.f32 %v7346, %v7302
        %v7363 = vmul.f32 %v7347, %v7304
        %v7364 = vmul.f32 %v7348, %v7306
        %v7365 = vmul.f32 %v7349, %v7308
        %v7366 = vmul.f32 %v7350, %v7310
        %v7367 = vmul.f32 %v7351, %v7312
        %v7368 = vmul.f32 %v7352, %v7314
        %v7369 = vmul.f32 %v7353, %v7316
        %v7370 = vmul.f32 %v7354, %v7318
        %v7371 = vmul.f32 %v7355, %v7320
        %v7372 = vmul.f32 %v7356, %v7322
        %v7373 = vmul.f32 %v7357, %v7324
        %v7374 = vmul.f32 %v7358, %v7326
        %v7375 = vadd.f32 %v7359, 1.4214138
        %v7376 = vadd.f32 %v7360, 1.4214138
        %v7377 = vadd.f32 %v7361, 1.4214138
        %v7378 = vadd.f32 %v7362, 1.4214138
        %v7379 = vadd.f32 %v7363, 1.4214138
        %v7380 = vadd.f32 %v7364, 1.4214138
        %v7381 = vadd.f32 %v7365, 1.4214138
        %v7382 = vadd.f32 %v7366, 1.4214138
        %v7383 = vadd.f32 %v7367, 1.4214138
        %v7384 = vadd.f32 %v7368, 1.4214138
        %v7385 = vadd.f32 %v7369, 1.4214138
        %v7386 = vadd.f32 %v7370, 1.4214138
        %v7387 = vadd.f32 %v7371, 1.4214138
        %v7388 = vadd.f32 %v7372, 1.4214138
        %v7389 = vadd.f32 %v7373, 1.4214138
        %v7390 = vadd.f32 %v7374, 1.4214138
        %v7391 = vmul.f32 %v7375, %v7296
        %v7392 = vmul.f32 %v7376, %v7298
        %v7393 = vmul.f32 %v7377, %v7300
        %v7394 = vmul.f32 %v7378, %v7302
        %v7395 = vmul.f32 %v7379, %v7304
        %v7396 = vmul.f32 %v7380, %v7306
        %v7397 = vmul.f32 %v7381, %v7308
        %v7398 = vmul.f32 %v7382, %v7310
        %v7399 = vmul.f32 %v7383, %v7312
        %v7400 = vmul.f32 %v7384, %v7314
        %v7401 = vmul.f32 %v7385, %v7316
        %v7402 = vmul.f32 %v7386, %v7318
        %v7403 = vmul.f32 %v7387, %v7320
        %v7404 = vmul.f32 %v7388, %v7322
        %v7405 = vmul.f32 %v7389, %v7324
        %v7406 = vmul.f32 %v7390, %v7326
        %v7407 = vadd.f32 %v7391, -0.28449672
        %v7408 = vadd.f32 %v7392, -0.28449672
        %v7409 = vadd.f32 %v7393, -0.28449672
        %v7410 = vadd.f32 %v7394, -0.28449672
        %v7411 = vadd.f32 %v7395, -0.28449672
        %v7412 = vadd.f32 %v7396, -0.28449672
        %v7413 = vadd.f32 %v7397, -0.28449672
        %v7414 = vadd.f32 %v7398, -0.28449672
        %v7415 = vadd.f32 %v7399, -0.28449672
        %v7416 = vadd.f32 %v7400, -0.28449672
        %v7417 = vadd.f32 %v7401, -0.28449672
        %v7418 = vadd.f32 %v7402, -0.28449672
        %v7419 = vadd.f32 %v7403, -0.28449672
        %v7420 = vadd.f32 %v7404, -0.28449672
        %v7421 = vadd.f32 %v7405, -0.28449672
        %v7422 = vadd.f32 %v7406, -0.28449672
        %v7423 = vmul.f32 %v7407, %v7296
        %v7424 = vmul.f32 %v7408, %v7298
        %v7425 = vmul.f32 %v7409, %v7300
        %v7426 = vmul.f32 %v7410, %v7302
        %v7427 = vmul.f32 %v7411, %v7304
        %v7428 = vmul.f32 %v7412, %v7306
        %v7429 = vmul.f32 %v7413, %v7308
        %v7430 = vmul.f32 %v7414, %v7310
        %v7431 = vmul.f32 %v7415, %v7312
        %v7432 = vmul.f32 %v7416, %v7314
        %v7433 = vmul.f32 %v7417, %v7316
        %v7434 = vmul.f32 %v7418, %v7318
        %v7435 = vmul.f32 %v7419, %v7320
        %v7436 = vmul.f32 %v7420, %v7322
        %v7437 = vmul.f32 %v7421, %v7324
        %v7438 = vmul.f32 %v7422, %v7326
        %v7439 = vadd.f32 %v7423, 0.2548296
        %v7440 = vadd.f32 %v7424, 0.2548296
        %v7441 = vadd.f32 %v7425, 0.2548296
        %v7442 = vadd.f32 %v7426, 0.2548296
        %v7443 = vadd.f32 %v7427, 0.2548296
        %v7444 = vadd.f32 %v7428, 0.2548296
        %v7445 = vadd.f32 %v7429, 0.2548296
        %v7446 = vadd.f32 %v7430, 0.2548296
        %v7447 = vadd.f32 %v7431, 0.2548296
        %v7448 = vadd.f32 %v7432, 0.2548296
        %v7449 = vadd.f32 %v7433, 0.2548296
        %v7450 = vadd.f32 %v7434, 0.2548296
        %v7451 = vadd.f32 %v7435, 0.2548296
        %v7452 = vadd.f32 %v7436, 0.2548296
        %v7453 = vadd.f32 %v7437, 0.2548296
        %v7454 = vadd.f32 %v7438, 0.2548296
        %v7455 = vmul.f32 %v7439, %v7296
        %v7456 = vmul.f32 %v7440, %v7298
        %v7457 = vmul.f32 %v7441, %v7300
        %v7458 = vmul.f32 %v7442, %v7302
        %v7459 = vmul.f32 %v7443, %v7304
        %v7460 = vmul.f32 %v7444, %v7306
        %v7461 = vmul.f32 %v7445, %v7308
        %v7462 = vmul.f32 %v7446, %v7310
        %v7463 = vmul.f32 %v7447, %v7312
        %v7464 = vmul.f32 %v7448, %v7314
        %v7465 = vmul.f32 %v7449, %v7316
        %v7466 = vmul.f32 %v7450, %v7318
        %v7467 = vmul.f32 %v7451, %v7320
        %v7468 = vmul.f32 %v7452, %v7322
        %v7469 = vmul.f32 %v7453, %v7324
        %v7470 = vmul.f32 %v7454, %v7326
        %v7471 = vsub.f32 0.0, %v7247
        %v7472 = vsub.f32 0.0, %v7248
        %v7473 = vsub.f32 0.0, %v7249
        %v7474 = vsub.f32 0.0, %v7250
        %v7475 = vsub.f32 0.0, %v7251
        %v7476 = vsub.f32 0.0, %v7252
        %v7477 = vsub.f32 0.0, %v7253
        %v7478 = vsub.f32 0.0, %v7254
        %v7479 = vsub.f32 0.0, %v7255
        %v7480 = vsub.f32 0.0, %v7256
        %v7481 = vsub.f32 0.0, %v7257
        %v7482 = vsub.f32 0.0, %v7258
        %v7483 = vsub.f32 0.0, %v7259
        %v7484 = vsub.f32 0.0, %v7260
        %v7485 = vsub.f32 0.0, %v7261
        %v7486 = vsub.f32 0.0, %v7262
        %v7487 = vmul.f32 %v7471, %v7247
        %v7488 = vmul.f32 %v7472, %v7248
        %v7489 = vmul.f32 %v7473, %v7249
        %v7490 = vmul.f32 %v7474, %v7250
        %v7491 = vmul.f32 %v7475, %v7251
        %v7492 = vmul.f32 %v7476, %v7252
        %v7493 = vmul.f32 %v7477, %v7253
        %v7494 = vmul.f32 %v7478, %v7254
        %v7495 = vmul.f32 %v7479, %v7255
        %v7496 = vmul.f32 %v7480, %v7256
        %v7497 = vmul.f32 %v7481, %v7257
        %v7498 = vmul.f32 %v7482, %v7258
        %v7499 = vmul.f32 %v7483, %v7259
        %v7500 = vmul.f32 %v7484, %v7260
        %v7501 = vmul.f32 %v7485, %v7261
        %v7502 = vmul.f32 %v7486, %v7262
        %v7503 = vmul.f32 %v7487, 1.442695
        %v7504 = vpow.pop %v7503
        %v7505 = vmul.f32 %v7488, 1.442695
        %v7506 = vpow.pop %v7505
        %v7507 = vmul.f32 %v7489, 1.442695
        %v7508 = vpow.pop %v7507
        %v7509 = vmul.f32 %v7490, 1.442695
        %v7510 = vpow.pop %v7509
        %v7511 = vmul.f32 %v7491, 1.442695
        %v7512 = vpow.pop %v7511
        %v7513 = vmul.f32 %v7492, 1.442695
        %v7514 = vpow.pop %v7513
        %v7515 = vmul.f32 %v7493, 1.442695
        %v7516 = vpow.pop %v7515
        %v7517 = vmul.f32 %v7494, 1.442695
        %v7518 = vpow.pop %v7517
        %v7519 = vmul.f32 %v7495, 1.442695
        %v7520 = vpow.pop %v7519
        %v7521 = vmul.f32 %v7496, 1.442695
        %v7522 = vpow.pop %v7521
        %v7523 = vmul.f32 %v7497, 1.442695
        %v7524 = vpow.pop %v7523
        %v7525 = vmul.f32 %v7498, 1.442695
        %v7526 = vpow.pop %v7525
        %v7527 = vmul.f32 %v7499, 1.442695
        %v7528 = vpow.pop %v7527
        %v7529 = vmul.f32 %v7500, 1.442695
        %v7530 = vpow.pop %v7529
        %v7531 = vmul.f32 %v7501, 1.442695
        %v7532 = vpow.pop %v7531
        %v7533 = vmul.f32 %v7502, 1.442695
        %v7534 = vpow.pop %v7533
        %v7535 = vmul.f32 %v7455, %v7504
        %v7536 = vmul.f32 %v7456, %v7506
        %v7537 = vmul.f32 %v7457, %v7508
        %v7538 = vmul.f32 %v7458, %v7510
        %v7539 = vmul.f32 %v7459, %v7512
        %v7540 = vmul.f32 %v7460, %v7514
        %v7541 = vmul.f32 %v7461, %v7516
        %v7542 = vmul.f32 %v7462, %v7518
        %v7543 = vmul.f32 %v7463, %v7520
        %v7544 = vmul.f32 %v7464, %v7522
        %v7545 = vmul.f32 %v7465, %v7524
        %v7546 = vmul.f32 %v7466, %v7526
        %v7547 = vmul.f32 %v7467, %v7528
        %v7548 = vmul.f32 %v7468, %v7530
        %v7549 = vmul.f32 %v7469, %v7532
        %v7550 = vmul.f32 %v7470, %v7534
        %v7551 = vsub.f32 1.0, %v7535
        %v7552 = vsub.f32 1.0, %v7536
        %v7553 = vsub.f32 1.0, %v7537
        %v7554 = vsub.f32 1.0, %v7538
        %v7555 = vsub.f32 1.0, %v7539
        %v7556 = vsub.f32 1.0, %v7540
        %v7557 = vsub.f32 1.0, %v7541
        %v7558 = vsub.f32 1.0, %v7542
        %v7559 = vsub.f32 1.0, %v7543
        %v7560 = vsub.f32 1.0, %v7544
        %v7561 = vsub.f32 1.0, %v7545
        %v7562 = vsub.f32 1.0, %v7546
        %v7563 = vsub.f32 1.0, %v7547
        %v7564 = vsub.f32 1.0, %v7548
        %v7565 = vsub.f32 1.0, %v7549
        %v7566 = vsub.f32 1.0, %v7550
        %vm7567 = vcmp.ge.f32.partialorder %v7231, 0.0
        %vm7568 = vcmp.ge.f32.partialorder %v7232, 0.0
        %vm7569 = vcmp.ge.f32.partialorder %v7233, 0.0
        %vm7570 = vcmp.ge.f32.partialorder %v7234, 0.0
        %vm7571 = vcmp.ge.f32.partialorder %v7235, 0.0
        %vm7572 = vcmp.ge.f32.partialorder %v7236, 0.0
        %vm7573 = vcmp.ge.f32.partialorder %v7237, 0.0
        %vm7574 = vcmp.ge.f32.partialorder %v7238, 0.0
        %vm7575 = vcmp.ge.f32.partialorder %v7239, 0.0
        %vm7576 = vcmp.ge.f32.partialorder %v7240, 0.0
        %vm7577 = vcmp.ge.f32.partialorder %v7241, 0.0
        %vm7578 = vcmp.ge.f32.partialorder %v7242, 0.0
        %vm7579 = vcmp.ge.f32.partialorder %v7243, 0.0
        %vm7580 = vcmp.ge.f32.partialorder %v7244, 0.0
        %vm7581 = vcmp.ge.f32.partialorder %v7245, 0.0
        %vm7582 = vcmp.ge.f32.partialorder %v7246, 0.0
        %v7583 = vsub.f32 0.0, %v7551
        %v7584 = vsub.f32 0.0, %v7552
        %v7585 = vsub.f32 0.0, %v7553
        %v7586 = vsub.f32 0.0, %v7554
        %v7587 = vsub.f32 0.0, %v7555
        %v7588 = vsub.f32 0.0, %v7556
        %v7589 = vsub.f32 0.0, %v7557
        %v7590 = vsub.f32 0.0, %v7558
        %v7591 = vsub.f32 0.0, %v7559
        %v7592 = vsub.f32 0.0, %v7560
        %v7593 = vsub.f32 0.0, %v7561
        %v7594 = vsub.f32 0.0, %v7562
        %v7595 = vsub.f32 0.0, %v7563
        %v7596 = vsub.f32 0.0, %v7564
        %v7597 = vsub.f32 0.0, %v7565
        %v7598 = vsub.f32 0.0, %v7566
        %v7599 = vsel %vm7567, %v7551, %v7583
        %v7600 = vsel %vm7568, %v7552, %v7584
        %v7601 = vsel %vm7569, %v7553, %v7585
        %v7602 = vsel %vm7570, %v7554, %v7586
        %v7603 = vsel %vm7571, %v7555, %v7587
        %v7604 = vsel %vm7572, %v7556, %v7588
        %v7605 = vsel %vm7573, %v7557, %v7589
        %v7606 = vsel %vm7574, %v7558, %v7590
        %v7607 = vsel %vm7575, %v7559, %v7591
        %v7608 = vsel %vm7576, %v7560, %v7592
        %v7609 = vsel %vm7577, %v7561, %v7593
        %v7610 = vsel %vm7578, %v7562, %v7594
        %v7611 = vsel %vm7579, %v7563, %v7595
        %v7612 = vsel %vm7580, %v7564, %v7596
        %v7613 = vsel %vm7581, %v7565, %v7597
        %v7614 = vsel %vm7582, %v7566, %v7598
        %v7615 = vadd.f32 %v7599, 1.0
        %v7616 = vadd.f32 %v7600, 1.0
        %v7617 = vadd.f32 %v7601, 1.0
        %v7618 = vadd.f32 %v7602, 1.0
        %v7619 = vadd.f32 %v7603, 1.0
        %v7620 = vadd.f32 %v7604, 1.0
        %v7621 = vadd.f32 %v7605, 1.0
        %v7622 = vadd.f32 %v7606, 1.0
        %v7623 = vadd.f32 %v7607, 1.0
        %v7624 = vadd.f32 %v7608, 1.0
        %v7625 = vadd.f32 %v7609, 1.0
        %v7626 = vadd.f32 %v7610, 1.0
        %v7627 = vadd.f32 %v7611, 1.0
        %v7628 = vadd.f32 %v7612, 1.0
        %v7629 = vadd.f32 %v7613, 1.0
        %v7630 = vadd.f32 %v7614, 1.0
        %v7631 = vmul.f32 %v7215, %v7615
        %v7632 = vmul.f32 %v7216, %v7616
        %v7633 = vmul.f32 %v7217, %v7617
        %v7634 = vmul.f32 %v7218, %v7618
        %v7635 = vmul.f32 %v7219, %v7619
        %v7636 = vmul.f32 %v7220, %v7620
        %v7637 = vmul.f32 %v7221, %v7621
        %v7638 = vmul.f32 %v7222, %v7622
        %v7639 = vmul.f32 %v7223, %v7623
        %v7640 = vmul.f32 %v7224, %v7624
        %v7641 = vmul.f32 %v7225, %v7625
        %v7642 = vmul.f32 %v7226, %v7626
        %v7643 = vmul.f32 %v7227, %v7627
        %v7644 = vmul.f32 %v7228, %v7628
        %v7645 = vmul.f32 %v7229, %v7629
        %v7646 = vmul.f32 %v7230, %v7630
        %v7647 = vpack.c.bf16 %v7632, %v7631
        %v7648 = vpack.c.bf16 %v7634, %v7633
        %v7649 = vpack.c.bf16 %v7636, %v7635
        %v7650 = vpack.c.bf16 %v7638, %v7637
        %v7651 = vpack.c.bf16 %v7640, %v7639
        %v7652 = vpack.c.bf16 %v7642, %v7641
        %v7653 = vpack.c.bf16 %v7644, %v7643
        %v7654 = vpack.c.bf16 %v7646, %v7645
        %v7655 = vld [vmem:[%s11] sm:$0xf]
        %v7656 = vld [vmem:[%s11 + $0x4] sm:$0xf]
        %v7657 = vld [vmem:[%s11 + $0x8] sm:$0xf]
        %v7658 = vld [vmem:[%s11 + $0xc] sm:$0xf]
        %v7659 = vld [vmem:[%s11 + $0x10] sm:$0xf]
        %v7660 = vld [vmem:[%s11 + $0x14] sm:$0xf]
        %v7661 = vld [vmem:[%s11 + $0x18] sm:$0xf]
        %v7662 = vld [vmem:[%s11 + $0x1c] sm:$0xf]
        %v7663 = vld [vmem:[%s11 + $0x20] sm:$0xf]
        %v7664 = vld [vmem:[%s11 + $0x24] sm:$0xf]
        %v7665 = vld [vmem:[%s11 + $0x28] sm:$0xf]
        %v7666 = vld [vmem:[%s11 + $0x2c] sm:$0xf]
        %v7667 = vld [vmem:[%s11 + $0x30] sm:$0xf]
        %v7668 = vld [vmem:[%s11 + $0x34] sm:$0xf]
        %v7669 = vld [vmem:[%s11 + $0x38] sm:$0xf]
        %v7670 = vld [vmem:[%s11 + $0x3c] sm:$0xf]
        %v7671 = vld [vmem:[#allocation13] sm:$0x1]
        %v7673 = vlaneseq
        %v7674 = vshrl.u32 %v7673, 7
        %v7675 = vsub.s32 0, %v7674
        %v7676 = vrot.slane %v7671, %v7675
        %v7694 = vunpack.c.l.b16 %v7655
        %v7695 = vunpack.c.l.b16 %v7656
        %v7696 = vunpack.c.l.b16 %v7657
        %v7697 = vunpack.c.l.b16 %v7658
        %v7698 = vunpack.c.l.b16 %v7659
        %v7699 = vunpack.c.l.b16 %v7660
        %v7700 = vunpack.c.l.b16 %v7661
        %v7701 = vunpack.c.l.b16 %v7662
        %v7702 = vunpack.c.l.b16 %v7663
        %v7703 = vunpack.c.l.b16 %v7664
        %v7704 = vunpack.c.l.b16 %v7665
        %v7705 = vunpack.c.l.b16 %v7666
        %v7706 = vunpack.c.l.b16 %v7667
        %v7707 = vunpack.c.l.b16 %v7668
        %v7708 = vunpack.c.l.b16 %v7669
        %v7709 = vunpack.c.l.b16 %v7670
        %v7710 = vpack.c.b16 %v7695, %v7694
        %v7711 = vpack.c.b16 %v7697, %v7696
        %v7712 = vpack.c.b16 %v7699, %v7698
        %v7713 = vpack.c.b16 %v7701, %v7700
        %v7714 = vpack.c.b16 %v7703, %v7702
        %v7715 = vpack.c.b16 %v7705, %v7704
        %v7716 = vpack.c.b16 %v7707, %v7706
        %v7717 = vpack.c.b16 %v7709, %v7708
        %7726 = vmatprep.subr.bf16.mxu0 0
        %7727 = vmatpush1.bf16.msra.mxu0 %v7710
        %7728 = vmatprep.subr.bf16.mxu0 0
        %7729 = vmatpush1.bf16.msra.mxu0 %v7711
        %7730 = vmatprep.subr.bf16.mxu0 0
        %7731 = vmatpush1.bf16.msra.mxu0 %v7712
        %7732 = vmatprep.subr.bf16.mxu0 0
        %7733 = vmatpush1.bf16.msra.mxu0 %v7713
        %7734 = vmatprep.subr.bf16.mxu0 0
        %7735 = vmatpush1.bf16.msra.mxu0 %v7714
        %7736 = vmatprep.subr.bf16.mxu0 0
        %7737 = vmatpush1.bf16.msra.mxu0 %v7715
        %7738 = vmatprep.subr.bf16.mxu0 0
        %7739 = vmatpush1.bf16.msra.mxu0 %v7716
        %7740 = vmatprep.subr.bf16.mxu0 0
        %7741 = vmatpush1.bf16.msra.mxu0 %v7717
        %7742 = vmatprep.subr.bf16.mxu0 0
        %7743 = vmatpush1.bf16.msra.mxu0 0
        %7744 = vmatprep.subr.bf16.mxu0 0
        %7745 = vmatpush1.bf16.msra.mxu0 0
        %7746 = vmatprep.subr.bf16.mxu0 0
        %7747 = vmatpush1.bf16.msra.mxu0 0
        %7748 = vmatprep.subr.bf16.mxu0 0
        %7749 = vmatpush1.bf16.msra.mxu0 0
        %7750 = vmatprep.subr.bf16.mxu0 0
        %7751 = vmatpush1.bf16.msra.mxu0 0
        %7752 = vmatprep.subr.bf16.mxu0 0
        %7753 = vmatpush1.bf16.msra.mxu0 0
        %7754 = vmatprep.subr.bf16.mxu0 0
        %7755 = vmatpush1.bf16.msra.mxu0 0
        %7756 = vmatprep.subr.bf16.mxu0 0
        %7757 = vmatpush1.bf16.msra.mxu0 0
        %7758 = vmatprep.mubr.bf16.mxu0 0
        %7759 = vmatmul.mubr.bf16.gmra.mrb[0].mxu0 %v7647
        %v7760 = vpop.f32.mrb[0].mxu0
        %v7761 = vadd.f32 %v7676, %v7760
        %v7762 = vpop.f32.mrb[0].mxu0
        %v7763 = vpop.f32.mrb[0].mxu0
        %v7764 = vadd.f32 %v7676, %v7763
        %v7765 = vpop.f32.mrb[0].mxu0
        %7766 = vmatprep.mubr.bf16.mxu0 0
        %7767 = vmatmul.mubr.bf16.gmra.mrb[0].mxu0 %v7648
        %v7768 = vpop.f32.mrb[0].mxu0
        %v7769 = vadd.f32 %v7676, %v7768
        %v7770 = vpop.f32.mrb[0].mxu0
        %v7771 = vpop.f32.mrb[0].mxu0
        %v7772 = vadd.f32 %v7676, %v7771
        %v7773 = vpop.f32.mrb[0].mxu0
        %7774 = vmatprep.mubr.bf16.mxu0 0
        %7775 = vmatmul.mubr.bf16.gmra.mrb[0].mxu0 %v7649
        %v7776 = vpop.f32.mrb[0].mxu0
        %v7777 = vadd.f32 %v7676, %v7776
        %v7778 = vpop.f32.mrb[0].mxu0
        %v7779 = vpop.f32.mrb[0].mxu0
        %v7780 = vadd.f32 %v7676, %v7779
        %v7781 = vpop.f32.mrb[0].mxu0
        %7782 = vmatprep.mubr.bf16.mxu0 0
        %7783 = vmatmul.mubr.bf16.gmra.mrb[0].mxu0 %v7650
        %v7784 = vpop.f32.mrb[0].mxu0
        %v7785 = vadd.f32 %v7676, %v7784
        %v7786 = vpop.f32.mrb[0].mxu0
        %v7787 = vpop.f32.mrb[0].mxu0
        %v7788 = vadd.f32 %v7676, %v7787
        %v7789 = vpop.f32.mrb[0].mxu0
        %7790 = vmatprep.mubr.bf16.mxu0 0
        %7791 = vmatmul.mubr.bf16.gmra.mrb[0].mxu0 %v7651
        %v7792 = vpop.f32.mrb[0].mxu0
        %v7793 = vadd.f32 %v7676, %v7792
        %v7794 = vpop.f32.mrb[0].mxu0
        %v7795 = vpop.f32.mrb[0].mxu0
        %v7796 = vadd.f32 %v7676, %v7795
        %v7797 = vpop.f32.mrb[0].mxu0
        %7798 = vmatprep.mubr.bf16.mxu0 0
        %7799 = vmatmul.mubr.bf16.gmra.mrb[0].mxu0 %v7652
        %v7800 = vpop.f32.mrb[0].mxu0
        %v7801 = vadd.f32 %v7676, %v7800
        %v7802 = vpop.f32.mrb[0].mxu0
        %v7803 = vpop.f32.mrb[0].mxu0
        %v7804 = vadd.f32 %v7676, %v7803
        %v7805 = vpop.f32.mrb[0].mxu0
        %7806 = vmatprep.mubr.bf16.mxu0 0
        %7807 = vmatmul.mubr.bf16.gmra.mrb[0].mxu0 %v7653
        %v7808 = vpop.f32.mrb[0].mxu0
        %v7809 = vadd.f32 %v7676, %v7808
        %v7810 = vpop.f32.mrb[0].mxu0
        %v7811 = vpop.f32.mrb[0].mxu0
        %v7812 = vadd.f32 %v7676, %v7811
        %v7813 = vpop.f32.mrb[0].mxu0
        %7814 = vmatprep.mubr.bf16.mxu0 0
        %7815 = vmatmul.mubr.bf16.gmra.mrb[0].mxu0 %v7654
        %v7816 = vpop.f32.mrb[0].mxu0
        %v7817 = vadd.f32 %v7676, %v7816
        %v7818 = vpop.f32.mrb[0].mxu0
        %v7819 = vpop.f32.mrb[0].mxu0
        %v7820 = vadd.f32 %v7676, %v7819
        %v7821 = vpop.f32.mrb[0].mxu0
        %7822 = vdwg.mxu0
        %v7823 = vmul.f32 %v7761, 0.5
        %v7824 = vmul.f32 %v7764, 0.5
        %v7825 = vmul.f32 %v7769, 0.5
        %v7826 = vmul.f32 %v7772, 0.5
        %v7827 = vmul.f32 %v7777, 0.5
        %v7828 = vmul.f32 %v7780, 0.5
        %v7829 = vmul.f32 %v7785, 0.5
        %v7830 = vmul.f32 %v7788, 0.5
        %v7831 = vmul.f32 %v7793, 0.5
        %v7832 = vmul.f32 %v7796, 0.5
        %v7833 = vmul.f32 %v7801, 0.5
        %v7834 = vmul.f32 %v7804, 0.5
        %v7835 = vmul.f32 %v7809, 0.5
        %v7836 = vmul.f32 %v7812, 0.5
        %v7837 = vmul.f32 %v7817, 0.5
        %v7838 = vmul.f32 %v7820, 0.5
        %v7839 = vmul.f32 %v7761, 0.70710677
        %v7840 = vmul.f32 %v7764, 0.70710677
        %v7841 = vmul.f32 %v7769, 0.70710677
        %v7842 = vmul.f32 %v7772, 0.70710677
        %v7843 = vmul.f32 %v7777, 0.70710677
        %v7844 = vmul.f32 %v7780, 0.70710677
        %v7845 = vmul.f32 %v7785, 0.70710677
        %v7846 = vmul.f32 %v7788, 0.70710677
        %v7847 = vmul.f32 %v7793, 0.70710677
        %v7848 = vmul.f32 %v7796, 0.70710677
        %v7849 = vmul.f32 %v7801, 0.70710677
        %v7850 = vmul.f32 %v7804, 0.70710677
        %v7851 = vmul.f32 %v7809, 0.70710677
        %v7852 = vmul.f32 %v7812, 0.70710677
        %v7853 = vmul.f32 %v7817, 0.70710677
        %v7854 = vmul.f32 %v7820, 0.70710677
        %v7855 = vand.u32 2147483647, %v7839
        %v7856 = vand.u32 2147483647, %v7840
        %v7857 = vand.u32 2147483647, %v7841
        %v7858 = vand.u32 2147483647, %v7842
        %v7859 = vand.u32 2147483647, %v7843
        %v7860 = vand.u32 2147483647, %v7844
        %v7861 = vand.u32 2147483647, %v7845
        %v7862 = vand.u32 2147483647, %v7846
        %v7863 = vand.u32 2147483647, %v7847
        %v7864 = vand.u32 2147483647, %v7848
        %v7865 = vand.u32 2147483647, %v7849
        %v7866 = vand.u32 2147483647, %v7850
        %v7867 = vand.u32 2147483647, %v7851
        %v7868 = vand.u32 2147483647, %v7852
        %v7869 = vand.u32 2147483647, %v7853
        %v7870 = vand.u32 2147483647, %v7854
        %v7871 = vmul.f32 %v7855, 0.3275911
        %v7872 = vmul.f32 %v7856, 0.3275911
        %v7873 = vmul.f32 %v7857, 0.3275911
        %v7874 = vmul.f32 %v7858, 0.3275911
        %v7875 = vmul.f32 %v7859, 0.3275911
        %v7876 = vmul.f32 %v7860, 0.3275911
        %v7877 = vmul.f32 %v7861, 0.3275911
        %v7878 = vmul.f32 %v7862, 0.3275911
        %v7879 = vmul.f32 %v7863, 0.3275911
        %v7880 = vmul.f32 %v7864, 0.3275911
        %v7881 = vmul.f32 %v7865, 0.3275911
        %v7882 = vmul.f32 %v7866, 0.3275911
        %v7883 = vmul.f32 %v7867, 0.3275911
        %v7884 = vmul.f32 %v7868, 0.3275911
        %v7885 = vmul.f32 %v7869, 0.3275911
        %v7886 = vmul.f32 %v7870, 0.3275911
        %v7887 = vadd.f32 %v7871, 1.0
        %v7888 = vadd.f32 %v7872, 1.0
        %v7889 = vadd.f32 %v7873, 1.0
        %v7890 = vadd.f32 %v7874, 1.0
        %v7891 = vadd.f32 %v7875, 1.0
        %v7892 = vadd.f32 %v7876, 1.0
        %v7893 = vadd.f32 %v7877, 1.0
        %v7894 = vadd.f32 %v7878, 1.0
        %v7895 = vadd.f32 %v7879, 1.0
        %v7896 = vadd.f32 %v7880, 1.0
        %v7897 = vadd.f32 %v7881, 1.0
        %v7898 = vadd.f32 %v7882, 1.0
        %v7899 = vadd.f32 %v7883, 1.0
        %v7900 = vadd.f32 %v7884, 1.0
        %v7901 = vadd.f32 %v7885, 1.0
        %v7902 = vadd.f32 %v7886, 1.0
        %v7903 = vrcp.pop %v7887
        %v7904 = vmul.f32 1.0, %v7903
        %v7905 = vrcp.pop %v7888
        %v7906 = vmul.f32 1.0, %v7905
        %v7907 = vrcp.pop %v7889
        %v7908 = vmul.f32 1.0, %v7907
        %v7909 = vrcp.pop %v7890
        %v7910 = vmul.f32 1.0, %v7909
        %v7911 = vrcp.pop %v7891
        %v7912 = vmul.f32 1.0, %v7911
        %v7913 = vrcp.pop %v7892
        %v7914 = vmul.f32 1.0, %v7913
        %v7915 = vrcp.pop %v7893
        %v7916 = vmul.f32 1.0, %v7915
        %v7917 = vrcp.pop %v7894
        %v7918 = vmul.f32 1.0, %v7917
        %v7919 = vrcp.pop %v7895
        %v7920 = vmul.f32 1.0, %v7919
        %v7921 = vrcp.pop %v7896
        %v7922 = vmul.f32 1.0, %v7921
        %v7923 = vrcp.pop %v7897
        %v7924 = vmul.f32 1.0, %v7923
        %v7925 = vrcp.pop %v7898
        %v7926 = vmul.f32 1.0, %v7925
        %v7927 = vrcp.pop %v7899
        %v7928 = vmul.f32 1.0, %v7927
        %v7929 = vrcp.pop %v7900
        %v7930 = vmul.f32 1.0, %v7929
        %v7931 = vrcp.pop %v7901
        %v7932 = vmul.f32 1.0, %v7931
        %v7933 = vrcp.pop %v7902
        %v7934 = vmul.f32 1.0, %v7933
        %v7935 = vmul.f32 %v7904, 1.0614054
        %v7936 = vmul.f32 %v7906, 1.0614054
        %v7937 = vmul.f32 %v7908, 1.0614054
        %v7938 = vmul.f32 %v7910, 1.0614054
        %v7939 = vmul.f32 %v7912, 1.0614054
        %v7940 = vmul.f32 %v7914, 1.0614054
        %v7941 = vmul.f32 %v7916, 1.0614054
        %v7942 = vmul.f32 %v7918, 1.0614054
        %v7943 = vmul.f32 %v7920, 1.0614054
        %v7944 = vmul.f32 %v7922, 1.0614054
        %v7945 = vmul.f32 %v7924, 1.0614054
        %v7946 = vmul.f32 %v7926, 1.0614054
        %v7947 = vmul.f32 %v7928, 1.0614054
        %v7948 = vmul.f32 %v7930, 1.0614054
        %v7949 = vmul.f32 %v7932, 1.0614054
        %v7950 = vmul.f32 %v7934, 1.0614054
        %v7951 = vadd.f32 %v7935, -1.4531521
        %v7952 = vadd.f32 %v7936, -1.4531521
        %v7953 = vadd.f32 %v7937, -1.4531521
        %v7954 = vadd.f32 %v7938, -1.4531521
        %v7955 = vadd.f32 %v7939, -1.4531521
        %v7956 = vadd.f32 %v7940, -1.4531521
        %v7957 = vadd.f32 %v7941, -1.4531521
        %v7958 = vadd.f32 %v7942, -1.4531521
        %v7959 = vadd.f32 %v7943, -1.4531521
        %v7960 = vadd.f32 %v7944, -1.4531521
        %v7961 = vadd.f32 %v7945, -1.4531521
        %v7962 = vadd.f32 %v7946, -1.4531521
        %v7963 = vadd.f32 %v7947, -1.4531521
        %v7964 = vadd.f32 %v7948, -1.4531521
        %v7965 = vadd.f32 %v7949, -1.4531521
        %v7966 = vadd.f32 %v7950, -1.4531521
        %v7967 = vmul.f32 %v7951, %v7904
        %v7968 = vmul.f32 %v7952, %v7906
        %v7969 = vmul.f32 %v7953, %v7908
        %v7970 = vmul.f32 %v7954, %v7910
        %v7971 = vmul.f32 %v7955, %v7912
        %v7972 = vmul.f32 %v7956, %v7914
        %v7973 = vmul.f32 %v7957, %v7916
        %v7974 = vmul.f32 %v7958, %v7918
        %v7975 = vmul.f32 %v7959, %v7920
        %v7976 = vmul.f32 %v7960, %v7922
        %v7977 = vmul.f32 %v7961, %v7924
        %v7978 = vmul.f32 %v7962, %v7926
        %v7979 = vmul.f32 %v7963, %v7928
        %v7980 = vmul.f32 %v7964, %v7930
        %v7981 = vmul.f32 %v7965, %v7932
        %v7982 = vmul.f32 %v7966, %v7934
        %v7983 = vadd.f32 %v7967, 1.4214138
        %v7984 = vadd.f32 %v7968, 1.4214138
        %v7985 = vadd.f32 %v7969, 1.4214138
        %v7986 = vadd.f32 %v7970, 1.4214138
        %v7987 = vadd.f32 %v7971, 1.4214138
        %v7988 = vadd.f32 %v7972, 1.4214138
        %v7989 = vadd.f32 %v7973, 1.4214138
        %v7990 = vadd.f32 %v7974, 1.4214138
        %v7991 = vadd.f32 %v7975, 1.4214138
        %v7992 = vadd.f32 %v7976, 1.4214138
        %v7993 = vadd.f32 %v7977, 1.4214138
        %v7994 = vadd.f32 %v7978, 1.4214138
        %v7995 = vadd.f32 %v7979, 1.4214138
        %v7996 = vadd.f32 %v7980, 1.4214138
        %v7997 = vadd.f32 %v7981, 1.4214138
        %v7998 = vadd.f32 %v7982, 1.4214138
        %v7999 = vmul.f32 %v7983, %v7904
        %v8000 = vmul.f32 %v7984, %v7906
        %v8001 = vmul.f32 %v7985, %v7908
        %v8002 = vmul.f32 %v7986, %v7910
        %v8003 = vmul.f32 %v7987, %v7912
        %v8004 = vmul.f32 %v7988, %v7914
        %v8005 = vmul.f32 %v7989, %v7916
        %v8006 = vmul.f32 %v7990, %v7918
        %v8007 = vmul.f32 %v7991, %v7920
        %v8008 = vmul.f32 %v7992, %v7922
        %v8009 = vmul.f32 %v7993, %v7924
        %v8010 = vmul.f32 %v7994, %v7926
        %v8011 = vmul.f32 %v7995, %v7928
        %v8012 = vmul.f32 %v7996, %v7930
        %v8013 = vmul.f32 %v7997, %v7932
        %v8014 = vmul.f32 %v7998, %v7934
        %v8015 = vadd.f32 %v7999, -0.28449672
        %v8016 = vadd.f32 %v8000, -0.28449672
        %v8017 = vadd.f32 %v8001, -0.28449672
        %v8018 = vadd.f32 %v8002, -0.28449672
        %v8019 = vadd.f32 %v8003, -0.28449672
        %v8020 = vadd.f32 %v8004, -0.28449672
        %v8021 = vadd.f32 %v8005, -0.28449672
        %v8022 = vadd.f32 %v8006, -0.28449672
        %v8023 = vadd.f32 %v8007, -0.28449672
        %v8024 = vadd.f32 %v8008, -0.28449672
        %v8025 = vadd.f32 %v8009, -0.28449672
        %v8026 = vadd.f32 %v8010, -0.28449672
        %v8027 = vadd.f32 %v8011, -0.28449672
        %v8028 = vadd.f32 %v8012, -0.28449672
        %v8029 = vadd.f32 %v8013, -0.28449672
        %v8030 = vadd.f32 %v8014, -0.28449672
        %v8031 = vmul.f32 %v8015, %v7904
        %v8032 = vmul.f32 %v8016, %v7906
        %v8033 = vmul.f32 %v8017, %v7908
        %v8034 = vmul.f32 %v8018, %v7910
        %v8035 = vmul.f32 %v8019, %v7912
        %v8036 = vmul.f32 %v8020, %v7914
        %v8037 = vmul.f32 %v8021, %v7916
        %v8038 = vmul.f32 %v8022, %v7918
        %v8039 = vmul.f32 %v8023, %v7920
        %v8040 = vmul.f32 %v8024, %v7922
        %v8041 = vmul.f32 %v8025, %v7924
        %v8042 = vmul.f32 %v8026, %v7926
        %v8043 = vmul.f32 %v8027, %v7928
        %v8044 = vmul.f32 %v8028, %v7930
        %v8045 = vmul.f32 %v8029, %v7932
        %v8046 = vmul.f32 %v8030, %v7934
        %v8047 = vadd.f32 %v8031, 0.2548296
        %v8048 = vadd.f32 %v8032, 0.2548296
        %v8049 = vadd.f32 %v8033, 0.2548296
        %v8050 = vadd.f32 %v8034, 0.2548296
        %v8051 = vadd.f32 %v8035, 0.2548296
        %v8052 = vadd.f32 %v8036, 0.2548296
        %v8053 = vadd.f32 %v8037, 0.2548296
        %v8054 = vadd.f32 %v8038, 0.2548296
        %v8055 = vadd.f32 %v8039, 0.2548296
        %v8056 = vadd.f32 %v8040, 0.2548296
        %v8057 = vadd.f32 %v8041, 0.2548296
        %v8058 = vadd.f32 %v8042, 0.2548296
        %v8059 = vadd.f32 %v8043, 0.2548296
        %v8060 = vadd.f32 %v8044, 0.2548296
        %v8061 = vadd.f32 %v8045, 0.2548296
        %v8062 = vadd.f32 %v8046, 0.2548296
        %v8063 = vmul.f32 %v8047, %v7904
        %v8064 = vmul.f32 %v8048, %v7906
        %v8065 = vmul.f32 %v8049, %v7908
        %v8066 = vmul.f32 %v8050, %v7910
        %v8067 = vmul.f32 %v8051, %v7912
        %v8068 = vmul.f32 %v8052, %v7914
        %v8069 = vmul.f32 %v8053, %v7916
        %v8070 = vmul.f32 %v8054, %v7918
        %v8071 = vmul.f32 %v8055, %v7920
        %v8072 = vmul.f32 %v8056, %v7922
        %v8073 = vmul.f32 %v8057, %v7924
        %v8074 = vmul.f32 %v8058, %v7926
        %v8075 = vmul.f32 %v8059, %v7928
        %v8076 = vmul.f32 %v8060, %v7930
        %v8077 = vmul.f32 %v8061, %v7932
        %v8078 = vmul.f32 %v8062, %v7934
        %v8079 = vsub.f32 0.0, %v7855
        %v8080 = vsub.f32 0.0, %v7856
        %v8081 = vsub.f32 0.0, %v7857
        %v8082 = vsub.f32 0.0, %v7858
        %v8083 = vsub.f32 0.0, %v7859
        %v8084 = vsub.f32 0.0, %v7860
        %v8085 = vsub.f32 0.0, %v7861
        %v8086 = vsub.f32 0.0, %v7862
        %v8087 = vsub.f32 0.0, %v7863
        %v8088 = vsub.f32 0.0, %v7864
        %v8089 = vsub.f32 0.0, %v7865
        %v8090 = vsub.f32 0.0, %v7866
        %v8091 = vsub.f32 0.0, %v7867
        %v8092 = vsub.f32 0.0, %v7868
        %v8093 = vsub.f32 0.0, %v7869
        %v8094 = vsub.f32 0.0, %v7870
        %v8095 = vmul.f32 %v8079, %v7855
        %v8096 = vmul.f32 %v8080, %v7856
        %v8097 = vmul.f32 %v8081, %v7857
        %v8098 = vmul.f32 %v8082, %v7858
        %v8099 = vmul.f32 %v8083, %v7859
        %v8100 = vmul.f32 %v8084, %v7860
        %v8101 = vmul.f32 %v8085, %v7861
        %v8102 = vmul.f32 %v8086, %v7862
        %v8103 = vmul.f32 %v8087, %v7863
        %v8104 = vmul.f32 %v8088, %v7864
        %v8105 = vmul.f32 %v8089, %v7865
        %v8106 = vmul.f32 %v8090, %v7866
        %v8107 = vmul.f32 %v8091, %v7867
        %v8108 = vmul.f32 %v8092, %v7868
        %v8109 = vmul.f32 %v8093, %v7869
        %v8110 = vmul.f32 %v8094, %v7870
        %v8111 = vmul.f32 %v8095, 1.442695
        %v8112 = vpow.pop %v8111
        %v8113 = vmul.f32 %v8096, 1.442695
        %v8114 = vpow.pop %v8113
        %v8115 = vmul.f32 %v8097, 1.442695
        %v8116 = vpow.pop %v8115
        %v8117 = vmul.f32 %v8098, 1.442695
        %v8118 = vpow.pop %v8117
        %v8119 = vmul.f32 %v8099, 1.442695
        %v8120 = vpow.pop %v8119
        %v8121 = vmul.f32 %v8100, 1.442695
        %v8122 = vpow.pop %v8121
        %v8123 = vmul.f32 %v8101, 1.442695
        %v8124 = vpow.pop %v8123
        %v8125 = vmul.f32 %v8102, 1.442695
        %v8126 = vpow.pop %v8125
        %v8127 = vmul.f32 %v8103, 1.442695
        %v8128 = vpow.pop %v8127
        %v8129 = vmul.f32 %v8104, 1.442695
        %v8130 = vpow.pop %v8129
        %v8131 = vmul.f32 %v8105, 1.442695
        %v8132 = vpow.pop %v8131
        %v8133 = vmul.f32 %v8106, 1.442695
        %v8134 = vpow.pop %v8133
        %v8135 = vmul.f32 %v8107, 1.442695
        %v8136 = vpow.pop %v8135
        %v8137 = vmul.f32 %v8108, 1.442695
        %v8138 = vpow.pop %v8137
        %v8139 = vmul.f32 %v8109, 1.442695
        %v8140 = vpow.pop %v8139
        %v8141 = vmul.f32 %v8110, 1.442695
        %v8142 = vpow.pop %v8141
        %v8143 = vmul.f32 %v8063, %v8112
        %v8144 = vmul.f32 %v8064, %v8114
        %v8145 = vmul.f32 %v8065, %v8116
        %v8146 = vmul.f32 %v8066, %v8118
        %v8147 = vmul.f32 %v8067, %v8120
        %v8148 = vmul.f32 %v8068, %v8122
        %v8149 = vmul.f32 %v8069, %v8124
        %v8150 = vmul.f32 %v8070, %v8126
        %v8151 = vmul.f32 %v8071, %v8128
        %v8152 = vmul.f32 %v8072, %v8130
        %v8153 = vmul.f32 %v8073, %v8132
        %v8154 = vmul.f32 %v8074, %v8134
        %v8155 = vmul.f32 %v8075, %v8136
        %v8156 = vmul.f32 %v8076, %v8138
        %v8157 = vmul.f32 %v8077, %v8140
        %v8158 = vmul.f32 %v8078, %v8142
        %v8159 = vsub.f32 1.0, %v8143
        %v8160 = vsub.f32 1.0, %v8144
        %v8161 = vsub.f32 1.0, %v8145
        %v8162 = vsub.f32 1.0, %v8146
        %v8163 = vsub.f32 1.0, %v8147
        %v8164 = vsub.f32 1.0, %v8148
        %v8165 = vsub.f32 1.0, %v8149
        %v8166 = vsub.f32 1.0, %v8150
        %v8167 = vsub.f32 1.0, %v8151
        %v8168 = vsub.f32 1.0, %v8152
        %v8169 = vsub.f32 1.0, %v8153
        %v8170 = vsub.f32 1.0, %v8154
        %v8171 = vsub.f32 1.0, %v8155
        %v8172 = vsub.f32 1.0, %v8156
        %v8173 = vsub.f32 1.0, %v8157
        %v8174 = vsub.f32 1.0, %v8158
        %vm8175 = vcmp.ge.f32.partialorder %v7839, 0.0
        %vm8176 = vcmp.ge.f32.partialorder %v7840, 0.0
        %vm8177 = vcmp.ge.f32.partialorder %v7841, 0.0
        %vm8178 = vcmp.ge.f32.partialorder %v7842, 0.0
        %vm8179 = vcmp.ge.f32.partialorder %v7843, 0.0
        %vm8180 = vcmp.ge.f32.partialorder %v7844, 0.0
        %vm8181 = vcmp.ge.f32.partialorder %v7845, 0.0
        %vm8182 = vcmp.ge.f32.partialorder %v7846, 0.0
        %vm8183 = vcmp.ge.f32.partialorder %v7847, 0.0
        %vm8184 = vcmp.ge.f32.partialorder %v7848, 0.0
        %vm8185 = vcmp.ge.f32.partialorder %v7849, 0.0
        %vm8186 = vcmp.ge.f32.partialorder %v7850, 0.0
        %vm8187 = vcmp.ge.f32.partialorder %v7851, 0.0
        %vm8188 = vcmp.ge.f32.partialorder %v7852, 0.0
        %vm8189 = vcmp.ge.f32.partialorder %v7853, 0.0
        %vm8190 = vcmp.ge.f32.partialorder %v7854, 0.0
        %v8191 = vsub.f32 0.0, %v8159
        %v8192 = vsub.f32 0.0, %v8160
        %v8193 = vsub.f32 0.0, %v8161
        %v8194 = vsub.f32 0.0, %v8162
        %v8195 = vsub.f32 0.0, %v8163
        %v8196 = vsub.f32 0.0, %v8164
        %v8197 = vsub.f32 0.0, %v8165
        %v8198 = vsub.f32 0.0, %v8166
        %v8199 = vsub.f32 0.0, %v8167
        %v8200 = vsub.f32 0.0, %v8168
        %v8201 = vsub.f32 0.0, %v8169
        %v8202 = vsub.f32 0.0, %v8170
        %v8203 = vsub.f32 0.0, %v8171
        %v8204 = vsub.f32 0.0, %v8172
        %v8205 = vsub.f32 0.0, %v8173
        %v8206 = vsub.f32 0.0, %v8174
        %v8207 = vsel %vm8175, %v8159, %v8191
        %v8208 = vsel %vm8176, %v8160, %v8192
        %v8209 = vsel %vm8177, %v8161, %v8193
        %v8210 = vsel %vm8178, %v8162, %v8194
        %v8211 = vsel %vm8179, %v8163, %v8195
        %v8212 = vsel %vm8180, %v8164, %v8196
        %v8213 = vsel %vm8181, %v8165, %v8197
        %v8214 = vsel %vm8182, %v8166, %v8198
        %v8215 = vsel %vm8183, %v8167, %v8199
        %v8216 = vsel %vm8184, %v8168, %v8200
        %v8217 = vsel %vm8185, %v8169, %v8201
        %v8218 = vsel %vm8186, %v8170, %v8202
        %v8219 = vsel %vm8187, %v8171, %v8203
        %v8220 = vsel %vm8188, %v8172, %v8204
        %v8221 = vsel %vm8189, %v8173, %v8205
        %v8222 = vsel %vm8190, %v8174, %v8206
        %v8223 = vadd.f32 %v8207, 1.0
        %v8224 = vadd.f32 %v8208, 1.0
        %v8225 = vadd.f32 %v8209, 1.0
        %v8226 = vadd.f32 %v8210, 1.0
        %v8227 = vadd.f32 %v8211, 1.0
        %v8228 = vadd.f32 %v8212, 1.0
        %v8229 = vadd.f32 %v8213, 1.0
        %v8230 = vadd.f32 %v8214, 1.0
        %v8231 = vadd.f32 %v8215, 1.0
        %v8232 = vadd.f32 %v8216, 1.0
        %v8233 = vadd.f32 %v8217, 1.0
        %v8234 = vadd.f32 %v8218, 1.0
        %v8235 = vadd.f32 %v8219, 1.0
        %v8236 = vadd.f32 %v8220, 1.0
        %v8237 = vadd.f32 %v8221, 1.0
        %v8238 = vadd.f32 %v8222, 1.0
        %v8239 = vmul.f32 %v7823, %v8223
        %v8240 = vmul.f32 %v7824, %v8224
        %v8241 = vmul.f32 %v7825, %v8225
        %v8242 = vmul.f32 %v7826, %v8226
        %v8243 = vmul.f32 %v7827, %v8227
        %v8244 = vmul.f32 %v7828, %v8228
        %v8245 = vmul.f32 %v7829, %v8229
        %v8246 = vmul.f32 %v7830, %v8230
        %v8247 = vmul.f32 %v7831, %v8231
        %v8248 = vmul.f32 %v7832, %v8232
        %v8249 = vmul.f32 %v7833, %v8233
        %v8250 = vmul.f32 %v7834, %v8234
        %v8251 = vmul.f32 %v7835, %v8235
        %v8252 = vmul.f32 %v7836, %v8236
        %v8253 = vmul.f32 %v7837, %v8237
        %v8254 = vmul.f32 %v7838, %v8238
        %v8255 = vpack.c.bf16 %v8240, %v8239
        %v8256 = vpack.c.bf16 %v8242, %v8241
        %v8257 = vpack.c.bf16 %v8244, %v8243
        %v8258 = vpack.c.bf16 %v8246, %v8245
        %v8259 = vpack.c.bf16 %v8248, %v8247
        %v8260 = vpack.c.bf16 %v8250, %v8249
        %v8261 = vpack.c.bf16 %v8252, %v8251
        %v8262 = vpack.c.bf16 %v8254, %v8253
        %v8263 = vld [vmem:[%s13] sm:$0xf]
        %v8264 = vld [vmem:[%s13 + $0x4] sm:$0xf]
        %v8265 = vld [vmem:[%s13 + $0x8] sm:$0xf]
        %v8266 = vld [vmem:[%s13 + $0xc] sm:$0xf]
        %v8267 = vld [vmem:[%s13 + $0x10] sm:$0xf]
        %v8268 = vld [vmem:[%s13 + $0x14] sm:$0xf]
        %v8269 = vld [vmem:[%s13 + $0x18] sm:$0xf]
        %v8270 = vld [vmem:[%s13 + $0x1c] sm:$0xf]
        %v8271 = vld [vmem:[%s14] sm:$0x1]
        %v8273 = vlaneseq
        %v8274 = vshrl.u32 %v8273, 7
        %v8275 = vsub.s32 0, %v8274
        %v8276 = vrot.slane %v8271, %v8275
        %v8286 = vunpack.c.l.b16 %v8263
        %v8287 = vunpack.c.l.b16 %v8264
        %v8288 = vunpack.c.l.b16 %v8265
        %v8289 = vunpack.c.l.b16 %v8266
        %v8290 = vunpack.c.l.b16 %v8267
        %v8291 = vunpack.c.l.b16 %v8268
        %v8292 = vunpack.c.l.b16 %v8269
        %v8293 = vunpack.c.l.b16 %v8270
        %v8294 = vpack.c.b16 %v8287, %v8286
        %v8295 = vpack.c.b16 %v8289, %v8288
        %v8296 = vpack.c.b16 %v8291, %v8290
        %v8297 = vpack.c.b16 %v8293, %v8292
        %v8303 = vsel %vm3624, %v8255, 0
        %v8306 = vsel %vm3624, %v8256, 0
        %v8309 = vsel %vm3624, %v8257, 0
        %v8312 = vsel %vm3624, %v8258, 0
        %v8315 = vsel %vm3624, %v8259, 0
        %v8318 = vsel %vm3624, %v8260, 0
        %v8321 = vsel %vm3624, %v8261, 0
        %v8324 = vsel %vm3624, %v8262, 0
        %8326 = vmatprep.subr.bf16.mxu0 0
        %8327 = vmatpush1.bf16.msra.mxu0 %v8294
        %8328 = vmatprep.subr.bf16.mxu0 0
        %8329 = vmatpush1.bf16.msra.mxu0 %v8295
        %8330 = vmatprep.subr.bf16.mxu0 0
        %8331 = vmatpush1.bf16.msra.mxu0 %v8296
        %8332 = vmatprep.subr.bf16.mxu0 0
        %8333 = vmatpush1.bf16.msra.mxu0 %v8297
        %8334 = vmatprep.subr.bf16.mxu0 0
        %8335 = vmatpush1.bf16.msra.mxu0 0
        %8336 = vmatprep.subr.bf16.mxu0 0
        %8337 = vmatpush1.bf16.msra.mxu0 0
        %8338 = vmatprep.subr.bf16.mxu0 0
        %8339 = vmatpush1.bf16.msra.mxu0 0
        %8340 = vmatprep.subr.bf16.mxu0 0
        %8341 = vmatpush1.bf16.msra.mxu0 0
        %8342 = vmatprep.subr.bf16.mxu0 0
        %8343 = vmatpush1.bf16.msra.mxu0 0
        %8344 = vmatprep.subr.bf16.mxu0 0
        %8345 = vmatpush1.bf16.msra.mxu0 0
        %8346 = vmatprep.subr.bf16.mxu0 0
        %8347 = vmatpush1.bf16.msra.mxu0 0
        %8348 = vmatprep.subr.bf16.mxu0 0
        %8349 = vmatpush1.bf16.msra.mxu0 0
        %8350 = vmatprep.subr.bf16.mxu0 0
        %8351 = vmatpush1.bf16.msra.mxu0 0
        %8352 = vmatprep.subr.bf16.mxu0 0
        %8353 = vmatpush1.bf16.msra.mxu0 0
        %8354 = vmatprep.subr.bf16.mxu0 0
        %8355 = vmatpush1.bf16.msra.mxu0 0
        %8356 = vmatprep.subr.bf16.mxu0 0
        %8357 = vmatpush1.bf16.msra.mxu0 0
        %8358 = vmatprep.mubr.bf16.mxu0 0
        %8359 = vmatmul.mubr.bf16.gmra.mrb[0].mxu0 %v8303
        %v8360 = vpop.f32.mrb[0].mxu0
        %v8361 = vadd.f32 %v8276, %v8360
        %v8362 = vpop.f32.mrb[0].mxu0
        %v8363 = vpop.f32.mrb[0].mxu0
        %v8364 = vadd.f32 %v8276, %v8363
        %v8365 = vpop.f32.mrb[0].mxu0
        %8366 = vmatprep.mubr.bf16.mxu0 0
        %8367 = vmatmul.mubr.bf16.gmra.mrb[0].mxu0 %v8306
        %v8368 = vpop.f32.mrb[0].mxu0
        %v8369 = vadd.f32 %v8276, %v8368
        %v8370 = vpop.f32.mrb[0].mxu0
        %v8371 = vpop.f32.mrb[0].mxu0
        %v8372 = vadd.f32 %v8276, %v8371
        %v8373 = vpop.f32.mrb[0].mxu0
        %8374 = vmatprep.mubr.bf16.mxu0 0
        %8375 = vmatmul.mubr.bf16.gmra.mrb[0].mxu0 %v8309
        %v8376 = vpop.f32.mrb[0].mxu0
        %v8377 = vadd.f32 %v8276, %v8376
        %v8378 = vpop.f32.mrb[0].mxu0
        %v8379 = vpop.f32.mrb[0].mxu0
        %v8380 = vadd.f32 %v8276, %v8379
        %v8381 = vpop.f32.mrb[0].mxu0
        %8382 = vmatprep.mubr.bf16.mxu0 0
        %8383 = vmatmul.mubr.bf16.gmra.mrb[0].mxu0 %v8312
        %v8384 = vpop.f32.mrb[0].mxu0
        %v8385 = vadd.f32 %v8276, %v8384
        %v8386 = vpop.f32.mrb[0].mxu0
        %v8387 = vpop.f32.mrb[0].mxu0
        %v8388 = vadd.f32 %v8276, %v8387
        %v8389 = vpop.f32.mrb[0].mxu0
        %8390 = vmatprep.mubr.bf16.mxu0 0
        %8391 = vmatmul.mubr.bf16.gmra.mrb[0].mxu0 %v8315
        %v8392 = vpop.f32.mrb[0].mxu0
        %v8393 = vadd.f32 %v8276, %v8392
        %v8394 = vpop.f32.mrb[0].mxu0
        %v8395 = vpop.f32.mrb[0].mxu0
        %v8396 = vadd.f32 %v8276, %v8395
        %v8397 = vpop.f32.mrb[0].mxu0
        %8398 = vmatprep.mubr.bf16.mxu0 0
        %8399 = vmatmul.mubr.bf16.gmra.mrb[0].mxu0 %v8318
        %v8400 = vpop.f32.mrb[0].mxu0
        %v8401 = vadd.f32 %v8276, %v8400
        %v8402 = vpop.f32.mrb[0].mxu0
        %v8403 = vpop.f32.mrb[0].mxu0
        %v8404 = vadd.f32 %v8276, %v8403
        %v8405 = vpop.f32.mrb[0].mxu0
        %8406 = vmatprep.mubr.bf16.mxu0 0
        %8407 = vmatmul.mubr.bf16.gmra.mrb[0].mxu0 %v8321
        %v8408 = vpop.f32.mrb[0].mxu0
        %v8409 = vadd.f32 %v8276, %v8408
        %v8410 = vpop.f32.mrb[0].mxu0
        %v8411 = vpop.f32.mrb[0].mxu0
        %v8412 = vadd.f32 %v8276, %v8411
        %v8413 = vpop.f32.mrb[0].mxu0
        %8414 = vmatprep.mubr.bf16.mxu0 0
        %8415 = vmatmul.mubr.bf16.gmra.mrb[0].mxu0 %v8324
        %v8416 = vpop.f32.mrb[0].mxu0
        %v8417 = vadd.f32 %v8276, %v8416
        %v8418 = vpop.f32.mrb[0].mxu0
        %v8419 = vpop.f32.mrb[0].mxu0
        %v8420 = vadd.f32 %v8276, %v8419
        %v8421 = vpop.f32.mrb[0].mxu0
        %8422 = vdwg.mxu0
        %8423 = vxpose.xlu0.b32.start [1/16] %v8361, 128
        %8424 = vxpose.xlu0.b32.cont [2/16] %v8364, 128
        %8425 = vxpose.xlu0.b32.cont [3/16] %v8369, 128
        %8426 = vxpose.xlu0.b32.cont [4/16] %v8372, 128
        %8427 = vxpose.xlu0.b32.cont [5/16] %v8377, 128
        %8428 = vxpose.xlu0.b32.cont [6/16] %v8380, 128
        %8429 = vxpose.xlu0.b32.cont [7/16] %v8385, 128
        %8430 = vxpose.xlu0.b32.cont [8/16] %v8388, 128
        %8431 = vxpose.xlu0.b32.cont [9/16] %v8393, 128
        %8432 = vxpose.xlu0.b32.cont [10/16] %v8396, 128
        %8433 = vxpose.xlu0.b32.cont [11/16] %v8401, 128
        %8434 = vxpose.xlu0.b32.cont [12/16] %v8404, 128
        %8435 = vxpose.xlu0.b32.cont [13/16] %v8409, 128
        %8436 = vxpose.xlu0.b32.cont [14/16] %v8412, 128
        %8437 = vxpose.xlu0.b32.cont [15/16] %v8417, 128
        %8438 = vxpose.xlu0.b32.end [16/16] %v8420, 128
        %v8439 = vpop.trf.xlu0
        %v8440 = vpop.trf.xlu0
        %v8441 = vpop.trf.xlu0
        %v8442 = vpop.trf.xlu0
        %v8443 = vpop.trf.xlu0
        %v8444 = vpop.trf.xlu0
        %v8445 = vpop.trf.xlu0
        %v8446 = vpop.trf.xlu0
        %v8447 = vpop.trf.xlu0
        %v8448 = vpop.trf.xlu0
        %v8449 = vpop.trf.xlu0
        %v8450 = vpop.trf.xlu0
        %v8451 = vpop.trf.xlu0
        %v8452 = vpop.trf.xlu0
        %v8453 = vpop.trf.xlu0
        %v8454 = vpop.trf.xlu0
        %v8457 = vcombine.high %v8439, %v8439
        %v8459 = vunpack.c.l.s4 1983009808
        %v8460 = vunpack.c.0.s8 %v8459
        %v8461 = vlaneseq
        %v8462 = vshrl.u32 %v8461, 7
        %v8463 = vsub.s32 %v8460, %v8462
        %v8464 = vrot.slane %v8439, %v8463
        %v8466 = vunpack.c.l.s4 1983009808
        %v8467 = vunpack.c.0.s8 %v8466
        %v8468 = vlaneseq
        %v8469 = vshrl.u32 %v8468, 7
        %v8470 = vsub.s32 %v8467, %v8469
        %v8471 = vrot.slane %v8457, %v8470
        %v8472 = vcombine.high %v8464, %v8464
        %v8473 = vcombine.high %v8471, %v8471
        %v8474 = vcombine.high %v8440, %v8440
        %v8476 = vunpack.c.l.s4 1983009808
        %v8477 = vunpack.c.0.s8 %v8476
        %v8478 = vlaneseq
        %v8479 = vshrl.u32 %v8478, 7
        %v8480 = vsub.s32 %v8477, %v8479
        %v8481 = vrot.slane %v8440, %v8480
        %v8483 = vunpack.c.l.s4 1983009808
        %v8484 = vunpack.c.0.s8 %v8483
        %v8485 = vlaneseq
        %v8486 = vshrl.u32 %v8485, 7
        %v8487 = vsub.s32 %v8484, %v8486
        %v8488 = vrot.slane %v8474, %v8487
        %v8489 = vcombine.high %v8481, %v8481
        %v8490 = vcombine.high %v8488, %v8488
        %8499 = vst [vmem:[%s584] sm:$0x3] %v8464
        %8500 = vst [vmem:[%s584 + $0x2] sm:$0x3] %v8472
        %8501 = vst [vmem:[%s584 + $0x4] sm:$0x3] %v8471
        %8502 = vst [vmem:[%s584 + $0x6] sm:$0x3] %v8473
        %8503 = vst [vmem:[%s584 + $0x8] sm:$0x3] %v8481
        %8504 = vst [vmem:[%s584 + $0xa] sm:$0x3] %v8489
        %8505 = vst [vmem:[%s584 + $0xc] sm:$0x3] %v8488
        %8506 = vst [vmem:[%s584 + $0xe] sm:$0x3] %v8490
        %s8507 = sand.u32 %s361, 1
        %s8508 = scalar_lea.sflag [#allocation4], %s8507
        %s8509 = sand.u32 %s361, 1
        %s8510 = smul.addr %s8509, 16
        %s8511 = scalar_lea.vmem [#allocation14], %s8510
        // Predicated region
        $region109: #{fno1d_forward.1} parent=79 // pred_check
          %p8512 = pneg %p371
        $region110: #{fno1d_forward.1} parent=79 // pred_check_branch
          %8514 = sbr.rel (%p8512) target = $region112
        $region111: #{fno1d_forward.1} parent=79 // pred_region
          %s8515 = smul.u32 8, %s33
          %s8517 = ssub.s32 256, 256
          %8518 = vsyncadd %s8508, %s8517
          %s8519 = smul.addr %s8515, 32
          %s8520 = scalar_lea.hbm %s15, %s8519
          %s8521 = sshll.u32 %s8511, 4
          %s8522 = int_to_ptr.vmem [resolvable:$true] %s8521
          %8527 = dma.vmem_to_hbm [thread:$0]  %s8522, 256, %s8520, %s8508, 32, 32, 2
        $region112: #{fno1d_forward.1} parent=79 // pred_fallthru
          _
      $region80: #{fno1d_forward.1} parent=5 // pred_fallthru
        _
      %p8528 = scmp.le.s32.totalorder 2, %s28
      // Predicated region
      $region113: #{fno1d_forward.1} parent=5 // pred_check
        %p8529 = pneg %p8528
      $region114: #{fno1d_forward.1} parent=5 // pred_check_branch
        %8531 = sbr.rel (%p8529) target = $region116
      $region115: #{fno1d_forward.1} parent=5 // pred_region
        %s8532 = ssub.s32 %s28, 2
        // Predicated region
        $region117: #{fno1d_forward.1} parent=115 // pred_check
          %p8533 = pneg %p377
        $region118: #{fno1d_forward.1} parent=115 // pred_check_branch
          %8535 = sbr.rel (%p8533) target = $region120
        $region119: #{fno1d_forward.1} parent=115 // pred_region
          %s8536 = sand.u32 %s362, 1
          %s8537 = scalar_lea.sflag [#allocation4], %s8536
          %s8538 = sand.u32 %s362, 1
          %s8539 = smul.addr %s8538, 16
          %s8540 = scalar_lea.vmem [#allocation14], %s8539
          %8541 = dma.done %s8537, 256
        $region120: #{fno1d_forward.1} parent=115 // pred_fallthru
          _
      $region116: #{fno1d_forward.1} parent=5 // pred_fallthru
        _
    $region6: #{fno1d_forward.1} parent=1 // loop_footer
      %s32 = sadd.s32 1, %s28
    $region7: #{fno1d_forward.1} parent=1 // loop_footer_branch
      %27 = sbr.rel target = $region3
    $region8: #{fno1d_forward.1} parent=1 // loop_exit
      _
    %8542 = vsyncpa [#allocation3], 1
    %s8543 = scalar_lea.sflag [#allocation3], 1
    %8544 = vsyncpa %s8543, 1
    %8545 = vsyncpa [#allocation6], 1
    %8546 = vsyncpa [#allocation9], 1
    %8547 = vsyncpa [#allocation12], 1
    %8548 = vsyncpa [#allocation4], 1
    %s8549 = scalar_lea.sflag [#allocation4], 1
    %8550 = vsyncpa %s8549, 1

</llo_original>
